<compile_context>
chip_gen: v6e
topology: v6e:2x2x1
jax: 0.10.0
libtpu: 0.0.40
codegen_flags: <defaults>
</compile_context>

<pallas_src>
import jax
import jax.numpy as jnp
from jax import lax
from jax.experimental import pallas as pl
from jax.experimental.pallas import tpu as pltpu

# ---- static model dimensions --------------------------------------------------
STATE_DIM = 32      # state_dimension == LSTM hidden size
ACTION_DIM = 8      # action_dimension
HIDDEN_DIM = 32     # hidden_layer_dimensions == Linear output / LSTM input size
NUM_LAYERS = 2      # number_of_hidden_layer (kernel specialized to 2)
SEQ = 8             # rows ("batch" -> unbatched LSTM sequence length)
LANES = 128

# ---- packed weight-slab row offsets (all 8-row aligned) ------------------------
R_WLIN_S = 0                            # (32, 32)  state part of Linear weight
R_WLIN_A = R_WLIN_S + STATE_DIM         # 32,  (8, 32) action part of Linear weight
R_BLIN = R_WLIN_A + 8                   # 40,  (1, 32) Linear bias
R_WIH0 = R_BLIN + 8                     # 48,  4 gates x (32, 32)  layer-0 input weights
R_WHH0 = R_WIH0 + 4 * HIDDEN_DIM        # 176, 4 gates x (32, 32)  layer-0 recurrent
R_WIH1 = R_WHH0 + 4 * STATE_DIM         # 304, 4 gates x (32, 32)  layer-1 input
R_WHH1 = R_WIH1 + 4 * STATE_DIM         # 432, 4 gates x (32, 32)  layer-1 recurrent
R_B0 = R_WHH1 + 4 * STATE_DIM           # 560, (1, 128) layer-0 combined bias [i|f|g|o]
R_B1 = R_B0 + 8                         # 568, (1, 128) layer-1 combined bias
R_TOTAL = R_B1 + 8                      # 576 rows x 128 lanes f32  (~288 KiB)


def afterstate_kernel(state_ref, action_ref, w_ref, out_ref):
    SD = STATE_DIM
    T = state_ref.shape[0]
    f32 = jnp.float32

    # ---- one-time static views of the packed slab (hoisted out of loop) ----
    w_lin_s = w_ref[R_WLIN_S:R_WLIN_S + STATE_DIM, 0:HIDDEN_DIM]
    w_lin_a = w_ref[R_WLIN_A:R_WLIN_A + ACTION_DIM, 0:HIDDEN_DIM]
    b_lin = w_ref[R_BLIN:R_BLIN + 1, 0:HIDDEN_DIM]

    def gate_block(base, rows, g):
        return w_ref[base + rows * g:base + rows * (g + 1), 0:SD]

    wih0 = [gate_block(R_WIH0, HIDDEN_DIM, g) for g in range(4)]
    whh0 = [gate_block(R_WHH0, SD, g) for g in range(4)]
    wih1 = [gate_block(R_WIH1, SD, g) for g in range(4)]
    whh1 = [gate_block(R_WHH1, SD, g) for g in range(4)]
    b0g = [w_ref[R_B0:R_B0 + 1, g * SD:(g + 1) * SD] for g in range(4)]
    b1g = [w_ref[R_B1:R_B1 + 1, g * SD:(g + 1) * SD] for g in range(4)]

    # ---- fused Linear: concat([state, action]) @ W + b ----------------------
    z = (jnp.dot(state_ref[...], w_lin_s, preferred_element_type=f32)
         + jnp.dot(action_ref[...], w_lin_a, preferred_element_type=f32)
         + b_lin)                                                   # (T, H)

    # ---- layer-0 non-recurrent gate pre-activations, per gate, one pass ----
    g0_pre = [jnp.dot(z, wih0[g], preferred_element_type=f32) + b0g[g]
              for g in range(4)]                                    # 4 x (T, SD)

    def lstm_cell(gates, c):
        # PyTorch gate order [i, f, g, o]; everything already at lanes 0:SD.
        i = jax.nn.sigmoid(gates[0])
        f = jax.nn.sigmoid(gates[1])
        gg = jnp.tanh(gates[2])
        o = jax.nn.sigmoid(gates[3])
        c_new = f * c + i * gg
        return o * jnp.tanh(c_new), c_new

    h0 = jnp.zeros((1, SD), f32)
    c0 = jnp.zeros((1, SD), f32)
    h1 = jnp.zeros((1, SD), f32)
    c1 = jnp.zeros((1, SD), f32)
    hs = []

    # Fully unrolled, layer-interleaved recurrence.  Layer 1's step t depends
    # only on layer 0's step-t output, so the flat trace lets the scheduler
    # overlap the two layers' serial MXU/EUP/VPU latencies.
    for t in range(T):
        # ---- layer 0, step t (h0 == 0 at t == 0: skip its matmuls) ----
        if t == 0:
            gates0 = [g0_pre[g][0:1, :] for g in range(4)]
        else:
            gates0 = [g0_pre[g][t:t + 1, :]
                      + jnp.dot(h0, whh0[g], preferred_element_type=f32)
                      for g in range(4)]
        h0, c0 = lstm_cell(gates0, c0)

        # ---- layer 1, step t (h1 == 0 at t == 0: skip its matmuls) ----
        if t == 0:
            gates1 = [b1g[g]
                      + jnp.dot(h0, wih1[g], preferred_element_type=f32)
                      for g in range(4)]
        else:
            gates1 = [b1g[g]
                      + jnp.dot(h0, wih1[g], preferred_element_type=f32)
                      + jnp.dot(h1, whh1[g], preferred_element_type=f32)
                      for g in range(4)]
        h1, c1 = lstm_cell(gates1, c1)
        hs.append(h1)

    # ---- scale_to_bound_action, hoisted: one reduce, one divide, one store --
    H = jnp.concatenate(hs, axis=0)                                 # (T, SD)
    r_min = jnp.min(H, axis=1, keepdims=True)
    r_max = jnp.max(H, axis=1, keepdims=True)
    scale = r_max - r_min
    scale = jnp.where(scale < 1e-5, scale + 1e-5, scale)
    out_ref[...] = (H - r_min) / scale


def afterstate_dynamics(state_normalized, action, weight_slab):
    T = state_normalized.shape[0]
    vmem = pl.BlockSpec(memory_space=pltpu.MemorySpace.VMEM)
    # Everything (< 350 KiB total) lives entirely in VMEM; no grid/pipelining
    # needed at this size.  For many independent sequences, add a leading
    # "parallel" batch grid axis (uses v7x's second TensorCore).
    return pl.pallas_call(
        afterstate_kernel,
        out_shape=jax.ShapeDtypeStruct((T, STATE_DIM), jnp.float32),
        in_specs=[vmem, vmem, vmem],
        out_specs=vmem,
    )(state_normalized.astype(jnp.float32), action.astype(jnp.float32),
      weight_slab)


# ---- deterministic synthetic parameters ---------------------------------------
def make_params(key):
    S, A, H, SD = STATE_DIM, ACTION_DIM, HIDDEN_DIM, STATE_DIM
    ks = jax.random.split(key, 3 + 3 * NUM_LAYERS)

    def u(k, shape, fan_in):
        bound = 1.0 / (fan_in ** 0.5)
        return jax.random.uniform(k, shape, jnp.float32, -bound, bound)

    params = {
        "w_lin_s": u(ks[0], (S, H), S + A),
        "w_lin_a": u(ks[1], (A, H), S + A),
        "b_lin": u(ks[2], (1, H), S + A),
    }
    in_dims = [H] + [SD] * (NUM_LAYERS - 1)
    for l in range(NUM_LAYERS):
        params[f"w_ih{l}"] = u(ks[3 + 3 * l], (in_dims[l], 4 * SD), SD)
        params[f"w_hh{l}"] = u(ks[4 + 3 * l], (SD, 4 * SD), SD)
        # combined bias (b_ih + b_hh) in PyTorch gate order [i, f, g, o]
        params[f"b{l}"] = u(ks[5 + 3 * l], (1, 4 * SD), SD)
    return params
    # NOTE: when importing real PyTorch weights, transpose weight_ih/weight_hh
    # ((4H,in) -> (in,4H)) and pre-sum b_ih + b_hh before calling pack_weights.


# ---- pack all weights/biases into one lane-dense VMEM slab (done ONCE) --------
def pack_weights(params):
    SD = STATE_DIM
    slab = jnp.zeros((R_TOTAL, LANES), jnp.float32)

    def put(s, r, x):
        x = jnp.asarray(x, jnp.float32)
        return s.at[r:r + x.shape[0], 0:x.shape[1]].set(x)

    slab = put(slab, R_WLIN_S, params["w_lin_s"])
    slab = put(slab, R_WLIN_A, params["w_lin_a"])
    slab = put(slab, R_BLIN, params["b_lin"])
    for g in range(4):
        slab = put(slab, R_WIH0 + HIDDEN_DIM * g,
                   params["w_ih0"][:, g * SD:(g + 1) * SD])
        slab = put(slab, R_WHH0 + SD * g,
                   params["w_hh0"][:, g * SD:(g + 1) * SD])
        slab = put(slab, R_WIH1 + SD * g,
                   params["w_ih1"][:, g * SD:(g + 1) * SD])
        slab = put(slab, R_WHH1 + SD * g,
                   params["w_hh1"][:, g * SD:(g + 1) * SD])
    slab = put(slab, R_B0, params["b0"])
    slab = put(slab, R_B1, params["b1"])
    return slab


# ---- pure-JAX reference (for correctness check) --------------------------------
def reference(state_normalized, action, params):
    SD = STATE_DIM
    x = jnp.concatenate([state_normalized, action], axis=1).astype(jnp.float32)
    w_lin = jnp.concatenate([params["w_lin_s"], params["w_lin_a"]], axis=0)
    z = x @ w_lin + params["b_lin"]
    for l in range(NUM_LAYERS):
        wih, whh, b = params[f"w_ih{l}"], params[f"w_hh{l}"], params[f"b{l}"]
        gx = z @ wih + b

        def step(carry, g_row):
            h, c = carry
            g = g_row + h @ whh
            i = jax.nn.sigmoid(g[0 * SD:1 * SD])
            f = jax.nn.sigmoid(g[1 * SD:2 * SD])
            gg = jnp.tanh(g[2 * SD:3 * SD])
            o = jax.nn.sigmoid(g[3 * SD:4 * SD])
            c = f * c + i * gg
            h = o * jnp.tanh(c)
            return (h, c), h

        (_, _), ys = lax.scan(step, (jnp.zeros(SD), jnp.zeros(SD)), gx)
        z = ys
    y_min = z.min(axis=1, keepdims=True)
    y_max = z.max(axis=1, keepdims=True)
    scale = y_max - y_min
    scale = jnp.where(scale < 1e-5, scale + 1e-5, scale)
    return (z - y_min) / scale


if __name__ == "__main__":
    key = jax.random.PRNGKey(0)
    kp, kstate, kaction = jax.random.split(key, 3)
    params = make_params(kp)
    weight_slab = jax.block_until_ready(pack_weights(params))  # pack once, reuse

    state_normalized = jax.random.normal(kstate, (SEQ, STATE_DIM), jnp.float32)
    action = jax.random.normal(kaction, (SEQ, ACTION_DIM), jnp.float32)

    out = afterstate_dynamics(state_normalized, action, weight_slab)
    jax.block_until_ready(out)

    ref = reference(state_normalized, action, params)
    assert out.shape == (SEQ, STATE_DIM)
    assert jnp.allclose(out, ref, atol=2e-4), float(jnp.max(jnp.abs(out - ref)))
    print("KERNEL_OK")
</pallas_src>

<mosaic_0001>
module attributes {stable_mosaic.version = 11 : i64} {
  func.func @afterstate_kernel(%arg0: memref<8x32xf32, #tpu.memory_space<vmem>>, %arg1: memref<8x8xf32, #tpu.memory_space<vmem>>, %arg2: memref<576x128xf32, #tpu.memory_space<vmem>>, %arg3: memref<8x32xf32, #tpu.memory_space<vmem>>) attributes {dimension_semantics = [], scalar_prefetch = 0 : i64, scratch_operands = 0 : i64, tpu.core_type = #tpu.core_type<tc>} {
    %c0 = arith.constant 0 : index
    %c0_0 = arith.constant 0 : index
    %0 = vector.load %arg2[%c0, %c0_0] : memref<576x128xf32, #tpu.memory_space<vmem>>, vector<32x32xf32>
    %c32 = arith.constant 32 : index
    %c0_1 = arith.constant 0 : index
    %1 = vector.load %arg2[%c32, %c0_1] : memref<576x128xf32, #tpu.memory_space<vmem>>, vector<8x32xf32>
    %c40 = arith.constant 40 : index
    %c0_2 = arith.constant 0 : index
    %2 = vector.load %arg2[%c40, %c0_2] : memref<576x128xf32, #tpu.memory_space<vmem>>, vector<1x32xf32>
    %c48 = arith.constant 48 : index
    %c0_3 = arith.constant 0 : index
    %3 = vector.load %arg2[%c48, %c0_3] : memref<576x128xf32, #tpu.memory_space<vmem>>, vector<32x32xf32>
    %c80 = arith.constant 80 : index
    %c0_4 = arith.constant 0 : index
    %4 = vector.load %arg2[%c80, %c0_4] : memref<576x128xf32, #tpu.memory_space<vmem>>, vector<32x32xf32>
    %c112 = arith.constant 112 : index
    %c0_5 = arith.constant 0 : index
    %5 = vector.load %arg2[%c112, %c0_5] : memref<576x128xf32, #tpu.memory_space<vmem>>, vector<32x32xf32>
    %c144 = arith.constant 144 : index
    %c0_6 = arith.constant 0 : index
    %6 = vector.load %arg2[%c144, %c0_6] : memref<576x128xf32, #tpu.memory_space<vmem>>, vector<32x32xf32>
    %c176 = arith.constant 176 : index
    %c0_7 = arith.constant 0 : index
    %7 = vector.load %arg2[%c176, %c0_7] : memref<576x128xf32, #tpu.memory_space<vmem>>, vector<32x32xf32>
    %c208 = arith.constant 208 : index
    %c0_8 = arith.constant 0 : index
    %8 = vector.load %arg2[%c208, %c0_8] : memref<576x128xf32, #tpu.memory_space<vmem>>, vector<32x32xf32>
    %c240 = arith.constant 240 : index
    %c0_9 = arith.constant 0 : index
    %9 = vector.load %arg2[%c240, %c0_9] : memref<576x128xf32, #tpu.memory_space<vmem>>, vector<32x32xf32>
    %c272 = arith.constant 272 : index
    %c0_10 = arith.constant 0 : index
    %10 = vector.load %arg2[%c272, %c0_10] : memref<576x128xf32, #tpu.memory_space<vmem>>, vector<32x32xf32>
    %c304 = arith.constant 304 : index
    %c0_11 = arith.constant 0 : index
    %11 = vector.load %arg2[%c304, %c0_11] : memref<576x128xf32, #tpu.memory_space<vmem>>, vector<32x32xf32>
    %c336 = arith.constant 336 : index
    %c0_12 = arith.constant 0 : index
    %12 = vector.load %arg2[%c336, %c0_12] : memref<576x128xf32, #tpu.memory_space<vmem>>, vector<32x32xf32>
    %c368 = arith.constant 368 : index
    %c0_13 = arith.constant 0 : index
    %13 = vector.load %arg2[%c368, %c0_13] : memref<576x128xf32, #tpu.memory_space<vmem>>, vector<32x32xf32>
    %c400 = arith.constant 400 : index
    %c0_14 = arith.constant 0 : index
    %14 = vector.load %arg2[%c400, %c0_14] : memref<576x128xf32, #tpu.memory_space<vmem>>, vector<32x32xf32>
    %c432 = arith.constant 432 : index
    %c0_15 = arith.constant 0 : index
    %15 = vector.load %arg2[%c432, %c0_15] : memref<576x128xf32, #tpu.memory_space<vmem>>, vector<32x32xf32>
    %c464 = arith.constant 464 : index
    %c0_16 = arith.constant 0 : index
    %16 = vector.load %arg2[%c464, %c0_16] : memref<576x128xf32, #tpu.memory_space<vmem>>, vector<32x32xf32>
    %c496 = arith.constant 496 : index
    %c0_17 = arith.constant 0 : index
    %17 = vector.load %arg2[%c496, %c0_17] : memref<576x128xf32, #tpu.memory_space<vmem>>, vector<32x32xf32>
    %c528 = arith.constant 528 : index
    %c0_18 = arith.constant 0 : index
    %18 = vector.load %arg2[%c528, %c0_18] : memref<576x128xf32, #tpu.memory_space<vmem>>, vector<32x32xf32>
    %c560 = arith.constant 560 : index
    %c0_19 = arith.constant 0 : index
    %19 = vector.load %arg2[%c560, %c0_19] : memref<576x128xf32, #tpu.memory_space<vmem>>, vector<1x32xf32>
    %c560_20 = arith.constant 560 : index
    %c32_21 = arith.constant 32 : index
    %20 = vector.load %arg2[%c560_20, %c32_21] : memref<576x128xf32, #tpu.memory_space<vmem>>, vector<1x32xf32>
    %c560_22 = arith.constant 560 : index
    %c64 = arith.constant 64 : index
    %21 = vector.load %arg2[%c560_22, %c64] : memref<576x128xf32, #tpu.memory_space<vmem>>, vector<1x32xf32>
    %c560_23 = arith.constant 560 : index
    %c96 = arith.constant 96 : index
    %22 = vector.load %arg2[%c560_23, %c96] : memref<576x128xf32, #tpu.memory_space<vmem>>, vector<1x32xf32>
    %c568 = arith.constant 568 : index
    %c0_24 = arith.constant 0 : index
    %23 = vector.load %arg2[%c568, %c0_24] : memref<576x128xf32, #tpu.memory_space<vmem>>, vector<1x32xf32>
    %c568_25 = arith.constant 568 : index
    %c32_26 = arith.constant 32 : index
    %24 = vector.load %arg2[%c568_25, %c32_26] : memref<576x128xf32, #tpu.memory_space<vmem>>, vector<1x32xf32>
    %c568_27 = arith.constant 568 : index
    %c64_28 = arith.constant 64 : index
    %25 = vector.load %arg2[%c568_27, %c64_28] : memref<576x128xf32, #tpu.memory_space<vmem>>, vector<1x32xf32>
    %c568_29 = arith.constant 568 : index
    %c96_30 = arith.constant 96 : index
    %26 = vector.load %arg2[%c568_29, %c96_30] : memref<576x128xf32, #tpu.memory_space<vmem>>, vector<1x32xf32>
    %c0_31 = arith.constant 0 : index
    %c0_32 = arith.constant 0 : index
    %27 = vector.load %arg0[%c0_31, %c0_32] : memref<8x32xf32, #tpu.memory_space<vmem>>, vector<8x32xf32>
    %cst = arith.constant dense<0.000000e+00> : vector<8x32xf32>
    %28 = tpu.matmul %27, %0, %cst {dimension_numbers = #tpu.dot_dimension_numbers<[1], [0], [0], [1], [0, 0, 1, 1], [], []>} : vector<8x32xf32>, vector<32x32xf32>, vector<8x32xf32> -> vector<8x32xf32>
    %c0_33 = arith.constant 0 : index
    %c0_34 = arith.constant 0 : index
    %29 = vector.load %arg1[%c0_33, %c0_34] : memref<8x8xf32, #tpu.memory_space<vmem>>, vector<8x8xf32>
    %cst_35 = arith.constant dense<0.000000e+00> : vector<8x32xf32>
    %30 = tpu.matmul %29, %1, %cst_35 {dimension_numbers = #tpu.dot_dimension_numbers<[1], [0], [0], [1], [0, 0, 1, 1], [], []>} : vector<8x8xf32>, vector<8x32xf32>, vector<8x32xf32> -> vector<8x32xf32>
    %31 = arith.addf %28, %30 : vector<8x32xf32>
    %32 = vector.broadcast %2 : vector<1x32xf32> to vector<8x32xf32>
    %33 = arith.addf %31, %32 : vector<8x32xf32>
    %cst_36 = arith.constant dense<0.000000e+00> : vector<8x32xf32>
    %34 = tpu.matmul %33, %3, %cst_36 {dimension_numbers = #tpu.dot_dimension_numbers<[1], [0], [0], [1], [0, 0, 1, 1], [], []>} : vector<8x32xf32>, vector<32x32xf32>, vector<8x32xf32> -> vector<8x32xf32>
    %35 = vector.broadcast %19 : vector<1x32xf32> to vector<8x32xf32>
    %36 = arith.addf %34, %35 : vector<8x32xf32>
    %cst_37 = arith.constant dense<0.000000e+00> : vector<8x32xf32>
    %37 = tpu.matmul %33, %4, %cst_37 {dimension_numbers = #tpu.dot_dimension_numbers<[1], [0], [0], [1], [0, 0, 1, 1], [], []>} : vector<8x32xf32>, vector<32x32xf32>, vector<8x32xf32> -> vector<8x32xf32>
    %38 = vector.broadcast %20 : vector<1x32xf32> to vector<8x32xf32>
    %39 = arith.addf %37, %38 : vector<8x32xf32>
    %cst_38 = arith.constant dense<0.000000e+00> : vector<8x32xf32>
    %40 = tpu.matmul %33, %5, %cst_38 {dimension_numbers = #tpu.dot_dimension_numbers<[1], [0], [0], [1], [0, 0, 1, 1], [], []>} : vector<8x32xf32>, vector<32x32xf32>, vector<8x32xf32> -> vector<8x32xf32>
    %41 = vector.broadcast %21 : vector<1x32xf32> to vector<8x32xf32>
    %42 = arith.addf %40, %41 : vector<8x32xf32>
    %cst_39 = arith.constant dense<0.000000e+00> : vector<8x32xf32>
    %43 = tpu.matmul %33, %6, %cst_39 {dimension_numbers = #tpu.dot_dimension_numbers<[1], [0], [0], [1], [0, 0, 1, 1], [], []>} : vector<8x32xf32>, vector<32x32xf32>, vector<8x32xf32> -> vector<8x32xf32>
    %44 = vector.broadcast %22 : vector<1x32xf32> to vector<8x32xf32>
    %45 = arith.addf %43, %44 : vector<8x32xf32>
    %cst_40 = arith.constant 0.000000e+00 : f32
    %46 = vector.broadcast %cst_40 : f32 to vector<1x32xf32>
    %cst_41 = arith.constant 0.000000e+00 : f32
    %47 = vector.broadcast %cst_41 : f32 to vector<1x32xf32>
    %48 = vector.extract_strided_slice %36 {offsets = [0, 0], sizes = [1, 32], strides = [1, 1]} : vector<8x32xf32> to vector<1x32xf32>
    %49 = vector.extract_strided_slice %39 {offsets = [0, 0], sizes = [1, 32], strides = [1, 1]} : vector<8x32xf32> to vector<1x32xf32>
    %50 = vector.extract_strided_slice %42 {offsets = [0, 0], sizes = [1, 32], strides = [1, 1]} : vector<8x32xf32> to vector<1x32xf32>
    %51 = vector.extract_strided_slice %45 {offsets = [0, 0], sizes = [1, 32], strides = [1, 1]} : vector<8x32xf32> to vector<1x32xf32>
    %52 = arith.negf %48 : vector<1x32xf32>
    %53 = math.exp %52 : vector<1x32xf32>
    %cst_42 = arith.constant 1.000000e+00 : f32
    %54 = vector.broadcast %cst_42 : f32 to vector<1x32xf32>
    %55 = arith.addf %54, %53 : vector<1x32xf32>
    %56 = arith.divf %54, %55 : vector<1x32xf32>
    %57 = arith.negf %49 : vector<1x32xf32>
    %58 = math.exp %57 : vector<1x32xf32>
    %cst_43 = arith.constant 1.000000e+00 : f32
    %59 = vector.broadcast %cst_43 : f32 to vector<1x32xf32>
    %60 = arith.addf %59, %58 : vector<1x32xf32>
    %61 = arith.divf %59, %60 : vector<1x32xf32>
    %62 = math.tanh %50 : vector<1x32xf32>
    %63 = arith.negf %51 : vector<1x32xf32>
    %64 = math.exp %63 : vector<1x32xf32>
    %cst_44 = arith.constant 1.000000e+00 : f32
    %65 = vector.broadcast %cst_44 : f32 to vector<1x32xf32>
    %66 = arith.addf %65, %64 : vector<1x32xf32>
    %67 = arith.divf %65, %66 : vector<1x32xf32>
    %68 = arith.mulf %61, %46 : vector<1x32xf32>
    %69 = arith.mulf %56, %62 : vector<1x32xf32>
    %70 = arith.addf %68, %69 : vector<1x32xf32>
    %71 = math.tanh %70 : vector<1x32xf32>
    %72 = arith.mulf %67, %71 : vector<1x32xf32>
    %cst_45 = arith.constant dense<0.000000e+00> : vector<1x32xf32>
    %73 = tpu.matmul %72, %11, %cst_45 {dimension_numbers = #tpu.dot_dimension_numbers<[1], [0], [0], [1], [0, 0, 1, 1], [], []>} : vector<1x32xf32>, vector<32x32xf32>, vector<1x32xf32> -> vector<1x32xf32>
    %74 = arith.addf %23, %73 : vector<1x32xf32>
    %cst_46 = arith.constant dense<0.000000e+00> : vector<1x32xf32>
    %75 = tpu.matmul %72, %12, %cst_46 {dimension_numbers = #tpu.dot_dimension_numbers<[1], [0], [0], [1], [0, 0, 1, 1], [], []>} : vector<1x32xf32>, vector<32x32xf32>, vector<1x32xf32> -> vector<1x32xf32>
    %76 = arith.addf %24, %75 : vector<1x32xf32>
    %cst_47 = arith.constant dense<0.000000e+00> : vector<1x32xf32>
    %77 = tpu.matmul %72, %13, %cst_47 {dimension_numbers = #tpu.dot_dimension_numbers<[1], [0], [0], [1], [0, 0, 1, 1], [], []>} : vector<1x32xf32>, vector<32x32xf32>, vector<1x32xf32> -> vector<1x32xf32>
    %78 = arith.addf %25, %77 : vector<1x32xf32>
    %cst_48 = arith.constant dense<0.000000e+00> : vector<1x32xf32>
    %79 = tpu.matmul %72, %14, %cst_48 {dimension_numbers = #tpu.dot_dimension_numbers<[1], [0], [0], [1], [0, 0, 1, 1], [], []>} : vector<1x32xf32>, vector<32x32xf32>, vector<1x32xf32> -> vector<1x32xf32>
    %80 = arith.addf %26, %79 : vector<1x32xf32>
    %81 = arith.negf %74 : vector<1x32xf32>
    %82 = math.exp %81 : vector<1x32xf32>
    %cst_49 = arith.constant 1.000000e+00 : f32
    %83 = vector.broadcast %cst_49 : f32 to vector<1x32xf32>
    %84 = arith.addf %83, %82 : vector<1x32xf32>
    %85 = arith.divf %83, %84 : vector<1x32xf32>
    %86 = arith.negf %76 : vector<1x32xf32>
    %87 = math.exp %86 : vector<1x32xf32>
    %cst_50 = arith.constant 1.000000e+00 : f32
    %88 = vector.broadcast %cst_50 : f32 to vector<1x32xf32>
    %89 = arith.addf %88, %87 : vector<1x32xf32>
    %90 = arith.divf %88, %89 : vector<1x32xf32>
    %91 = math.tanh %78 : vector<1x32xf32>
    %92 = arith.negf %80 : vector<1x32xf32>
    %93 = math.exp %92 : vector<1x32xf32>
    %cst_51 = arith.constant 1.000000e+00 : f32
    %94 = vector.broadcast %cst_51 : f32 to vector<1x32xf32>
    %95 = arith.addf %94, %93 : vector<1x32xf32>
    %96 = arith.divf %94, %95 : vector<1x32xf32>
    %97 = arith.mulf %90, %47 : vector<1x32xf32>
    %98 = arith.mulf %85, %91 : vector<1x32xf32>
    %99 = arith.addf %97, %98 : vector<1x32xf32>
    %100 = math.tanh %99 : vector<1x32xf32>
    %101 = arith.mulf %96, %100 : vector<1x32xf32>
    %102 = vector.extract_strided_slice %36 {offsets = [1, 0], sizes = [1, 32], strides = [1, 1]} : vector<8x32xf32> to vector<1x32xf32>
    %cst_52 = arith.constant dense<0.000000e+00> : vector<1x32xf32>
    %103 = tpu.matmul %72, %7, %cst_52 {dimension_numbers = #tpu.dot_dimension_numbers<[1], [0], [0], [1], [0, 0, 1, 1], [], []>} : vector<1x32xf32>, vector<32x32xf32>, vector<1x32xf32> -> vector<1x32xf32>
    %104 = arith.addf %102, %103 : vector<1x32xf32>
    %105 = vector.extract_strided_slice %39 {offsets = [1, 0], sizes = [1, 32], strides = [1, 1]} : vector<8x32xf32> to vector<1x32xf32>
    %cst_53 = arith.constant dense<0.000000e+00> : vector<1x32xf32>
    %106 = tpu.matmul %72, %8, %cst_53 {dimension_numbers = #tpu.dot_dimension_numbers<[1], [0], [0], [1], [0, 0, 1, 1], [], []>} : vector<1x32xf32>, vector<32x32xf32>, vector<1x32xf32> -> vector<1x32xf32>
    %107 = arith.addf %105, %106 : vector<1x32xf32>
    %108 = vector.extract_strided_slice %42 {offsets = [1, 0], sizes = [1, 32], strides = [1, 1]} : vector<8x32xf32> to vector<1x32xf32>
    %cst_54 = arith.constant dense<0.000000e+00> : vector<1x32xf32>
    %109 = tpu.matmul %72, %9, %cst_54 {dimension_numbers = #tpu.dot_dimension_numbers<[1], [0], [0], [1], [0, 0, 1, 1], [], []>} : vector<1x32xf32>, vector<32x32xf32>, vector<1x32xf32> -> vector<1x32xf32>
    %110 = arith.addf %108, %109 : vector<1x32xf32>
    %111 = vector.extract_strided_slice %45 {offsets = [1, 0], sizes = [1, 32], strides = [1, 1]} : vector<8x32xf32> to vector<1x32xf32>
    %cst_55 = arith.constant dense<0.000000e+00> : vector<1x32xf32>
    %112 = tpu.matmul %72, %10, %cst_55 {dimension_numbers = #tpu.dot_dimension_numbers<[1], [0], [0], [1], [0, 0, 1, 1], [], []>} : vector<1x32xf32>, vector<32x32xf32>, vector<1x32xf32> -> vector<1x32xf32>
    %113 = arith.addf %111, %112 : vector<1x32xf32>
    %114 = arith.negf %104 : vector<1x32xf32>
    %115 = math.exp %114 : vector<1x32xf32>
    %cst_56 = arith.constant 1.000000e+00 : f32
    %116 = vector.broadcast %cst_56 : f32 to vector<1x32xf32>
    %117 = arith.addf %116, %115 : vector<1x32xf32>
    %118 = arith.divf %116, %117 : vector<1x32xf32>
    %119 = arith.negf %107 : vector<1x32xf32>
    %120 = math.exp %119 : vector<1x32xf32>
    %cst_57 = arith.constant 1.000000e+00 : f32
    %121 = vector.broadcast %cst_57 : f32 to vector<1x32xf32>
    %122 = arith.addf %121, %120 : vector<1x32xf32>
    %123 = arith.divf %121, %122 : vector<1x32xf32>
    %124 = math.tanh %110 : vector<1x32xf32>
    %125 = arith.negf %113 : vector<1x32xf32>
    %126 = math.exp %125 : vector<1x32xf32>
    %cst_58 = arith.constant 1.000000e+00 : f32
    %127 = vector.broadcast %cst_58 : f32 to vector<1x32xf32>
    %128 = arith.addf %127, %126 : vector<1x32xf32>
    %129 = arith.divf %127, %128 : vector<1x32xf32>
    %130 = arith.mulf %123, %70 : vector<1x32xf32>
    %131 = arith.mulf %118, %124 : vector<1x32xf32>
    %132 = arith.addf %130, %131 : vector<1x32xf32>
    %133 = math.tanh %132 : vector<1x32xf32>
    %134 = arith.mulf %129, %133 : vector<1x32xf32>
    %cst_59 = arith.constant dense<0.000000e+00> : vector<1x32xf32>
    %135 = tpu.matmul %134, %11, %cst_59 {dimension_numbers = #tpu.dot_dimension_numbers<[1], [0], [0], [1], [0, 0, 1, 1], [], []>} : vector<1x32xf32>, vector<32x32xf32>, vector<1x32xf32> -> vector<1x32xf32>
    %136 = arith.addf %23, %135 : vector<1x32xf32>
    %cst_60 = arith.constant dense<0.000000e+00> : vector<1x32xf32>
    %137 = tpu.matmul %101, %15, %cst_60 {dimension_numbers = #tpu.dot_dimension_numbers<[1], [0], [0], [1], [0, 0, 1, 1], [], []>} : vector<1x32xf32>, vector<32x32xf32>, vector<1x32xf32> -> vector<1x32xf32>
    %138 = arith.addf %136, %137 : vector<1x32xf32>
    %cst_61 = arith.constant dense<0.000000e+00> : vector<1x32xf32>
    %139 = tpu.matmul %134, %12, %cst_61 {dimension_numbers = #tpu.dot_dimension_numbers<[1], [0], [0], [1], [0, 0, 1, 1], [], []>} : vector<1x32xf32>, vector<32x32xf32>, vector<1x32xf32> -> vector<1x32xf32>
    %140 = arith.addf %24, %139 : vector<1x32xf32>
    %cst_62 = arith.constant dense<0.000000e+00> : vector<1x32xf32>
    %141 = tpu.matmul %101, %16, %cst_62 {dimension_numbers = #tpu.dot_dimension_numbers<[1], [0], [0], [1], [0, 0, 1, 1], [], []>} : vector<1x32xf32>, vector<32x32xf32>, vector<1x32xf32> -> vector<1x32xf32>
    %142 = arith.addf %140, %141 : vector<1x32xf32>
    %cst_63 = arith.constant dense<0.000000e+00> : vector<1x32xf32>
    %143 = tpu.matmul %134, %13, %cst_63 {dimension_numbers = #tpu.dot_dimension_numbers<[1], [0], [0], [1], [0, 0, 1, 1], [], []>} : vector<1x32xf32>, vector<32x32xf32>, vector<1x32xf32> -> vector<1x32xf32>
    %144 = arith.addf %25, %143 : vector<1x32xf32>
    %cst_64 = arith.constant dense<0.000000e+00> : vector<1x32xf32>
    %145 = tpu.matmul %101, %17, %cst_64 {dimension_numbers = #tpu.dot_dimension_numbers<[1], [0], [0], [1], [0, 0, 1, 1], [], []>} : vector<1x32xf32>, vector<32x32xf32>, vector<1x32xf32> -> vector<1x32xf32>
    %146 = arith.addf %144, %145 : vector<1x32xf32>
    %cst_65 = arith.constant dense<0.000000e+00> : vector<1x32xf32>
    %147 = tpu.matmul %134, %14, %cst_65 {dimension_numbers = #tpu.dot_dimension_numbers<[1], [0], [0], [1], [0, 0, 1, 1], [], []>} : vector<1x32xf32>, vector<32x32xf32>, vector<1x32xf32> -> vector<1x32xf32>
    %148 = arith.addf %26, %147 : vector<1x32xf32>
    %cst_66 = arith.constant dense<0.000000e+00> : vector<1x32xf32>
    %149 = tpu.matmul %101, %18, %cst_66 {dimension_numbers = #tpu.dot_dimension_numbers<[1], [0], [0], [1], [0, 0, 1, 1], [], []>} : vector<1x32xf32>, vector<32x32xf32>, vector<1x32xf32> -> vector<1x32xf32>
    %150 = arith.addf %148, %149 : vector<1x32xf32>
    %151 = arith.negf %138 : vector<1x32xf32>
    %152 = math.exp %151 : vector<1x32xf32>
    %cst_67 = arith.constant 1.000000e+00 : f32
    %153 = vector.broadcast %cst_67 : f32 to vector<1x32xf32>
    %154 = arith.addf %153, %152 : vector<1x32xf32>
    %155 = arith.divf %153, %154 : vector<1x32xf32>
    %156 = arith.negf %142 : vector<1x32xf32>
    %157 = math.exp %156 : vector<1x32xf32>
    %cst_68 = arith.constant 1.000000e+00 : f32
    %158 = vector.broadcast %cst_68 : f32 to vector<1x32xf32>
    %159 = arith.addf %158, %157 : vector<1x32xf32>
    %160 = arith.divf %158, %159 : vector<1x32xf32>
    %161 = math.tanh %146 : vector<1x32xf32>
    %162 = arith.negf %150 : vector<1x32xf32>
    %163 = math.exp %162 : vector<1x32xf32>
    %cst_69 = arith.constant 1.000000e+00 : f32
    %164 = vector.broadcast %cst_69 : f32 to vector<1x32xf32>
    %165 = arith.addf %164, %163 : vector<1x32xf32>
    %166 = arith.divf %164, %165 : vector<1x32xf32>
    %167 = arith.mulf %160, %99 : vector<1x32xf32>
    %168 = arith.mulf %155, %161 : vector<1x32xf32>
    %169 = arith.addf %167, %168 : vector<1x32xf32>
    %170 = math.tanh %169 : vector<1x32xf32>
    %171 = arith.mulf %166, %170 : vector<1x32xf32>
    %172 = vector.extract_strided_slice %36 {offsets = [2, 0], sizes = [1, 32], strides = [1, 1]} : vector<8x32xf32> to vector<1x32xf32>
    %cst_70 = arith.constant dense<0.000000e+00> : vector<1x32xf32>
    %173 = tpu.matmul %134, %7, %cst_70 {dimension_numbers = #tpu.dot_dimension_numbers<[1], [0], [0], [1], [0, 0, 1, 1], [], []>} : vector<1x32xf32>, vector<32x32xf32>, vector<1x32xf32> -> vector<1x32xf32>
    %174 = arith.addf %172, %173 : vector<1x32xf32>
    %175 = vector.extract_strided_slice %39 {offsets = [2, 0], sizes = [1, 32], strides = [1, 1]} : vector<8x32xf32> to vector<1x32xf32>
    %cst_71 = arith.constant dense<0.000000e+00> : vector<1x32xf32>
    %176 = tpu.matmul %134, %8, %cst_71 {dimension_numbers = #tpu.dot_dimension_numbers<[1], [0], [0], [1], [0, 0, 1, 1], [], []>} : vector<1x32xf32>, vector<32x32xf32>, vector<1x32xf32> -> vector<1x32xf32>
    %177 = arith.addf %175, %176 : vector<1x32xf32>
    %178 = vector.extract_strided_slice %42 {offsets = [2, 0], sizes = [1, 32], strides = [1, 1]} : vector<8x32xf32> to vector<1x32xf32>
    %cst_72 = arith.constant dense<0.000000e+00> : vector<1x32xf32>
    %179 = tpu.matmul %134, %9, %cst_72 {dimension_numbers = #tpu.dot_dimension_numbers<[1], [0], [0], [1], [0, 0, 1, 1], [], []>} : vector<1x32xf32>, vector<32x32xf32>, vector<1x32xf32> -> vector<1x32xf32>
    %180 = arith.addf %178, %179 : vector<1x32xf32>
    %181 = vector.extract_strided_slice %45 {offsets = [2, 0], sizes = [1, 32], strides = [1, 1]} : vector<8x32xf32> to vector<1x32xf32>
    %cst_73 = arith.constant dense<0.000000e+00> : vector<1x32xf32>
    %182 = tpu.matmul %134, %10, %cst_73 {dimension_numbers = #tpu.dot_dimension_numbers<[1], [0], [0], [1], [0, 0, 1, 1], [], []>} : vector<1x32xf32>, vector<32x32xf32>, vector<1x32xf32> -> vector<1x32xf32>
    %183 = arith.addf %181, %182 : vector<1x32xf32>
    %184 = arith.negf %174 : vector<1x32xf32>
    %185 = math.exp %184 : vector<1x32xf32>
    %cst_74 = arith.constant 1.000000e+00 : f32
    %186 = vector.broadcast %cst_74 : f32 to vector<1x32xf32>
    %187 = arith.addf %186, %185 : vector<1x32xf32>
    %188 = arith.divf %186, %187 : vector<1x32xf32>
    %189 = arith.negf %177 : vector<1x32xf32>
    %190 = math.exp %189 : vector<1x32xf32>
    %cst_75 = arith.constant 1.000000e+00 : f32
    %191 = vector.broadcast %cst_75 : f32 to vector<1x32xf32>
    %192 = arith.addf %191, %190 : vector<1x32xf32>
    %193 = arith.divf %191, %192 : vector<1x32xf32>
    %194 = math.tanh %180 : vector<1x32xf32>
    %195 = arith.negf %183 : vector<1x32xf32>
    %196 = math.exp %195 : vector<1x32xf32>
    %cst_76 = arith.constant 1.000000e+00 : f32
    %197 = vector.broadcast %cst_76 : f32 to vector<1x32xf32>
    %198 = arith.addf %197, %196 : vector<1x32xf32>
    %199 = arith.divf %197, %198 : vector<1x32xf32>
    %200 = arith.mulf %193, %132 : vector<1x32xf32>
    %201 = arith.mulf %188, %194 : vector<1x32xf32>
    %202 = arith.addf %200, %201 : vector<1x32xf32>
    %203 = math.tanh %202 : vector<1x32xf32>
    %204 = arith.mulf %199, %203 : vector<1x32xf32>
    %cst_77 = arith.constant dense<0.000000e+00> : vector<1x32xf32>
    %205 = tpu.matmul %204, %11, %cst_77 {dimension_numbers = #tpu.dot_dimension_numbers<[1], [0], [0], [1], [0, 0, 1, 1], [], []>} : vector<1x32xf32>, vector<32x32xf32>, vector<1x32xf32> -> vector<1x32xf32>
    %206 = arith.addf %23, %205 : vector<1x32xf32>
    %cst_78 = arith.constant dense<0.000000e+00> : vector<1x32xf32>
    %207 = tpu.matmul %171, %15, %cst_78 {dimension_numbers = #tpu.dot_dimension_numbers<[1], [0], [0], [1], [0, 0, 1, 1], [], []>} : vector<1x32xf32>, vector<32x32xf32>, vector<1x32xf32> -> vector<1x32xf32>
    %208 = arith.addf %206, %207 : vector<1x32xf32>
    %cst_79 = arith.constant dense<0.000000e+00> : vector<1x32xf32>
    %209 = tpu.matmul %204, %12, %cst_79 {dimension_numbers = #tpu.dot_dimension_numbers<[1], [0], [0], [1], [0, 0, 1, 1], [], []>} : vector<1x32xf32>, vector<32x32xf32>, vector<1x32xf32> -> vector<1x32xf32>
    %210 = arith.addf %24, %209 : vector<1x32xf32>
    %cst_80 = arith.constant dense<0.000000e+00> : vector<1x32xf32>
    %211 = tpu.matmul %171, %16, %cst_80 {dimension_numbers = #tpu.dot_dimension_numbers<[1], [0], [0], [1], [0, 0, 1, 1], [], []>} : vector<1x32xf32>, vector<32x32xf32>, vector<1x32xf32> -> vector<1x32xf32>
    %212 = arith.addf %210, %211 : vector<1x32xf32>
    %cst_81 = arith.constant dense<0.000000e+00> : vector<1x32xf32>
    %213 = tpu.matmul %204, %13, %cst_81 {dimension_numbers = #tpu.dot_dimension_numbers<[1], [0], [0], [1], [0, 0, 1, 1], [], []>} : vector<1x32xf32>, vector<32x32xf32>, vector<1x32xf32> -> vector<1x32xf32>
    %214 = arith.addf %25, %213 : vector<1x32xf32>
    %cst_82 = arith.constant dense<0.000000e+00> : vector<1x32xf32>
    %215 = tpu.matmul %171, %17, %cst_82 {dimension_numbers = #tpu.dot_dimension_numbers<[1], [0], [0], [1], [0, 0, 1, 1], [], []>} : vector<1x32xf32>, vector<32x32xf32>, vector<1x32xf32> -> vector<1x32xf32>
    %216 = arith.addf %214, %215 : vector<1x32xf32>
    %cst_83 = arith.constant dense<0.000000e+00> : vector<1x32xf32>
    %217 = tpu.matmul %204, %14, %cst_83 {dimension_numbers = #tpu.dot_dimension_numbers<[1], [0], [0], [1], [0, 0, 1, 1], [], []>} : vector<1x32xf32>, vector<32x32xf32>, vector<1x32xf32> -> vector<1x32xf32>
    %218 = arith.addf %26, %217 : vector<1x32xf32>
    %cst_84 = arith.constant dense<0.000000e+00> : vector<1x32xf32>
    %219 = tpu.matmul %171, %18, %cst_84 {dimension_numbers = #tpu.dot_dimension_numbers<[1], [0], [0], [1], [0, 0, 1, 1], [], []>} : vector<1x32xf32>, vector<32x32xf32>, vector<1x32xf32> -> vector<1x32xf32>
    %220 = arith.addf %218, %219 : vector<1x32xf32>
    %221 = arith.negf %208 : vector<1x32xf32>
    %222 = math.exp %221 : vector<1x32xf32>
    %cst_85 = arith.constant 1.000000e+00 : f32
    %223 = vector.broadcast %cst_85 : f32 to vector<1x32xf32>
    %224 = arith.addf %223, %222 : vector<1x32xf32>
    %225 = arith.divf %223, %224 : vector<1x32xf32>
    %226 = arith.negf %212 : vector<1x32xf32>
    %227 = math.exp %226 : vector<1x32xf32>
    %cst_86 = arith.constant 1.000000e+00 : f32
    %228 = vector.broadcast %cst_86 : f32 to vector<1x32xf32>
    %229 = arith.addf %228, %227 : vector<1x32xf32>
    %230 = arith.divf %228, %229 : vector<1x32xf32>
    %231 = math.tanh %216 : vector<1x32xf32>
    %232 = arith.negf %220 : vector<1x32xf32>
    %233 = math.exp %232 : vector<1x32xf32>
    %cst_87 = arith.constant 1.000000e+00 : f32
    %234 = vector.broadcast %cst_87 : f32 to vector<1x32xf32>
    %235 = arith.addf %234, %233 : vector<1x32xf32>
    %236 = arith.divf %234, %235 : vector<1x32xf32>
    %237 = arith.mulf %230, %169 : vector<1x32xf32>
    %238 = arith.mulf %225, %231 : vector<1x32xf32>
    %239 = arith.addf %237, %238 : vector<1x32xf32>
    %240 = math.tanh %239 : vector<1x32xf32>
    %241 = arith.mulf %236, %240 : vector<1x32xf32>
    %242 = vector.extract_strided_slice %36 {offsets = [3, 0], sizes = [1, 32], strides = [1, 1]} : vector<8x32xf32> to vector<1x32xf32>
    %cst_88 = arith.constant dense<0.000000e+00> : vector<1x32xf32>
    %243 = tpu.matmul %204, %7, %cst_88 {dimension_numbers = #tpu.dot_dimension_numbers<[1], [0], [0], [1], [0, 0, 1, 1], [], []>} : vector<1x32xf32>, vector<32x32xf32>, vector<1x32xf32> -> vector<1x32xf32>
    %244 = arith.addf %242, %243 : vector<1x32xf32>
    %245 = vector.extract_strided_slice %39 {offsets = [3, 0], sizes = [1, 32], strides = [1, 1]} : vector<8x32xf32> to vector<1x32xf32>
    %cst_89 = arith.constant dense<0.000000e+00> : vector<1x32xf32>
    %246 = tpu.matmul %204, %8, %cst_89 {dimension_numbers = #tpu.dot_dimension_numbers<[1], [0], [0], [1], [0, 0, 1, 1], [], []>} : vector<1x32xf32>, vector<32x32xf32>, vector<1x32xf32> -> vector<1x32xf32>
    %247 = arith.addf %245, %246 : vector<1x32xf32>
    %248 = vector.extract_strided_slice %42 {offsets = [3, 0], sizes = [1, 32], strides = [1, 1]} : vector<8x32xf32> to vector<1x32xf32>
    %cst_90 = arith.constant dense<0.000000e+00> : vector<1x32xf32>
    %249 = tpu.matmul %204, %9, %cst_90 {dimension_numbers = #tpu.dot_dimension_numbers<[1], [0], [0], [1], [0, 0, 1, 1], [], []>} : vector<1x32xf32>, vector<32x32xf32>, vector<1x32xf32> -> vector<1x32xf32>
    %250 = arith.addf %248, %249 : vector<1x32xf32>
    %251 = vector.extract_strided_slice %45 {offsets = [3, 0], sizes = [1, 32], strides = [1, 1]} : vector<8x32xf32> to vector<1x32xf32>
    %cst_91 = arith.constant dense<0.000000e+00> : vector<1x32xf32>
    %252 = tpu.matmul %204, %10, %cst_91 {dimension_numbers = #tpu.dot_dimension_numbers<[1], [0], [0], [1], [0, 0, 1, 1], [], []>} : vector<1x32xf32>, vector<32x32xf32>, vector<1x32xf32> -> vector<1x32xf32>
    %253 = arith.addf %251, %252 : vector<1x32xf32>
    %254 = arith.negf %244 : vector<1x32xf32>
    %255 = math.exp %254 : vector<1x32xf32>
    %cst_92 = arith.constant 1.000000e+00 : f32
    %256 = vector.broadcast %cst_92 : f32 to vector<1x32xf32>
    %257 = arith.addf %256, %255 : vector<1x32xf32>
    %258 = arith.divf %256, %257 : vector<1x32xf32>
    %259 = arith.negf %247 : vector<1x32xf32>
    %260 = math.exp %259 : vector<1x32xf32>
    %cst_93 = arith.constant 1.000000e+00 : f32
    %261 = vector.broadcast %cst_93 : f32 to vector<1x32xf32>
    %262 = arith.addf %261, %260 : vector<1x32xf32>
    %263 = arith.divf %261, %262 : vector<1x32xf32>
    %264 = math.tanh %250 : vector<1x32xf32>
    %265 = arith.negf %253 : vector<1x32xf32>
    %266 = math.exp %265 : vector<1x32xf32>
    %cst_94 = arith.constant 1.000000e+00 : f32
    %267 = vector.broadcast %cst_94 : f32 to vector<1x32xf32>
    %268 = arith.addf %267, %266 : vector<1x32xf32>
    %269 = arith.divf %267, %268 : vector<1x32xf32>
    %270 = arith.mulf %263, %202 : vector<1x32xf32>
    %271 = arith.mulf %258, %264 : vector<1x32xf32>
    %272 = arith.addf %270, %271 : vector<1x32xf32>
    %273 = math.tanh %272 : vector<1x32xf32>
    %274 = arith.mulf %269, %273 : vector<1x32xf32>
    %cst_95 = arith.constant dense<0.000000e+00> : vector<1x32xf32>
    %275 = tpu.matmul %274, %11, %cst_95 {dimension_numbers = #tpu.dot_dimension_numbers<[1], [0], [0], [1], [0, 0, 1, 1], [], []>} : vector<1x32xf32>, vector<32x32xf32>, vector<1x32xf32> -> vector<1x32xf32>
    %276 = arith.addf %23, %275 : vector<1x32xf32>
    %cst_96 = arith.constant dense<0.000000e+00> : vector<1x32xf32>
    %277 = tpu.matmul %241, %15, %cst_96 {dimension_numbers = #tpu.dot_dimension_numbers<[1], [0], [0], [1], [0, 0, 1, 1], [], []>} : vector<1x32xf32>, vector<32x32xf32>, vector<1x32xf32> -> vector<1x32xf32>
    %278 = arith.addf %276, %277 : vector<1x32xf32>
    %cst_97 = arith.constant dense<0.000000e+00> : vector<1x32xf32>
    %279 = tpu.matmul %274, %12, %cst_97 {dimension_numbers = #tpu.dot_dimension_numbers<[1], [0], [0], [1], [0, 0, 1, 1], [], []>} : vector<1x32xf32>, vector<32x32xf32>, vector<1x32xf32> -> vector<1x32xf32>
    %280 = arith.addf %24, %279 : vector<1x32xf32>
    %cst_98 = arith.constant dense<0.000000e+00> : vector<1x32xf32>
    %281 = tpu.matmul %241, %16, %cst_98 {dimension_numbers = #tpu.dot_dimension_numbers<[1], [0], [0], [1], [0, 0, 1, 1], [], []>} : vector<1x32xf32>, vector<32x32xf32>, vector<1x32xf32> -> vector<1x32xf32>
    %282 = arith.addf %280, %281 : vector<1x32xf32>
    %cst_99 = arith.constant dense<0.000000e+00> : vector<1x32xf32>
    %283 = tpu.matmul %274, %13, %cst_99 {dimension_numbers = #tpu.dot_dimension_numbers<[1], [0], [0], [1], [0, 0, 1, 1], [], []>} : vector<1x32xf32>, vector<32x32xf32>, vector<1x32xf32> -> vector<1x32xf32>
    %284 = arith.addf %25, %283 : vector<1x32xf32>
    %cst_100 = arith.constant dense<0.000000e+00> : vector<1x32xf32>
    %285 = tpu.matmul %241, %17, %cst_100 {dimension_numbers = #tpu.dot_dimension_numbers<[1], [0], [0], [1], [0, 0, 1, 1], [], []>} : vector<1x32xf32>, vector<32x32xf32>, vector<1x32xf32> -> vector<1x32xf32>
    %286 = arith.addf %284, %285 : vector<1x32xf32>
    %cst_101 = arith.constant dense<0.000000e+00> : vector<1x32xf32>
    %287 = tpu.matmul %274, %14, %cst_101 {dimension_numbers = #tpu.dot_dimension_numbers<[1], [0], [0], [1], [0, 0, 1, 1], [], []>} : vector<1x32xf32>, vector<32x32xf32>, vector<1x32xf32> -> vector<1x32xf32>
    %288 = arith.addf %26, %287 : vector<1x32xf32>
    %cst_102 = arith.constant dense<0.000000e+00> : vector<1x32xf32>
    %289 = tpu.matmul %241, %18, %cst_102 {dimension_numbers = #tpu.dot_dimension_numbers<[1], [0], [0], [1], [0, 0, 1, 1], [], []>} : vector<1x32xf32>, vector<32x32xf32>, vector<1x32xf32> -> vector<1x32xf32>
    %290 = arith.addf %288, %289 : vector<1x32xf32>
    %291 = arith.negf %278 : vector<1x32xf32>
    %292 = math.exp %291 : vector<1x32xf32>
    %cst_103 = arith.constant 1.000000e+00 : f32
    %293 = vector.broadcast %cst_103 : f32 to vector<1x32xf32>
    %294 = arith.addf %293, %292 : vector<1x32xf32>
    %295 = arith.divf %293, %294 : vector<1x32xf32>
    %296 = arith.negf %282 : vector<1x32xf32>
    %297 = math.exp %296 : vector<1x32xf32>
    %cst_104 = arith.constant 1.000000e+00 : f32
    %298 = vector.broadcast %cst_104 : f32 to vector<1x32xf32>
    %299 = arith.addf %298, %297 : vector<1x32xf32>
    %300 = arith.divf %298, %299 : vector<1x32xf32>
    %301 = math.tanh %286 : vector<1x32xf32>
    %302 = arith.negf %290 : vector<1x32xf32>
    %303 = math.exp %302 : vector<1x32xf32>
    %cst_105 = arith.constant 1.000000e+00 : f32
    %304 = vector.broadcast %cst_105 : f32 to vector<1x32xf32>
    %305 = arith.addf %304, %303 : vector<1x32xf32>
    %306 = arith.divf %304, %305 : vector<1x32xf32>
    %307 = arith.mulf %300, %239 : vector<1x32xf32>
    %308 = arith.mulf %295, %301 : vector<1x32xf32>
    %309 = arith.addf %307, %308 : vector<1x32xf32>
    %310 = math.tanh %309 : vector<1x32xf32>
    %311 = arith.mulf %306, %310 : vector<1x32xf32>
    %312 = vector.extract_strided_slice %36 {offsets = [4, 0], sizes = [1, 32], strides = [1, 1]} : vector<8x32xf32> to vector<1x32xf32>
    %cst_106 = arith.constant dense<0.000000e+00> : vector<1x32xf32>
    %313 = tpu.matmul %274, %7, %cst_106 {dimension_numbers = #tpu.dot_dimension_numbers<[1], [0], [0], [1], [0, 0, 1, 1], [], []>} : vector<1x32xf32>, vector<32x32xf32>, vector<1x32xf32> -> vector<1x32xf32>
    %314 = arith.addf %312, %313 : vector<1x32xf32>
    %315 = vector.extract_strided_slice %39 {offsets = [4, 0], sizes = [1, 32], strides = [1, 1]} : vector<8x32xf32> to vector<1x32xf32>
    %cst_107 = arith.constant dense<0.000000e+00> : vector<1x32xf32>
    %316 = tpu.matmul %274, %8, %cst_107 {dimension_numbers = #tpu.dot_dimension_numbers<[1], [0], [0], [1], [0, 0, 1, 1], [], []>} : vector<1x32xf32>, vector<32x32xf32>, vector<1x32xf32> -> vector<1x32xf32>
    %317 = arith.addf %315, %316 : vector<1x32xf32>
    %318 = vector.extract_strided_slice %42 {offsets = [4, 0], sizes = [1, 32], strides = [1, 1]} : vector<8x32xf32> to vector<1x32xf32>
    %cst_108 = arith.constant dense<0.000000e+00> : vector<1x32xf32>
    %319 = tpu.matmul %274, %9, %cst_108 {dimension_numbers = #tpu.dot_dimension_numbers<[1], [0], [0], [1], [0, 0, 1, 1], [], []>} : vector<1x32xf32>, vector<32x32xf32>, vector<1x32xf32> -> vector<1x32xf32>
    %320 = arith.addf %318, %319 : vector<1x32xf32>
    %321 = vector.extract_strided_slice %45 {offsets = [4, 0], sizes = [1, 32], strides = [1, 1]} : vector<8x32xf32> to vector<1x32xf32>
    %cst_109 = arith.constant dense<0.000000e+00> : vector<1x32xf32>
    %322 = tpu.matmul %274, %10, %cst_109 {dimension_numbers = #tpu.dot_dimension_numbers<[1], [0], [0], [1], [0, 0, 1, 1], [], []>} : vector<1x32xf32>, vector<32x32xf32>, vector<1x32xf32> -> vector<1x32xf32>
    %323 = arith.addf %321, %322 : vector<1x32xf32>
    %324 = arith.negf %314 : vector<1x32xf32>
    %325 = math.exp %324 : vector<1x32xf32>
    %cst_110 = arith.constant 1.000000e+00 : f32
    %326 = vector.broadcast %cst_110 : f32 to vector<1x32xf32>
    %327 = arith.addf %326, %325 : vector<1x32xf32>
    %328 = arith.divf %326, %327 : vector<1x32xf32>
    %329 = arith.negf %317 : vector<1x32xf32>
    %330 = math.exp %329 : vector<1x32xf32>
    %cst_111 = arith.constant 1.000000e+00 : f32
    %331 = vector.broadcast %cst_111 : f32 to vector<1x32xf32>
    %332 = arith.addf %331, %330 : vector<1x32xf32>
    %333 = arith.divf %331, %332 : vector<1x32xf32>
    %334 = math.tanh %320 : vector<1x32xf32>
    %335 = arith.negf %323 : vector<1x32xf32>
    %336 = math.exp %335 : vector<1x32xf32>
    %cst_112 = arith.constant 1.000000e+00 : f32
    %337 = vector.broadcast %cst_112 : f32 to vector<1x32xf32>
    %338 = arith.addf %337, %336 : vector<1x32xf32>
    %339 = arith.divf %337, %338 : vector<1x32xf32>
    %340 = arith.mulf %333, %272 : vector<1x32xf32>
    %341 = arith.mulf %328, %334 : vector<1x32xf32>
    %342 = arith.addf %340, %341 : vector<1x32xf32>
    %343 = math.tanh %342 : vector<1x32xf32>
    %344 = arith.mulf %339, %343 : vector<1x32xf32>
    %cst_113 = arith.constant dense<0.000000e+00> : vector<1x32xf32>
    %345 = tpu.matmul %344, %11, %cst_113 {dimension_numbers = #tpu.dot_dimension_numbers<[1], [0], [0], [1], [0, 0, 1, 1], [], []>} : vector<1x32xf32>, vector<32x32xf32>, vector<1x32xf32> -> vector<1x32xf32>
    %346 = arith.addf %23, %345 : vector<1x32xf32>
    %cst_114 = arith.constant dense<0.000000e+00> : vector<1x32xf32>
    %347 = tpu.matmul %311, %15, %cst_114 {dimension_numbers = #tpu.dot_dimension_numbers<[1], [0], [0], [1], [0, 0, 1, 1], [], []>} : vector<1x32xf32>, vector<32x32xf32>, vector<1x32xf32> -> vector<1x32xf32>
    %348 = arith.addf %346, %347 : vector<1x32xf32>
    %cst_115 = arith.constant dense<0.000000e+00> : vector<1x32xf32>
    %349 = tpu.matmul %344, %12, %cst_115 {dimension_numbers = #tpu.dot_dimension_numbers<[1], [0], [0], [1], [0, 0, 1, 1], [], []>} : vector<1x32xf32>, vector<32x32xf32>, vector<1x32xf32> -> vector<1x32xf32>
    %350 = arith.addf %24, %349 : vector<1x32xf32>
    %cst_116 = arith.constant dense<0.000000e+00> : vector<1x32xf32>
    %351 = tpu.matmul %311, %16, %cst_116 {dimension_numbers = #tpu.dot_dimension_numbers<[1], [0], [0], [1], [0, 0, 1, 1], [], []>} : vector<1x32xf32>, vector<32x32xf32>, vector<1x32xf32> -> vector<1x32xf32>
    %352 = arith.addf %350, %351 : vector<1x32xf32>
    %cst_117 = arith.constant dense<0.000000e+00> : vector<1x32xf32>
    %353 = tpu.matmul %344, %13, %cst_117 {dimension_numbers = #tpu.dot_dimension_numbers<[1], [0], [0], [1], [0, 0, 1, 1], [], []>} : vector<1x32xf32>, vector<32x32xf32>, vector<1x32xf32> -> vector<1x32xf32>
    %354 = arith.addf %25, %353 : vector<1x32xf32>
    %cst_118 = arith.constant dense<0.000000e+00> : vector<1x32xf32>
    %355 = tpu.matmul %311, %17, %cst_118 {dimension_numbers = #tpu.dot_dimension_numbers<[1], [0], [0], [1], [0, 0, 1, 1], [], []>} : vector<1x32xf32>, vector<32x32xf32>, vector<1x32xf32> -> vector<1x32xf32>
    %356 = arith.addf %354, %355 : vector<1x32xf32>
    %cst_119 = arith.constant dense<0.000000e+00> : vector<1x32xf32>
    %357 = tpu.matmul %344, %14, %cst_119 {dimension_numbers = #tpu.dot_dimension_numbers<[1], [0], [0], [1], [0, 0, 1, 1], [], []>} : vector<1x32xf32>, vector<32x32xf32>, vector<1x32xf32> -> vector<1x32xf32>
    %358 = arith.addf %26, %357 : vector<1x32xf32>
    %cst_120 = arith.constant dense<0.000000e+00> : vector<1x32xf32>
    %359 = tpu.matmul %311, %18, %cst_120 {dimension_numbers = #tpu.dot_dimension_numbers<[1], [0], [0], [1], [0, 0, 1, 1], [], []>} : vector<1x32xf32>, vector<32x32xf32>, vector<1x32xf32> -> vector<1x32xf32>
    %360 = arith.addf %358, %359 : vector<1x32xf32>
    %361 = arith.negf %348 : vector<1x32xf32>
    %362 = math.exp %361 : vector<1x32xf32>
    %cst_121 = arith.constant 1.000000e+00 : f32
    %363 = vector.broadcast %cst_121 : f32 to vector<1x32xf32>
    %364 = arith.addf %363, %362 : vector<1x32xf32>
    %365 = arith.divf %363, %364 : vector<1x32xf32>
    %366 = arith.negf %352 : vector<1x32xf32>
    %367 = math.exp %366 : vector<1x32xf32>
    %cst_122 = arith.constant 1.000000e+00 : f32
    %368 = vector.broadcast %cst_122 : f32 to vector<1x32xf32>
    %369 = arith.addf %368, %367 : vector<1x32xf32>
    %370 = arith.divf %368, %369 : vector<1x32xf32>
    %371 = math.tanh %356 : vector<1x32xf32>
    %372 = arith.negf %360 : vector<1x32xf32>
    %373 = math.exp %372 : vector<1x32xf32>
    %cst_123 = arith.constant 1.000000e+00 : f32
    %374 = vector.broadcast %cst_123 : f32 to vector<1x32xf32>
    %375 = arith.addf %374, %373 : vector<1x32xf32>
    %376 = arith.divf %374, %375 : vector<1x32xf32>
    %377 = arith.mulf %370, %309 : vector<1x32xf32>
    %378 = arith.mulf %365, %371 : vector<1x32xf32>
    %379 = arith.addf %377, %378 : vector<1x32xf32>
    %380 = math.tanh %379 : vector<1x32xf32>
    %381 = arith.mulf %376, %380 : vector<1x32xf32>
    %382 = vector.extract_strided_slice %36 {offsets = [5, 0], sizes = [1, 32], strides = [1, 1]} : vector<8x32xf32> to vector<1x32xf32>
    %cst_124 = arith.constant dense<0.000000e+00> : vector<1x32xf32>
    %383 = tpu.matmul %344, %7, %cst_124 {dimension_numbers = #tpu.dot_dimension_numbers<[1], [0], [0], [1], [0, 0, 1, 1], [], []>} : vector<1x32xf32>, vector<32x32xf32>, vector<1x32xf32> -> vector<1x32xf32>
    %384 = arith.addf %382, %383 : vector<1x32xf32>
    %385 = vector.extract_strided_slice %39 {offsets = [5, 0], sizes = [1, 32], strides = [1, 1]} : vector<8x32xf32> to vector<1x32xf32>
    %cst_125 = arith.constant dense<0.000000e+00> : vector<1x32xf32>
    %386 = tpu.matmul %344, %8, %cst_125 {dimension_numbers = #tpu.dot_dimension_numbers<[1], [0], [0], [1], [0, 0, 1, 1], [], []>} : vector<1x32xf32>, vector<32x32xf32>, vector<1x32xf32> -> vector<1x32xf32>
    %387 = arith.addf %385, %386 : vector<1x32xf32>
    %388 = vector.extract_strided_slice %42 {offsets = [5, 0], sizes = [1, 32], strides = [1, 1]} : vector<8x32xf32> to vector<1x32xf32>
    %cst_126 = arith.constant dense<0.000000e+00> : vector<1x32xf32>
    %389 = tpu.matmul %344, %9, %cst_126 {dimension_numbers = #tpu.dot_dimension_numbers<[1], [0], [0], [1], [0, 0, 1, 1], [], []>} : vector<1x32xf32>, vector<32x32xf32>, vector<1x32xf32> -> vector<1x32xf32>
    %390 = arith.addf %388, %389 : vector<1x32xf32>
    %391 = vector.extract_strided_slice %45 {offsets = [5, 0], sizes = [1, 32], strides = [1, 1]} : vector<8x32xf32> to vector<1x32xf32>
    %cst_127 = arith.constant dense<0.000000e+00> : vector<1x32xf32>
    %392 = tpu.matmul %344, %10, %cst_127 {dimension_numbers = #tpu.dot_dimension_numbers<[1], [0], [0], [1], [0, 0, 1, 1], [], []>} : vector<1x32xf32>, vector<32x32xf32>, vector<1x32xf32> -> vector<1x32xf32>
    %393 = arith.addf %391, %392 : vector<1x32xf32>
    %394 = arith.negf %384 : vector<1x32xf32>
    %395 = math.exp %394 : vector<1x32xf32>
    %cst_128 = arith.constant 1.000000e+00 : f32
    %396 = vector.broadcast %cst_128 : f32 to vector<1x32xf32>
    %397 = arith.addf %396, %395 : vector<1x32xf32>
    %398 = arith.divf %396, %397 : vector<1x32xf32>
    %399 = arith.negf %387 : vector<1x32xf32>
    %400 = math.exp %399 : vector<1x32xf32>
    %cst_129 = arith.constant 1.000000e+00 : f32
    %401 = vector.broadcast %cst_129 : f32 to vector<1x32xf32>
    %402 = arith.addf %401, %400 : vector<1x32xf32>
    %403 = arith.divf %401, %402 : vector<1x32xf32>
    %404 = math.tanh %390 : vector<1x32xf32>
    %405 = arith.negf %393 : vector<1x32xf32>
    %406 = math.exp %405 : vector<1x32xf32>
    %cst_130 = arith.constant 1.000000e+00 : f32
    %407 = vector.broadcast %cst_130 : f32 to vector<1x32xf32>
    %408 = arith.addf %407, %406 : vector<1x32xf32>
    %409 = arith.divf %407, %408 : vector<1x32xf32>
    %410 = arith.mulf %403, %342 : vector<1x32xf32>
    %411 = arith.mulf %398, %404 : vector<1x32xf32>
    %412 = arith.addf %410, %411 : vector<1x32xf32>
    %413 = math.tanh %412 : vector<1x32xf32>
    %414 = arith.mulf %409, %413 : vector<1x32xf32>
    %cst_131 = arith.constant dense<0.000000e+00> : vector<1x32xf32>
    %415 = tpu.matmul %414, %11, %cst_131 {dimension_numbers = #tpu.dot_dimension_numbers<[1], [0], [0], [1], [0, 0, 1, 1], [], []>} : vector<1x32xf32>, vector<32x32xf32>, vector<1x32xf32> -> vector<1x32xf32>
    %416 = arith.addf %23, %415 : vector<1x32xf32>
    %cst_132 = arith.constant dense<0.000000e+00> : vector<1x32xf32>
    %417 = tpu.matmul %381, %15, %cst_132 {dimension_numbers = #tpu.dot_dimension_numbers<[1], [0], [0], [1], [0, 0, 1, 1], [], []>} : vector<1x32xf32>, vector<32x32xf32>, vector<1x32xf32> -> vector<1x32xf32>
    %418 = arith.addf %416, %417 : vector<1x32xf32>
    %cst_133 = arith.constant dense<0.000000e+00> : vector<1x32xf32>
    %419 = tpu.matmul %414, %12, %cst_133 {dimension_numbers = #tpu.dot_dimension_numbers<[1], [0], [0], [1], [0, 0, 1, 1], [], []>} : vector<1x32xf32>, vector<32x32xf32>, vector<1x32xf32> -> vector<1x32xf32>
    %420 = arith.addf %24, %419 : vector<1x32xf32>
    %cst_134 = arith.constant dense<0.000000e+00> : vector<1x32xf32>
    %421 = tpu.matmul %381, %16, %cst_134 {dimension_numbers = #tpu.dot_dimension_numbers<[1], [0], [0], [1], [0, 0, 1, 1], [], []>} : vector<1x32xf32>, vector<32x32xf32>, vector<1x32xf32> -> vector<1x32xf32>
    %422 = arith.addf %420, %421 : vector<1x32xf32>
    %cst_135 = arith.constant dense<0.000000e+00> : vector<1x32xf32>
    %423 = tpu.matmul %414, %13, %cst_135 {dimension_numbers = #tpu.dot_dimension_numbers<[1], [0], [0], [1], [0, 0, 1, 1], [], []>} : vector<1x32xf32>, vector<32x32xf32>, vector<1x32xf32> -> vector<1x32xf32>
    %424 = arith.addf %25, %423 : vector<1x32xf32>
    %cst_136 = arith.constant dense<0.000000e+00> : vector<1x32xf32>
    %425 = tpu.matmul %381, %17, %cst_136 {dimension_numbers = #tpu.dot_dimension_numbers<[1], [0], [0], [1], [0, 0, 1, 1], [], []>} : vector<1x32xf32>, vector<32x32xf32>, vector<1x32xf32> -> vector<1x32xf32>
    %426 = arith.addf %424, %425 : vector<1x32xf32>
    %cst_137 = arith.constant dense<0.000000e+00> : vector<1x32xf32>
    %427 = tpu.matmul %414, %14, %cst_137 {dimension_numbers = #tpu.dot_dimension_numbers<[1], [0], [0], [1], [0, 0, 1, 1], [], []>} : vector<1x32xf32>, vector<32x32xf32>, vector<1x32xf32> -> vector<1x32xf32>
    %428 = arith.addf %26, %427 : vector<1x32xf32>
    %cst_138 = arith.constant dense<0.000000e+00> : vector<1x32xf32>
    %429 = tpu.matmul %381, %18, %cst_138 {dimension_numbers = #tpu.dot_dimension_numbers<[1], [0], [0], [1], [0, 0, 1, 1], [], []>} : vector<1x32xf32>, vector<32x32xf32>, vector<1x32xf32> -> vector<1x32xf32>
    %430 = arith.addf %428, %429 : vector<1x32xf32>
    %431 = arith.negf %418 : vector<1x32xf32>
    %432 = math.exp %431 : vector<1x32xf32>
    %cst_139 = arith.constant 1.000000e+00 : f32
    %433 = vector.broadcast %cst_139 : f32 to vector<1x32xf32>
    %434 = arith.addf %433, %432 : vector<1x32xf32>
    %435 = arith.divf %433, %434 : vector<1x32xf32>
    %436 = arith.negf %422 : vector<1x32xf32>
    %437 = math.exp %436 : vector<1x32xf32>
    %cst_140 = arith.constant 1.000000e+00 : f32
    %438 = vector.broadcast %cst_140 : f32 to vector<1x32xf32>
    %439 = arith.addf %438, %437 : vector<1x32xf32>
    %440 = arith.divf %438, %439 : vector<1x32xf32>
    %441 = math.tanh %426 : vector<1x32xf32>
    %442 = arith.negf %430 : vector<1x32xf32>
    %443 = math.exp %442 : vector<1x32xf32>
    %cst_141 = arith.constant 1.000000e+00 : f32
    %444 = vector.broadcast %cst_141 : f32 to vector<1x32xf32>
    %445 = arith.addf %444, %443 : vector<1x32xf32>
    %446 = arith.divf %444, %445 : vector<1x32xf32>
    %447 = arith.mulf %440, %379 : vector<1x32xf32>
    %448 = arith.mulf %435, %441 : vector<1x32xf32>
    %449 = arith.addf %447, %448 : vector<1x32xf32>
    %450 = math.tanh %449 : vector<1x32xf32>
    %451 = arith.mulf %446, %450 : vector<1x32xf32>
    %452 = vector.extract_strided_slice %36 {offsets = [6, 0], sizes = [1, 32], strides = [1, 1]} : vector<8x32xf32> to vector<1x32xf32>
    %cst_142 = arith.constant dense<0.000000e+00> : vector<1x32xf32>
    %453 = tpu.matmul %414, %7, %cst_142 {dimension_numbers = #tpu.dot_dimension_numbers<[1], [0], [0], [1], [0, 0, 1, 1], [], []>} : vector<1x32xf32>, vector<32x32xf32>, vector<1x32xf32> -> vector<1x32xf32>
    %454 = arith.addf %452, %453 : vector<1x32xf32>
    %455 = vector.extract_strided_slice %39 {offsets = [6, 0], sizes = [1, 32], strides = [1, 1]} : vector<8x32xf32> to vector<1x32xf32>
    %cst_143 = arith.constant dense<0.000000e+00> : vector<1x32xf32>
    %456 = tpu.matmul %414, %8, %cst_143 {dimension_numbers = #tpu.dot_dimension_numbers<[1], [0], [0], [1], [0, 0, 1, 1], [], []>} : vector<1x32xf32>, vector<32x32xf32>, vector<1x32xf32> -> vector<1x32xf32>
    %457 = arith.addf %455, %456 : vector<1x32xf32>
    %458 = vector.extract_strided_slice %42 {offsets = [6, 0], sizes = [1, 32], strides = [1, 1]} : vector<8x32xf32> to vector<1x32xf32>
    %cst_144 = arith.constant dense<0.000000e+00> : vector<1x32xf32>
    %459 = tpu.matmul %414, %9, %cst_144 {dimension_numbers = #tpu.dot_dimension_numbers<[1], [0], [0], [1], [0, 0, 1, 1], [], []>} : vector<1x32xf32>, vector<32x32xf32>, vector<1x32xf32> -> vector<1x32xf32>
    %460 = arith.addf %458, %459 : vector<1x32xf32>
    %461 = vector.extract_strided_slice %45 {offsets = [6, 0], sizes = [1, 32], strides = [1, 1]} : vector<8x32xf32> to vector<1x32xf32>
    %cst_145 = arith.constant dense<0.000000e+00> : vector<1x32xf32>
    %462 = tpu.matmul %414, %10, %cst_145 {dimension_numbers = #tpu.dot_dimension_numbers<[1], [0], [0], [1], [0, 0, 1, 1], [], []>} : vector<1x32xf32>, vector<32x32xf32>, vector<1x32xf32> -> vector<1x32xf32>
    %463 = arith.addf %461, %462 : vector<1x32xf32>
    %464 = arith.negf %454 : vector<1x32xf32>
    %465 = math.exp %464 : vector<1x32xf32>
    %cst_146 = arith.constant 1.000000e+00 : f32
    %466 = vector.broadcast %cst_146 : f32 to vector<1x32xf32>
    %467 = arith.addf %466, %465 : vector<1x32xf32>
    %468 = arith.divf %466, %467 : vector<1x32xf32>
    %469 = arith.negf %457 : vector<1x32xf32>
    %470 = math.exp %469 : vector<1x32xf32>
    %cst_147 = arith.constant 1.000000e+00 : f32
    %471 = vector.broadcast %cst_147 : f32 to vector<1x32xf32>
    %472 = arith.addf %471, %470 : vector<1x32xf32>
    %473 = arith.divf %471, %472 : vector<1x32xf32>
    %474 = math.tanh %460 : vector<1x32xf32>
    %475 = arith.negf %463 : vector<1x32xf32>
    %476 = math.exp %475 : vector<1x32xf32>
    %cst_148 = arith.constant 1.000000e+00 : f32
    %477 = vector.broadcast %cst_148 : f32 to vector<1x32xf32>
    %478 = arith.addf %477, %476 : vector<1x32xf32>
    %479 = arith.divf %477, %478 : vector<1x32xf32>
    %480 = arith.mulf %473, %412 : vector<1x32xf32>
    %481 = arith.mulf %468, %474 : vector<1x32xf32>
    %482 = arith.addf %480, %481 : vector<1x32xf32>
    %483 = math.tanh %482 : vector<1x32xf32>
    %484 = arith.mulf %479, %483 : vector<1x32xf32>
    %cst_149 = arith.constant dense<0.000000e+00> : vector<1x32xf32>
    %485 = tpu.matmul %484, %11, %cst_149 {dimension_numbers = #tpu.dot_dimension_numbers<[1], [0], [0], [1], [0, 0, 1, 1], [], []>} : vector<1x32xf32>, vector<32x32xf32>, vector<1x32xf32> -> vector<1x32xf32>
    %486 = arith.addf %23, %485 : vector<1x32xf32>
    %cst_150 = arith.constant dense<0.000000e+00> : vector<1x32xf32>
    %487 = tpu.matmul %451, %15, %cst_150 {dimension_numbers = #tpu.dot_dimension_numbers<[1], [0], [0], [1], [0, 0, 1, 1], [], []>} : vector<1x32xf32>, vector<32x32xf32>, vector<1x32xf32> -> vector<1x32xf32>
    %488 = arith.addf %486, %487 : vector<1x32xf32>
    %cst_151 = arith.constant dense<0.000000e+00> : vector<1x32xf32>
    %489 = tpu.matmul %484, %12, %cst_151 {dimension_numbers = #tpu.dot_dimension_numbers<[1], [0], [0], [1], [0, 0, 1, 1], [], []>} : vector<1x32xf32>, vector<32x32xf32>, vector<1x32xf32> -> vector<1x32xf32>
    %490 = arith.addf %24, %489 : vector<1x32xf32>
    %cst_152 = arith.constant dense<0.000000e+00> : vector<1x32xf32>
    %491 = tpu.matmul %451, %16, %cst_152 {dimension_numbers = #tpu.dot_dimension_numbers<[1], [0], [0], [1], [0, 0, 1, 1], [], []>} : vector<1x32xf32>, vector<32x32xf32>, vector<1x32xf32> -> vector<1x32xf32>
    %492 = arith.addf %490, %491 : vector<1x32xf32>
    %cst_153 = arith.constant dense<0.000000e+00> : vector<1x32xf32>
    %493 = tpu.matmul %484, %13, %cst_153 {dimension_numbers = #tpu.dot_dimension_numbers<[1], [0], [0], [1], [0, 0, 1, 1], [], []>} : vector<1x32xf32>, vector<32x32xf32>, vector<1x32xf32> -> vector<1x32xf32>
    %494 = arith.addf %25, %493 : vector<1x32xf32>
    %cst_154 = arith.constant dense<0.000000e+00> : vector<1x32xf32>
    %495 = tpu.matmul %451, %17, %cst_154 {dimension_numbers = #tpu.dot_dimension_numbers<[1], [0], [0], [1], [0, 0, 1, 1], [], []>} : vector<1x32xf32>, vector<32x32xf32>, vector<1x32xf32> -> vector<1x32xf32>
    %496 = arith.addf %494, %495 : vector<1x32xf32>
    %cst_155 = arith.constant dense<0.000000e+00> : vector<1x32xf32>
    %497 = tpu.matmul %484, %14, %cst_155 {dimension_numbers = #tpu.dot_dimension_numbers<[1], [0], [0], [1], [0, 0, 1, 1], [], []>} : vector<1x32xf32>, vector<32x32xf32>, vector<1x32xf32> -> vector<1x32xf32>
    %498 = arith.addf %26, %497 : vector<1x32xf32>
    %cst_156 = arith.constant dense<0.000000e+00> : vector<1x32xf32>
    %499 = tpu.matmul %451, %18, %cst_156 {dimension_numbers = #tpu.dot_dimension_numbers<[1], [0], [0], [1], [0, 0, 1, 1], [], []>} : vector<1x32xf32>, vector<32x32xf32>, vector<1x32xf32> -> vector<1x32xf32>
    %500 = arith.addf %498, %499 : vector<1x32xf32>
    %501 = arith.negf %488 : vector<1x32xf32>
    %502 = math.exp %501 : vector<1x32xf32>
    %cst_157 = arith.constant 1.000000e+00 : f32
    %503 = vector.broadcast %cst_157 : f32 to vector<1x32xf32>
    %504 = arith.addf %503, %502 : vector<1x32xf32>
    %505 = arith.divf %503, %504 : vector<1x32xf32>
    %506 = arith.negf %492 : vector<1x32xf32>
    %507 = math.exp %506 : vector<1x32xf32>
    %cst_158 = arith.constant 1.000000e+00 : f32
    %508 = vector.broadcast %cst_158 : f32 to vector<1x32xf32>
    %509 = arith.addf %508, %507 : vector<1x32xf32>
    %510 = arith.divf %508, %509 : vector<1x32xf32>
    %511 = math.tanh %496 : vector<1x32xf32>
    %512 = arith.negf %500 : vector<1x32xf32>
    %513 = math.exp %512 : vector<1x32xf32>
    %cst_159 = arith.constant 1.000000e+00 : f32
    %514 = vector.broadcast %cst_159 : f32 to vector<1x32xf32>
    %515 = arith.addf %514, %513 : vector<1x32xf32>
    %516 = arith.divf %514, %515 : vector<1x32xf32>
    %517 = arith.mulf %510, %449 : vector<1x32xf32>
    %518 = arith.mulf %505, %511 : vector<1x32xf32>
    %519 = arith.addf %517, %518 : vector<1x32xf32>
    %520 = math.tanh %519 : vector<1x32xf32>
    %521 = arith.mulf %516, %520 : vector<1x32xf32>
    %522 = vector.extract_strided_slice %36 {offsets = [7, 0], sizes = [1, 32], strides = [1, 1]} : vector<8x32xf32> to vector<1x32xf32>
    %cst_160 = arith.constant dense<0.000000e+00> : vector<1x32xf32>
    %523 = tpu.matmul %484, %7, %cst_160 {dimension_numbers = #tpu.dot_dimension_numbers<[1], [0], [0], [1], [0, 0, 1, 1], [], []>} : vector<1x32xf32>, vector<32x32xf32>, vector<1x32xf32> -> vector<1x32xf32>
    %524 = arith.addf %522, %523 : vector<1x32xf32>
    %525 = vector.extract_strided_slice %39 {offsets = [7, 0], sizes = [1, 32], strides = [1, 1]} : vector<8x32xf32> to vector<1x32xf32>
    %cst_161 = arith.constant dense<0.000000e+00> : vector<1x32xf32>
    %526 = tpu.matmul %484, %8, %cst_161 {dimension_numbers = #tpu.dot_dimension_numbers<[1], [0], [0], [1], [0, 0, 1, 1], [], []>} : vector<1x32xf32>, vector<32x32xf32>, vector<1x32xf32> -> vector<1x32xf32>
    %527 = arith.addf %525, %526 : vector<1x32xf32>
    %528 = vector.extract_strided_slice %42 {offsets = [7, 0], sizes = [1, 32], strides = [1, 1]} : vector<8x32xf32> to vector<1x32xf32>
    %cst_162 = arith.constant dense<0.000000e+00> : vector<1x32xf32>
    %529 = tpu.matmul %484, %9, %cst_162 {dimension_numbers = #tpu.dot_dimension_numbers<[1], [0], [0], [1], [0, 0, 1, 1], [], []>} : vector<1x32xf32>, vector<32x32xf32>, vector<1x32xf32> -> vector<1x32xf32>
    %530 = arith.addf %528, %529 : vector<1x32xf32>
    %531 = vector.extract_strided_slice %45 {offsets = [7, 0], sizes = [1, 32], strides = [1, 1]} : vector<8x32xf32> to vector<1x32xf32>
    %cst_163 = arith.constant dense<0.000000e+00> : vector<1x32xf32>
    %532 = tpu.matmul %484, %10, %cst_163 {dimension_numbers = #tpu.dot_dimension_numbers<[1], [0], [0], [1], [0, 0, 1, 1], [], []>} : vector<1x32xf32>, vector<32x32xf32>, vector<1x32xf32> -> vector<1x32xf32>
    %533 = arith.addf %531, %532 : vector<1x32xf32>
    %534 = arith.negf %524 : vector<1x32xf32>
    %535 = math.exp %534 : vector<1x32xf32>
    %cst_164 = arith.constant 1.000000e+00 : f32
    %536 = vector.broadcast %cst_164 : f32 to vector<1x32xf32>
    %537 = arith.addf %536, %535 : vector<1x32xf32>
    %538 = arith.divf %536, %537 : vector<1x32xf32>
    %539 = arith.negf %527 : vector<1x32xf32>
    %540 = math.exp %539 : vector<1x32xf32>
    %cst_165 = arith.constant 1.000000e+00 : f32
    %541 = vector.broadcast %cst_165 : f32 to vector<1x32xf32>
    %542 = arith.addf %541, %540 : vector<1x32xf32>
    %543 = arith.divf %541, %542 : vector<1x32xf32>
    %544 = math.tanh %530 : vector<1x32xf32>
    %545 = arith.negf %533 : vector<1x32xf32>
    %546 = math.exp %545 : vector<1x32xf32>
    %cst_166 = arith.constant 1.000000e+00 : f32
    %547 = vector.broadcast %cst_166 : f32 to vector<1x32xf32>
    %548 = arith.addf %547, %546 : vector<1x32xf32>
    %549 = arith.divf %547, %548 : vector<1x32xf32>
    %550 = arith.mulf %543, %482 : vector<1x32xf32>
    %551 = arith.mulf %538, %544 : vector<1x32xf32>
    %552 = arith.addf %550, %551 : vector<1x32xf32>
    %553 = math.tanh %552 : vector<1x32xf32>
    %554 = arith.mulf %549, %553 : vector<1x32xf32>
    %cst_167 = arith.constant dense<0.000000e+00> : vector<1x32xf32>
    %555 = tpu.matmul %554, %11, %cst_167 {dimension_numbers = #tpu.dot_dimension_numbers<[1], [0], [0], [1], [0, 0, 1, 1], [], []>} : vector<1x32xf32>, vector<32x32xf32>, vector<1x32xf32> -> vector<1x32xf32>
    %556 = arith.addf %23, %555 : vector<1x32xf32>
    %cst_168 = arith.constant dense<0.000000e+00> : vector<1x32xf32>
    %557 = tpu.matmul %521, %15, %cst_168 {dimension_numbers = #tpu.dot_dimension_numbers<[1], [0], [0], [1], [0, 0, 1, 1], [], []>} : vector<1x32xf32>, vector<32x32xf32>, vector<1x32xf32> -> vector<1x32xf32>
    %558 = arith.addf %556, %557 : vector<1x32xf32>
    %cst_169 = arith.constant dense<0.000000e+00> : vector<1x32xf32>
    %559 = tpu.matmul %554, %12, %cst_169 {dimension_numbers = #tpu.dot_dimension_numbers<[1], [0], [0], [1], [0, 0, 1, 1], [], []>} : vector<1x32xf32>, vector<32x32xf32>, vector<1x32xf32> -> vector<1x32xf32>
    %560 = arith.addf %24, %559 : vector<1x32xf32>
    %cst_170 = arith.constant dense<0.000000e+00> : vector<1x32xf32>
    %561 = tpu.matmul %521, %16, %cst_170 {dimension_numbers = #tpu.dot_dimension_numbers<[1], [0], [0], [1], [0, 0, 1, 1], [], []>} : vector<1x32xf32>, vector<32x32xf32>, vector<1x32xf32> -> vector<1x32xf32>
    %562 = arith.addf %560, %561 : vector<1x32xf32>
    %cst_171 = arith.constant dense<0.000000e+00> : vector<1x32xf32>
    %563 = tpu.matmul %554, %13, %cst_171 {dimension_numbers = #tpu.dot_dimension_numbers<[1], [0], [0], [1], [0, 0, 1, 1], [], []>} : vector<1x32xf32>, vector<32x32xf32>, vector<1x32xf32> -> vector<1x32xf32>
    %564 = arith.addf %25, %563 : vector<1x32xf32>
    %cst_172 = arith.constant dense<0.000000e+00> : vector<1x32xf32>
    %565 = tpu.matmul %521, %17, %cst_172 {dimension_numbers = #tpu.dot_dimension_numbers<[1], [0], [0], [1], [0, 0, 1, 1], [], []>} : vector<1x32xf32>, vector<32x32xf32>, vector<1x32xf32> -> vector<1x32xf32>
    %566 = arith.addf %564, %565 : vector<1x32xf32>
    %cst_173 = arith.constant dense<0.000000e+00> : vector<1x32xf32>
    %567 = tpu.matmul %554, %14, %cst_173 {dimension_numbers = #tpu.dot_dimension_numbers<[1], [0], [0], [1], [0, 0, 1, 1], [], []>} : vector<1x32xf32>, vector<32x32xf32>, vector<1x32xf32> -> vector<1x32xf32>
    %568 = arith.addf %26, %567 : vector<1x32xf32>
    %cst_174 = arith.constant dense<0.000000e+00> : vector<1x32xf32>
    %569 = tpu.matmul %521, %18, %cst_174 {dimension_numbers = #tpu.dot_dimension_numbers<[1], [0], [0], [1], [0, 0, 1, 1], [], []>} : vector<1x32xf32>, vector<32x32xf32>, vector<1x32xf32> -> vector<1x32xf32>
    %570 = arith.addf %568, %569 : vector<1x32xf32>
    %571 = arith.negf %558 : vector<1x32xf32>
    %572 = math.exp %571 : vector<1x32xf32>
    %cst_175 = arith.constant 1.000000e+00 : f32
    %573 = vector.broadcast %cst_175 : f32 to vector<1x32xf32>
    %574 = arith.addf %573, %572 : vector<1x32xf32>
    %575 = arith.divf %573, %574 : vector<1x32xf32>
    %576 = arith.negf %562 : vector<1x32xf32>
    %577 = math.exp %576 : vector<1x32xf32>
    %cst_176 = arith.constant 1.000000e+00 : f32
    %578 = vector.broadcast %cst_176 : f32 to vector<1x32xf32>
    %579 = arith.addf %578, %577 : vector<1x32xf32>
    %580 = arith.divf %578, %579 : vector<1x32xf32>
    %581 = math.tanh %566 : vector<1x32xf32>
    %582 = arith.negf %570 : vector<1x32xf32>
    %583 = math.exp %582 : vector<1x32xf32>
    %cst_177 = arith.constant 1.000000e+00 : f32
    %584 = vector.broadcast %cst_177 : f32 to vector<1x32xf32>
    %585 = arith.addf %584, %583 : vector<1x32xf32>
    %586 = arith.divf %584, %585 : vector<1x32xf32>
    %587 = arith.mulf %580, %519 : vector<1x32xf32>
    %588 = arith.mulf %575, %581 : vector<1x32xf32>
    %589 = arith.addf %587, %588 : vector<1x32xf32>
    %590 = math.tanh %589 : vector<1x32xf32>
    %591 = arith.mulf %586, %590 : vector<1x32xf32>
    %592 = tpu.concatenate %101, %171, %241, %311, %381, %451, %521, %591 in 0 : vector<1x32xf32>, vector<1x32xf32>, vector<1x32xf32>, vector<1x32xf32>, vector<1x32xf32>, vector<1x32xf32>, vector<1x32xf32>, vector<1x32xf32> -> vector<8x32xf32>
    %cst_178 = arith.constant dense<0x7F800000> : vector<8xf32>
    %593 = vector.multi_reduction <minimumf>, %592, %cst_178 [1] : vector<8x32xf32> to vector<8xf32>
    %594 = vector.shape_cast %593 : vector<8xf32> to vector<8x1xf32>
    %cst_179 = arith.constant dense<0xFF800000> : vector<8xf32>
    %595 = vector.multi_reduction <maximumf>, %592, %cst_179 [1] : vector<8x32xf32> to vector<8xf32>
    %596 = vector.shape_cast %595 : vector<8xf32> to vector<8x1xf32>
    %597 = arith.subf %596, %594 : vector<8x1xf32>
    %cst_180 = arith.constant 9.99999974E-6 : f32
    %598 = vector.broadcast %cst_180 : f32 to vector<8x1xf32>
    %599 = arith.cmpf olt, %597, %598 : vector<8x1xf32>
    %cst_181 = arith.constant 9.99999974E-6 : f32
    %600 = vector.broadcast %cst_181 : f32 to vector<8x1xf32>
    %601 = arith.addf %597, %600 : vector<8x1xf32>
    %602 = arith.select %599, %601, %597 : vector<8x1xi1>, vector<8x1xf32>
    %603 = vector.broadcast %594 : vector<8x1xf32> to vector<8x32xf32>
    %604 = arith.subf %592, %603 : vector<8x32xf32>
    %605 = vector.broadcast %602 : vector<8x1xf32> to vector<8x32xf32>
    %606 = arith.divf %604, %605 : vector<8x32xf32>
    %c0_182 = arith.constant 0 : index
    %c0_183 = arith.constant 0 : index
    %607 = vector.load %arg3[%c0_182, %c0_183] : memref<8x32xf32, #tpu.memory_space<vmem>>, vector<8x32xf32>
    tpu.vector_store %arg3[%c0_182, %c0_183], %606 {strides = array<i32>} : memref<8x32xf32, #tpu.memory_space<vmem>>, vector<8x32xf32>,
    return
  }
}

</mosaic_0001>

<llo_original>
// kernel: tpu_custom_call.1
$region0: #{tpu_custom_call.1}
  #allocation0 [shape = 'u32[]', space=smem, size = 0x4, offset = 0x4, fixed_abs, tag = 'smem constant byte address 0x4 - core index']
  #allocation1 [shape = 'u32[144,128]{1,0:T(1,128)}', space=vmem, size = 0x12000, scoped, tag = 'internal scratch']
  %s0 = inlined_call_operand.hbm [shape: f32[8,32], index: 0, kind: input, shape index: {}]
  %s1 = inlined_call_operand.hbm [shape: f32[8,8], index: 1, kind: input, shape index: {}]
  %s2 = inlined_call_operand.hbm [shape: f32[576,128], index: 2, kind: input, shape index: {}]
  %s3 = inlined_call_operand.hbm [shape: f32[8,32], index: 3, kind: output, shape index: {}]
  %s4 = sld [smem:[#allocation0]]
  $region34: #{tpu_custom_call.1} parent=0
    _
  %s6 = ssub.s32 1, %s4
  %s7 = scalar_select 0, %s6, %s4
  $region1: #{tpu_custom_call.1} parent=0
    #allocation2 [shape = 'u8[4096]{0}', space=vmem, size = 0x1000, scoped, tag = 'input window, operand 0, single buffered']
    #allocation3 [shape = 's32[1]{0}', space=sflag, size = 0x4, scoped, tag = 'scoped memory for tpu_custom_call.1']
    #allocation4 [shape = 's32[1]{0}', space=sflag, size = 0x4, scoped, tag = 'scoped memory for tpu_custom_call.1']
    #allocation5 [shape = 'u8[4096]{0}', space=vmem, size = 0x1000, scoped, tag = 'input window, operand 1, single buffered']
    #allocation6 [shape = 's32[1]{0}', space=sflag, size = 0x4, scoped, tag = 'scoped memory for tpu_custom_call.1']
    #allocation7 [shape = 'u8[294912]{0}', space=vmem, size = 0x48000, scoped, tag = 'input window, operand 2, single buffered']
    #allocation8 [shape = 'u8[4096]{0}', space=vmem, size = 0x1000, scoped, tag = 'output window, operand 0, single buffered']
    %8 = vsyncpa [#allocation3], 0
    %9 = vsyncpa [#allocation6], 0
    %10 = vsyncpa [#allocation4], 0
    // Predicated region
    $region2: #{tpu_custom_call.1} parent=1 // pred_check
      _
    $region3: #{tpu_custom_call.1} parent=1 // pred_check_branch
      %12 = sbr.rel (0) target = $region5
    $region4: #{tpu_custom_call.1} parent=1 // pred_region
      %s14 = ssub.s32 128, 128
      %15 = vsyncadd [#allocation3], %s14
      %s17 = sshll.u32 [#allocation2], 4
      %s18 = int_to_ptr.vmem [resolvable:$true] %s17
      %20 = dma.hbm_to_vmem [thread:$0]  %s0, 128, %s18, [#allocation3]
    $region5: #{tpu_custom_call.1} parent=1 // pred_fallthru
      _
    // Predicated region
    $region6: #{tpu_custom_call.1} parent=1 // pred_check
      _
    $region7: #{tpu_custom_call.1} parent=1 // pred_check_branch
      %22 = sbr.rel (0) target = $region9
    $region8: #{tpu_custom_call.1} parent=1 // pred_region
      %s24 = ssub.s32 128, 128
      %25 = vsyncadd [#allocation6], %s24
      %s27 = sshll.u32 [#allocation5], 4
      %s28 = int_to_ptr.vmem [resolvable:$true] %s27
      %30 = dma.hbm_to_vmem [thread:$0]  %s1, 128, %s28, [#allocation6]
    $region9: #{tpu_custom_call.1} parent=1 // pred_fallthru
      _
    // Predicated region
    $region10: #{tpu_custom_call.1} parent=1 // pred_check
      _
    $region11: #{tpu_custom_call.1} parent=1 // pred_check_branch
      %32 = sbr.rel (0) target = $region13
    $region12: #{tpu_custom_call.1} parent=1 // pred_region
      %s34 = ssub.s32 9216, 9216
      %35 = vsyncadd [#allocation6], %s34
      %s36 = sshll.u32 [#allocation7], 4
      %s37 = int_to_ptr.vmem [resolvable:$true] %s36
      %42 = dma.hbm_to_vmem [thread:$0]  %s2, 9216, %s37, [#allocation6], 128, 128, 8
    $region13: #{tpu_custom_call.1} parent=1 // pred_fallthru
      _
    // Predicated region
    $region14: #{tpu_custom_call.1} parent=1 // pred_check
      _
    $region15: #{tpu_custom_call.1} parent=1 // pred_check_branch
      %44 = sbr.rel (0) target = $region17
    $region16: #{tpu_custom_call.1} parent=1 // pred_region
      %45 = dma.done [#allocation3], 128
    $region17: #{tpu_custom_call.1} parent=1 // pred_fallthru
      _
    // Predicated region
    $region18: #{tpu_custom_call.1} parent=1 // pred_check
      _
    $region19: #{tpu_custom_call.1} parent=1 // pred_check_branch
      %47 = sbr.rel (0) target = $region21
    $region20: #{tpu_custom_call.1} parent=1 // pred_region
      %48 = dma.done [#allocation6], 128
    $region21: #{tpu_custom_call.1} parent=1 // pred_fallthru
      _
    // Predicated region
    $region22: #{tpu_custom_call.1} parent=1 // pred_check
      _
    $region23: #{tpu_custom_call.1} parent=1 // pred_check_branch
      %50 = sbr.rel (0) target = $region25
    $region24: #{tpu_custom_call.1} parent=1 // pred_region
      %51 = dma.done [#allocation6], 9216
    $region25: #{tpu_custom_call.1} parent=1 // pred_fallthru
      _
    %v52 = vld [vmem:[#allocation7] sm:$0xff]
    %v53 = vld [vmem:[#allocation7 + $0x8] sm:$0xff]
    %v54 = vld [vmem:[#allocation7 + $0x10] sm:$0xff]
    %v55 = vld [vmem:[#allocation7 + $0x18] sm:$0xff]
    %v56 = vld [vmem:[#allocation7 + $0x20] sm:$0xff]
    %v57 = vld [vmem:[#allocation7 + $0x28] sm:$0x1]
    %v58 = vld [vmem:[#allocation7 + $0x30] sm:$0xff]
    %v59 = vld [vmem:[#allocation7 + $0x38] sm:$0xff]
    %v60 = vld [vmem:[#allocation7 + $0x40] sm:$0xff]
    %v61 = vld [vmem:[#allocation7 + $0x48] sm:$0xff]
    %v62 = vld [vmem:[#allocation7 + $0x50] sm:$0xff]
    %v63 = vld [vmem:[#allocation7 + $0x58] sm:$0xff]
    %v64 = vld [vmem:[#allocation7 + $0x60] sm:$0xff]
    %v65 = vld [vmem:[#allocation7 + $0x68] sm:$0xff]
    %v66 = vld [vmem:[#allocation7 + $0x70] sm:$0xff]
    %v67 = vld [vmem:[#allocation7 + $0x78] sm:$0xff]
    %v68 = vld [vmem:[#allocation7 + $0x80] sm:$0xff]
    %v69 = vld [vmem:[#allocation7 + $0x88] sm:$0xff]
    %v70 = vld [vmem:[#allocation7 + $0x90] sm:$0xff]
    %v71 = vld [vmem:[#allocation7 + $0x98] sm:$0xff]
    %v72 = vld [vmem:[#allocation7 + $0xa0] sm:$0xff]
    %v73 = vld [vmem:[#allocation7 + $0xa8] sm:$0xff]
    %v74 = vld [vmem:[#allocation7 + $0xb0] sm:$0xff]
    %v75 = vld [vmem:[#allocation7 + $0xb8] sm:$0xff]
    %v76 = vld [vmem:[#allocation7 + $0xc0] sm:$0xff]
    %v77 = vld [vmem:[#allocation7 + $0xc8] sm:$0xff]
    %v78 = vld [vmem:[#allocation7 + $0xd0] sm:$0xff]
    %v79 = vld [vmem:[#allocation7 + $0xd8] sm:$0xff]
    %v80 = vld [vmem:[#allocation7 + $0xe0] sm:$0xff]
    %v81 = vld [vmem:[#allocation7 + $0xe8] sm:$0xff]
    %v82 = vld [vmem:[#allocation7 + $0xf0] sm:$0xff]
    %v83 = vld [vmem:[#allocation7 + $0xf8] sm:$0xff]
    %v84 = vld [vmem:[#allocation7 + $0x100] sm:$0xff]
    %v85 = vld [vmem:[#allocation7 + $0x108] sm:$0xff]
    %v86 = vld [vmem:[#allocation7 + $0x110] sm:$0xff]
    %v87 = vld [vmem:[#allocation7 + $0x118] sm:$0xff]
    %v88 = vld [vmem:[#allocation7 + $0x120] sm:$0xff]
    %v89 = vld [vmem:[#allocation7 + $0x128] sm:$0xff]
    %v90 = vld [vmem:[#allocation7 + $0x130] sm:$0xff]
    %v91 = vld [vmem:[#allocation7 + $0x138] sm:$0xff]
    %v92 = vld [vmem:[#allocation7 + $0x140] sm:$0xff]
    %v93 = vld [vmem:[#allocation7 + $0x148] sm:$0xff]
    %v94 = vld [vmem:[#allocation7 + $0x150] sm:$0xff]
    %v95 = vld [vmem:[#allocation7 + $0x158] sm:$0xff]
    %v96 = vld [vmem:[#allocation7 + $0x160] sm:$0xff]
    %v97 = vld [vmem:[#allocation7 + $0x168] sm:$0xff]
    %v98 = vld [vmem:[#allocation7 + $0x170] sm:$0xff]
    %v99 = vld [vmem:[#allocation7 + $0x178] sm:$0xff]
    %v100 = vld [vmem:[#allocation7 + $0x180] sm:$0xff]
    %v101 = vld [vmem:[#allocation7 + $0x188] sm:$0xff]
    %v102 = vld [vmem:[#allocation7 + $0x190] sm:$0xff]
    %v103 = vld [vmem:[#allocation7 + $0x198] sm:$0xff]
    %v104 = vld [vmem:[#allocation7 + $0x1a0] sm:$0xff]
    %v105 = vld [vmem:[#allocation7 + $0x1a8] sm:$0xff]
    %v106 = vld [vmem:[#allocation7 + $0x1b0] sm:$0xff]
    %v107 = vld [vmem:[#allocation7 + $0x1b8] sm:$0xff]
    %v108 = vld [vmem:[#allocation7 + $0x1c0] sm:$0xff]
    %v109 = vld [vmem:[#allocation7 + $0x1c8] sm:$0xff]
    %v110 = vld [vmem:[#allocation7 + $0x1d0] sm:$0xff]
    %v111 = vld [vmem:[#allocation7 + $0x1d8] sm:$0xff]
    %v112 = vld [vmem:[#allocation7 + $0x1e0] sm:$0xff]
    %v113 = vld [vmem:[#allocation7 + $0x1e8] sm:$0xff]
    %v114 = vld [vmem:[#allocation7 + $0x1f0] sm:$0xff]
    %v115 = vld [vmem:[#allocation7 + $0x1f8] sm:$0xff]
    %v116 = vld [vmem:[#allocation7 + $0x200] sm:$0xff]
    %v117 = vld [vmem:[#allocation7 + $0x208] sm:$0xff]
    %v118 = vld [vmem:[#allocation7 + $0x210] sm:$0xff]
    %v119 = vld [vmem:[#allocation7 + $0x218] sm:$0xff]
    %v120 = vld [vmem:[#allocation7 + $0x220] sm:$0xff]
    %v121 = vld [vmem:[#allocation7 + $0x228] sm:$0xff]
    %v122 = vld [vmem:[#allocation7 + $0x230] sm:$0x1]
    %v123 = vld [vmem:[#allocation7 + $0x238] sm:$0x1]
    %v124 = vld [vmem:[#allocation2] sm:$0xff]
    %v125 = vld [vmem:[#allocation5] sm:$0xff]
    %vm126 = vcmask 64512
    %v128 = vsel %vm126, %v125, 0
    %130 = vmatprep.subr.mxu0 0.0
    %131 = vmatpush1.msra.mxu0 0.0
    %132 = vmatprep.subr.mxu0 0.0
    %133 = vmatpush1.msra.mxu0 0.0
    %134 = vmatprep.subr.mxu0 0.0
    %135 = vmatpush1.msra.mxu0 0.0
    %136 = vmatprep.subr.mxu0 0.0
    %137 = vmatpush1.msra.mxu0 0.0
    %138 = vmatprep.subr.mxu0 0.0
    %139 = vmatpush1.msra.mxu0 0.0
    %140 = vmatprep.subr.mxu0 0.0
    %141 = vmatpush1.msra.mxu0 0.0
    %142 = vmatprep.subr.mxu0 0.0
    %143 = vmatpush1.msra.mxu0 0.0
    %144 = vmatprep.subr.mxu0 0.0
    %145 = vmatpush1.msra.mxu0 0.0
    %146 = vmatprep.subr.mxu0 0.0
    %147 = vmatpush1.msra.mxu0 0.0
    %148 = vmatprep.subr.mxu0 0.0
    %149 = vmatpush1.msra.mxu0 0.0
    %150 = vmatprep.subr.mxu0 0.0
    %151 = vmatpush1.msra.mxu0 0.0
    %152 = vmatprep.subr.mxu0 0.0
    %153 = vmatpush1.msra.mxu0 0.0
    %154 = vmatprep.subr.mxu0 0.0
    %155 = vmatpush1.msra.mxu0 0.0
    %156 = vmatprep.subr.mxu0 0.0
    %157 = vmatpush1.msra.mxu0 0.0
    %158 = vmatprep.subr.mxu0 0.0
    %159 = vmatpush1.msra.mxu0 0.0
    %160 = vmatprep.subr.mxu0 0.0
    %161 = vmatpush1.msra.mxu0 %v56
    %162 = vmatprep.subr.mxu0 0.0
    %163 = vmatpush2.msra.mxu0 0.0
    %164 = vmatprep.subr.mxu0 0.0
    %165 = vmatpush2.msra.mxu0 0.0
    %166 = vmatprep.subr.mxu0 0.0
    %167 = vmatpush2.msra.mxu0 0.0
    %168 = vmatprep.subr.mxu0 0.0
    %169 = vmatpush2.msra.mxu0 0.0
    %170 = vmatprep.subr.mxu0 0.0
    %171 = vmatpush2.msra.mxu0 0.0
    %172 = vmatprep.subr.mxu0 0.0
    %173 = vmatpush2.msra.mxu0 0.0
    %174 = vmatprep.subr.mxu0 0.0
    %175 = vmatpush2.msra.mxu0 0.0
    %176 = vmatprep.subr.mxu0 0.0
    %177 = vmatpush2.msra.mxu0 0.0
    %178 = vmatprep.subr.mxu0 0.0
    %179 = vmatpush2.msra.mxu0 0.0
    %180 = vmatprep.subr.mxu0 0.0
    %181 = vmatpush2.msra.mxu0 0.0
    %182 = vmatprep.subr.mxu0 0.0
    %183 = vmatpush2.msra.mxu0 0.0
    %184 = vmatprep.subr.mxu0 0.0
    %185 = vmatpush2.msra.mxu0 0.0
    %186 = vmatprep.subr.mxu0 0.0
    %187 = vmatpush2.msra.mxu0 0.0
    %188 = vmatprep.subr.mxu0 0.0
    %189 = vmatpush2.msra.mxu0 0.0
    %190 = vmatprep.subr.mxu0 0.0
    %191 = vmatpush2.msra.mxu0 0.0
    %192 = vmatprep.subr.mxu0 0.0
    %193 = vmatpush2.msra.mxu0 0.0
    %194 = vmatprep.mubr.f32.mxu0 0.0
    %195 = vmatmul.mubr.f32.gmra.mxu0 %v128
    %v196 = vpop.f32.mrf.mxu0
    %v197 = vadd.f32 0.0, %v196
    %v198 = vpop.f32.mrf.mxu0
    %199 = vdwg.mxu0
    %vm200 = vcmask 261120
    %v202 = vsel %vm200, %v124, 0
    %204 = vmatprep.subr.mxu0 0.0
    %205 = vmatpush1.msra.mxu0 0.0
    %206 = vmatprep.subr.mxu0 0.0
    %207 = vmatpush1.msra.mxu0 0.0
    %208 = vmatprep.subr.mxu0 0.0
    %209 = vmatpush1.msra.mxu0 0.0
    %210 = vmatprep.subr.mxu0 0.0
    %211 = vmatpush1.msra.mxu0 0.0
    %212 = vmatprep.subr.mxu0 0.0
    %213 = vmatpush1.msra.mxu0 0.0
    %214 = vmatprep.subr.mxu0 0.0
    %215 = vmatpush1.msra.mxu0 0.0
    %216 = vmatprep.subr.mxu0 0.0
    %217 = vmatpush1.msra.mxu0 0.0
    %218 = vmatprep.subr.mxu0 0.0
    %219 = vmatpush1.msra.mxu0 0.0
    %220 = vmatprep.subr.mxu0 0.0
    %221 = vmatpush1.msra.mxu0 0.0
    %222 = vmatprep.subr.mxu0 0.0
    %223 = vmatpush1.msra.mxu0 0.0
    %224 = vmatprep.subr.mxu0 0.0
    %225 = vmatpush1.msra.mxu0 0.0
    %226 = vmatprep.subr.mxu0 0.0
    %227 = vmatpush1.msra.mxu0 0.0
    %228 = vmatprep.subr.mxu0 0.0
    %229 = vmatpush1.msra.mxu0 %v55
    %230 = vmatprep.subr.mxu0 0.0
    %231 = vmatpush1.msra.mxu0 %v54
    %232 = vmatprep.subr.mxu0 0.0
    %233 = vmatpush1.msra.mxu0 %v53
    %234 = vmatprep.subr.mxu0 0.0
    %235 = vmatpush1.msra.mxu0 %v52
    %236 = vmatprep.subr.mxu0 0.0
    %237 = vmatpush2.msra.mxu0 0.0
    %238 = vmatprep.subr.mxu0 0.0
    %239 = vmatpush2.msra.mxu0 0.0
    %240 = vmatprep.subr.mxu0 0.0
    %241 = vmatpush2.msra.mxu0 0.0
    %242 = vmatprep.subr.mxu0 0.0
    %243 = vmatpush2.msra.mxu0 0.0
    %244 = vmatprep.subr.mxu0 0.0
    %245 = vmatpush2.msra.mxu0 0.0
    %246 = vmatprep.subr.mxu0 0.0
    %247 = vmatpush2.msra.mxu0 0.0
    %248 = vmatprep.subr.mxu0 0.0
    %249 = vmatpush2.msra.mxu0 0.0
    %250 = vmatprep.subr.mxu0 0.0
    %251 = vmatpush2.msra.mxu0 0.0
    %252 = vmatprep.subr.mxu0 0.0
    %253 = vmatpush2.msra.mxu0 0.0
    %254 = vmatprep.subr.mxu0 0.0
    %255 = vmatpush2.msra.mxu0 0.0
    %256 = vmatprep.subr.mxu0 0.0
    %257 = vmatpush2.msra.mxu0 0.0
    %258 = vmatprep.subr.mxu0 0.0
    %259 = vmatpush2.msra.mxu0 0.0
    %260 = vmatprep.subr.mxu0 0.0
    %261 = vmatpush2.msra.mxu0 0.0
    %262 = vmatprep.subr.mxu0 0.0
    %263 = vmatpush2.msra.mxu0 0.0
    %264 = vmatprep.subr.mxu0 0.0
    %265 = vmatpush2.msra.mxu0 0.0
    %266 = vmatprep.subr.mxu0 0.0
    %267 = vmatpush2.msra.mxu0 0.0
    %268 = vmatprep.mubr.f32.mxu0 0.0
    %269 = vmatmul.mubr.f32.gmra.mxu0 %v202
    %v270 = vpop.f32.mrf.mxu0
    %v271 = vadd.f32 %v197, %v270
    %v272 = vpop.f32.mrf.mxu0
    %273 = vdwg.mxu0
    %v274 = vlaneseq
    %v275 = vshrl.u32 %v274, 7
    %v276 = vsub.s32 0, %v275
    %v277 = vrot.slane %v57, %v276
    %v278 = vadd.f32 %v271, %v277
    %v279 = vlaneseq
    %v280 = vshrl.u32 %v279, 7
    %v281 = vsub.s32 0, %v280
    %v282 = vrot.slane %v122, %v281
    %v284 = vsel %vm200, %v278, 0
    %286 = vmatprep.subr.mxu0 0.0
    %287 = vmatpush1.msra.mxu0 0.0
    %288 = vmatprep.subr.mxu0 0.0
    %289 = vmatpush1.msra.mxu0 0.0
    %290 = vmatprep.subr.mxu0 0.0
    %291 = vmatpush1.msra.mxu0 0.0
    %292 = vmatprep.subr.mxu0 0.0
    %293 = vmatpush1.msra.mxu0 0.0
    %294 = vmatprep.subr.mxu0 0.0
    %295 = vmatpush1.msra.mxu0 0.0
    %296 = vmatprep.subr.mxu0 0.0
    %297 = vmatpush1.msra.mxu0 0.0
    %298 = vmatprep.subr.mxu0 0.0
    %299 = vmatpush1.msra.mxu0 0.0
    %300 = vmatprep.subr.mxu0 0.0
    %301 = vmatpush1.msra.mxu0 0.0
    %302 = vmatprep.subr.mxu0 0.0
    %303 = vmatpush1.msra.mxu0 0.0
    %304 = vmatprep.subr.mxu0 0.0
    %305 = vmatpush1.msra.mxu0 0.0
    %306 = vmatprep.subr.mxu0 0.0
    %307 = vmatpush1.msra.mxu0 0.0
    %308 = vmatprep.subr.mxu0 0.0
    %309 = vmatpush1.msra.mxu0 0.0
    %310 = vmatprep.subr.mxu0 0.0
    %311 = vmatpush1.msra.mxu0 %v61
    %312 = vmatprep.subr.mxu0 0.0
    %313 = vmatpush1.msra.mxu0 %v60
    %314 = vmatprep.subr.mxu0 0.0
    %315 = vmatpush1.msra.mxu0 %v59
    %316 = vmatprep.subr.mxu0 0.0
    %317 = vmatpush1.msra.mxu0 %v58
    %318 = vmatprep.subr.mxu0 0.0
    %319 = vmatpush2.msra.mxu0 0.0
    %320 = vmatprep.subr.mxu0 0.0
    %321 = vmatpush2.msra.mxu0 0.0
    %322 = vmatprep.subr.mxu0 0.0
    %323 = vmatpush2.msra.mxu0 0.0
    %324 = vmatprep.subr.mxu0 0.0
    %325 = vmatpush2.msra.mxu0 0.0
    %326 = vmatprep.subr.mxu0 0.0
    %327 = vmatpush2.msra.mxu0 0.0
    %328 = vmatprep.subr.mxu0 0.0
    %329 = vmatpush2.msra.mxu0 0.0
    %330 = vmatprep.subr.mxu0 0.0
    %331 = vmatpush2.msra.mxu0 0.0
    %332 = vmatprep.subr.mxu0 0.0
    %333 = vmatpush2.msra.mxu0 0.0
    %334 = vmatprep.subr.mxu0 0.0
    %335 = vmatpush2.msra.mxu0 0.0
    %336 = vmatprep.subr.mxu0 0.0
    %337 = vmatpush2.msra.mxu0 0.0
    %338 = vmatprep.subr.mxu0 0.0
    %339 = vmatpush2.msra.mxu0 0.0
    %340 = vmatprep.subr.mxu0 0.0
    %341 = vmatpush2.msra.mxu0 0.0
    %342 = vmatprep.subr.mxu0 0.0
    %343 = vmatpush2.msra.mxu0 0.0
    %344 = vmatprep.subr.mxu0 0.0
    %345 = vmatpush2.msra.mxu0 0.0
    %346 = vmatprep.subr.mxu0 0.0
    %347 = vmatpush2.msra.mxu0 0.0
    %348 = vmatprep.subr.mxu0 0.0
    %349 = vmatpush2.msra.mxu0 0.0
    %350 = vmatprep.mubr.f32.mxu0 0.0
    %351 = vmatmul.mubr.f32.gmra.mxu0 %v284
    %v352 = vpop.f32.mrf.mxu0
    %v353 = vadd.f32 %v282, %v352
    %v354 = vpop.f32.mrf.mxu0
    %355 = vdwg.mxu0
    %357 = vrot.lane.b32.xlu0 %v282, 96
    %v358 = vpop.permute.xlu0 %357
    %360 = vmatprep.subr.mxu0 0.0
    %361 = vmatpush1.msra.mxu0 0.0
    %362 = vmatprep.subr.mxu0 0.0
    %363 = vmatpush1.msra.mxu0 0.0
    %364 = vmatprep.subr.mxu0 0.0
    %365 = vmatpush1.msra.mxu0 0.0
    %366 = vmatprep.subr.mxu0 0.0
    %367 = vmatpush1.msra.mxu0 0.0
    %368 = vmatprep.subr.mxu0 0.0
    %369 = vmatpush1.msra.mxu0 0.0
    %370 = vmatprep.subr.mxu0 0.0
    %371 = vmatpush1.msra.mxu0 0.0
    %372 = vmatprep.subr.mxu0 0.0
    %373 = vmatpush1.msra.mxu0 0.0
    %374 = vmatprep.subr.mxu0 0.0
    %375 = vmatpush1.msra.mxu0 0.0
    %376 = vmatprep.subr.mxu0 0.0
    %377 = vmatpush1.msra.mxu0 0.0
    %378 = vmatprep.subr.mxu0 0.0
    %379 = vmatpush1.msra.mxu0 0.0
    %380 = vmatprep.subr.mxu0 0.0
    %381 = vmatpush1.msra.mxu0 0.0
    %382 = vmatprep.subr.mxu0 0.0
    %383 = vmatpush1.msra.mxu0 0.0
    %384 = vmatprep.subr.mxu0 0.0
    %385 = vmatpush1.msra.mxu0 %v65
    %386 = vmatprep.subr.mxu0 0.0
    %387 = vmatpush1.msra.mxu0 %v64
    %388 = vmatprep.subr.mxu0 0.0
    %389 = vmatpush1.msra.mxu0 %v63
    %390 = vmatprep.subr.mxu0 0.0
    %391 = vmatpush1.msra.mxu0 %v62
    %392 = vmatprep.subr.mxu0 0.0
    %393 = vmatpush2.msra.mxu0 0.0
    %394 = vmatprep.subr.mxu0 0.0
    %395 = vmatpush2.msra.mxu0 0.0
    %396 = vmatprep.subr.mxu0 0.0
    %397 = vmatpush2.msra.mxu0 0.0
    %398 = vmatprep.subr.mxu0 0.0
    %399 = vmatpush2.msra.mxu0 0.0
    %400 = vmatprep.subr.mxu0 0.0
    %401 = vmatpush2.msra.mxu0 0.0
    %402 = vmatprep.subr.mxu0 0.0
    %403 = vmatpush2.msra.mxu0 0.0
    %404 = vmatprep.subr.mxu0 0.0
    %405 = vmatpush2.msra.mxu0 0.0
    %406 = vmatprep.subr.mxu0 0.0
    %407 = vmatpush2.msra.mxu0 0.0
    %408 = vmatprep.subr.mxu0 0.0
    %409 = vmatpush2.msra.mxu0 0.0
    %410 = vmatprep.subr.mxu0 0.0
    %411 = vmatpush2.msra.mxu0 0.0
    %412 = vmatprep.subr.mxu0 0.0
    %413 = vmatpush2.msra.mxu0 0.0
    %414 = vmatprep.subr.mxu0 0.0
    %415 = vmatpush2.msra.mxu0 0.0
    %416 = vmatprep.subr.mxu0 0.0
    %417 = vmatpush2.msra.mxu0 0.0
    %418 = vmatprep.subr.mxu0 0.0
    %419 = vmatpush2.msra.mxu0 0.0
    %420 = vmatprep.subr.mxu0 0.0
    %421 = vmatpush2.msra.mxu0 0.0
    %422 = vmatprep.subr.mxu0 0.0
    %423 = vmatpush2.msra.mxu0 0.0
    %424 = vmatprep.mubr.f32.mxu0 0.0
    %425 = vmatmul.mubr.f32.gmra.mxu0 %v284
    %v426 = vpop.f32.mrf.mxu0
    %v427 = vadd.f32 %v358, %v426
    %v428 = vpop.f32.mrf.mxu0
    %429 = vdwg.mxu0
    %430 = vrot.lane.b32.xlu0 %v282, 64
    %v431 = vpop.permute.xlu0 %430
    %433 = vmatprep.subr.mxu0 0.0
    %434 = vmatpush1.msra.mxu0 0.0
    %435 = vmatprep.subr.mxu0 0.0
    %436 = vmatpush1.msra.mxu0 0.0
    %437 = vmatprep.subr.mxu0 0.0
    %438 = vmatpush1.msra.mxu0 0.0
    %439 = vmatprep.subr.mxu0 0.0
    %440 = vmatpush1.msra.mxu0 0.0
    %441 = vmatprep.subr.mxu0 0.0
    %442 = vmatpush1.msra.mxu0 0.0
    %443 = vmatprep.subr.mxu0 0.0
    %444 = vmatpush1.msra.mxu0 0.0
    %445 = vmatprep.subr.mxu0 0.0
    %446 = vmatpush1.msra.mxu0 0.0
    %447 = vmatprep.subr.mxu0 0.0
    %448 = vmatpush1.msra.mxu0 0.0
    %449 = vmatprep.subr.mxu0 0.0
    %450 = vmatpush1.msra.mxu0 0.0
    %451 = vmatprep.subr.mxu0 0.0
    %452 = vmatpush1.msra.mxu0 0.0
    %453 = vmatprep.subr.mxu0 0.0
    %454 = vmatpush1.msra.mxu0 0.0
    %455 = vmatprep.subr.mxu0 0.0
    %456 = vmatpush1.msra.mxu0 0.0
    %457 = vmatprep.subr.mxu0 0.0
    %458 = vmatpush1.msra.mxu0 %v69
    %459 = vmatprep.subr.mxu0 0.0
    %460 = vmatpush1.msra.mxu0 %v68
    %461 = vmatprep.subr.mxu0 0.0
    %462 = vmatpush1.msra.mxu0 %v67
    %463 = vmatprep.subr.mxu0 0.0
    %464 = vmatpush1.msra.mxu0 %v66
    %465 = vmatprep.subr.mxu0 0.0
    %466 = vmatpush2.msra.mxu0 0.0
    %467 = vmatprep.subr.mxu0 0.0
    %468 = vmatpush2.msra.mxu0 0.0
    %469 = vmatprep.subr.mxu0 0.0
    %470 = vmatpush2.msra.mxu0 0.0
    %471 = vmatprep.subr.mxu0 0.0
    %472 = vmatpush2.msra.mxu0 0.0
    %473 = vmatprep.subr.mxu0 0.0
    %474 = vmatpush2.msra.mxu0 0.0
    %475 = vmatprep.subr.mxu0 0.0
    %476 = vmatpush2.msra.mxu0 0.0
    %477 = vmatprep.subr.mxu0 0.0
    %478 = vmatpush2.msra.mxu0 0.0
    %479 = vmatprep.subr.mxu0 0.0
    %480 = vmatpush2.msra.mxu0 0.0
    %481 = vmatprep.subr.mxu0 0.0
    %482 = vmatpush2.msra.mxu0 0.0
    %483 = vmatprep.subr.mxu0 0.0
    %484 = vmatpush2.msra.mxu0 0.0
    %485 = vmatprep.subr.mxu0 0.0
    %486 = vmatpush2.msra.mxu0 0.0
    %487 = vmatprep.subr.mxu0 0.0
    %488 = vmatpush2.msra.mxu0 0.0
    %489 = vmatprep.subr.mxu0 0.0
    %490 = vmatpush2.msra.mxu0 0.0
    %491 = vmatprep.subr.mxu0 0.0
    %492 = vmatpush2.msra.mxu0 0.0
    %493 = vmatprep.subr.mxu0 0.0
    %494 = vmatpush2.msra.mxu0 0.0
    %495 = vmatprep.subr.mxu0 0.0
    %496 = vmatpush2.msra.mxu0 0.0
    %497 = vmatprep.mubr.f32.mxu0 0.0
    %498 = vmatmul.mubr.f32.gmra.mxu0 %v284
    %v499 = vpop.f32.mrf.mxu0
    %v500 = vadd.f32 %v431, %v499
    %v501 = vpop.f32.mrf.mxu0
    %502 = vdwg.mxu0
    %503 = vrot.lane.b32.xlu0 %v282, 32
    %v504 = vpop.permute.xlu0 %503
    %506 = vmatprep.subr.mxu0 0.0
    %507 = vmatpush1.msra.mxu0 0.0
    %508 = vmatprep.subr.mxu0 0.0
    %509 = vmatpush1.msra.mxu0 0.0
    %510 = vmatprep.subr.mxu0 0.0
    %511 = vmatpush1.msra.mxu0 0.0
    %512 = vmatprep.subr.mxu0 0.0
    %513 = vmatpush1.msra.mxu0 0.0
    %514 = vmatprep.subr.mxu0 0.0
    %515 = vmatpush1.msra.mxu0 0.0
    %516 = vmatprep.subr.mxu0 0.0
    %517 = vmatpush1.msra.mxu0 0.0
    %518 = vmatprep.subr.mxu0 0.0
    %519 = vmatpush1.msra.mxu0 0.0
    %520 = vmatprep.subr.mxu0 0.0
    %521 = vmatpush1.msra.mxu0 0.0
    %522 = vmatprep.subr.mxu0 0.0
    %523 = vmatpush1.msra.mxu0 0.0
    %524 = vmatprep.subr.mxu0 0.0
    %525 = vmatpush1.msra.mxu0 0.0
    %526 = vmatprep.subr.mxu0 0.0
    %527 = vmatpush1.msra.mxu0 0.0
    %528 = vmatprep.subr.mxu0 0.0
    %529 = vmatpush1.msra.mxu0 0.0
    %530 = vmatprep.subr.mxu0 0.0
    %531 = vmatpush1.msra.mxu0 %v73
    %532 = vmatprep.subr.mxu0 0.0
    %533 = vmatpush1.msra.mxu0 %v72
    %534 = vmatprep.subr.mxu0 0.0
    %535 = vmatpush1.msra.mxu0 %v71
    %536 = vmatprep.subr.mxu0 0.0
    %537 = vmatpush1.msra.mxu0 %v70
    %538 = vmatprep.subr.mxu0 0.0
    %539 = vmatpush2.msra.mxu0 0.0
    %540 = vmatprep.subr.mxu0 0.0
    %541 = vmatpush2.msra.mxu0 0.0
    %542 = vmatprep.subr.mxu0 0.0
    %543 = vmatpush2.msra.mxu0 0.0
    %544 = vmatprep.subr.mxu0 0.0
    %545 = vmatpush2.msra.mxu0 0.0
    %546 = vmatprep.subr.mxu0 0.0
    %547 = vmatpush2.msra.mxu0 0.0
    %548 = vmatprep.subr.mxu0 0.0
    %549 = vmatpush2.msra.mxu0 0.0
    %550 = vmatprep.subr.mxu0 0.0
    %551 = vmatpush2.msra.mxu0 0.0
    %552 = vmatprep.subr.mxu0 0.0
    %553 = vmatpush2.msra.mxu0 0.0
    %554 = vmatprep.subr.mxu0 0.0
    %555 = vmatpush2.msra.mxu0 0.0
    %556 = vmatprep.subr.mxu0 0.0
    %557 = vmatpush2.msra.mxu0 0.0
    %558 = vmatprep.subr.mxu0 0.0
    %559 = vmatpush2.msra.mxu0 0.0
    %560 = vmatprep.subr.mxu0 0.0
    %561 = vmatpush2.msra.mxu0 0.0
    %562 = vmatprep.subr.mxu0 0.0
    %563 = vmatpush2.msra.mxu0 0.0
    %564 = vmatprep.subr.mxu0 0.0
    %565 = vmatpush2.msra.mxu0 0.0
    %566 = vmatprep.subr.mxu0 0.0
    %567 = vmatpush2.msra.mxu0 0.0
    %568 = vmatprep.subr.mxu0 0.0
    %569 = vmatpush2.msra.mxu0 0.0
    %570 = vmatprep.mubr.f32.mxu0 0.0
    %571 = vmatmul.mubr.f32.gmra.mxu0 %v284
    %v572 = vpop.f32.mrf.mxu0
    %v573 = vadd.f32 %v504, %v572
    %v574 = vpop.f32.mrf.mxu0
    %575 = vdwg.mxu0
    %v576 = vxor.u32 %v353, 2147483648
    %v577 = vmul.f32 %v576, 1.442695
    %v578 = vpow.pop %v577
    %v579 = vadd.f32 %v578, 1.0
    %v580 = vrcp.pop %v579
    %v581 = vmul.f32 1.0, %v580
    %v582 = vxor.u32 %v427, 2147483648
    %v583 = vmul.f32 %v582, 1.442695
    %v584 = vpow.pop %v583
    %v585 = vadd.f32 %v584, 1.0
    %v586 = vrcp.pop %v585
    %v587 = vmul.f32 1.0, %v586
    %v588 = vtanh.pop %v500
    %v589 = vxor.u32 %v573, 2147483648
    %v590 = vmul.f32 %v589, 1.442695
    %v591 = vpow.pop %v590
    %v592 = vadd.f32 %v591, 1.0
    %v593 = vrcp.pop %v592
    %v594 = vmul.f32 1.0, %v593
    %v595 = vmul.f32 %v587, 0.0
    %v596 = vmul.f32 %v581, %v588
    %v597 = vadd.f32 %v595, %v596
    %v598 = vtanh.pop %v597
    %v599 = vmul.f32 %v594, %v598
    %v601 = vsel %vm200, %v599, 0
    %603 = vmatprep.subr.mxu0 0.0
    %604 = vmatpush1.msra.mxu0 0.0
    %605 = vmatprep.subr.mxu0 0.0
    %606 = vmatpush1.msra.mxu0 0.0
    %607 = vmatprep.subr.mxu0 0.0
    %608 = vmatpush1.msra.mxu0 0.0
    %609 = vmatprep.subr.mxu0 0.0
    %610 = vmatpush1.msra.mxu0 0.0
    %611 = vmatprep.subr.mxu0 0.0
    %612 = vmatpush1.msra.mxu0 0.0
    %613 = vmatprep.subr.mxu0 0.0
    %614 = vmatpush1.msra.mxu0 0.0
    %615 = vmatprep.subr.mxu0 0.0
    %616 = vmatpush1.msra.mxu0 0.0
    %617 = vmatprep.subr.mxu0 0.0
    %618 = vmatpush1.msra.mxu0 0.0
    %619 = vmatprep.subr.mxu0 0.0
    %620 = vmatpush1.msra.mxu0 0.0
    %621 = vmatprep.subr.mxu0 0.0
    %622 = vmatpush1.msra.mxu0 0.0
    %623 = vmatprep.subr.mxu0 0.0
    %624 = vmatpush1.msra.mxu0 0.0
    %625 = vmatprep.subr.mxu0 0.0
    %626 = vmatpush1.msra.mxu0 0.0
    %627 = vmatprep.subr.mxu0 0.0
    %628 = vmatpush1.msra.mxu0 %v93
    %629 = vmatprep.subr.mxu0 0.0
    %630 = vmatpush1.msra.mxu0 %v92
    %631 = vmatprep.subr.mxu0 0.0
    %632 = vmatpush1.msra.mxu0 %v91
    %633 = vmatprep.subr.mxu0 0.0
    %634 = vmatpush1.msra.mxu0 %v90
    %635 = vmatprep.subr.mxu0 0.0
    %636 = vmatpush2.msra.mxu0 0.0
    %637 = vmatprep.subr.mxu0 0.0
    %638 = vmatpush2.msra.mxu0 0.0
    %639 = vmatprep.subr.mxu0 0.0
    %640 = vmatpush2.msra.mxu0 0.0
    %641 = vmatprep.subr.mxu0 0.0
    %642 = vmatpush2.msra.mxu0 0.0
    %643 = vmatprep.subr.mxu0 0.0
    %644 = vmatpush2.msra.mxu0 0.0
    %645 = vmatprep.subr.mxu0 0.0
    %646 = vmatpush2.msra.mxu0 0.0
    %647 = vmatprep.subr.mxu0 0.0
    %648 = vmatpush2.msra.mxu0 0.0
    %649 = vmatprep.subr.mxu0 0.0
    %650 = vmatpush2.msra.mxu0 0.0
    %651 = vmatprep.subr.mxu0 0.0
    %652 = vmatpush2.msra.mxu0 0.0
    %653 = vmatprep.subr.mxu0 0.0
    %654 = vmatpush2.msra.mxu0 0.0
    %655 = vmatprep.subr.mxu0 0.0
    %656 = vmatpush2.msra.mxu0 0.0
    %657 = vmatprep.subr.mxu0 0.0
    %658 = vmatpush2.msra.mxu0 0.0
    %659 = vmatprep.subr.mxu0 0.0
    %660 = vmatpush2.msra.mxu0 0.0
    %661 = vmatprep.subr.mxu0 0.0
    %662 = vmatpush2.msra.mxu0 0.0
    %663 = vmatprep.subr.mxu0 0.0
    %664 = vmatpush2.msra.mxu0 0.0
    %665 = vmatprep.subr.mxu0 0.0
    %666 = vmatpush2.msra.mxu0 0.0
    %667 = vmatprep.mubr.f32.mxu0 0.0
    %668 = vmatmul.mubr.f32.gmra.mxu0 %v601
    %v669 = vpop.f32.mrf.mxu0
    %v670 = vadd.f32 0.0, %v669
    %v671 = vpop.f32.mrf.mxu0
    %672 = vdwg.mxu0
    %v673 = vadd.f32 %v123, %v670
    %674 = vmatprep.subr.mxu0 0.0
    %675 = vmatpush1.msra.mxu0 0.0
    %676 = vmatprep.subr.mxu0 0.0
    %677 = vmatpush1.msra.mxu0 0.0
    %678 = vmatprep.subr.mxu0 0.0
    %679 = vmatpush1.msra.mxu0 0.0
    %680 = vmatprep.subr.mxu0 0.0
    %681 = vmatpush1.msra.mxu0 0.0
    %682 = vmatprep.subr.mxu0 0.0
    %683 = vmatpush1.msra.mxu0 0.0
    %684 = vmatprep.subr.mxu0 0.0
    %685 = vmatpush1.msra.mxu0 0.0
    %686 = vmatprep.subr.mxu0 0.0
    %687 = vmatpush1.msra.mxu0 0.0
    %688 = vmatprep.subr.mxu0 0.0
    %689 = vmatpush1.msra.mxu0 0.0
    %690 = vmatprep.subr.mxu0 0.0
    %691 = vmatpush1.msra.mxu0 0.0
    %692 = vmatprep.subr.mxu0 0.0
    %693 = vmatpush1.msra.mxu0 0.0
    %694 = vmatprep.subr.mxu0 0.0
    %695 = vmatpush1.msra.mxu0 0.0
    %696 = vmatprep.subr.mxu0 0.0
    %697 = vmatpush1.msra.mxu0 0.0
    %698 = vmatprep.subr.mxu0 0.0
    %699 = vmatpush1.msra.mxu0 %v97
    %700 = vmatprep.subr.mxu0 0.0
    %701 = vmatpush1.msra.mxu0 %v96
    %702 = vmatprep.subr.mxu0 0.0
    %703 = vmatpush1.msra.mxu0 %v95
    %704 = vmatprep.subr.mxu0 0.0
    %705 = vmatpush1.msra.mxu0 %v94
    %706 = vmatprep.subr.mxu0 0.0
    %707 = vmatpush2.msra.mxu0 0.0
    %708 = vmatprep.subr.mxu0 0.0
    %709 = vmatpush2.msra.mxu0 0.0
    %710 = vmatprep.subr.mxu0 0.0
    %711 = vmatpush2.msra.mxu0 0.0
    %712 = vmatprep.subr.mxu0 0.0
    %713 = vmatpush2.msra.mxu0 0.0
    %714 = vmatprep.subr.mxu0 0.0
    %715 = vmatpush2.msra.mxu0 0.0
    %716 = vmatprep.subr.mxu0 0.0
    %717 = vmatpush2.msra.mxu0 0.0
    %718 = vmatprep.subr.mxu0 0.0
    %719 = vmatpush2.msra.mxu0 0.0
    %720 = vmatprep.subr.mxu0 0.0
    %721 = vmatpush2.msra.mxu0 0.0
    %722 = vmatprep.subr.mxu0 0.0
    %723 = vmatpush2.msra.mxu0 0.0
    %724 = vmatprep.subr.mxu0 0.0
    %725 = vmatpush2.msra.mxu0 0.0
    %726 = vmatprep.subr.mxu0 0.0
    %727 = vmatpush2.msra.mxu0 0.0
    %728 = vmatprep.subr.mxu0 0.0
    %729 = vmatpush2.msra.mxu0 0.0
    %730 = vmatprep.subr.mxu0 0.0
    %731 = vmatpush2.msra.mxu0 0.0
    %732 = vmatprep.subr.mxu0 0.0
    %733 = vmatpush2.msra.mxu0 0.0
    %734 = vmatprep.subr.mxu0 0.0
    %735 = vmatpush2.msra.mxu0 0.0
    %736 = vmatprep.subr.mxu0 0.0
    %737 = vmatpush2.msra.mxu0 0.0
    %738 = vmatprep.mubr.f32.mxu0 0.0
    %739 = vmatmul.mubr.f32.gmra.mxu0 %v601
    %v740 = vpop.f32.mrf.mxu0
    %v741 = vadd.f32 0.0, %v740
    %v742 = vpop.f32.mrf.mxu0
    %743 = vdwg.mxu0
    %745 = vrot.lane.b32.xlu0 %v741, 32
    %v746 = vpop.permute.xlu0 %745
    %v748 = vadd.f32 %v123, %v746
    %749 = vmatprep.subr.mxu0 0.0
    %750 = vmatpush1.msra.mxu0 0.0
    %751 = vmatprep.subr.mxu0 0.0
    %752 = vmatpush1.msra.mxu0 0.0
    %753 = vmatprep.subr.mxu0 0.0
    %754 = vmatpush1.msra.mxu0 0.0
    %755 = vmatprep.subr.mxu0 0.0
    %756 = vmatpush1.msra.mxu0 0.0
    %757 = vmatprep.subr.mxu0 0.0
    %758 = vmatpush1.msra.mxu0 0.0
    %759 = vmatprep.subr.mxu0 0.0
    %760 = vmatpush1.msra.mxu0 0.0
    %761 = vmatprep.subr.mxu0 0.0
    %762 = vmatpush1.msra.mxu0 0.0
    %763 = vmatprep.subr.mxu0 0.0
    %764 = vmatpush1.msra.mxu0 0.0
    %765 = vmatprep.subr.mxu0 0.0
    %766 = vmatpush1.msra.mxu0 0.0
    %767 = vmatprep.subr.mxu0 0.0
    %768 = vmatpush1.msra.mxu0 0.0
    %769 = vmatprep.subr.mxu0 0.0
    %770 = vmatpush1.msra.mxu0 0.0
    %771 = vmatprep.subr.mxu0 0.0
    %772 = vmatpush1.msra.mxu0 0.0
    %773 = vmatprep.subr.mxu0 0.0
    %774 = vmatpush1.msra.mxu0 %v101
    %775 = vmatprep.subr.mxu0 0.0
    %776 = vmatpush1.msra.mxu0 %v100
    %777 = vmatprep.subr.mxu0 0.0
    %778 = vmatpush1.msra.mxu0 %v99
    %779 = vmatprep.subr.mxu0 0.0
    %780 = vmatpush1.msra.mxu0 %v98
    %781 = vmatprep.subr.mxu0 0.0
    %782 = vmatpush2.msra.mxu0 0.0
    %783 = vmatprep.subr.mxu0 0.0
    %784 = vmatpush2.msra.mxu0 0.0
    %785 = vmatprep.subr.mxu0 0.0
    %786 = vmatpush2.msra.mxu0 0.0
    %787 = vmatprep.subr.mxu0 0.0
    %788 = vmatpush2.msra.mxu0 0.0
    %789 = vmatprep.subr.mxu0 0.0
    %790 = vmatpush2.msra.mxu0 0.0
    %791 = vmatprep.subr.mxu0 0.0
    %792 = vmatpush2.msra.mxu0 0.0
    %793 = vmatprep.subr.mxu0 0.0
    %794 = vmatpush2.msra.mxu0 0.0
    %795 = vmatprep.subr.mxu0 0.0
    %796 = vmatpush2.msra.mxu0 0.0
    %797 = vmatprep.subr.mxu0 0.0
    %798 = vmatpush2.msra.mxu0 0.0
    %799 = vmatprep.subr.mxu0 0.0
    %800 = vmatpush2.msra.mxu0 0.0
    %801 = vmatprep.subr.mxu0 0.0
    %802 = vmatpush2.msra.mxu0 0.0
    %803 = vmatprep.subr.mxu0 0.0
    %804 = vmatpush2.msra.mxu0 0.0
    %805 = vmatprep.subr.mxu0 0.0
    %806 = vmatpush2.msra.mxu0 0.0
    %807 = vmatprep.subr.mxu0 0.0
    %808 = vmatpush2.msra.mxu0 0.0
    %809 = vmatprep.subr.mxu0 0.0
    %810 = vmatpush2.msra.mxu0 0.0
    %811 = vmatprep.subr.mxu0 0.0
    %812 = vmatpush2.msra.mxu0 0.0
    %813 = vmatprep.mubr.f32.mxu0 0.0
    %814 = vmatmul.mubr.f32.gmra.mxu0 %v601
    %v815 = vpop.f32.mrf.mxu0
    %v816 = vadd.f32 0.0, %v815
    %v817 = vpop.f32.mrf.mxu0
    %818 = vdwg.mxu0
    %820 = vrot.lane.b32.xlu0 %v816, 64
    %v821 = vpop.permute.xlu0 %820
    %v823 = vadd.f32 %v123, %v821
    %824 = vmatprep.subr.mxu0 0.0
    %825 = vmatpush1.msra.mxu0 0.0
    %826 = vmatprep.subr.mxu0 0.0
    %827 = vmatpush1.msra.mxu0 0.0
    %828 = vmatprep.subr.mxu0 0.0
    %829 = vmatpush1.msra.mxu0 0.0
    %830 = vmatprep.subr.mxu0 0.0
    %831 = vmatpush1.msra.mxu0 0.0
    %832 = vmatprep.subr.mxu0 0.0
    %833 = vmatpush1.msra.mxu0 0.0
    %834 = vmatprep.subr.mxu0 0.0
    %835 = vmatpush1.msra.mxu0 0.0
    %836 = vmatprep.subr.mxu0 0.0
    %837 = vmatpush1.msra.mxu0 0.0
    %838 = vmatprep.subr.mxu0 0.0
    %839 = vmatpush1.msra.mxu0 0.0
    %840 = vmatprep.subr.mxu0 0.0
    %841 = vmatpush1.msra.mxu0 0.0
    %842 = vmatprep.subr.mxu0 0.0
    %843 = vmatpush1.msra.mxu0 0.0
    %844 = vmatprep.subr.mxu0 0.0
    %845 = vmatpush1.msra.mxu0 0.0
    %846 = vmatprep.subr.mxu0 0.0
    %847 = vmatpush1.msra.mxu0 0.0
    %848 = vmatprep.subr.mxu0 0.0
    %849 = vmatpush1.msra.mxu0 %v105
    %850 = vmatprep.subr.mxu0 0.0
    %851 = vmatpush1.msra.mxu0 %v104
    %852 = vmatprep.subr.mxu0 0.0
    %853 = vmatpush1.msra.mxu0 %v103
    %854 = vmatprep.subr.mxu0 0.0
    %855 = vmatpush1.msra.mxu0 %v102
    %856 = vmatprep.subr.mxu0 0.0
    %857 = vmatpush2.msra.mxu0 0.0
    %858 = vmatprep.subr.mxu0 0.0
    %859 = vmatpush2.msra.mxu0 0.0
    %860 = vmatprep.subr.mxu0 0.0
    %861 = vmatpush2.msra.mxu0 0.0
    %862 = vmatprep.subr.mxu0 0.0
    %863 = vmatpush2.msra.mxu0 0.0
    %864 = vmatprep.subr.mxu0 0.0
    %865 = vmatpush2.msra.mxu0 0.0
    %866 = vmatprep.subr.mxu0 0.0
    %867 = vmatpush2.msra.mxu0 0.0
    %868 = vmatprep.subr.mxu0 0.0
    %869 = vmatpush2.msra.mxu0 0.0
    %870 = vmatprep.subr.mxu0 0.0
    %871 = vmatpush2.msra.mxu0 0.0
    %872 = vmatprep.subr.mxu0 0.0
    %873 = vmatpush2.msra.mxu0 0.0
    %874 = vmatprep.subr.mxu0 0.0
    %875 = vmatpush2.msra.mxu0 0.0
    %876 = vmatprep.subr.mxu0 0.0
    %877 = vmatpush2.msra.mxu0 0.0
    %878 = vmatprep.subr.mxu0 0.0
    %879 = vmatpush2.msra.mxu0 0.0
    %880 = vmatprep.subr.mxu0 0.0
    %881 = vmatpush2.msra.mxu0 0.0
    %882 = vmatprep.subr.mxu0 0.0
    %883 = vmatpush2.msra.mxu0 0.0
    %884 = vmatprep.subr.mxu0 0.0
    %885 = vmatpush2.msra.mxu0 0.0
    %886 = vmatprep.subr.mxu0 0.0
    %887 = vmatpush2.msra.mxu0 0.0
    %888 = vmatprep.mubr.f32.mxu0 0.0
    %889 = vmatmul.mubr.f32.gmra.mxu0 %v601
    %v890 = vpop.f32.mrf.mxu0
    %v891 = vadd.f32 0.0, %v890
    %v892 = vpop.f32.mrf.mxu0
    %893 = vdwg.mxu0
    %895 = vrot.lane.b32.xlu0 %v891, 96
    %v896 = vpop.permute.xlu0 %895
    %v898 = vadd.f32 %v123, %v896
    %v899 = vxor.u32 %v673, 2147483648
    %v900 = vmul.f32 %v899, 1.442695
    %v901 = vpow.pop %v900
    %v902 = vadd.f32 %v901, 1.0
    %v903 = vrcp.pop %v902
    %v904 = vmul.f32 1.0, %v903
    %v905 = vxor.u32 %v748, 2147483648
    %v906 = vmul.f32 %v905, 1.442695
    %v907 = vpow.pop %v906
    %v908 = vadd.f32 %v907, 1.0
    %v909 = vrcp.pop %v908
    %v910 = vmul.f32 1.0, %v909
    %v911 = vtanh.pop %v823
    %v912 = vxor.u32 %v898, 2147483648
    %v913 = vmul.f32 %v912, 1.442695
    %v914 = vpow.pop %v913
    %v915 = vadd.f32 %v914, 1.0
    %v916 = vrcp.pop %v915
    %v917 = vmul.f32 1.0, %v916
    %v918 = vmul.f32 %v910, 0.0
    %920 = vrot.lane.b32.xlu0 %v911, 64
    %v921 = vpop.permute.xlu0 %920
    %v923 = vmul.f32 %v904, %v921
    %925 = vrot.lane.b32.xlu0 %v923, 32
    %v926 = vpop.permute.xlu0 %925
    %v928 = vadd.f32 %v918, %v926
    %v929 = vtanh.pop %v928
    %931 = vrot.lane.b32.xlu0 %v929, 64
    %v932 = vpop.permute.xlu0 %931
    %v934 = vmul.f32 %v917, %v932
    %935 = vmatprep.subr.mxu0 0.0
    %936 = vmatpush1.msra.mxu0 0.0
    %937 = vmatprep.subr.mxu0 0.0
    %938 = vmatpush1.msra.mxu0 0.0
    %939 = vmatprep.subr.mxu0 0.0
    %940 = vmatpush1.msra.mxu0 0.0
    %941 = vmatprep.subr.mxu0 0.0
    %942 = vmatpush1.msra.mxu0 0.0
    %943 = vmatprep.subr.mxu0 0.0
    %944 = vmatpush1.msra.mxu0 0.0
    %945 = vmatprep.subr.mxu0 0.0
    %946 = vmatpush1.msra.mxu0 0.0
    %947 = vmatprep.subr.mxu0 0.0
    %948 = vmatpush1.msra.mxu0 0.0
    %949 = vmatprep.subr.mxu0 0.0
    %950 = vmatpush1.msra.mxu0 0.0
    %951 = vmatprep.subr.mxu0 0.0
    %952 = vmatpush1.msra.mxu0 0.0
    %953 = vmatprep.subr.mxu0 0.0
    %954 = vmatpush1.msra.mxu0 0.0
    %955 = vmatprep.subr.mxu0 0.0
    %956 = vmatpush1.msra.mxu0 0.0
    %957 = vmatprep.subr.mxu0 0.0
    %958 = vmatpush1.msra.mxu0 0.0
    %959 = vmatprep.subr.mxu0 0.0
    %960 = vmatpush1.msra.mxu0 %v77
    %961 = vmatprep.subr.mxu0 0.0
    %962 = vmatpush1.msra.mxu0 %v76
    %963 = vmatprep.subr.mxu0 0.0
    %964 = vmatpush1.msra.mxu0 %v75
    %965 = vmatprep.subr.mxu0 0.0
    %966 = vmatpush1.msra.mxu0 %v74
    %967 = vmatprep.subr.mxu0 0.0
    %968 = vmatpush2.msra.mxu0 0.0
    %969 = vmatprep.subr.mxu0 0.0
    %970 = vmatpush2.msra.mxu0 0.0
    %971 = vmatprep.subr.mxu0 0.0
    %972 = vmatpush2.msra.mxu0 0.0
    %973 = vmatprep.subr.mxu0 0.0
    %974 = vmatpush2.msra.mxu0 0.0
    %975 = vmatprep.subr.mxu0 0.0
    %976 = vmatpush2.msra.mxu0 0.0
    %977 = vmatprep.subr.mxu0 0.0
    %978 = vmatpush2.msra.mxu0 0.0
    %979 = vmatprep.subr.mxu0 0.0
    %980 = vmatpush2.msra.mxu0 0.0
    %981 = vmatprep.subr.mxu0 0.0
    %982 = vmatpush2.msra.mxu0 0.0
    %983 = vmatprep.subr.mxu0 0.0
    %984 = vmatpush2.msra.mxu0 0.0
    %985 = vmatprep.subr.mxu0 0.0
    %986 = vmatpush2.msra.mxu0 0.0
    %987 = vmatprep.subr.mxu0 0.0
    %988 = vmatpush2.msra.mxu0 0.0
    %989 = vmatprep.subr.mxu0 0.0
    %990 = vmatpush2.msra.mxu0 0.0
    %991 = vmatprep.subr.mxu0 0.0
    %992 = vmatpush2.msra.mxu0 0.0
    %993 = vmatprep.subr.mxu0 0.0
    %994 = vmatpush2.msra.mxu0 0.0
    %995 = vmatprep.subr.mxu0 0.0
    %996 = vmatpush2.msra.mxu0 0.0
    %997 = vmatprep.subr.mxu0 0.0
    %998 = vmatpush2.msra.mxu0 0.0
    %999 = vmatprep.mubr.f32.mxu0 0.0
    %1000 = vmatmul.mubr.f32.gmra.mxu0 %v601
    %v1001 = vpop.f32.mrf.mxu0
    %v1002 = vadd.f32 0.0, %v1001
    %v1003 = vpop.f32.mrf.mxu0
    %1004 = vdwg.mxu0
    %v1006 = vrot.slane %v1002, 7
    %v1008 = vadd.f32 %v353, %v1006
    %1009 = vmatprep.subr.mxu0 0.0
    %1010 = vmatpush1.msra.mxu0 0.0
    %1011 = vmatprep.subr.mxu0 0.0
    %1012 = vmatpush1.msra.mxu0 0.0
    %1013 = vmatprep.subr.mxu0 0.0
    %1014 = vmatpush1.msra.mxu0 0.0
    %1015 = vmatprep.subr.mxu0 0.0
    %1016 = vmatpush1.msra.mxu0 0.0
    %1017 = vmatprep.subr.mxu0 0.0
    %1018 = vmatpush1.msra.mxu0 0.0
    %1019 = vmatprep.subr.mxu0 0.0
    %1020 = vmatpush1.msra.mxu0 0.0
    %1021 = vmatprep.subr.mxu0 0.0
    %1022 = vmatpush1.msra.mxu0 0.0
    %1023 = vmatprep.subr.mxu0 0.0
    %1024 = vmatpush1.msra.mxu0 0.0
    %1025 = vmatprep.subr.mxu0 0.0
    %1026 = vmatpush1.msra.mxu0 0.0
    %1027 = vmatprep.subr.mxu0 0.0
    %1028 = vmatpush1.msra.mxu0 0.0
    %1029 = vmatprep.subr.mxu0 0.0
    %1030 = vmatpush1.msra.mxu0 0.0
    %1031 = vmatprep.subr.mxu0 0.0
    %1032 = vmatpush1.msra.mxu0 0.0
    %1033 = vmatprep.subr.mxu0 0.0
    %1034 = vmatpush1.msra.mxu0 %v81
    %1035 = vmatprep.subr.mxu0 0.0
    %1036 = vmatpush1.msra.mxu0 %v80
    %1037 = vmatprep.subr.mxu0 0.0
    %1038 = vmatpush1.msra.mxu0 %v79
    %1039 = vmatprep.subr.mxu0 0.0
    %1040 = vmatpush1.msra.mxu0 %v78
    %1041 = vmatprep.subr.mxu0 0.0
    %1042 = vmatpush2.msra.mxu0 0.0
    %1043 = vmatprep.subr.mxu0 0.0
    %1044 = vmatpush2.msra.mxu0 0.0
    %1045 = vmatprep.subr.mxu0 0.0
    %1046 = vmatpush2.msra.mxu0 0.0
    %1047 = vmatprep.subr.mxu0 0.0
    %1048 = vmatpush2.msra.mxu0 0.0
    %1049 = vmatprep.subr.mxu0 0.0
    %1050 = vmatpush2.msra.mxu0 0.0
    %1051 = vmatprep.subr.mxu0 0.0
    %1052 = vmatpush2.msra.mxu0 0.0
    %1053 = vmatprep.subr.mxu0 0.0
    %1054 = vmatpush2.msra.mxu0 0.0
    %1055 = vmatprep.subr.mxu0 0.0
    %1056 = vmatpush2.msra.mxu0 0.0
    %1057 = vmatprep.subr.mxu0 0.0
    %1058 = vmatpush2.msra.mxu0 0.0
    %1059 = vmatprep.subr.mxu0 0.0
    %1060 = vmatpush2.msra.mxu0 0.0
    %1061 = vmatprep.subr.mxu0 0.0
    %1062 = vmatpush2.msra.mxu0 0.0
    %1063 = vmatprep.subr.mxu0 0.0
    %1064 = vmatpush2.msra.mxu0 0.0
    %1065 = vmatprep.subr.mxu0 0.0
    %1066 = vmatpush2.msra.mxu0 0.0
    %1067 = vmatprep.subr.mxu0 0.0
    %1068 = vmatpush2.msra.mxu0 0.0
    %1069 = vmatprep.subr.mxu0 0.0
    %1070 = vmatpush2.msra.mxu0 0.0
    %1071 = vmatprep.subr.mxu0 0.0
    %1072 = vmatpush2.msra.mxu0 0.0
    %1073 = vmatprep.mubr.f32.mxu0 0.0
    %1074 = vmatmul.mubr.f32.gmra.mxu0 %v601
    %v1075 = vpop.f32.mrf.mxu0
    %v1076 = vadd.f32 0.0, %v1075
    %v1077 = vpop.f32.mrf.mxu0
    %1078 = vdwg.mxu0
    %v1080 = vrot.slane %v1076, 7
    %v1082 = vadd.f32 %v427, %v1080
    %1083 = vmatprep.subr.mxu0 0.0
    %1084 = vmatpush1.msra.mxu0 0.0
    %1085 = vmatprep.subr.mxu0 0.0
    %1086 = vmatpush1.msra.mxu0 0.0
    %1087 = vmatprep.subr.mxu0 0.0
    %1088 = vmatpush1.msra.mxu0 0.0
    %1089 = vmatprep.subr.mxu0 0.0
    %1090 = vmatpush1.msra.mxu0 0.0
    %1091 = vmatprep.subr.mxu0 0.0
    %1092 = vmatpush1.msra.mxu0 0.0
    %1093 = vmatprep.subr.mxu0 0.0
    %1094 = vmatpush1.msra.mxu0 0.0
    %1095 = vmatprep.subr.mxu0 0.0
    %1096 = vmatpush1.msra.mxu0 0.0
    %1097 = vmatprep.subr.mxu0 0.0
    %1098 = vmatpush1.msra.mxu0 0.0
    %1099 = vmatprep.subr.mxu0 0.0
    %1100 = vmatpush1.msra.mxu0 0.0
    %1101 = vmatprep.subr.mxu0 0.0
    %1102 = vmatpush1.msra.mxu0 0.0
    %1103 = vmatprep.subr.mxu0 0.0
    %1104 = vmatpush1.msra.mxu0 0.0
    %1105 = vmatprep.subr.mxu0 0.0
    %1106 = vmatpush1.msra.mxu0 0.0
    %1107 = vmatprep.subr.mxu0 0.0
    %1108 = vmatpush1.msra.mxu0 %v85
    %1109 = vmatprep.subr.mxu0 0.0
    %1110 = vmatpush1.msra.mxu0 %v84
    %1111 = vmatprep.subr.mxu0 0.0
    %1112 = vmatpush1.msra.mxu0 %v83
    %1113 = vmatprep.subr.mxu0 0.0
    %1114 = vmatpush1.msra.mxu0 %v82
    %1115 = vmatprep.subr.mxu0 0.0
    %1116 = vmatpush2.msra.mxu0 0.0
    %1117 = vmatprep.subr.mxu0 0.0
    %1118 = vmatpush2.msra.mxu0 0.0
    %1119 = vmatprep.subr.mxu0 0.0
    %1120 = vmatpush2.msra.mxu0 0.0
    %1121 = vmatprep.subr.mxu0 0.0
    %1122 = vmatpush2.msra.mxu0 0.0
    %1123 = vmatprep.subr.mxu0 0.0
    %1124 = vmatpush2.msra.mxu0 0.0
    %1125 = vmatprep.subr.mxu0 0.0
    %1126 = vmatpush2.msra.mxu0 0.0
    %1127 = vmatprep.subr.mxu0 0.0
    %1128 = vmatpush2.msra.mxu0 0.0
    %1129 = vmatprep.subr.mxu0 0.0
    %1130 = vmatpush2.msra.mxu0 0.0
    %1131 = vmatprep.subr.mxu0 0.0
    %1132 = vmatpush2.msra.mxu0 0.0
    %1133 = vmatprep.subr.mxu0 0.0
    %1134 = vmatpush2.msra.mxu0 0.0
    %1135 = vmatprep.subr.mxu0 0.0
    %1136 = vmatpush2.msra.mxu0 0.0
    %1137 = vmatprep.subr.mxu0 0.0
    %1138 = vmatpush2.msra.mxu0 0.0
    %1139 = vmatprep.subr.mxu0 0.0
    %1140 = vmatpush2.msra.mxu0 0.0
    %1141 = vmatprep.subr.mxu0 0.0
    %1142 = vmatpush2.msra.mxu0 0.0
    %1143 = vmatprep.subr.mxu0 0.0
    %1144 = vmatpush2.msra.mxu0 0.0
    %1145 = vmatprep.subr.mxu0 0.0
    %1146 = vmatpush2.msra.mxu0 0.0
    %1147 = vmatprep.mubr.f32.mxu0 0.0
    %1148 = vmatmul.mubr.f32.gmra.mxu0 %v601
    %v1149 = vpop.f32.mrf.mxu0
    %v1150 = vadd.f32 0.0, %v1149
    %v1151 = vpop.f32.mrf.mxu0
    %1152 = vdwg.mxu0
    %v1154 = vrot.slane %v1150, 7
    %v1156 = vadd.f32 %v500, %v1154
    %1157 = vmatprep.subr.mxu0 0.0
    %1158 = vmatpush1.msra.mxu0 0.0
    %1159 = vmatprep.subr.mxu0 0.0
    %1160 = vmatpush1.msra.mxu0 0.0
    %1161 = vmatprep.subr.mxu0 0.0
    %1162 = vmatpush1.msra.mxu0 0.0
    %1163 = vmatprep.subr.mxu0 0.0
    %1164 = vmatpush1.msra.mxu0 0.0
    %1165 = vmatprep.subr.mxu0 0.0
    %1166 = vmatpush1.msra.mxu0 0.0
    %1167 = vmatprep.subr.mxu0 0.0
    %1168 = vmatpush1.msra.mxu0 0.0
    %1169 = vmatprep.subr.mxu0 0.0
    %1170 = vmatpush1.msra.mxu0 0.0
    %1171 = vmatprep.subr.mxu0 0.0
    %1172 = vmatpush1.msra.mxu0 0.0
    %1173 = vmatprep.subr.mxu0 0.0
    %1174 = vmatpush1.msra.mxu0 0.0
    %1175 = vmatprep.subr.mxu0 0.0
    %1176 = vmatpush1.msra.mxu0 0.0
    %1177 = vmatprep.subr.mxu0 0.0
    %1178 = vmatpush1.msra.mxu0 0.0
    %1179 = vmatprep.subr.mxu0 0.0
    %1180 = vmatpush1.msra.mxu0 0.0
    %1181 = vmatprep.subr.mxu0 0.0
    %1182 = vmatpush1.msra.mxu0 %v89
    %1183 = vmatprep.subr.mxu0 0.0
    %1184 = vmatpush1.msra.mxu0 %v88
    %1185 = vmatprep.subr.mxu0 0.0
    %1186 = vmatpush1.msra.mxu0 %v87
    %1187 = vmatprep.subr.mxu0 0.0
    %1188 = vmatpush1.msra.mxu0 %v86
    %1189 = vmatprep.subr.mxu0 0.0
    %1190 = vmatpush2.msra.mxu0 0.0
    %1191 = vmatprep.subr.mxu0 0.0
    %1192 = vmatpush2.msra.mxu0 0.0
    %1193 = vmatprep.subr.mxu0 0.0
    %1194 = vmatpush2.msra.mxu0 0.0
    %1195 = vmatprep.subr.mxu0 0.0
    %1196 = vmatpush2.msra.mxu0 0.0
    %1197 = vmatprep.subr.mxu0 0.0
    %1198 = vmatpush2.msra.mxu0 0.0
    %1199 = vmatprep.subr.mxu0 0.0
    %1200 = vmatpush2.msra.mxu0 0.0
    %1201 = vmatprep.subr.mxu0 0.0
    %1202 = vmatpush2.msra.mxu0 0.0
    %1203 = vmatprep.subr.mxu0 0.0
    %1204 = vmatpush2.msra.mxu0 0.0
    %1205 = vmatprep.subr.mxu0 0.0
    %1206 = vmatpush2.msra.mxu0 0.0
    %1207 = vmatprep.subr.mxu0 0.0
    %1208 = vmatpush2.msra.mxu0 0.0
    %1209 = vmatprep.subr.mxu0 0.0
    %1210 = vmatpush2.msra.mxu0 0.0
    %1211 = vmatprep.subr.mxu0 0.0
    %1212 = vmatpush2.msra.mxu0 0.0
    %1213 = vmatprep.subr.mxu0 0.0
    %1214 = vmatpush2.msra.mxu0 0.0
    %1215 = vmatprep.subr.mxu0 0.0
    %1216 = vmatpush2.msra.mxu0 0.0
    %1217 = vmatprep.subr.mxu0 0.0
    %1218 = vmatpush2.msra.mxu0 0.0
    %1219 = vmatprep.subr.mxu0 0.0
    %1220 = vmatpush2.msra.mxu0 0.0
    %1221 = vmatprep.mubr.f32.mxu0 0.0
    %1222 = vmatmul.mubr.f32.gmra.mxu0 %v601
    %v1223 = vpop.f32.mrf.mxu0
    %v1224 = vadd.f32 0.0, %v1223
    %v1225 = vpop.f32.mrf.mxu0
    %1226 = vdwg.mxu0
    %v1228 = vrot.slane %v1224, 7
    %v1230 = vadd.f32 %v573, %v1228
    %v1231 = vxor.u32 %v1008, 2147483648
    %v1232 = vmul.f32 %v1231, 1.442695
    %v1233 = vpow.pop %v1232
    %v1234 = vadd.f32 %v1233, 1.0
    %v1235 = vrcp.pop %v1234
    %v1236 = vmul.f32 1.0, %v1235
    %v1237 = vxor.u32 %v1082, 2147483648
    %v1238 = vmul.f32 %v1237, 1.442695
    %v1239 = vpow.pop %v1238
    %v1240 = vadd.f32 %v1239, 1.0
    %v1241 = vrcp.pop %v1240
    %v1242 = vmul.f32 1.0, %v1241
    %v1243 = vtanh.pop %v1156
    %v1244 = vxor.u32 %v1230, 2147483648
    %v1245 = vmul.f32 %v1244, 1.442695
    %v1246 = vpow.pop %v1245
    %v1247 = vadd.f32 %v1246, 1.0
    %v1248 = vrcp.pop %v1247
    %v1249 = vmul.f32 1.0, %v1248
    %v1251 = vrot.slane %v597, 7
    %v1253 = vmul.f32 %v1242, %v1251
    %v1254 = vmul.f32 %v1236, %v1243
    %v1255 = vadd.f32 %v1253, %v1254
    %v1256 = vtanh.pop %v1255
    %v1257 = vmul.f32 %v1249, %v1256
    %v1259 = vrot.slane %v1257, 1
    %v1260 = vsel %vm200, %v1259, 0
    %1262 = vmatprep.subr.mxu0 0.0
    %1263 = vmatpush1.msra.mxu0 0.0
    %1264 = vmatprep.subr.mxu0 0.0
    %1265 = vmatpush1.msra.mxu0 0.0
    %1266 = vmatprep.subr.mxu0 0.0
    %1267 = vmatpush1.msra.mxu0 0.0
    %1268 = vmatprep.subr.mxu0 0.0
    %1269 = vmatpush1.msra.mxu0 0.0
    %1270 = vmatprep.subr.mxu0 0.0
    %1271 = vmatpush1.msra.mxu0 0.0
    %1272 = vmatprep.subr.mxu0 0.0
    %1273 = vmatpush1.msra.mxu0 0.0
    %1274 = vmatprep.subr.mxu0 0.0
    %1275 = vmatpush1.msra.mxu0 0.0
    %1276 = vmatprep.subr.mxu0 0.0
    %1277 = vmatpush1.msra.mxu0 0.0
    %1278 = vmatprep.subr.mxu0 0.0
    %1279 = vmatpush1.msra.mxu0 0.0
    %1280 = vmatprep.subr.mxu0 0.0
    %1281 = vmatpush1.msra.mxu0 0.0
    %1282 = vmatprep.subr.mxu0 0.0
    %1283 = vmatpush1.msra.mxu0 0.0
    %1284 = vmatprep.subr.mxu0 0.0
    %1285 = vmatpush1.msra.mxu0 0.0
    %1286 = vmatprep.subr.mxu0 0.0
    %1287 = vmatpush1.msra.mxu0 %v93
    %1288 = vmatprep.subr.mxu0 0.0
    %1289 = vmatpush1.msra.mxu0 %v92
    %1290 = vmatprep.subr.mxu0 0.0
    %1291 = vmatpush1.msra.mxu0 %v91
    %1292 = vmatprep.subr.mxu0 0.0
    %1293 = vmatpush1.msra.mxu0 %v90
    %1294 = vmatprep.subr.mxu0 0.0
    %1295 = vmatpush2.msra.mxu0 0.0
    %1296 = vmatprep.subr.mxu0 0.0
    %1297 = vmatpush2.msra.mxu0 0.0
    %1298 = vmatprep.subr.mxu0 0.0
    %1299 = vmatpush2.msra.mxu0 0.0
    %1300 = vmatprep.subr.mxu0 0.0
    %1301 = vmatpush2.msra.mxu0 0.0
    %1302 = vmatprep.subr.mxu0 0.0
    %1303 = vmatpush2.msra.mxu0 0.0
    %1304 = vmatprep.subr.mxu0 0.0
    %1305 = vmatpush2.msra.mxu0 0.0
    %1306 = vmatprep.subr.mxu0 0.0
    %1307 = vmatpush2.msra.mxu0 0.0
    %1308 = vmatprep.subr.mxu0 0.0
    %1309 = vmatpush2.msra.mxu0 0.0
    %1310 = vmatprep.subr.mxu0 0.0
    %1311 = vmatpush2.msra.mxu0 0.0
    %1312 = vmatprep.subr.mxu0 0.0
    %1313 = vmatpush2.msra.mxu0 0.0
    %1314 = vmatprep.subr.mxu0 0.0
    %1315 = vmatpush2.msra.mxu0 0.0
    %1316 = vmatprep.subr.mxu0 0.0
    %1317 = vmatpush2.msra.mxu0 0.0
    %1318 = vmatprep.subr.mxu0 0.0
    %1319 = vmatpush2.msra.mxu0 0.0
    %1320 = vmatprep.subr.mxu0 0.0
    %1321 = vmatpush2.msra.mxu0 0.0
    %1322 = vmatprep.subr.mxu0 0.0
    %1323 = vmatpush2.msra.mxu0 0.0
    %1324 = vmatprep.subr.mxu0 0.0
    %1325 = vmatpush2.msra.mxu0 0.0
    %1326 = vmatprep.mubr.f32.mxu0 0.0
    %1327 = vmatmul.mubr.f32.gmra.mxu0 %v1260
    %v1328 = vpop.f32.mrf.mxu0
    %v1329 = vadd.f32 0.0, %v1328
    %v1330 = vpop.f32.mrf.mxu0
    %1331 = vdwg.mxu0
    %v1332 = vadd.f32 %v123, %v1329
    %1334 = vrot.lane.b32.xlu0 %v934, 32
    %v1335 = vpop.permute.xlu0 %1334
    %v1336 = vsel %vm200, %v1335, 0
    %1338 = vmatprep.subr.mxu0 0.0
    %1339 = vmatpush1.msra.mxu0 0.0
    %1340 = vmatprep.subr.mxu0 0.0
    %1341 = vmatpush1.msra.mxu0 0.0
    %1342 = vmatprep.subr.mxu0 0.0
    %1343 = vmatpush1.msra.mxu0 0.0
    %1344 = vmatprep.subr.mxu0 0.0
    %1345 = vmatpush1.msra.mxu0 0.0
    %1346 = vmatprep.subr.mxu0 0.0
    %1347 = vmatpush1.msra.mxu0 0.0
    %1348 = vmatprep.subr.mxu0 0.0
    %1349 = vmatpush1.msra.mxu0 0.0
    %1350 = vmatprep.subr.mxu0 0.0
    %1351 = vmatpush1.msra.mxu0 0.0
    %1352 = vmatprep.subr.mxu0 0.0
    %1353 = vmatpush1.msra.mxu0 0.0
    %1354 = vmatprep.subr.mxu0 0.0
    %1355 = vmatpush1.msra.mxu0 0.0
    %1356 = vmatprep.subr.mxu0 0.0
    %1357 = vmatpush1.msra.mxu0 0.0
    %1358 = vmatprep.subr.mxu0 0.0
    %1359 = vmatpush1.msra.mxu0 0.0
    %1360 = vmatprep.subr.mxu0 0.0
    %1361 = vmatpush1.msra.mxu0 0.0
    %1362 = vmatprep.subr.mxu0 0.0
    %1363 = vmatpush1.msra.mxu0 %v109
    %1364 = vmatprep.subr.mxu0 0.0
    %1365 = vmatpush1.msra.mxu0 %v108
    %1366 = vmatprep.subr.mxu0 0.0
    %1367 = vmatpush1.msra.mxu0 %v107
    %1368 = vmatprep.subr.mxu0 0.0
    %1369 = vmatpush1.msra.mxu0 %v106
    %1370 = vmatprep.subr.mxu0 0.0
    %1371 = vmatpush2.msra.mxu0 0.0
    %1372 = vmatprep.subr.mxu0 0.0
    %1373 = vmatpush2.msra.mxu0 0.0
    %1374 = vmatprep.subr.mxu0 0.0
    %1375 = vmatpush2.msra.mxu0 0.0
    %1376 = vmatprep.subr.mxu0 0.0
    %1377 = vmatpush2.msra.mxu0 0.0
    %1378 = vmatprep.subr.mxu0 0.0
    %1379 = vmatpush2.msra.mxu0 0.0
    %1380 = vmatprep.subr.mxu0 0.0
    %1381 = vmatpush2.msra.mxu0 0.0
    %1382 = vmatprep.subr.mxu0 0.0
    %1383 = vmatpush2.msra.mxu0 0.0
    %1384 = vmatprep.subr.mxu0 0.0
    %1385 = vmatpush2.msra.mxu0 0.0
    %1386 = vmatprep.subr.mxu0 0.0
    %1387 = vmatpush2.msra.mxu0 0.0
    %1388 = vmatprep.subr.mxu0 0.0
    %1389 = vmatpush2.msra.mxu0 0.0
    %1390 = vmatprep.subr.mxu0 0.0
    %1391 = vmatpush2.msra.mxu0 0.0
    %1392 = vmatprep.subr.mxu0 0.0
    %1393 = vmatpush2.msra.mxu0 0.0
    %1394 = vmatprep.subr.mxu0 0.0
    %1395 = vmatpush2.msra.mxu0 0.0
    %1396 = vmatprep.subr.mxu0 0.0
    %1397 = vmatpush2.msra.mxu0 0.0
    %1398 = vmatprep.subr.mxu0 0.0
    %1399 = vmatpush2.msra.mxu0 0.0
    %1400 = vmatprep.subr.mxu0 0.0
    %1401 = vmatpush2.msra.mxu0 0.0
    %1402 = vmatprep.mubr.f32.mxu0 0.0
    %1403 = vmatmul.mubr.f32.gmra.mxu0 %v1336
    %v1404 = vpop.f32.mrf.mxu0
    %v1405 = vadd.f32 0.0, %v1404
    %v1406 = vpop.f32.mrf.mxu0
    %1407 = vdwg.mxu0
    %v1408 = vadd.f32 %v1332, %v1405
    %1409 = vmatprep.subr.mxu0 0.0
    %1410 = vmatpush1.msra.mxu0 0.0
    %1411 = vmatprep.subr.mxu0 0.0
    %1412 = vmatpush1.msra.mxu0 0.0
    %1413 = vmatprep.subr.mxu0 0.0
    %1414 = vmatpush1.msra.mxu0 0.0
    %1415 = vmatprep.subr.mxu0 0.0
    %1416 = vmatpush1.msra.mxu0 0.0
    %1417 = vmatprep.subr.mxu0 0.0
    %1418 = vmatpush1.msra.mxu0 0.0
    %1419 = vmatprep.subr.mxu0 0.0
    %1420 = vmatpush1.msra.mxu0 0.0
    %1421 = vmatprep.subr.mxu0 0.0
    %1422 = vmatpush1.msra.mxu0 0.0
    %1423 = vmatprep.subr.mxu0 0.0
    %1424 = vmatpush1.msra.mxu0 0.0
    %1425 = vmatprep.subr.mxu0 0.0
    %1426 = vmatpush1.msra.mxu0 0.0
    %1427 = vmatprep.subr.mxu0 0.0
    %1428 = vmatpush1.msra.mxu0 0.0
    %1429 = vmatprep.subr.mxu0 0.0
    %1430 = vmatpush1.msra.mxu0 0.0
    %1431 = vmatprep.subr.mxu0 0.0
    %1432 = vmatpush1.msra.mxu0 0.0
    %1433 = vmatprep.subr.mxu0 0.0
    %1434 = vmatpush1.msra.mxu0 %v97
    %1435 = vmatprep.subr.mxu0 0.0
    %1436 = vmatpush1.msra.mxu0 %v96
    %1437 = vmatprep.subr.mxu0 0.0
    %1438 = vmatpush1.msra.mxu0 %v95
    %1439 = vmatprep.subr.mxu0 0.0
    %1440 = vmatpush1.msra.mxu0 %v94
    %1441 = vmatprep.subr.mxu0 0.0
    %1442 = vmatpush2.msra.mxu0 0.0
    %1443 = vmatprep.subr.mxu0 0.0
    %1444 = vmatpush2.msra.mxu0 0.0
    %1445 = vmatprep.subr.mxu0 0.0
    %1446 = vmatpush2.msra.mxu0 0.0
    %1447 = vmatprep.subr.mxu0 0.0
    %1448 = vmatpush2.msra.mxu0 0.0
    %1449 = vmatprep.subr.mxu0 0.0
    %1450 = vmatpush2.msra.mxu0 0.0
    %1451 = vmatprep.subr.mxu0 0.0
    %1452 = vmatpush2.msra.mxu0 0.0
    %1453 = vmatprep.subr.mxu0 0.0
    %1454 = vmatpush2.msra.mxu0 0.0
    %1455 = vmatprep.subr.mxu0 0.0
    %1456 = vmatpush2.msra.mxu0 0.0
    %1457 = vmatprep.subr.mxu0 0.0
    %1458 = vmatpush2.msra.mxu0 0.0
    %1459 = vmatprep.subr.mxu0 0.0
    %1460 = vmatpush2.msra.mxu0 0.0
    %1461 = vmatprep.subr.mxu0 0.0
    %1462 = vmatpush2.msra.mxu0 0.0
    %1463 = vmatprep.subr.mxu0 0.0
    %1464 = vmatpush2.msra.mxu0 0.0
    %1465 = vmatprep.subr.mxu0 0.0
    %1466 = vmatpush2.msra.mxu0 0.0
    %1467 = vmatprep.subr.mxu0 0.0
    %1468 = vmatpush2.msra.mxu0 0.0
    %1469 = vmatprep.subr.mxu0 0.0
    %1470 = vmatpush2.msra.mxu0 0.0
    %1471 = vmatprep.subr.mxu0 0.0
    %1472 = vmatpush2.msra.mxu0 0.0
    %1473 = vmatprep.mubr.f32.mxu0 0.0
    %1474 = vmatmul.mubr.f32.gmra.mxu0 %v1260
    %v1475 = vpop.f32.mrf.mxu0
    %v1476 = vadd.f32 0.0, %v1475
    %v1477 = vpop.f32.mrf.mxu0
    %1478 = vdwg.mxu0
    %1480 = vrot.lane.b32.xlu0 %v1476, 32
    %v1481 = vpop.permute.xlu0 %1480
    %v1483 = vadd.f32 %v123, %v1481
    %1484 = vmatprep.subr.mxu0 0.0
    %1485 = vmatpush1.msra.mxu0 0.0
    %1486 = vmatprep.subr.mxu0 0.0
    %1487 = vmatpush1.msra.mxu0 0.0
    %1488 = vmatprep.subr.mxu0 0.0
    %1489 = vmatpush1.msra.mxu0 0.0
    %1490 = vmatprep.subr.mxu0 0.0
    %1491 = vmatpush1.msra.mxu0 0.0
    %1492 = vmatprep.subr.mxu0 0.0
    %1493 = vmatpush1.msra.mxu0 0.0
    %1494 = vmatprep.subr.mxu0 0.0
    %1495 = vmatpush1.msra.mxu0 0.0
    %1496 = vmatprep.subr.mxu0 0.0
    %1497 = vmatpush1.msra.mxu0 0.0
    %1498 = vmatprep.subr.mxu0 0.0
    %1499 = vmatpush1.msra.mxu0 0.0
    %1500 = vmatprep.subr.mxu0 0.0
    %1501 = vmatpush1.msra.mxu0 0.0
    %1502 = vmatprep.subr.mxu0 0.0
    %1503 = vmatpush1.msra.mxu0 0.0
    %1504 = vmatprep.subr.mxu0 0.0
    %1505 = vmatpush1.msra.mxu0 0.0
    %1506 = vmatprep.subr.mxu0 0.0
    %1507 = vmatpush1.msra.mxu0 0.0
    %1508 = vmatprep.subr.mxu0 0.0
    %1509 = vmatpush1.msra.mxu0 %v113
    %1510 = vmatprep.subr.mxu0 0.0
    %1511 = vmatpush1.msra.mxu0 %v112
    %1512 = vmatprep.subr.mxu0 0.0
    %1513 = vmatpush1.msra.mxu0 %v111
    %1514 = vmatprep.subr.mxu0 0.0
    %1515 = vmatpush1.msra.mxu0 %v110
    %1516 = vmatprep.subr.mxu0 0.0
    %1517 = vmatpush2.msra.mxu0 0.0
    %1518 = vmatprep.subr.mxu0 0.0
    %1519 = vmatpush2.msra.mxu0 0.0
    %1520 = vmatprep.subr.mxu0 0.0
    %1521 = vmatpush2.msra.mxu0 0.0
    %1522 = vmatprep.subr.mxu0 0.0
    %1523 = vmatpush2.msra.mxu0 0.0
    %1524 = vmatprep.subr.mxu0 0.0
    %1525 = vmatpush2.msra.mxu0 0.0
    %1526 = vmatprep.subr.mxu0 0.0
    %1527 = vmatpush2.msra.mxu0 0.0
    %1528 = vmatprep.subr.mxu0 0.0
    %1529 = vmatpush2.msra.mxu0 0.0
    %1530 = vmatprep.subr.mxu0 0.0
    %1531 = vmatpush2.msra.mxu0 0.0
    %1532 = vmatprep.subr.mxu0 0.0
    %1533 = vmatpush2.msra.mxu0 0.0
    %1534 = vmatprep.subr.mxu0 0.0
    %1535 = vmatpush2.msra.mxu0 0.0
    %1536 = vmatprep.subr.mxu0 0.0
    %1537 = vmatpush2.msra.mxu0 0.0
    %1538 = vmatprep.subr.mxu0 0.0
    %1539 = vmatpush2.msra.mxu0 0.0
    %1540 = vmatprep.subr.mxu0 0.0
    %1541 = vmatpush2.msra.mxu0 0.0
    %1542 = vmatprep.subr.mxu0 0.0
    %1543 = vmatpush2.msra.mxu0 0.0
    %1544 = vmatprep.subr.mxu0 0.0
    %1545 = vmatpush2.msra.mxu0 0.0
    %1546 = vmatprep.subr.mxu0 0.0
    %1547 = vmatpush2.msra.mxu0 0.0
    %1548 = vmatprep.mubr.f32.mxu0 0.0
    %1549 = vmatmul.mubr.f32.gmra.mxu0 %v1336
    %v1550 = vpop.f32.mrf.mxu0
    %v1551 = vadd.f32 0.0, %v1550
    %v1552 = vpop.f32.mrf.mxu0
    %1553 = vdwg.mxu0
    %1555 = vrot.lane.b32.xlu0 %v1551, 32
    %v1556 = vpop.permute.xlu0 %1555
    %v1558 = vadd.f32 %v1483, %v1556
    %1559 = vmatprep.subr.mxu0 0.0
    %1560 = vmatpush1.msra.mxu0 0.0
    %1561 = vmatprep.subr.mxu0 0.0
    %1562 = vmatpush1.msra.mxu0 0.0
    %1563 = vmatprep.subr.mxu0 0.0
    %1564 = vmatpush1.msra.mxu0 0.0
    %1565 = vmatprep.subr.mxu0 0.0
    %1566 = vmatpush1.msra.mxu0 0.0
    %1567 = vmatprep.subr.mxu0 0.0
    %1568 = vmatpush1.msra.mxu0 0.0
    %1569 = vmatprep.subr.mxu0 0.0
    %1570 = vmatpush1.msra.mxu0 0.0
    %1571 = vmatprep.subr.mxu0 0.0
    %1572 = vmatpush1.msra.mxu0 0.0
    %1573 = vmatprep.subr.mxu0 0.0
    %1574 = vmatpush1.msra.mxu0 0.0
    %1575 = vmatprep.subr.mxu0 0.0
    %1576 = vmatpush1.msra.mxu0 0.0
    %1577 = vmatprep.subr.mxu0 0.0
    %1578 = vmatpush1.msra.mxu0 0.0
    %1579 = vmatprep.subr.mxu0 0.0
    %1580 = vmatpush1.msra.mxu0 0.0
    %1581 = vmatprep.subr.mxu0 0.0
    %1582 = vmatpush1.msra.mxu0 0.0
    %1583 = vmatprep.subr.mxu0 0.0
    %1584 = vmatpush1.msra.mxu0 %v101
    %1585 = vmatprep.subr.mxu0 0.0
    %1586 = vmatpush1.msra.mxu0 %v100
    %1587 = vmatprep.subr.mxu0 0.0
    %1588 = vmatpush1.msra.mxu0 %v99
    %1589 = vmatprep.subr.mxu0 0.0
    %1590 = vmatpush1.msra.mxu0 %v98
    %1591 = vmatprep.subr.mxu0 0.0
    %1592 = vmatpush2.msra.mxu0 0.0
    %1593 = vmatprep.subr.mxu0 0.0
    %1594 = vmatpush2.msra.mxu0 0.0
    %1595 = vmatprep.subr.mxu0 0.0
    %1596 = vmatpush2.msra.mxu0 0.0
    %1597 = vmatprep.subr.mxu0 0.0
    %1598 = vmatpush2.msra.mxu0 0.0
    %1599 = vmatprep.subr.mxu0 0.0
    %1600 = vmatpush2.msra.mxu0 0.0
    %1601 = vmatprep.subr.mxu0 0.0
    %1602 = vmatpush2.msra.mxu0 0.0
    %1603 = vmatprep.subr.mxu0 0.0
    %1604 = vmatpush2.msra.mxu0 0.0
    %1605 = vmatprep.subr.mxu0 0.0
    %1606 = vmatpush2.msra.mxu0 0.0
    %1607 = vmatprep.subr.mxu0 0.0
    %1608 = vmatpush2.msra.mxu0 0.0
    %1609 = vmatprep.subr.mxu0 0.0
    %1610 = vmatpush2.msra.mxu0 0.0
    %1611 = vmatprep.subr.mxu0 0.0
    %1612 = vmatpush2.msra.mxu0 0.0
    %1613 = vmatprep.subr.mxu0 0.0
    %1614 = vmatpush2.msra.mxu0 0.0
    %1615 = vmatprep.subr.mxu0 0.0
    %1616 = vmatpush2.msra.mxu0 0.0
    %1617 = vmatprep.subr.mxu0 0.0
    %1618 = vmatpush2.msra.mxu0 0.0
    %1619 = vmatprep.subr.mxu0 0.0
    %1620 = vmatpush2.msra.mxu0 0.0
    %1621 = vmatprep.subr.mxu0 0.0
    %1622 = vmatpush2.msra.mxu0 0.0
    %1623 = vmatprep.mubr.f32.mxu0 0.0
    %1624 = vmatmul.mubr.f32.gmra.mxu0 %v1260
    %v1625 = vpop.f32.mrf.mxu0
    %v1626 = vadd.f32 0.0, %v1625
    %v1627 = vpop.f32.mrf.mxu0
    %1628 = vdwg.mxu0
    %1630 = vrot.lane.b32.xlu0 %v1626, 64
    %v1631 = vpop.permute.xlu0 %1630
    %v1633 = vadd.f32 %v123, %v1631
    %1634 = vmatprep.subr.mxu0 0.0
    %1635 = vmatpush1.msra.mxu0 0.0
    %1636 = vmatprep.subr.mxu0 0.0
    %1637 = vmatpush1.msra.mxu0 0.0
    %1638 = vmatprep.subr.mxu0 0.0
    %1639 = vmatpush1.msra.mxu0 0.0
    %1640 = vmatprep.subr.mxu0 0.0
    %1641 = vmatpush1.msra.mxu0 0.0
    %1642 = vmatprep.subr.mxu0 0.0
    %1643 = vmatpush1.msra.mxu0 0.0
    %1644 = vmatprep.subr.mxu0 0.0
    %1645 = vmatpush1.msra.mxu0 0.0
    %1646 = vmatprep.subr.mxu0 0.0
    %1647 = vmatpush1.msra.mxu0 0.0
    %1648 = vmatprep.subr.mxu0 0.0
    %1649 = vmatpush1.msra.mxu0 0.0
    %1650 = vmatprep.subr.mxu0 0.0
    %1651 = vmatpush1.msra.mxu0 0.0
    %1652 = vmatprep.subr.mxu0 0.0
    %1653 = vmatpush1.msra.mxu0 0.0
    %1654 = vmatprep.subr.mxu0 0.0
    %1655 = vmatpush1.msra.mxu0 0.0
    %1656 = vmatprep.subr.mxu0 0.0
    %1657 = vmatpush1.msra.mxu0 0.0
    %1658 = vmatprep.subr.mxu0 0.0
    %1659 = vmatpush1.msra.mxu0 %v117
    %1660 = vmatprep.subr.mxu0 0.0
    %1661 = vmatpush1.msra.mxu0 %v116
    %1662 = vmatprep.subr.mxu0 0.0
    %1663 = vmatpush1.msra.mxu0 %v115
    %1664 = vmatprep.subr.mxu0 0.0
    %1665 = vmatpush1.msra.mxu0 %v114
    %1666 = vmatprep.subr.mxu0 0.0
    %1667 = vmatpush2.msra.mxu0 0.0
    %1668 = vmatprep.subr.mxu0 0.0
    %1669 = vmatpush2.msra.mxu0 0.0
    %1670 = vmatprep.subr.mxu0 0.0
    %1671 = vmatpush2.msra.mxu0 0.0
    %1672 = vmatprep.subr.mxu0 0.0
    %1673 = vmatpush2.msra.mxu0 0.0
    %1674 = vmatprep.subr.mxu0 0.0
    %1675 = vmatpush2.msra.mxu0 0.0
    %1676 = vmatprep.subr.mxu0 0.0
    %1677 = vmatpush2.msra.mxu0 0.0
    %1678 = vmatprep.subr.mxu0 0.0
    %1679 = vmatpush2.msra.mxu0 0.0
    %1680 = vmatprep.subr.mxu0 0.0
    %1681 = vmatpush2.msra.mxu0 0.0
    %1682 = vmatprep.subr.mxu0 0.0
    %1683 = vmatpush2.msra.mxu0 0.0
    %1684 = vmatprep.subr.mxu0 0.0
    %1685 = vmatpush2.msra.mxu0 0.0
    %1686 = vmatprep.subr.mxu0 0.0
    %1687 = vmatpush2.msra.mxu0 0.0
    %1688 = vmatprep.subr.mxu0 0.0
    %1689 = vmatpush2.msra.mxu0 0.0
    %1690 = vmatprep.subr.mxu0 0.0
    %1691 = vmatpush2.msra.mxu0 0.0
    %1692 = vmatprep.subr.mxu0 0.0
    %1693 = vmatpush2.msra.mxu0 0.0
    %1694 = vmatprep.subr.mxu0 0.0
    %1695 = vmatpush2.msra.mxu0 0.0
    %1696 = vmatprep.subr.mxu0 0.0
    %1697 = vmatpush2.msra.mxu0 0.0
    %1698 = vmatprep.mubr.f32.mxu0 0.0
    %1699 = vmatmul.mubr.f32.gmra.mxu0 %v1336
    %v1700 = vpop.f32.mrf.mxu0
    %v1701 = vadd.f32 0.0, %v1700
    %v1702 = vpop.f32.mrf.mxu0
    %1703 = vdwg.mxu0
    %1705 = vrot.lane.b32.xlu0 %v1701, 64
    %v1706 = vpop.permute.xlu0 %1705
    %v1708 = vadd.f32 %v1633, %v1706
    %1709 = vmatprep.subr.mxu0 0.0
    %1710 = vmatpush1.msra.mxu0 0.0
    %1711 = vmatprep.subr.mxu0 0.0
    %1712 = vmatpush1.msra.mxu0 0.0
    %1713 = vmatprep.subr.mxu0 0.0
    %1714 = vmatpush1.msra.mxu0 0.0
    %1715 = vmatprep.subr.mxu0 0.0
    %1716 = vmatpush1.msra.mxu0 0.0
    %1717 = vmatprep.subr.mxu0 0.0
    %1718 = vmatpush1.msra.mxu0 0.0
    %1719 = vmatprep.subr.mxu0 0.0
    %1720 = vmatpush1.msra.mxu0 0.0
    %1721 = vmatprep.subr.mxu0 0.0
    %1722 = vmatpush1.msra.mxu0 0.0
    %1723 = vmatprep.subr.mxu0 0.0
    %1724 = vmatpush1.msra.mxu0 0.0
    %1725 = vmatprep.subr.mxu0 0.0
    %1726 = vmatpush1.msra.mxu0 0.0
    %1727 = vmatprep.subr.mxu0 0.0
    %1728 = vmatpush1.msra.mxu0 0.0
    %1729 = vmatprep.subr.mxu0 0.0
    %1730 = vmatpush1.msra.mxu0 0.0
    %1731 = vmatprep.subr.mxu0 0.0
    %1732 = vmatpush1.msra.mxu0 0.0
    %1733 = vmatprep.subr.mxu0 0.0
    %1734 = vmatpush1.msra.mxu0 %v105
    %1735 = vmatprep.subr.mxu0 0.0
    %1736 = vmatpush1.msra.mxu0 %v104
    %1737 = vmatprep.subr.mxu0 0.0
    %1738 = vmatpush1.msra.mxu0 %v103
    %1739 = vmatprep.subr.mxu0 0.0
    %1740 = vmatpush1.msra.mxu0 %v102
    %1741 = vmatprep.subr.mxu0 0.0
    %1742 = vmatpush2.msra.mxu0 0.0
    %1743 = vmatprep.subr.mxu0 0.0
    %1744 = vmatpush2.msra.mxu0 0.0
    %1745 = vmatprep.subr.mxu0 0.0
    %1746 = vmatpush2.msra.mxu0 0.0
    %1747 = vmatprep.subr.mxu0 0.0
    %1748 = vmatpush2.msra.mxu0 0.0
    %1749 = vmatprep.subr.mxu0 0.0
    %1750 = vmatpush2.msra.mxu0 0.0
    %1751 = vmatprep.subr.mxu0 0.0
    %1752 = vmatpush2.msra.mxu0 0.0
    %1753 = vmatprep.subr.mxu0 0.0
    %1754 = vmatpush2.msra.mxu0 0.0
    %1755 = vmatprep.subr.mxu0 0.0
    %1756 = vmatpush2.msra.mxu0 0.0
    %1757 = vmatprep.subr.mxu0 0.0
    %1758 = vmatpush2.msra.mxu0 0.0
    %1759 = vmatprep.subr.mxu0 0.0
    %1760 = vmatpush2.msra.mxu0 0.0
    %1761 = vmatprep.subr.mxu0 0.0
    %1762 = vmatpush2.msra.mxu0 0.0
    %1763 = vmatprep.subr.mxu0 0.0
    %1764 = vmatpush2.msra.mxu0 0.0
    %1765 = vmatprep.subr.mxu0 0.0
    %1766 = vmatpush2.msra.mxu0 0.0
    %1767 = vmatprep.subr.mxu0 0.0
    %1768 = vmatpush2.msra.mxu0 0.0
    %1769 = vmatprep.subr.mxu0 0.0
    %1770 = vmatpush2.msra.mxu0 0.0
    %1771 = vmatprep.subr.mxu0 0.0
    %1772 = vmatpush2.msra.mxu0 0.0
    %1773 = vmatprep.mubr.f32.mxu0 0.0
    %1774 = vmatmul.mubr.f32.gmra.mxu0 %v1260
    %v1775 = vpop.f32.mrf.mxu0
    %v1776 = vadd.f32 0.0, %v1775
    %v1777 = vpop.f32.mrf.mxu0
    %1778 = vdwg.mxu0
    %1780 = vrot.lane.b32.xlu0 %v1776, 96
    %v1781 = vpop.permute.xlu0 %1780
    %v1783 = vadd.f32 %v123, %v1781
    %1784 = vmatprep.subr.mxu0 0.0
    %1785 = vmatpush1.msra.mxu0 0.0
    %1786 = vmatprep.subr.mxu0 0.0
    %1787 = vmatpush1.msra.mxu0 0.0
    %1788 = vmatprep.subr.mxu0 0.0
    %1789 = vmatpush1.msra.mxu0 0.0
    %1790 = vmatprep.subr.mxu0 0.0
    %1791 = vmatpush1.msra.mxu0 0.0
    %1792 = vmatprep.subr.mxu0 0.0
    %1793 = vmatpush1.msra.mxu0 0.0
    %1794 = vmatprep.subr.mxu0 0.0
    %1795 = vmatpush1.msra.mxu0 0.0
    %1796 = vmatprep.subr.mxu0 0.0
    %1797 = vmatpush1.msra.mxu0 0.0
    %1798 = vmatprep.subr.mxu0 0.0
    %1799 = vmatpush1.msra.mxu0 0.0
    %1800 = vmatprep.subr.mxu0 0.0
    %1801 = vmatpush1.msra.mxu0 0.0
    %1802 = vmatprep.subr.mxu0 0.0
    %1803 = vmatpush1.msra.mxu0 0.0
    %1804 = vmatprep.subr.mxu0 0.0
    %1805 = vmatpush1.msra.mxu0 0.0
    %1806 = vmatprep.subr.mxu0 0.0
    %1807 = vmatpush1.msra.mxu0 0.0
    %1808 = vmatprep.subr.mxu0 0.0
    %1809 = vmatpush1.msra.mxu0 %v121
    %1810 = vmatprep.subr.mxu0 0.0
    %1811 = vmatpush1.msra.mxu0 %v120
    %1812 = vmatprep.subr.mxu0 0.0
    %1813 = vmatpush1.msra.mxu0 %v119
    %1814 = vmatprep.subr.mxu0 0.0
    %1815 = vmatpush1.msra.mxu0 %v118
    %1816 = vmatprep.subr.mxu0 0.0
    %1817 = vmatpush2.msra.mxu0 0.0
    %1818 = vmatprep.subr.mxu0 0.0
    %1819 = vmatpush2.msra.mxu0 0.0
    %1820 = vmatprep.subr.mxu0 0.0
    %1821 = vmatpush2.msra.mxu0 0.0
    %1822 = vmatprep.subr.mxu0 0.0
    %1823 = vmatpush2.msra.mxu0 0.0
    %1824 = vmatprep.subr.mxu0 0.0
    %1825 = vmatpush2.msra.mxu0 0.0
    %1826 = vmatprep.subr.mxu0 0.0
    %1827 = vmatpush2.msra.mxu0 0.0
    %1828 = vmatprep.subr.mxu0 0.0
    %1829 = vmatpush2.msra.mxu0 0.0
    %1830 = vmatprep.subr.mxu0 0.0
    %1831 = vmatpush2.msra.mxu0 0.0
    %1832 = vmatprep.subr.mxu0 0.0
    %1833 = vmatpush2.msra.mxu0 0.0
    %1834 = vmatprep.subr.mxu0 0.0
    %1835 = vmatpush2.msra.mxu0 0.0
    %1836 = vmatprep.subr.mxu0 0.0
    %1837 = vmatpush2.msra.mxu0 0.0
    %1838 = vmatprep.subr.mxu0 0.0
    %1839 = vmatpush2.msra.mxu0 0.0
    %1840 = vmatprep.subr.mxu0 0.0
    %1841 = vmatpush2.msra.mxu0 0.0
    %1842 = vmatprep.subr.mxu0 0.0
    %1843 = vmatpush2.msra.mxu0 0.0
    %1844 = vmatprep.subr.mxu0 0.0
    %1845 = vmatpush2.msra.mxu0 0.0
    %1846 = vmatprep.subr.mxu0 0.0
    %1847 = vmatpush2.msra.mxu0 0.0
    %1848 = vmatprep.mubr.f32.mxu0 0.0
    %1849 = vmatmul.mubr.f32.gmra.mxu0 %v1336
    %v1850 = vpop.f32.mrf.mxu0
    %v1851 = vadd.f32 0.0, %v1850
    %v1852 = vpop.f32.mrf.mxu0
    %1853 = vdwg.mxu0
    %1855 = vrot.lane.b32.xlu0 %v1851, 96
    %v1856 = vpop.permute.xlu0 %1855
    %v1858 = vadd.f32 %v1783, %v1856
    %v1859 = vxor.u32 %v1408, 2147483648
    %v1860 = vmul.f32 %v1859, 1.442695
    %v1861 = vpow.pop %v1860
    %v1862 = vadd.f32 %v1861, 1.0
    %v1863 = vrcp.pop %v1862
    %v1864 = vmul.f32 1.0, %v1863
    %v1865 = vxor.u32 %v1558, 2147483648
    %v1866 = vmul.f32 %v1865, 1.442695
    %v1867 = vpow.pop %v1866
    %v1868 = vadd.f32 %v1867, 1.0
    %v1869 = vrcp.pop %v1868
    %v1870 = vmul.f32 1.0, %v1869
    %v1871 = vtanh.pop %v1708
    %v1872 = vxor.u32 %v1858, 2147483648
    %v1873 = vmul.f32 %v1872, 1.442695
    %v1874 = vpow.pop %v1873
    %v1875 = vadd.f32 %v1874, 1.0
    %v1876 = vrcp.pop %v1875
    %v1877 = vmul.f32 1.0, %v1876
    %v1878 = vmul.f32 %v1870, %v928
    %1880 = vrot.lane.b32.xlu0 %v1871, 64
    %v1881 = vpop.permute.xlu0 %1880
    %v1883 = vmul.f32 %v1864, %v1881
    %1885 = vrot.lane.b32.xlu0 %v1883, 32
    %v1886 = vpop.permute.xlu0 %1885
    %v1888 = vadd.f32 %v1878, %v1886
    %v1889 = vtanh.pop %v1888
    %1891 = vrot.lane.b32.xlu0 %v1889, 64
    %v1892 = vpop.permute.xlu0 %1891
    %v1894 = vmul.f32 %v1877, %v1892
    %1895 = vmatprep.subr.mxu0 0.0
    %1896 = vmatpush1.msra.mxu0 0.0
    %1897 = vmatprep.subr.mxu0 0.0
    %1898 = vmatpush1.msra.mxu0 0.0
    %1899 = vmatprep.subr.mxu0 0.0
    %1900 = vmatpush1.msra.mxu0 0.0
    %1901 = vmatprep.subr.mxu0 0.0
    %1902 = vmatpush1.msra.mxu0 0.0
    %1903 = vmatprep.subr.mxu0 0.0
    %1904 = vmatpush1.msra.mxu0 0.0
    %1905 = vmatprep.subr.mxu0 0.0
    %1906 = vmatpush1.msra.mxu0 0.0
    %1907 = vmatprep.subr.mxu0 0.0
    %1908 = vmatpush1.msra.mxu0 0.0
    %1909 = vmatprep.subr.mxu0 0.0
    %1910 = vmatpush1.msra.mxu0 0.0
    %1911 = vmatprep.subr.mxu0 0.0
    %1912 = vmatpush1.msra.mxu0 0.0
    %1913 = vmatprep.subr.mxu0 0.0
    %1914 = vmatpush1.msra.mxu0 0.0
    %1915 = vmatprep.subr.mxu0 0.0
    %1916 = vmatpush1.msra.mxu0 0.0
    %1917 = vmatprep.subr.mxu0 0.0
    %1918 = vmatpush1.msra.mxu0 0.0
    %1919 = vmatprep.subr.mxu0 0.0
    %1920 = vmatpush1.msra.mxu0 %v77
    %1921 = vmatprep.subr.mxu0 0.0
    %1922 = vmatpush1.msra.mxu0 %v76
    %1923 = vmatprep.subr.mxu0 0.0
    %1924 = vmatpush1.msra.mxu0 %v75
    %1925 = vmatprep.subr.mxu0 0.0
    %1926 = vmatpush1.msra.mxu0 %v74
    %1927 = vmatprep.subr.mxu0 0.0
    %1928 = vmatpush2.msra.mxu0 0.0
    %1929 = vmatprep.subr.mxu0 0.0
    %1930 = vmatpush2.msra.mxu0 0.0
    %1931 = vmatprep.subr.mxu0 0.0
    %1932 = vmatpush2.msra.mxu0 0.0
    %1933 = vmatprep.subr.mxu0 0.0
    %1934 = vmatpush2.msra.mxu0 0.0
    %1935 = vmatprep.subr.mxu0 0.0
    %1936 = vmatpush2.msra.mxu0 0.0
    %1937 = vmatprep.subr.mxu0 0.0
    %1938 = vmatpush2.msra.mxu0 0.0
    %1939 = vmatprep.subr.mxu0 0.0
    %1940 = vmatpush2.msra.mxu0 0.0
    %1941 = vmatprep.subr.mxu0 0.0
    %1942 = vmatpush2.msra.mxu0 0.0
    %1943 = vmatprep.subr.mxu0 0.0
    %1944 = vmatpush2.msra.mxu0 0.0
    %1945 = vmatprep.subr.mxu0 0.0
    %1946 = vmatpush2.msra.mxu0 0.0
    %1947 = vmatprep.subr.mxu0 0.0
    %1948 = vmatpush2.msra.mxu0 0.0
    %1949 = vmatprep.subr.mxu0 0.0
    %1950 = vmatpush2.msra.mxu0 0.0
    %1951 = vmatprep.subr.mxu0 0.0
    %1952 = vmatpush2.msra.mxu0 0.0
    %1953 = vmatprep.subr.mxu0 0.0
    %1954 = vmatpush2.msra.mxu0 0.0
    %1955 = vmatprep.subr.mxu0 0.0
    %1956 = vmatpush2.msra.mxu0 0.0
    %1957 = vmatprep.subr.mxu0 0.0
    %1958 = vmatpush2.msra.mxu0 0.0
    %1959 = vmatprep.mubr.f32.mxu0 0.0
    %1960 = vmatmul.mubr.f32.gmra.mxu0 %v1260
    %v1961 = vpop.f32.mrf.mxu0
    %v1962 = vadd.f32 0.0, %v1961
    %v1963 = vpop.f32.mrf.mxu0
    %1964 = vdwg.mxu0
    %v1966 = vrot.slane %v1962, 6
    %v1968 = vadd.f32 %v353, %v1966
    %1969 = vmatprep.subr.mxu0 0.0
    %1970 = vmatpush1.msra.mxu0 0.0
    %1971 = vmatprep.subr.mxu0 0.0
    %1972 = vmatpush1.msra.mxu0 0.0
    %1973 = vmatprep.subr.mxu0 0.0
    %1974 = vmatpush1.msra.mxu0 0.0
    %1975 = vmatprep.subr.mxu0 0.0
    %1976 = vmatpush1.msra.mxu0 0.0
    %1977 = vmatprep.subr.mxu0 0.0
    %1978 = vmatpush1.msra.mxu0 0.0
    %1979 = vmatprep.subr.mxu0 0.0
    %1980 = vmatpush1.msra.mxu0 0.0
    %1981 = vmatprep.subr.mxu0 0.0
    %1982 = vmatpush1.msra.mxu0 0.0
    %1983 = vmatprep.subr.mxu0 0.0
    %1984 = vmatpush1.msra.mxu0 0.0
    %1985 = vmatprep.subr.mxu0 0.0
    %1986 = vmatpush1.msra.mxu0 0.0
    %1987 = vmatprep.subr.mxu0 0.0
    %1988 = vmatpush1.msra.mxu0 0.0
    %1989 = vmatprep.subr.mxu0 0.0
    %1990 = vmatpush1.msra.mxu0 0.0
    %1991 = vmatprep.subr.mxu0 0.0
    %1992 = vmatpush1.msra.mxu0 0.0
    %1993 = vmatprep.subr.mxu0 0.0
    %1994 = vmatpush1.msra.mxu0 %v81
    %1995 = vmatprep.subr.mxu0 0.0
    %1996 = vmatpush1.msra.mxu0 %v80
    %1997 = vmatprep.subr.mxu0 0.0
    %1998 = vmatpush1.msra.mxu0 %v79
    %1999 = vmatprep.subr.mxu0 0.0
    %2000 = vmatpush1.msra.mxu0 %v78
    %2001 = vmatprep.subr.mxu0 0.0
    %2002 = vmatpush2.msra.mxu0 0.0
    %2003 = vmatprep.subr.mxu0 0.0
    %2004 = vmatpush2.msra.mxu0 0.0
    %2005 = vmatprep.subr.mxu0 0.0
    %2006 = vmatpush2.msra.mxu0 0.0
    %2007 = vmatprep.subr.mxu0 0.0
    %2008 = vmatpush2.msra.mxu0 0.0
    %2009 = vmatprep.subr.mxu0 0.0
    %2010 = vmatpush2.msra.mxu0 0.0
    %2011 = vmatprep.subr.mxu0 0.0
    %2012 = vmatpush2.msra.mxu0 0.0
    %2013 = vmatprep.subr.mxu0 0.0
    %2014 = vmatpush2.msra.mxu0 0.0
    %2015 = vmatprep.subr.mxu0 0.0
    %2016 = vmatpush2.msra.mxu0 0.0
    %2017 = vmatprep.subr.mxu0 0.0
    %2018 = vmatpush2.msra.mxu0 0.0
    %2019 = vmatprep.subr.mxu0 0.0
    %2020 = vmatpush2.msra.mxu0 0.0
    %2021 = vmatprep.subr.mxu0 0.0
    %2022 = vmatpush2.msra.mxu0 0.0
    %2023 = vmatprep.subr.mxu0 0.0
    %2024 = vmatpush2.msra.mxu0 0.0
    %2025 = vmatprep.subr.mxu0 0.0
    %2026 = vmatpush2.msra.mxu0 0.0
    %2027 = vmatprep.subr.mxu0 0.0
    %2028 = vmatpush2.msra.mxu0 0.0
    %2029 = vmatprep.subr.mxu0 0.0
    %2030 = vmatpush2.msra.mxu0 0.0
    %2031 = vmatprep.subr.mxu0 0.0
    %2032 = vmatpush2.msra.mxu0 0.0
    %2033 = vmatprep.mubr.f32.mxu0 0.0
    %2034 = vmatmul.mubr.f32.gmra.mxu0 %v1260
    %v2035 = vpop.f32.mrf.mxu0
    %v2036 = vadd.f32 0.0, %v2035
    %v2037 = vpop.f32.mrf.mxu0
    %2038 = vdwg.mxu0
    %v2040 = vrot.slane %v2036, 6
    %v2042 = vadd.f32 %v427, %v2040
    %2043 = vmatprep.subr.mxu0 0.0
    %2044 = vmatpush1.msra.mxu0 0.0
    %2045 = vmatprep.subr.mxu0 0.0
    %2046 = vmatpush1.msra.mxu0 0.0
    %2047 = vmatprep.subr.mxu0 0.0
    %2048 = vmatpush1.msra.mxu0 0.0
    %2049 = vmatprep.subr.mxu0 0.0
    %2050 = vmatpush1.msra.mxu0 0.0
    %2051 = vmatprep.subr.mxu0 0.0
    %2052 = vmatpush1.msra.mxu0 0.0
    %2053 = vmatprep.subr.mxu0 0.0
    %2054 = vmatpush1.msra.mxu0 0.0
    %2055 = vmatprep.subr.mxu0 0.0
    %2056 = vmatpush1.msra.mxu0 0.0
    %2057 = vmatprep.subr.mxu0 0.0
    %2058 = vmatpush1.msra.mxu0 0.0
    %2059 = vmatprep.subr.mxu0 0.0
    %2060 = vmatpush1.msra.mxu0 0.0
    %2061 = vmatprep.subr.mxu0 0.0
    %2062 = vmatpush1.msra.mxu0 0.0
    %2063 = vmatprep.subr.mxu0 0.0
    %2064 = vmatpush1.msra.mxu0 0.0
    %2065 = vmatprep.subr.mxu0 0.0
    %2066 = vmatpush1.msra.mxu0 0.0
    %2067 = vmatprep.subr.mxu0 0.0
    %2068 = vmatpush1.msra.mxu0 %v85
    %2069 = vmatprep.subr.mxu0 0.0
    %2070 = vmatpush1.msra.mxu0 %v84
    %2071 = vmatprep.subr.mxu0 0.0
    %2072 = vmatpush1.msra.mxu0 %v83
    %2073 = vmatprep.subr.mxu0 0.0
    %2074 = vmatpush1.msra.mxu0 %v82
    %2075 = vmatprep.subr.mxu0 0.0
    %2076 = vmatpush2.msra.mxu0 0.0
    %2077 = vmatprep.subr.mxu0 0.0
    %2078 = vmatpush2.msra.mxu0 0.0
    %2079 = vmatprep.subr.mxu0 0.0
    %2080 = vmatpush2.msra.mxu0 0.0
    %2081 = vmatprep.subr.mxu0 0.0
    %2082 = vmatpush2.msra.mxu0 0.0
    %2083 = vmatprep.subr.mxu0 0.0
    %2084 = vmatpush2.msra.mxu0 0.0
    %2085 = vmatprep.subr.mxu0 0.0
    %2086 = vmatpush2.msra.mxu0 0.0
    %2087 = vmatprep.subr.mxu0 0.0
    %2088 = vmatpush2.msra.mxu0 0.0
    %2089 = vmatprep.subr.mxu0 0.0
    %2090 = vmatpush2.msra.mxu0 0.0
    %2091 = vmatprep.subr.mxu0 0.0
    %2092 = vmatpush2.msra.mxu0 0.0
    %2093 = vmatprep.subr.mxu0 0.0
    %2094 = vmatpush2.msra.mxu0 0.0
    %2095 = vmatprep.subr.mxu0 0.0
    %2096 = vmatpush2.msra.mxu0 0.0
    %2097 = vmatprep.subr.mxu0 0.0
    %2098 = vmatpush2.msra.mxu0 0.0
    %2099 = vmatprep.subr.mxu0 0.0
    %2100 = vmatpush2.msra.mxu0 0.0
    %2101 = vmatprep.subr.mxu0 0.0
    %2102 = vmatpush2.msra.mxu0 0.0
    %2103 = vmatprep.subr.mxu0 0.0
    %2104 = vmatpush2.msra.mxu0 0.0
    %2105 = vmatprep.subr.mxu0 0.0
    %2106 = vmatpush2.msra.mxu0 0.0
    %2107 = vmatprep.mubr.f32.mxu0 0.0
    %2108 = vmatmul.mubr.f32.gmra.mxu0 %v1260
    %v2109 = vpop.f32.mrf.mxu0
    %v2110 = vadd.f32 0.0, %v2109
    %v2111 = vpop.f32.mrf.mxu0
    %2112 = vdwg.mxu0
    %v2114 = vrot.slane %v2110, 6
    %v2116 = vadd.f32 %v500, %v2114
    %2117 = vmatprep.subr.mxu0 0.0
    %2118 = vmatpush1.msra.mxu0 0.0
    %2119 = vmatprep.subr.mxu0 0.0
    %2120 = vmatpush1.msra.mxu0 0.0
    %2121 = vmatprep.subr.mxu0 0.0
    %2122 = vmatpush1.msra.mxu0 0.0
    %2123 = vmatprep.subr.mxu0 0.0
    %2124 = vmatpush1.msra.mxu0 0.0
    %2125 = vmatprep.subr.mxu0 0.0
    %2126 = vmatpush1.msra.mxu0 0.0
    %2127 = vmatprep.subr.mxu0 0.0
    %2128 = vmatpush1.msra.mxu0 0.0
    %2129 = vmatprep.subr.mxu0 0.0
    %2130 = vmatpush1.msra.mxu0 0.0
    %2131 = vmatprep.subr.mxu0 0.0
    %2132 = vmatpush1.msra.mxu0 0.0
    %2133 = vmatprep.subr.mxu0 0.0
    %2134 = vmatpush1.msra.mxu0 0.0
    %2135 = vmatprep.subr.mxu0 0.0
    %2136 = vmatpush1.msra.mxu0 0.0
    %2137 = vmatprep.subr.mxu0 0.0
    %2138 = vmatpush1.msra.mxu0 0.0
    %2139 = vmatprep.subr.mxu0 0.0
    %2140 = vmatpush1.msra.mxu0 0.0
    %2141 = vmatprep.subr.mxu0 0.0
    %2142 = vmatpush1.msra.mxu0 %v89
    %2143 = vmatprep.subr.mxu0 0.0
    %2144 = vmatpush1.msra.mxu0 %v88
    %2145 = vmatprep.subr.mxu0 0.0
    %2146 = vmatpush1.msra.mxu0 %v87
    %2147 = vmatprep.subr.mxu0 0.0
    %2148 = vmatpush1.msra.mxu0 %v86
    %2149 = vmatprep.subr.mxu0 0.0
    %2150 = vmatpush2.msra.mxu0 0.0
    %2151 = vmatprep.subr.mxu0 0.0
    %2152 = vmatpush2.msra.mxu0 0.0
    %2153 = vmatprep.subr.mxu0 0.0
    %2154 = vmatpush2.msra.mxu0 0.0
    %2155 = vmatprep.subr.mxu0 0.0
    %2156 = vmatpush2.msra.mxu0 0.0
    %2157 = vmatprep.subr.mxu0 0.0
    %2158 = vmatpush2.msra.mxu0 0.0
    %2159 = vmatprep.subr.mxu0 0.0
    %2160 = vmatpush2.msra.mxu0 0.0
    %2161 = vmatprep.subr.mxu0 0.0
    %2162 = vmatpush2.msra.mxu0 0.0
    %2163 = vmatprep.subr.mxu0 0.0
    %2164 = vmatpush2.msra.mxu0 0.0
    %2165 = vmatprep.subr.mxu0 0.0
    %2166 = vmatpush2.msra.mxu0 0.0
    %2167 = vmatprep.subr.mxu0 0.0
    %2168 = vmatpush2.msra.mxu0 0.0
    %2169 = vmatprep.subr.mxu0 0.0
    %2170 = vmatpush2.msra.mxu0 0.0
    %2171 = vmatprep.subr.mxu0 0.0
    %2172 = vmatpush2.msra.mxu0 0.0
    %2173 = vmatprep.subr.mxu0 0.0
    %2174 = vmatpush2.msra.mxu0 0.0
    %2175 = vmatprep.subr.mxu0 0.0
    %2176 = vmatpush2.msra.mxu0 0.0
    %2177 = vmatprep.subr.mxu0 0.0
    %2178 = vmatpush2.msra.mxu0 0.0
    %2179 = vmatprep.subr.mxu0 0.0
    %2180 = vmatpush2.msra.mxu0 0.0
    %2181 = vmatprep.mubr.f32.mxu0 0.0
    %2182 = vmatmul.mubr.f32.gmra.mxu0 %v1260
    %v2183 = vpop.f32.mrf.mxu0
    %v2184 = vadd.f32 0.0, %v2183
    %v2185 = vpop.f32.mrf.mxu0
    %2186 = vdwg.mxu0
    %v2188 = vrot.slane %v2184, 6
    %v2190 = vadd.f32 %v573, %v2188
    %v2191 = vxor.u32 %v1968, 2147483648
    %v2192 = vmul.f32 %v2191, 1.442695
    %v2193 = vpow.pop %v2192
    %v2194 = vadd.f32 %v2193, 1.0
    %v2195 = vrcp.pop %v2194
    %v2196 = vmul.f32 1.0, %v2195
    %v2197 = vxor.u32 %v2042, 2147483648
    %v2198 = vmul.f32 %v2197, 1.442695
    %v2199 = vpow.pop %v2198
    %v2200 = vadd.f32 %v2199, 1.0
    %v2201 = vrcp.pop %v2200
    %v2202 = vmul.f32 1.0, %v2201
    %v2203 = vtanh.pop %v2116
    %v2204 = vxor.u32 %v2190, 2147483648
    %v2205 = vmul.f32 %v2204, 1.442695
    %v2206 = vpow.pop %v2205
    %v2207 = vadd.f32 %v2206, 1.0
    %v2208 = vrcp.pop %v2207
    %v2209 = vmul.f32 1.0, %v2208
    %v2211 = vrot.slane %v1255, 7
    %v2213 = vmul.f32 %v2202, %v2211
    %v2214 = vmul.f32 %v2196, %v2203
    %v2215 = vadd.f32 %v2213, %v2214
    %v2216 = vtanh.pop %v2215
    %v2217 = vmul.f32 %v2209, %v2216
    %v2219 = vrot.slane %v2217, 2
    %v2220 = vsel %vm200, %v2219, 0
    %2222 = vmatprep.subr.mxu0 0.0
    %2223 = vmatpush1.msra.mxu0 0.0
    %2224 = vmatprep.subr.mxu0 0.0
    %2225 = vmatpush1.msra.mxu0 0.0
    %2226 = vmatprep.subr.mxu0 0.0
    %2227 = vmatpush1.msra.mxu0 0.0
    %2228 = vmatprep.subr.mxu0 0.0
    %2229 = vmatpush1.msra.mxu0 0.0
    %2230 = vmatprep.subr.mxu0 0.0
    %2231 = vmatpush1.msra.mxu0 0.0
    %2232 = vmatprep.subr.mxu0 0.0
    %2233 = vmatpush1.msra.mxu0 0.0
    %2234 = vmatprep.subr.mxu0 0.0
    %2235 = vmatpush1.msra.mxu0 0.0
    %2236 = vmatprep.subr.mxu0 0.0
    %2237 = vmatpush1.msra.mxu0 0.0
    %2238 = vmatprep.subr.mxu0 0.0
    %2239 = vmatpush1.msra.mxu0 0.0
    %2240 = vmatprep.subr.mxu0 0.0
    %2241 = vmatpush1.msra.mxu0 0.0
    %2242 = vmatprep.subr.mxu0 0.0
    %2243 = vmatpush1.msra.mxu0 0.0
    %2244 = vmatprep.subr.mxu0 0.0
    %2245 = vmatpush1.msra.mxu0 0.0
    %2246 = vmatprep.subr.mxu0 0.0
    %2247 = vmatpush1.msra.mxu0 %v93
    %2248 = vmatprep.subr.mxu0 0.0
    %2249 = vmatpush1.msra.mxu0 %v92
    %2250 = vmatprep.subr.mxu0 0.0
    %2251 = vmatpush1.msra.mxu0 %v91
    %2252 = vmatprep.subr.mxu0 0.0
    %2253 = vmatpush1.msra.mxu0 %v90
    %2254 = vmatprep.subr.mxu0 0.0
    %2255 = vmatpush2.msra.mxu0 0.0
    %2256 = vmatprep.subr.mxu0 0.0
    %2257 = vmatpush2.msra.mxu0 0.0
    %2258 = vmatprep.subr.mxu0 0.0
    %2259 = vmatpush2.msra.mxu0 0.0
    %2260 = vmatprep.subr.mxu0 0.0
    %2261 = vmatpush2.msra.mxu0 0.0
    %2262 = vmatprep.subr.mxu0 0.0
    %2263 = vmatpush2.msra.mxu0 0.0
    %2264 = vmatprep.subr.mxu0 0.0
    %2265 = vmatpush2.msra.mxu0 0.0
    %2266 = vmatprep.subr.mxu0 0.0
    %2267 = vmatpush2.msra.mxu0 0.0
    %2268 = vmatprep.subr.mxu0 0.0
    %2269 = vmatpush2.msra.mxu0 0.0
    %2270 = vmatprep.subr.mxu0 0.0
    %2271 = vmatpush2.msra.mxu0 0.0
    %2272 = vmatprep.subr.mxu0 0.0
    %2273 = vmatpush2.msra.mxu0 0.0
    %2274 = vmatprep.subr.mxu0 0.0
    %2275 = vmatpush2.msra.mxu0 0.0
    %2276 = vmatprep.subr.mxu0 0.0
    %2277 = vmatpush2.msra.mxu0 0.0
    %2278 = vmatprep.subr.mxu0 0.0
    %2279 = vmatpush2.msra.mxu0 0.0
    %2280 = vmatprep.subr.mxu0 0.0
    %2281 = vmatpush2.msra.mxu0 0.0
    %2282 = vmatprep.subr.mxu0 0.0
    %2283 = vmatpush2.msra.mxu0 0.0
    %2284 = vmatprep.subr.mxu0 0.0
    %2285 = vmatpush2.msra.mxu0 0.0
    %2286 = vmatprep.mubr.f32.mxu0 0.0
    %2287 = vmatmul.mubr.f32.gmra.mxu0 %v2220
    %v2288 = vpop.f32.mrf.mxu0
    %v2289 = vadd.f32 0.0, %v2288
    %v2290 = vpop.f32.mrf.mxu0
    %2291 = vdwg.mxu0
    %v2292 = vadd.f32 %v123, %v2289
    %2294 = vrot.lane.b32.xlu0 %v1894, 32
    %v2295 = vpop.permute.xlu0 %2294
    %v2296 = vsel %vm200, %v2295, 0
    %2298 = vmatprep.subr.mxu0 0.0
    %2299 = vmatpush1.msra.mxu0 0.0
    %2300 = vmatprep.subr.mxu0 0.0
    %2301 = vmatpush1.msra.mxu0 0.0
    %2302 = vmatprep.subr.mxu0 0.0
    %2303 = vmatpush1.msra.mxu0 0.0
    %2304 = vmatprep.subr.mxu0 0.0
    %2305 = vmatpush1.msra.mxu0 0.0
    %2306 = vmatprep.subr.mxu0 0.0
    %2307 = vmatpush1.msra.mxu0 0.0
    %2308 = vmatprep.subr.mxu0 0.0
    %2309 = vmatpush1.msra.mxu0 0.0
    %2310 = vmatprep.subr.mxu0 0.0
    %2311 = vmatpush1.msra.mxu0 0.0
    %2312 = vmatprep.subr.mxu0 0.0
    %2313 = vmatpush1.msra.mxu0 0.0
    %2314 = vmatprep.subr.mxu0 0.0
    %2315 = vmatpush1.msra.mxu0 0.0
    %2316 = vmatprep.subr.mxu0 0.0
    %2317 = vmatpush1.msra.mxu0 0.0
    %2318 = vmatprep.subr.mxu0 0.0
    %2319 = vmatpush1.msra.mxu0 0.0
    %2320 = vmatprep.subr.mxu0 0.0
    %2321 = vmatpush1.msra.mxu0 0.0
    %2322 = vmatprep.subr.mxu0 0.0
    %2323 = vmatpush1.msra.mxu0 %v109
    %2324 = vmatprep.subr.mxu0 0.0
    %2325 = vmatpush1.msra.mxu0 %v108
    %2326 = vmatprep.subr.mxu0 0.0
    %2327 = vmatpush1.msra.mxu0 %v107
    %2328 = vmatprep.subr.mxu0 0.0
    %2329 = vmatpush1.msra.mxu0 %v106
    %2330 = vmatprep.subr.mxu0 0.0
    %2331 = vmatpush2.msra.mxu0 0.0
    %2332 = vmatprep.subr.mxu0 0.0
    %2333 = vmatpush2.msra.mxu0 0.0
    %2334 = vmatprep.subr.mxu0 0.0
    %2335 = vmatpush2.msra.mxu0 0.0
    %2336 = vmatprep.subr.mxu0 0.0
    %2337 = vmatpush2.msra.mxu0 0.0
    %2338 = vmatprep.subr.mxu0 0.0
    %2339 = vmatpush2.msra.mxu0 0.0
    %2340 = vmatprep.subr.mxu0 0.0
    %2341 = vmatpush2.msra.mxu0 0.0
    %2342 = vmatprep.subr.mxu0 0.0
    %2343 = vmatpush2.msra.mxu0 0.0
    %2344 = vmatprep.subr.mxu0 0.0
    %2345 = vmatpush2.msra.mxu0 0.0
    %2346 = vmatprep.subr.mxu0 0.0
    %2347 = vmatpush2.msra.mxu0 0.0
    %2348 = vmatprep.subr.mxu0 0.0
    %2349 = vmatpush2.msra.mxu0 0.0
    %2350 = vmatprep.subr.mxu0 0.0
    %2351 = vmatpush2.msra.mxu0 0.0
    %2352 = vmatprep.subr.mxu0 0.0
    %2353 = vmatpush2.msra.mxu0 0.0
    %2354 = vmatprep.subr.mxu0 0.0
    %2355 = vmatpush2.msra.mxu0 0.0
    %2356 = vmatprep.subr.mxu0 0.0
    %2357 = vmatpush2.msra.mxu0 0.0
    %2358 = vmatprep.subr.mxu0 0.0
    %2359 = vmatpush2.msra.mxu0 0.0
    %2360 = vmatprep.subr.mxu0 0.0
    %2361 = vmatpush2.msra.mxu0 0.0
    %2362 = vmatprep.mubr.f32.mxu0 0.0
    %2363 = vmatmul.mubr.f32.gmra.mxu0 %v2296
    %v2364 = vpop.f32.mrf.mxu0
    %v2365 = vadd.f32 0.0, %v2364
    %v2366 = vpop.f32.mrf.mxu0
    %2367 = vdwg.mxu0
    %v2368 = vadd.f32 %v2292, %v2365
    %2369 = vmatprep.subr.mxu0 0.0
    %2370 = vmatpush1.msra.mxu0 0.0
    %2371 = vmatprep.subr.mxu0 0.0
    %2372 = vmatpush1.msra.mxu0 0.0
    %2373 = vmatprep.subr.mxu0 0.0
    %2374 = vmatpush1.msra.mxu0 0.0
    %2375 = vmatprep.subr.mxu0 0.0
    %2376 = vmatpush1.msra.mxu0 0.0
    %2377 = vmatprep.subr.mxu0 0.0
    %2378 = vmatpush1.msra.mxu0 0.0
    %2379 = vmatprep.subr.mxu0 0.0
    %2380 = vmatpush1.msra.mxu0 0.0
    %2381 = vmatprep.subr.mxu0 0.0
    %2382 = vmatpush1.msra.mxu0 0.0
    %2383 = vmatprep.subr.mxu0 0.0
    %2384 = vmatpush1.msra.mxu0 0.0
    %2385 = vmatprep.subr.mxu0 0.0
    %2386 = vmatpush1.msra.mxu0 0.0
    %2387 = vmatprep.subr.mxu0 0.0
    %2388 = vmatpush1.msra.mxu0 0.0
    %2389 = vmatprep.subr.mxu0 0.0
    %2390 = vmatpush1.msra.mxu0 0.0
    %2391 = vmatprep.subr.mxu0 0.0
    %2392 = vmatpush1.msra.mxu0 0.0
    %2393 = vmatprep.subr.mxu0 0.0
    %2394 = vmatpush1.msra.mxu0 %v97
    %2395 = vmatprep.subr.mxu0 0.0
    %2396 = vmatpush1.msra.mxu0 %v96
    %2397 = vmatprep.subr.mxu0 0.0
    %2398 = vmatpush1.msra.mxu0 %v95
    %2399 = vmatprep.subr.mxu0 0.0
    %2400 = vmatpush1.msra.mxu0 %v94
    %2401 = vmatprep.subr.mxu0 0.0
    %2402 = vmatpush2.msra.mxu0 0.0
    %2403 = vmatprep.subr.mxu0 0.0
    %2404 = vmatpush2.msra.mxu0 0.0
    %2405 = vmatprep.subr.mxu0 0.0
    %2406 = vmatpush2.msra.mxu0 0.0
    %2407 = vmatprep.subr.mxu0 0.0
    %2408 = vmatpush2.msra.mxu0 0.0
    %2409 = vmatprep.subr.mxu0 0.0
    %2410 = vmatpush2.msra.mxu0 0.0
    %2411 = vmatprep.subr.mxu0 0.0
    %2412 = vmatpush2.msra.mxu0 0.0
    %2413 = vmatprep.subr.mxu0 0.0
    %2414 = vmatpush2.msra.mxu0 0.0
    %2415 = vmatprep.subr.mxu0 0.0
    %2416 = vmatpush2.msra.mxu0 0.0
    %2417 = vmatprep.subr.mxu0 0.0
    %2418 = vmatpush2.msra.mxu0 0.0
    %2419 = vmatprep.subr.mxu0 0.0
    %2420 = vmatpush2.msra.mxu0 0.0
    %2421 = vmatprep.subr.mxu0 0.0
    %2422 = vmatpush2.msra.mxu0 0.0
    %2423 = vmatprep.subr.mxu0 0.0
    %2424 = vmatpush2.msra.mxu0 0.0
    %2425 = vmatprep.subr.mxu0 0.0
    %2426 = vmatpush2.msra.mxu0 0.0
    %2427 = vmatprep.subr.mxu0 0.0
    %2428 = vmatpush2.msra.mxu0 0.0
    %2429 = vmatprep.subr.mxu0 0.0
    %2430 = vmatpush2.msra.mxu0 0.0
    %2431 = vmatprep.subr.mxu0 0.0
    %2432 = vmatpush2.msra.mxu0 0.0
    %2433 = vmatprep.mubr.f32.mxu0 0.0
    %2434 = vmatmul.mubr.f32.gmra.mxu0 %v2220
    %v2435 = vpop.f32.mrf.mxu0
    %v2436 = vadd.f32 0.0, %v2435
    %v2437 = vpop.f32.mrf.mxu0
    %2438 = vdwg.mxu0
    %2440 = vrot.lane.b32.xlu0 %v2436, 32
    %v2441 = vpop.permute.xlu0 %2440
    %v2443 = vadd.f32 %v123, %v2441
    %2444 = vmatprep.subr.mxu0 0.0
    %2445 = vmatpush1.msra.mxu0 0.0
    %2446 = vmatprep.subr.mxu0 0.0
    %2447 = vmatpush1.msra.mxu0 0.0
    %2448 = vmatprep.subr.mxu0 0.0
    %2449 = vmatpush1.msra.mxu0 0.0
    %2450 = vmatprep.subr.mxu0 0.0
    %2451 = vmatpush1.msra.mxu0 0.0
    %2452 = vmatprep.subr.mxu0 0.0
    %2453 = vmatpush1.msra.mxu0 0.0
    %2454 = vmatprep.subr.mxu0 0.0
    %2455 = vmatpush1.msra.mxu0 0.0
    %2456 = vmatprep.subr.mxu0 0.0
    %2457 = vmatpush1.msra.mxu0 0.0
    %2458 = vmatprep.subr.mxu0 0.0
    %2459 = vmatpush1.msra.mxu0 0.0
    %2460 = vmatprep.subr.mxu0 0.0
    %2461 = vmatpush1.msra.mxu0 0.0
    %2462 = vmatprep.subr.mxu0 0.0
    %2463 = vmatpush1.msra.mxu0 0.0
    %2464 = vmatprep.subr.mxu0 0.0
    %2465 = vmatpush1.msra.mxu0 0.0
    %2466 = vmatprep.subr.mxu0 0.0
    %2467 = vmatpush1.msra.mxu0 0.0
    %2468 = vmatprep.subr.mxu0 0.0
    %2469 = vmatpush1.msra.mxu0 %v113
    %2470 = vmatprep.subr.mxu0 0.0
    %2471 = vmatpush1.msra.mxu0 %v112
    %2472 = vmatprep.subr.mxu0 0.0
    %2473 = vmatpush1.msra.mxu0 %v111
    %2474 = vmatprep.subr.mxu0 0.0
    %2475 = vmatpush1.msra.mxu0 %v110
    %2476 = vmatprep.subr.mxu0 0.0
    %2477 = vmatpush2.msra.mxu0 0.0
    %2478 = vmatprep.subr.mxu0 0.0
    %2479 = vmatpush2.msra.mxu0 0.0
    %2480 = vmatprep.subr.mxu0 0.0
    %2481 = vmatpush2.msra.mxu0 0.0
    %2482 = vmatprep.subr.mxu0 0.0
    %2483 = vmatpush2.msra.mxu0 0.0
    %2484 = vmatprep.subr.mxu0 0.0
    %2485 = vmatpush2.msra.mxu0 0.0
    %2486 = vmatprep.subr.mxu0 0.0
    %2487 = vmatpush2.msra.mxu0 0.0
    %2488 = vmatprep.subr.mxu0 0.0
    %2489 = vmatpush2.msra.mxu0 0.0
    %2490 = vmatprep.subr.mxu0 0.0
    %2491 = vmatpush2.msra.mxu0 0.0
    %2492 = vmatprep.subr.mxu0 0.0
    %2493 = vmatpush2.msra.mxu0 0.0
    %2494 = vmatprep.subr.mxu0 0.0
    %2495 = vmatpush2.msra.mxu0 0.0
    %2496 = vmatprep.subr.mxu0 0.0
    %2497 = vmatpush2.msra.mxu0 0.0
    %2498 = vmatprep.subr.mxu0 0.0
    %2499 = vmatpush2.msra.mxu0 0.0
    %2500 = vmatprep.subr.mxu0 0.0
    %2501 = vmatpush2.msra.mxu0 0.0
    %2502 = vmatprep.subr.mxu0 0.0
    %2503 = vmatpush2.msra.mxu0 0.0
    %2504 = vmatprep.subr.mxu0 0.0
    %2505 = vmatpush2.msra.mxu0 0.0
    %2506 = vmatprep.subr.mxu0 0.0
    %2507 = vmatpush2.msra.mxu0 0.0
    %2508 = vmatprep.mubr.f32.mxu0 0.0
    %2509 = vmatmul.mubr.f32.gmra.mxu0 %v2296
    %v2510 = vpop.f32.mrf.mxu0
    %v2511 = vadd.f32 0.0, %v2510
    %v2512 = vpop.f32.mrf.mxu0
    %2513 = vdwg.mxu0
    %2515 = vrot.lane.b32.xlu0 %v2511, 32
    %v2516 = vpop.permute.xlu0 %2515
    %v2518 = vadd.f32 %v2443, %v2516
    %2519 = vmatprep.subr.mxu0 0.0
    %2520 = vmatpush1.msra.mxu0 0.0
    %2521 = vmatprep.subr.mxu0 0.0
    %2522 = vmatpush1.msra.mxu0 0.0
    %2523 = vmatprep.subr.mxu0 0.0
    %2524 = vmatpush1.msra.mxu0 0.0
    %2525 = vmatprep.subr.mxu0 0.0
    %2526 = vmatpush1.msra.mxu0 0.0
    %2527 = vmatprep.subr.mxu0 0.0
    %2528 = vmatpush1.msra.mxu0 0.0
    %2529 = vmatprep.subr.mxu0 0.0
    %2530 = vmatpush1.msra.mxu0 0.0
    %2531 = vmatprep.subr.mxu0 0.0
    %2532 = vmatpush1.msra.mxu0 0.0
    %2533 = vmatprep.subr.mxu0 0.0
    %2534 = vmatpush1.msra.mxu0 0.0
    %2535 = vmatprep.subr.mxu0 0.0
    %2536 = vmatpush1.msra.mxu0 0.0
    %2537 = vmatprep.subr.mxu0 0.0
    %2538 = vmatpush1.msra.mxu0 0.0
    %2539 = vmatprep.subr.mxu0 0.0
    %2540 = vmatpush1.msra.mxu0 0.0
    %2541 = vmatprep.subr.mxu0 0.0
    %2542 = vmatpush1.msra.mxu0 0.0
    %2543 = vmatprep.subr.mxu0 0.0
    %2544 = vmatpush1.msra.mxu0 %v101
    %2545 = vmatprep.subr.mxu0 0.0
    %2546 = vmatpush1.msra.mxu0 %v100
    %2547 = vmatprep.subr.mxu0 0.0
    %2548 = vmatpush1.msra.mxu0 %v99
    %2549 = vmatprep.subr.mxu0 0.0
    %2550 = vmatpush1.msra.mxu0 %v98
    %2551 = vmatprep.subr.mxu0 0.0
    %2552 = vmatpush2.msra.mxu0 0.0
    %2553 = vmatprep.subr.mxu0 0.0
    %2554 = vmatpush2.msra.mxu0 0.0
    %2555 = vmatprep.subr.mxu0 0.0
    %2556 = vmatpush2.msra.mxu0 0.0
    %2557 = vmatprep.subr.mxu0 0.0
    %2558 = vmatpush2.msra.mxu0 0.0
    %2559 = vmatprep.subr.mxu0 0.0
    %2560 = vmatpush2.msra.mxu0 0.0
    %2561 = vmatprep.subr.mxu0 0.0
    %2562 = vmatpush2.msra.mxu0 0.0
    %2563 = vmatprep.subr.mxu0 0.0
    %2564 = vmatpush2.msra.mxu0 0.0
    %2565 = vmatprep.subr.mxu0 0.0
    %2566 = vmatpush2.msra.mxu0 0.0
    %2567 = vmatprep.subr.mxu0 0.0
    %2568 = vmatpush2.msra.mxu0 0.0
    %2569 = vmatprep.subr.mxu0 0.0
    %2570 = vmatpush2.msra.mxu0 0.0
    %2571 = vmatprep.subr.mxu0 0.0
    %2572 = vmatpush2.msra.mxu0 0.0
    %2573 = vmatprep.subr.mxu0 0.0
    %2574 = vmatpush2.msra.mxu0 0.0
    %2575 = vmatprep.subr.mxu0 0.0
    %2576 = vmatpush2.msra.mxu0 0.0
    %2577 = vmatprep.subr.mxu0 0.0
    %2578 = vmatpush2.msra.mxu0 0.0
    %2579 = vmatprep.subr.mxu0 0.0
    %2580 = vmatpush2.msra.mxu0 0.0
    %2581 = vmatprep.subr.mxu0 0.0
    %2582 = vmatpush2.msra.mxu0 0.0
    %2583 = vmatprep.mubr.f32.mxu0 0.0
    %2584 = vmatmul.mubr.f32.gmra.mxu0 %v2220
    %v2585 = vpop.f32.mrf.mxu0
    %v2586 = vadd.f32 0.0, %v2585
    %v2587 = vpop.f32.mrf.mxu0
    %2588 = vdwg.mxu0
    %2590 = vrot.lane.b32.xlu0 %v2586, 64
    %v2591 = vpop.permute.xlu0 %2590
    %v2593 = vadd.f32 %v123, %v2591
    %2594 = vmatprep.subr.mxu0 0.0
    %2595 = vmatpush1.msra.mxu0 0.0
    %2596 = vmatprep.subr.mxu0 0.0
    %2597 = vmatpush1.msra.mxu0 0.0
    %2598 = vmatprep.subr.mxu0 0.0
    %2599 = vmatpush1.msra.mxu0 0.0
    %2600 = vmatprep.subr.mxu0 0.0
    %2601 = vmatpush1.msra.mxu0 0.0
    %2602 = vmatprep.subr.mxu0 0.0
    %2603 = vmatpush1.msra.mxu0 0.0
    %2604 = vmatprep.subr.mxu0 0.0
    %2605 = vmatpush1.msra.mxu0 0.0
    %2606 = vmatprep.subr.mxu0 0.0
    %2607 = vmatpush1.msra.mxu0 0.0
    %2608 = vmatprep.subr.mxu0 0.0
    %2609 = vmatpush1.msra.mxu0 0.0
    %2610 = vmatprep.subr.mxu0 0.0
    %2611 = vmatpush1.msra.mxu0 0.0
    %2612 = vmatprep.subr.mxu0 0.0
    %2613 = vmatpush1.msra.mxu0 0.0
    %2614 = vmatprep.subr.mxu0 0.0
    %2615 = vmatpush1.msra.mxu0 0.0
    %2616 = vmatprep.subr.mxu0 0.0
    %2617 = vmatpush1.msra.mxu0 0.0
    %2618 = vmatprep.subr.mxu0 0.0
    %2619 = vmatpush1.msra.mxu0 %v117
    %2620 = vmatprep.subr.mxu0 0.0
    %2621 = vmatpush1.msra.mxu0 %v116
    %2622 = vmatprep.subr.mxu0 0.0
    %2623 = vmatpush1.msra.mxu0 %v115
    %2624 = vmatprep.subr.mxu0 0.0
    %2625 = vmatpush1.msra.mxu0 %v114
    %2626 = vmatprep.subr.mxu0 0.0
    %2627 = vmatpush2.msra.mxu0 0.0
    %2628 = vmatprep.subr.mxu0 0.0
    %2629 = vmatpush2.msra.mxu0 0.0
    %2630 = vmatprep.subr.mxu0 0.0
    %2631 = vmatpush2.msra.mxu0 0.0
    %2632 = vmatprep.subr.mxu0 0.0
    %2633 = vmatpush2.msra.mxu0 0.0
    %2634 = vmatprep.subr.mxu0 0.0
    %2635 = vmatpush2.msra.mxu0 0.0
    %2636 = vmatprep.subr.mxu0 0.0
    %2637 = vmatpush2.msra.mxu0 0.0
    %2638 = vmatprep.subr.mxu0 0.0
    %2639 = vmatpush2.msra.mxu0 0.0
    %2640 = vmatprep.subr.mxu0 0.0
    %2641 = vmatpush2.msra.mxu0 0.0
    %2642 = vmatprep.subr.mxu0 0.0
    %2643 = vmatpush2.msra.mxu0 0.0
    %2644 = vmatprep.subr.mxu0 0.0
    %2645 = vmatpush2.msra.mxu0 0.0
    %2646 = vmatprep.subr.mxu0 0.0
    %2647 = vmatpush2.msra.mxu0 0.0
    %2648 = vmatprep.subr.mxu0 0.0
    %2649 = vmatpush2.msra.mxu0 0.0
    %2650 = vmatprep.subr.mxu0 0.0
    %2651 = vmatpush2.msra.mxu0 0.0
    %2652 = vmatprep.subr.mxu0 0.0
    %2653 = vmatpush2.msra.mxu0 0.0
    %2654 = vmatprep.subr.mxu0 0.0
    %2655 = vmatpush2.msra.mxu0 0.0
    %2656 = vmatprep.subr.mxu0 0.0
    %2657 = vmatpush2.msra.mxu0 0.0
    %2658 = vmatprep.mubr.f32.mxu0 0.0
    %2659 = vmatmul.mubr.f32.gmra.mxu0 %v2296
    %v2660 = vpop.f32.mrf.mxu0
    %v2661 = vadd.f32 0.0, %v2660
    %v2662 = vpop.f32.mrf.mxu0
    %2663 = vdwg.mxu0
    %2665 = vrot.lane.b32.xlu0 %v2661, 64
    %v2666 = vpop.permute.xlu0 %2665
    %v2668 = vadd.f32 %v2593, %v2666
    %2669 = vmatprep.subr.mxu0 0.0
    %2670 = vmatpush1.msra.mxu0 0.0
    %2671 = vmatprep.subr.mxu0 0.0
    %2672 = vmatpush1.msra.mxu0 0.0
    %2673 = vmatprep.subr.mxu0 0.0
    %2674 = vmatpush1.msra.mxu0 0.0
    %2675 = vmatprep.subr.mxu0 0.0
    %2676 = vmatpush1.msra.mxu0 0.0
    %2677 = vmatprep.subr.mxu0 0.0
    %2678 = vmatpush1.msra.mxu0 0.0
    %2679 = vmatprep.subr.mxu0 0.0
    %2680 = vmatpush1.msra.mxu0 0.0
    %2681 = vmatprep.subr.mxu0 0.0
    %2682 = vmatpush1.msra.mxu0 0.0
    %2683 = vmatprep.subr.mxu0 0.0
    %2684 = vmatpush1.msra.mxu0 0.0
    %2685 = vmatprep.subr.mxu0 0.0
    %2686 = vmatpush1.msra.mxu0 0.0
    %2687 = vmatprep.subr.mxu0 0.0
    %2688 = vmatpush1.msra.mxu0 0.0
    %2689 = vmatprep.subr.mxu0 0.0
    %2690 = vmatpush1.msra.mxu0 0.0
    %2691 = vmatprep.subr.mxu0 0.0
    %2692 = vmatpush1.msra.mxu0 0.0
    %2693 = vmatprep.subr.mxu0 0.0
    %2694 = vmatpush1.msra.mxu0 %v105
    %2695 = vmatprep.subr.mxu0 0.0
    %2696 = vmatpush1.msra.mxu0 %v104
    %2697 = vmatprep.subr.mxu0 0.0
    %2698 = vmatpush1.msra.mxu0 %v103
    %2699 = vmatprep.subr.mxu0 0.0
    %2700 = vmatpush1.msra.mxu0 %v102
    %2701 = vmatprep.subr.mxu0 0.0
    %2702 = vmatpush2.msra.mxu0 0.0
    %2703 = vmatprep.subr.mxu0 0.0
    %2704 = vmatpush2.msra.mxu0 0.0
    %2705 = vmatprep.subr.mxu0 0.0
    %2706 = vmatpush2.msra.mxu0 0.0
    %2707 = vmatprep.subr.mxu0 0.0
    %2708 = vmatpush2.msra.mxu0 0.0
    %2709 = vmatprep.subr.mxu0 0.0
    %2710 = vmatpush2.msra.mxu0 0.0
    %2711 = vmatprep.subr.mxu0 0.0
    %2712 = vmatpush2.msra.mxu0 0.0
    %2713 = vmatprep.subr.mxu0 0.0
    %2714 = vmatpush2.msra.mxu0 0.0
    %2715 = vmatprep.subr.mxu0 0.0
    %2716 = vmatpush2.msra.mxu0 0.0
    %2717 = vmatprep.subr.mxu0 0.0
    %2718 = vmatpush2.msra.mxu0 0.0
    %2719 = vmatprep.subr.mxu0 0.0
    %2720 = vmatpush2.msra.mxu0 0.0
    %2721 = vmatprep.subr.mxu0 0.0
    %2722 = vmatpush2.msra.mxu0 0.0
    %2723 = vmatprep.subr.mxu0 0.0
    %2724 = vmatpush2.msra.mxu0 0.0
    %2725 = vmatprep.subr.mxu0 0.0
    %2726 = vmatpush2.msra.mxu0 0.0
    %2727 = vmatprep.subr.mxu0 0.0
    %2728 = vmatpush2.msra.mxu0 0.0
    %2729 = vmatprep.subr.mxu0 0.0
    %2730 = vmatpush2.msra.mxu0 0.0
    %2731 = vmatprep.subr.mxu0 0.0
    %2732 = vmatpush2.msra.mxu0 0.0
    %2733 = vmatprep.mubr.f32.mxu0 0.0
    %2734 = vmatmul.mubr.f32.gmra.mxu0 %v2220
    %v2735 = vpop.f32.mrf.mxu0
    %v2736 = vadd.f32 0.0, %v2735
    %v2737 = vpop.f32.mrf.mxu0
    %2738 = vdwg.mxu0
    %2740 = vrot.lane.b32.xlu0 %v2736, 96
    %v2741 = vpop.permute.xlu0 %2740
    %v2743 = vadd.f32 %v123, %v2741
    %2744 = vmatprep.subr.mxu0 0.0
    %2745 = vmatpush1.msra.mxu0 0.0
    %2746 = vmatprep.subr.mxu0 0.0
    %2747 = vmatpush1.msra.mxu0 0.0
    %2748 = vmatprep.subr.mxu0 0.0
    %2749 = vmatpush1.msra.mxu0 0.0
    %2750 = vmatprep.subr.mxu0 0.0
    %2751 = vmatpush1.msra.mxu0 0.0
    %2752 = vmatprep.subr.mxu0 0.0
    %2753 = vmatpush1.msra.mxu0 0.0
    %2754 = vmatprep.subr.mxu0 0.0
    %2755 = vmatpush1.msra.mxu0 0.0
    %2756 = vmatprep.subr.mxu0 0.0
    %2757 = vmatpush1.msra.mxu0 0.0
    %2758 = vmatprep.subr.mxu0 0.0
    %2759 = vmatpush1.msra.mxu0 0.0
    %2760 = vmatprep.subr.mxu0 0.0
    %2761 = vmatpush1.msra.mxu0 0.0
    %2762 = vmatprep.subr.mxu0 0.0
    %2763 = vmatpush1.msra.mxu0 0.0
    %2764 = vmatprep.subr.mxu0 0.0
    %2765 = vmatpush1.msra.mxu0 0.0
    %2766 = vmatprep.subr.mxu0 0.0
    %2767 = vmatpush1.msra.mxu0 0.0
    %2768 = vmatprep.subr.mxu0 0.0
    %2769 = vmatpush1.msra.mxu0 %v121
    %2770 = vmatprep.subr.mxu0 0.0
    %2771 = vmatpush1.msra.mxu0 %v120
    %2772 = vmatprep.subr.mxu0 0.0
    %2773 = vmatpush1.msra.mxu0 %v119
    %2774 = vmatprep.subr.mxu0 0.0
    %2775 = vmatpush1.msra.mxu0 %v118
    %2776 = vmatprep.subr.mxu0 0.0
    %2777 = vmatpush2.msra.mxu0 0.0
    %2778 = vmatprep.subr.mxu0 0.0
    %2779 = vmatpush2.msra.mxu0 0.0
    %2780 = vmatprep.subr.mxu0 0.0
    %2781 = vmatpush2.msra.mxu0 0.0
    %2782 = vmatprep.subr.mxu0 0.0
    %2783 = vmatpush2.msra.mxu0 0.0
    %2784 = vmatprep.subr.mxu0 0.0
    %2785 = vmatpush2.msra.mxu0 0.0
    %2786 = vmatprep.subr.mxu0 0.0
    %2787 = vmatpush2.msra.mxu0 0.0
    %2788 = vmatprep.subr.mxu0 0.0
    %2789 = vmatpush2.msra.mxu0 0.0
    %2790 = vmatprep.subr.mxu0 0.0
    %2791 = vmatpush2.msra.mxu0 0.0
    %2792 = vmatprep.subr.mxu0 0.0
    %2793 = vmatpush2.msra.mxu0 0.0
    %2794 = vmatprep.subr.mxu0 0.0
    %2795 = vmatpush2.msra.mxu0 0.0
    %2796 = vmatprep.subr.mxu0 0.0
    %2797 = vmatpush2.msra.mxu0 0.0
    %2798 = vmatprep.subr.mxu0 0.0
    %2799 = vmatpush2.msra.mxu0 0.0
    %2800 = vmatprep.subr.mxu0 0.0
    %2801 = vmatpush2.msra.mxu0 0.0
    %2802 = vmatprep.subr.mxu0 0.0
    %2803 = vmatpush2.msra.mxu0 0.0
    %2804 = vmatprep.subr.mxu0 0.0
    %2805 = vmatpush2.msra.mxu0 0.0
    %2806 = vmatprep.subr.mxu0 0.0
    %2807 = vmatpush2.msra.mxu0 0.0
    %2808 = vmatprep.mubr.f32.mxu0 0.0
    %2809 = vmatmul.mubr.f32.gmra.mxu0 %v2296
    %v2810 = vpop.f32.mrf.mxu0
    %v2811 = vadd.f32 0.0, %v2810
    %v2812 = vpop.f32.mrf.mxu0
    %2813 = vdwg.mxu0
    %2815 = vrot.lane.b32.xlu0 %v2811, 96
    %v2816 = vpop.permute.xlu0 %2815
    %v2818 = vadd.f32 %v2743, %v2816
    %v2819 = vxor.u32 %v2368, 2147483648
    %v2820 = vmul.f32 %v2819, 1.442695
    %v2821 = vpow.pop %v2820
    %v2822 = vadd.f32 %v2821, 1.0
    %v2823 = vrcp.pop %v2822
    %v2824 = vmul.f32 1.0, %v2823
    %v2825 = vxor.u32 %v2518, 2147483648
    %v2826 = vmul.f32 %v2825, 1.442695
    %v2827 = vpow.pop %v2826
    %v2828 = vadd.f32 %v2827, 1.0
    %v2829 = vrcp.pop %v2828
    %v2830 = vmul.f32 1.0, %v2829
    %v2831 = vtanh.pop %v2668
    %v2832 = vxor.u32 %v2818, 2147483648
    %v2833 = vmul.f32 %v2832, 1.442695
    %v2834 = vpow.pop %v2833
    %v2835 = vadd.f32 %v2834, 1.0
    %v2836 = vrcp.pop %v2835
    %v2837 = vmul.f32 1.0, %v2836
    %v2838 = vmul.f32 %v2830, %v1888
    %2840 = vrot.lane.b32.xlu0 %v2831, 64
    %v2841 = vpop.permute.xlu0 %2840
    %v2843 = vmul.f32 %v2824, %v2841
    %2845 = vrot.lane.b32.xlu0 %v2843, 32
    %v2846 = vpop.permute.xlu0 %2845
    %v2848 = vadd.f32 %v2838, %v2846
    %v2849 = vtanh.pop %v2848
    %2851 = vrot.lane.b32.xlu0 %v2849, 64
    %v2852 = vpop.permute.xlu0 %2851
    %v2854 = vmul.f32 %v2837, %v2852
    %2855 = vmatprep.subr.mxu0 0.0
    %2856 = vmatpush1.msra.mxu0 0.0
    %2857 = vmatprep.subr.mxu0 0.0
    %2858 = vmatpush1.msra.mxu0 0.0
    %2859 = vmatprep.subr.mxu0 0.0
    %2860 = vmatpush1.msra.mxu0 0.0
    %2861 = vmatprep.subr.mxu0 0.0
    %2862 = vmatpush1.msra.mxu0 0.0
    %2863 = vmatprep.subr.mxu0 0.0
    %2864 = vmatpush1.msra.mxu0 0.0
    %2865 = vmatprep.subr.mxu0 0.0
    %2866 = vmatpush1.msra.mxu0 0.0
    %2867 = vmatprep.subr.mxu0 0.0
    %2868 = vmatpush1.msra.mxu0 0.0
    %2869 = vmatprep.subr.mxu0 0.0
    %2870 = vmatpush1.msra.mxu0 0.0
    %2871 = vmatprep.subr.mxu0 0.0
    %2872 = vmatpush1.msra.mxu0 0.0
    %2873 = vmatprep.subr.mxu0 0.0
    %2874 = vmatpush1.msra.mxu0 0.0
    %2875 = vmatprep.subr.mxu0 0.0
    %2876 = vmatpush1.msra.mxu0 0.0
    %2877 = vmatprep.subr.mxu0 0.0
    %2878 = vmatpush1.msra.mxu0 0.0
    %2879 = vmatprep.subr.mxu0 0.0
    %2880 = vmatpush1.msra.mxu0 %v77
    %2881 = vmatprep.subr.mxu0 0.0
    %2882 = vmatpush1.msra.mxu0 %v76
    %2883 = vmatprep.subr.mxu0 0.0
    %2884 = vmatpush1.msra.mxu0 %v75
    %2885 = vmatprep.subr.mxu0 0.0
    %2886 = vmatpush1.msra.mxu0 %v74
    %2887 = vmatprep.subr.mxu0 0.0
    %2888 = vmatpush2.msra.mxu0 0.0
    %2889 = vmatprep.subr.mxu0 0.0
    %2890 = vmatpush2.msra.mxu0 0.0
    %2891 = vmatprep.subr.mxu0 0.0
    %2892 = vmatpush2.msra.mxu0 0.0
    %2893 = vmatprep.subr.mxu0 0.0
    %2894 = vmatpush2.msra.mxu0 0.0
    %2895 = vmatprep.subr.mxu0 0.0
    %2896 = vmatpush2.msra.mxu0 0.0
    %2897 = vmatprep.subr.mxu0 0.0
    %2898 = vmatpush2.msra.mxu0 0.0
    %2899 = vmatprep.subr.mxu0 0.0
    %2900 = vmatpush2.msra.mxu0 0.0
    %2901 = vmatprep.subr.mxu0 0.0
    %2902 = vmatpush2.msra.mxu0 0.0
    %2903 = vmatprep.subr.mxu0 0.0
    %2904 = vmatpush2.msra.mxu0 0.0
    %2905 = vmatprep.subr.mxu0 0.0
    %2906 = vmatpush2.msra.mxu0 0.0
    %2907 = vmatprep.subr.mxu0 0.0
    %2908 = vmatpush2.msra.mxu0 0.0
    %2909 = vmatprep.subr.mxu0 0.0
    %2910 = vmatpush2.msra.mxu0 0.0
    %2911 = vmatprep.subr.mxu0 0.0
    %2912 = vmatpush2.msra.mxu0 0.0
    %2913 = vmatprep.subr.mxu0 0.0
    %2914 = vmatpush2.msra.mxu0 0.0
    %2915 = vmatprep.subr.mxu0 0.0
    %2916 = vmatpush2.msra.mxu0 0.0
    %2917 = vmatprep.subr.mxu0 0.0
    %2918 = vmatpush2.msra.mxu0 0.0
    %2919 = vmatprep.mubr.f32.mxu0 0.0
    %2920 = vmatmul.mubr.f32.gmra.mxu0 %v2220
    %v2921 = vpop.f32.mrf.mxu0
    %v2922 = vadd.f32 0.0, %v2921
    %v2923 = vpop.f32.mrf.mxu0
    %2924 = vdwg.mxu0
    %v2926 = vrot.slane %v2922, 5
    %v2928 = vadd.f32 %v353, %v2926
    %2929 = vmatprep.subr.mxu0 0.0
    %2930 = vmatpush1.msra.mxu0 0.0
    %2931 = vmatprep.subr.mxu0 0.0
    %2932 = vmatpush1.msra.mxu0 0.0
    %2933 = vmatprep.subr.mxu0 0.0
    %2934 = vmatpush1.msra.mxu0 0.0
    %2935 = vmatprep.subr.mxu0 0.0
    %2936 = vmatpush1.msra.mxu0 0.0
    %2937 = vmatprep.subr.mxu0 0.0
    %2938 = vmatpush1.msra.mxu0 0.0
    %2939 = vmatprep.subr.mxu0 0.0
    %2940 = vmatpush1.msra.mxu0 0.0
    %2941 = vmatprep.subr.mxu0 0.0
    %2942 = vmatpush1.msra.mxu0 0.0
    %2943 = vmatprep.subr.mxu0 0.0
    %2944 = vmatpush1.msra.mxu0 0.0
    %2945 = vmatprep.subr.mxu0 0.0
    %2946 = vmatpush1.msra.mxu0 0.0
    %2947 = vmatprep.subr.mxu0 0.0
    %2948 = vmatpush1.msra.mxu0 0.0
    %2949 = vmatprep.subr.mxu0 0.0
    %2950 = vmatpush1.msra.mxu0 0.0
    %2951 = vmatprep.subr.mxu0 0.0
    %2952 = vmatpush1.msra.mxu0 0.0
    %2953 = vmatprep.subr.mxu0 0.0
    %2954 = vmatpush1.msra.mxu0 %v81
    %2955 = vmatprep.subr.mxu0 0.0
    %2956 = vmatpush1.msra.mxu0 %v80
    %2957 = vmatprep.subr.mxu0 0.0
    %2958 = vmatpush1.msra.mxu0 %v79
    %2959 = vmatprep.subr.mxu0 0.0
    %2960 = vmatpush1.msra.mxu0 %v78
    %2961 = vmatprep.subr.mxu0 0.0
    %2962 = vmatpush2.msra.mxu0 0.0
    %2963 = vmatprep.subr.mxu0 0.0
    %2964 = vmatpush2.msra.mxu0 0.0
    %2965 = vmatprep.subr.mxu0 0.0
    %2966 = vmatpush2.msra.mxu0 0.0
    %2967 = vmatprep.subr.mxu0 0.0
    %2968 = vmatpush2.msra.mxu0 0.0
    %2969 = vmatprep.subr.mxu0 0.0
    %2970 = vmatpush2.msra.mxu0 0.0
    %2971 = vmatprep.subr.mxu0 0.0
    %2972 = vmatpush2.msra.mxu0 0.0
    %2973 = vmatprep.subr.mxu0 0.0
    %2974 = vmatpush2.msra.mxu0 0.0
    %2975 = vmatprep.subr.mxu0 0.0
    %2976 = vmatpush2.msra.mxu0 0.0
    %2977 = vmatprep.subr.mxu0 0.0
    %2978 = vmatpush2.msra.mxu0 0.0
    %2979 = vmatprep.subr.mxu0 0.0
    %2980 = vmatpush2.msra.mxu0 0.0
    %2981 = vmatprep.subr.mxu0 0.0
    %2982 = vmatpush2.msra.mxu0 0.0
    %2983 = vmatprep.subr.mxu0 0.0
    %2984 = vmatpush2.msra.mxu0 0.0
    %2985 = vmatprep.subr.mxu0 0.0
    %2986 = vmatpush2.msra.mxu0 0.0
    %2987 = vmatprep.subr.mxu0 0.0
    %2988 = vmatpush2.msra.mxu0 0.0
    %2989 = vmatprep.subr.mxu0 0.0
    %2990 = vmatpush2.msra.mxu0 0.0
    %2991 = vmatprep.subr.mxu0 0.0
    %2992 = vmatpush2.msra.mxu0 0.0
    %2993 = vmatprep.mubr.f32.mxu0 0.0
    %2994 = vmatmul.mubr.f32.gmra.mxu0 %v2220
    %v2995 = vpop.f32.mrf.mxu0
    %v2996 = vadd.f32 0.0, %v2995
    %v2997 = vpop.f32.mrf.mxu0
    %2998 = vdwg.mxu0
    %v3000 = vrot.slane %v2996, 5
    %v3002 = vadd.f32 %v427, %v3000
    %3003 = vmatprep.subr.mxu0 0.0
    %3004 = vmatpush1.msra.mxu0 0.0
    %3005 = vmatprep.subr.mxu0 0.0
    %3006 = vmatpush1.msra.mxu0 0.0
    %3007 = vmatprep.subr.mxu0 0.0
    %3008 = vmatpush1.msra.mxu0 0.0
    %3009 = vmatprep.subr.mxu0 0.0
    %3010 = vmatpush1.msra.mxu0 0.0
    %3011 = vmatprep.subr.mxu0 0.0
    %3012 = vmatpush1.msra.mxu0 0.0
    %3013 = vmatprep.subr.mxu0 0.0
    %3014 = vmatpush1.msra.mxu0 0.0
    %3015 = vmatprep.subr.mxu0 0.0
    %3016 = vmatpush1.msra.mxu0 0.0
    %3017 = vmatprep.subr.mxu0 0.0
    %3018 = vmatpush1.msra.mxu0 0.0
    %3019 = vmatprep.subr.mxu0 0.0
    %3020 = vmatpush1.msra.mxu0 0.0
    %3021 = vmatprep.subr.mxu0 0.0
    %3022 = vmatpush1.msra.mxu0 0.0
    %3023 = vmatprep.subr.mxu0 0.0
    %3024 = vmatpush1.msra.mxu0 0.0
    %3025 = vmatprep.subr.mxu0 0.0
    %3026 = vmatpush1.msra.mxu0 0.0
    %3027 = vmatprep.subr.mxu0 0.0
    %3028 = vmatpush1.msra.mxu0 %v85
    %3029 = vmatprep.subr.mxu0 0.0
    %3030 = vmatpush1.msra.mxu0 %v84
    %3031 = vmatprep.subr.mxu0 0.0
    %3032 = vmatpush1.msra.mxu0 %v83
    %3033 = vmatprep.subr.mxu0 0.0
    %3034 = vmatpush1.msra.mxu0 %v82
    %3035 = vmatprep.subr.mxu0 0.0
    %3036 = vmatpush2.msra.mxu0 0.0
    %3037 = vmatprep.subr.mxu0 0.0
    %3038 = vmatpush2.msra.mxu0 0.0
    %3039 = vmatprep.subr.mxu0 0.0
    %3040 = vmatpush2.msra.mxu0 0.0
    %3041 = vmatprep.subr.mxu0 0.0
    %3042 = vmatpush2.msra.mxu0 0.0
    %3043 = vmatprep.subr.mxu0 0.0
    %3044 = vmatpush2.msra.mxu0 0.0
    %3045 = vmatprep.subr.mxu0 0.0
    %3046 = vmatpush2.msra.mxu0 0.0
    %3047 = vmatprep.subr.mxu0 0.0
    %3048 = vmatpush2.msra.mxu0 0.0
    %3049 = vmatprep.subr.mxu0 0.0
    %3050 = vmatpush2.msra.mxu0 0.0
    %3051 = vmatprep.subr.mxu0 0.0
    %3052 = vmatpush2.msra.mxu0 0.0
    %3053 = vmatprep.subr.mxu0 0.0
    %3054 = vmatpush2.msra.mxu0 0.0
    %3055 = vmatprep.subr.mxu0 0.0
    %3056 = vmatpush2.msra.mxu0 0.0
    %3057 = vmatprep.subr.mxu0 0.0
    %3058 = vmatpush2.msra.mxu0 0.0
    %3059 = vmatprep.subr.mxu0 0.0
    %3060 = vmatpush2.msra.mxu0 0.0
    %3061 = vmatprep.subr.mxu0 0.0
    %3062 = vmatpush2.msra.mxu0 0.0
    %3063 = vmatprep.subr.mxu0 0.0
    %3064 = vmatpush2.msra.mxu0 0.0
    %3065 = vmatprep.subr.mxu0 0.0
    %3066 = vmatpush2.msra.mxu0 0.0
    %3067 = vmatprep.mubr.f32.mxu0 0.0
    %3068 = vmatmul.mubr.f32.gmra.mxu0 %v2220
    %v3069 = vpop.f32.mrf.mxu0
    %v3070 = vadd.f32 0.0, %v3069
    %v3071 = vpop.f32.mrf.mxu0
    %3072 = vdwg.mxu0
    %v3074 = vrot.slane %v3070, 5
    %v3076 = vadd.f32 %v500, %v3074
    %3077 = vmatprep.subr.mxu0 0.0
    %3078 = vmatpush1.msra.mxu0 0.0
    %3079 = vmatprep.subr.mxu0 0.0
    %3080 = vmatpush1.msra.mxu0 0.0
    %3081 = vmatprep.subr.mxu0 0.0
    %3082 = vmatpush1.msra.mxu0 0.0
    %3083 = vmatprep.subr.mxu0 0.0
    %3084 = vmatpush1.msra.mxu0 0.0
    %3085 = vmatprep.subr.mxu0 0.0
    %3086 = vmatpush1.msra.mxu0 0.0
    %3087 = vmatprep.subr.mxu0 0.0
    %3088 = vmatpush1.msra.mxu0 0.0
    %3089 = vmatprep.subr.mxu0 0.0
    %3090 = vmatpush1.msra.mxu0 0.0
    %3091 = vmatprep.subr.mxu0 0.0
    %3092 = vmatpush1.msra.mxu0 0.0
    %3093 = vmatprep.subr.mxu0 0.0
    %3094 = vmatpush1.msra.mxu0 0.0
    %3095 = vmatprep.subr.mxu0 0.0
    %3096 = vmatpush1.msra.mxu0 0.0
    %3097 = vmatprep.subr.mxu0 0.0
    %3098 = vmatpush1.msra.mxu0 0.0
    %3099 = vmatprep.subr.mxu0 0.0
    %3100 = vmatpush1.msra.mxu0 0.0
    %3101 = vmatprep.subr.mxu0 0.0
    %3102 = vmatpush1.msra.mxu0 %v89
    %3103 = vmatprep.subr.mxu0 0.0
    %3104 = vmatpush1.msra.mxu0 %v88
    %3105 = vmatprep.subr.mxu0 0.0
    %3106 = vmatpush1.msra.mxu0 %v87
    %3107 = vmatprep.subr.mxu0 0.0
    %3108 = vmatpush1.msra.mxu0 %v86
    %3109 = vmatprep.subr.mxu0 0.0
    %3110 = vmatpush2.msra.mxu0 0.0
    %3111 = vmatprep.subr.mxu0 0.0
    %3112 = vmatpush2.msra.mxu0 0.0
    %3113 = vmatprep.subr.mxu0 0.0
    %3114 = vmatpush2.msra.mxu0 0.0
    %3115 = vmatprep.subr.mxu0 0.0
    %3116 = vmatpush2.msra.mxu0 0.0
    %3117 = vmatprep.subr.mxu0 0.0
    %3118 = vmatpush2.msra.mxu0 0.0
    %3119 = vmatprep.subr.mxu0 0.0
    %3120 = vmatpush2.msra.mxu0 0.0
    %3121 = vmatprep.subr.mxu0 0.0
    %3122 = vmatpush2.msra.mxu0 0.0
    %3123 = vmatprep.subr.mxu0 0.0
    %3124 = vmatpush2.msra.mxu0 0.0
    %3125 = vmatprep.subr.mxu0 0.0
    %3126 = vmatpush2.msra.mxu0 0.0
    %3127 = vmatprep.subr.mxu0 0.0
    %3128 = vmatpush2.msra.mxu0 0.0
    %3129 = vmatprep.subr.mxu0 0.0
    %3130 = vmatpush2.msra.mxu0 0.0
    %3131 = vmatprep.subr.mxu0 0.0
    %3132 = vmatpush2.msra.mxu0 0.0
    %3133 = vmatprep.subr.mxu0 0.0
    %3134 = vmatpush2.msra.mxu0 0.0
    %3135 = vmatprep.subr.mxu0 0.0
    %3136 = vmatpush2.msra.mxu0 0.0
    %3137 = vmatprep.subr.mxu0 0.0
    %3138 = vmatpush2.msra.mxu0 0.0
    %3139 = vmatprep.subr.mxu0 0.0
    %3140 = vmatpush2.msra.mxu0 0.0
    %3141 = vmatprep.mubr.f32.mxu0 0.0
    %3142 = vmatmul.mubr.f32.gmra.mxu0 %v2220
    %v3143 = vpop.f32.mrf.mxu0
    %v3144 = vadd.f32 0.0, %v3143
    %v3145 = vpop.f32.mrf.mxu0
    %3146 = vdwg.mxu0
    %v3148 = vrot.slane %v3144, 5
    %v3150 = vadd.f32 %v573, %v3148
    %v3151 = vxor.u32 %v2928, 2147483648
    %v3152 = vmul.f32 %v3151, 1.442695
    %v3153 = vpow.pop %v3152
    %v3154 = vadd.f32 %v3153, 1.0
    %v3155 = vrcp.pop %v3154
    %v3156 = vmul.f32 1.0, %v3155
    %v3157 = vxor.u32 %v3002, 2147483648
    %v3158 = vmul.f32 %v3157, 1.442695
    %v3159 = vpow.pop %v3158
    %v3160 = vadd.f32 %v3159, 1.0
    %v3161 = vrcp.pop %v3160
    %v3162 = vmul.f32 1.0, %v3161
    %v3163 = vtanh.pop %v3076
    %v3164 = vxor.u32 %v3150, 2147483648
    %v3165 = vmul.f32 %v3164, 1.442695
    %v3166 = vpow.pop %v3165
    %v3167 = vadd.f32 %v3166, 1.0
    %v3168 = vrcp.pop %v3167
    %v3169 = vmul.f32 1.0, %v3168
    %v3171 = vrot.slane %v2215, 7
    %v3173 = vmul.f32 %v3162, %v3171
    %v3174 = vmul.f32 %v3156, %v3163
    %v3175 = vadd.f32 %v3173, %v3174
    %v3176 = vtanh.pop %v3175
    %v3177 = vmul.f32 %v3169, %v3176
    %v3179 = vrot.slane %v3177, 3
    %v3180 = vsel %vm200, %v3179, 0
    %3182 = vmatprep.subr.mxu0 0.0
    %3183 = vmatpush1.msra.mxu0 0.0
    %3184 = vmatprep.subr.mxu0 0.0
    %3185 = vmatpush1.msra.mxu0 0.0
    %3186 = vmatprep.subr.mxu0 0.0
    %3187 = vmatpush1.msra.mxu0 0.0
    %3188 = vmatprep.subr.mxu0 0.0
    %3189 = vmatpush1.msra.mxu0 0.0
    %3190 = vmatprep.subr.mxu0 0.0
    %3191 = vmatpush1.msra.mxu0 0.0
    %3192 = vmatprep.subr.mxu0 0.0
    %3193 = vmatpush1.msra.mxu0 0.0
    %3194 = vmatprep.subr.mxu0 0.0
    %3195 = vmatpush1.msra.mxu0 0.0
    %3196 = vmatprep.subr.mxu0 0.0
    %3197 = vmatpush1.msra.mxu0 0.0
    %3198 = vmatprep.subr.mxu0 0.0
    %3199 = vmatpush1.msra.mxu0 0.0
    %3200 = vmatprep.subr.mxu0 0.0
    %3201 = vmatpush1.msra.mxu0 0.0
    %3202 = vmatprep.subr.mxu0 0.0
    %3203 = vmatpush1.msra.mxu0 0.0
    %3204 = vmatprep.subr.mxu0 0.0
    %3205 = vmatpush1.msra.mxu0 0.0
    %3206 = vmatprep.subr.mxu0 0.0
    %3207 = vmatpush1.msra.mxu0 %v93
    %3208 = vmatprep.subr.mxu0 0.0
    %3209 = vmatpush1.msra.mxu0 %v92
    %3210 = vmatprep.subr.mxu0 0.0
    %3211 = vmatpush1.msra.mxu0 %v91
    %3212 = vmatprep.subr.mxu0 0.0
    %3213 = vmatpush1.msra.mxu0 %v90
    %3214 = vmatprep.subr.mxu0 0.0
    %3215 = vmatpush2.msra.mxu0 0.0
    %3216 = vmatprep.subr.mxu0 0.0
    %3217 = vmatpush2.msra.mxu0 0.0
    %3218 = vmatprep.subr.mxu0 0.0
    %3219 = vmatpush2.msra.mxu0 0.0
    %3220 = vmatprep.subr.mxu0 0.0
    %3221 = vmatpush2.msra.mxu0 0.0
    %3222 = vmatprep.subr.mxu0 0.0
    %3223 = vmatpush2.msra.mxu0 0.0
    %3224 = vmatprep.subr.mxu0 0.0
    %3225 = vmatpush2.msra.mxu0 0.0
    %3226 = vmatprep.subr.mxu0 0.0
    %3227 = vmatpush2.msra.mxu0 0.0
    %3228 = vmatprep.subr.mxu0 0.0
    %3229 = vmatpush2.msra.mxu0 0.0
    %3230 = vmatprep.subr.mxu0 0.0
    %3231 = vmatpush2.msra.mxu0 0.0
    %3232 = vmatprep.subr.mxu0 0.0
    %3233 = vmatpush2.msra.mxu0 0.0
    %3234 = vmatprep.subr.mxu0 0.0
    %3235 = vmatpush2.msra.mxu0 0.0
    %3236 = vmatprep.subr.mxu0 0.0
    %3237 = vmatpush2.msra.mxu0 0.0
    %3238 = vmatprep.subr.mxu0 0.0
    %3239 = vmatpush2.msra.mxu0 0.0
    %3240 = vmatprep.subr.mxu0 0.0
    %3241 = vmatpush2.msra.mxu0 0.0
    %3242 = vmatprep.subr.mxu0 0.0
    %3243 = vmatpush2.msra.mxu0 0.0
    %3244 = vmatprep.subr.mxu0 0.0
    %3245 = vmatpush2.msra.mxu0 0.0
    %3246 = vmatprep.mubr.f32.mxu0 0.0
    %3247 = vmatmul.mubr.f32.gmra.mxu0 %v3180
    %v3248 = vpop.f32.mrf.mxu0
    %v3249 = vadd.f32 0.0, %v3248
    %v3250 = vpop.f32.mrf.mxu0
    %3251 = vdwg.mxu0
    %v3252 = vadd.f32 %v123, %v3249
    %3254 = vrot.lane.b32.xlu0 %v2854, 32
    %v3255 = vpop.permute.xlu0 %3254
    %v3256 = vsel %vm200, %v3255, 0
    %3258 = vmatprep.subr.mxu0 0.0
    %3259 = vmatpush1.msra.mxu0 0.0
    %3260 = vmatprep.subr.mxu0 0.0
    %3261 = vmatpush1.msra.mxu0 0.0
    %3262 = vmatprep.subr.mxu0 0.0
    %3263 = vmatpush1.msra.mxu0 0.0
    %3264 = vmatprep.subr.mxu0 0.0
    %3265 = vmatpush1.msra.mxu0 0.0
    %3266 = vmatprep.subr.mxu0 0.0
    %3267 = vmatpush1.msra.mxu0 0.0
    %3268 = vmatprep.subr.mxu0 0.0
    %3269 = vmatpush1.msra.mxu0 0.0
    %3270 = vmatprep.subr.mxu0 0.0
    %3271 = vmatpush1.msra.mxu0 0.0
    %3272 = vmatprep.subr.mxu0 0.0
    %3273 = vmatpush1.msra.mxu0 0.0
    %3274 = vmatprep.subr.mxu0 0.0
    %3275 = vmatpush1.msra.mxu0 0.0
    %3276 = vmatprep.subr.mxu0 0.0
    %3277 = vmatpush1.msra.mxu0 0.0
    %3278 = vmatprep.subr.mxu0 0.0
    %3279 = vmatpush1.msra.mxu0 0.0
    %3280 = vmatprep.subr.mxu0 0.0
    %3281 = vmatpush1.msra.mxu0 0.0
    %3282 = vmatprep.subr.mxu0 0.0
    %3283 = vmatpush1.msra.mxu0 %v109
    %3284 = vmatprep.subr.mxu0 0.0
    %3285 = vmatpush1.msra.mxu0 %v108
    %3286 = vmatprep.subr.mxu0 0.0
    %3287 = vmatpush1.msra.mxu0 %v107
    %3288 = vmatprep.subr.mxu0 0.0
    %3289 = vmatpush1.msra.mxu0 %v106
    %3290 = vmatprep.subr.mxu0 0.0
    %3291 = vmatpush2.msra.mxu0 0.0
    %3292 = vmatprep.subr.mxu0 0.0
    %3293 = vmatpush2.msra.mxu0 0.0
    %3294 = vmatprep.subr.mxu0 0.0
    %3295 = vmatpush2.msra.mxu0 0.0
    %3296 = vmatprep.subr.mxu0 0.0
    %3297 = vmatpush2.msra.mxu0 0.0
    %3298 = vmatprep.subr.mxu0 0.0
    %3299 = vmatpush2.msra.mxu0 0.0
    %3300 = vmatprep.subr.mxu0 0.0
    %3301 = vmatpush2.msra.mxu0 0.0
    %3302 = vmatprep.subr.mxu0 0.0
    %3303 = vmatpush2.msra.mxu0 0.0
    %3304 = vmatprep.subr.mxu0 0.0
    %3305 = vmatpush2.msra.mxu0 0.0
    %3306 = vmatprep.subr.mxu0 0.0
    %3307 = vmatpush2.msra.mxu0 0.0
    %3308 = vmatprep.subr.mxu0 0.0
    %3309 = vmatpush2.msra.mxu0 0.0
    %3310 = vmatprep.subr.mxu0 0.0
    %3311 = vmatpush2.msra.mxu0 0.0
    %3312 = vmatprep.subr.mxu0 0.0
    %3313 = vmatpush2.msra.mxu0 0.0
    %3314 = vmatprep.subr.mxu0 0.0
    %3315 = vmatpush2.msra.mxu0 0.0
    %3316 = vmatprep.subr.mxu0 0.0
    %3317 = vmatpush2.msra.mxu0 0.0
    %3318 = vmatprep.subr.mxu0 0.0
    %3319 = vmatpush2.msra.mxu0 0.0
    %3320 = vmatprep.subr.mxu0 0.0
    %3321 = vmatpush2.msra.mxu0 0.0
    %3322 = vmatprep.mubr.f32.mxu0 0.0
    %3323 = vmatmul.mubr.f32.gmra.mxu0 %v3256
    %v3324 = vpop.f32.mrf.mxu0
    %v3325 = vadd.f32 0.0, %v3324
    %v3326 = vpop.f32.mrf.mxu0
    %3327 = vdwg.mxu0
    %v3328 = vadd.f32 %v3252, %v3325
    %3329 = vmatprep.subr.mxu0 0.0
    %3330 = vmatpush1.msra.mxu0 0.0
    %3331 = vmatprep.subr.mxu0 0.0
    %3332 = vmatpush1.msra.mxu0 0.0
    %3333 = vmatprep.subr.mxu0 0.0
    %3334 = vmatpush1.msra.mxu0 0.0
    %3335 = vmatprep.subr.mxu0 0.0
    %3336 = vmatpush1.msra.mxu0 0.0
    %3337 = vmatprep.subr.mxu0 0.0
    %3338 = vmatpush1.msra.mxu0 0.0
    %3339 = vmatprep.subr.mxu0 0.0
    %3340 = vmatpush1.msra.mxu0 0.0
    %3341 = vmatprep.subr.mxu0 0.0
    %3342 = vmatpush1.msra.mxu0 0.0
    %3343 = vmatprep.subr.mxu0 0.0
    %3344 = vmatpush1.msra.mxu0 0.0
    %3345 = vmatprep.subr.mxu0 0.0
    %3346 = vmatpush1.msra.mxu0 0.0
    %3347 = vmatprep.subr.mxu0 0.0
    %3348 = vmatpush1.msra.mxu0 0.0
    %3349 = vmatprep.subr.mxu0 0.0
    %3350 = vmatpush1.msra.mxu0 0.0
    %3351 = vmatprep.subr.mxu0 0.0
    %3352 = vmatpush1.msra.mxu0 0.0
    %3353 = vmatprep.subr.mxu0 0.0
    %3354 = vmatpush1.msra.mxu0 %v97
    %3355 = vmatprep.subr.mxu0 0.0
    %3356 = vmatpush1.msra.mxu0 %v96
    %3357 = vmatprep.subr.mxu0 0.0
    %3358 = vmatpush1.msra.mxu0 %v95
    %3359 = vmatprep.subr.mxu0 0.0
    %3360 = vmatpush1.msra.mxu0 %v94
    %3361 = vmatprep.subr.mxu0 0.0
    %3362 = vmatpush2.msra.mxu0 0.0
    %3363 = vmatprep.subr.mxu0 0.0
    %3364 = vmatpush2.msra.mxu0 0.0
    %3365 = vmatprep.subr.mxu0 0.0
    %3366 = vmatpush2.msra.mxu0 0.0
    %3367 = vmatprep.subr.mxu0 0.0
    %3368 = vmatpush2.msra.mxu0 0.0
    %3369 = vmatprep.subr.mxu0 0.0
    %3370 = vmatpush2.msra.mxu0 0.0
    %3371 = vmatprep.subr.mxu0 0.0
    %3372 = vmatpush2.msra.mxu0 0.0
    %3373 = vmatprep.subr.mxu0 0.0
    %3374 = vmatpush2.msra.mxu0 0.0
    %3375 = vmatprep.subr.mxu0 0.0
    %3376 = vmatpush2.msra.mxu0 0.0
    %3377 = vmatprep.subr.mxu0 0.0
    %3378 = vmatpush2.msra.mxu0 0.0
    %3379 = vmatprep.subr.mxu0 0.0
    %3380 = vmatpush2.msra.mxu0 0.0
    %3381 = vmatprep.subr.mxu0 0.0
    %3382 = vmatpush2.msra.mxu0 0.0
    %3383 = vmatprep.subr.mxu0 0.0
    %3384 = vmatpush2.msra.mxu0 0.0
    %3385 = vmatprep.subr.mxu0 0.0
    %3386 = vmatpush2.msra.mxu0 0.0
    %3387 = vmatprep.subr.mxu0 0.0
    %3388 = vmatpush2.msra.mxu0 0.0
    %3389 = vmatprep.subr.mxu0 0.0
    %3390 = vmatpush2.msra.mxu0 0.0
    %3391 = vmatprep.subr.mxu0 0.0
    %3392 = vmatpush2.msra.mxu0 0.0
    %3393 = vmatprep.mubr.f32.mxu0 0.0
    %3394 = vmatmul.mubr.f32.gmra.mxu0 %v3180
    %v3395 = vpop.f32.mrf.mxu0
    %v3396 = vadd.f32 0.0, %v3395
    %v3397 = vpop.f32.mrf.mxu0
    %3398 = vdwg.mxu0
    %3400 = vrot.lane.b32.xlu0 %v3396, 32
    %v3401 = vpop.permute.xlu0 %3400
    %v3403 = vadd.f32 %v123, %v3401
    %3404 = vmatprep.subr.mxu0 0.0
    %3405 = vmatpush1.msra.mxu0 0.0
    %3406 = vmatprep.subr.mxu0 0.0
    %3407 = vmatpush1.msra.mxu0 0.0
    %3408 = vmatprep.subr.mxu0 0.0
    %3409 = vmatpush1.msra.mxu0 0.0
    %3410 = vmatprep.subr.mxu0 0.0
    %3411 = vmatpush1.msra.mxu0 0.0
    %3412 = vmatprep.subr.mxu0 0.0
    %3413 = vmatpush1.msra.mxu0 0.0
    %3414 = vmatprep.subr.mxu0 0.0
    %3415 = vmatpush1.msra.mxu0 0.0
    %3416 = vmatprep.subr.mxu0 0.0
    %3417 = vmatpush1.msra.mxu0 0.0
    %3418 = vmatprep.subr.mxu0 0.0
    %3419 = vmatpush1.msra.mxu0 0.0
    %3420 = vmatprep.subr.mxu0 0.0
    %3421 = vmatpush1.msra.mxu0 0.0
    %3422 = vmatprep.subr.mxu0 0.0
    %3423 = vmatpush1.msra.mxu0 0.0
    %3424 = vmatprep.subr.mxu0 0.0
    %3425 = vmatpush1.msra.mxu0 0.0
    %3426 = vmatprep.subr.mxu0 0.0
    %3427 = vmatpush1.msra.mxu0 0.0
    %3428 = vmatprep.subr.mxu0 0.0
    %3429 = vmatpush1.msra.mxu0 %v113
    %3430 = vmatprep.subr.mxu0 0.0
    %3431 = vmatpush1.msra.mxu0 %v112
    %3432 = vmatprep.subr.mxu0 0.0
    %3433 = vmatpush1.msra.mxu0 %v111
    %3434 = vmatprep.subr.mxu0 0.0
    %3435 = vmatpush1.msra.mxu0 %v110
    %3436 = vmatprep.subr.mxu0 0.0
    %3437 = vmatpush2.msra.mxu0 0.0
    %3438 = vmatprep.subr.mxu0 0.0
    %3439 = vmatpush2.msra.mxu0 0.0
    %3440 = vmatprep.subr.mxu0 0.0
    %3441 = vmatpush2.msra.mxu0 0.0
    %3442 = vmatprep.subr.mxu0 0.0
    %3443 = vmatpush2.msra.mxu0 0.0
    %3444 = vmatprep.subr.mxu0 0.0
    %3445 = vmatpush2.msra.mxu0 0.0
    %3446 = vmatprep.subr.mxu0 0.0
    %3447 = vmatpush2.msra.mxu0 0.0
    %3448 = vmatprep.subr.mxu0 0.0
    %3449 = vmatpush2.msra.mxu0 0.0
    %3450 = vmatprep.subr.mxu0 0.0
    %3451 = vmatpush2.msra.mxu0 0.0
    %3452 = vmatprep.subr.mxu0 0.0
    %3453 = vmatpush2.msra.mxu0 0.0
    %3454 = vmatprep.subr.mxu0 0.0
    %3455 = vmatpush2.msra.mxu0 0.0
    %3456 = vmatprep.subr.mxu0 0.0
    %3457 = vmatpush2.msra.mxu0 0.0
    %3458 = vmatprep.subr.mxu0 0.0
    %3459 = vmatpush2.msra.mxu0 0.0
    %3460 = vmatprep.subr.mxu0 0.0
    %3461 = vmatpush2.msra.mxu0 0.0
    %3462 = vmatprep.subr.mxu0 0.0
    %3463 = vmatpush2.msra.mxu0 0.0
    %3464 = vmatprep.subr.mxu0 0.0
    %3465 = vmatpush2.msra.mxu0 0.0
    %3466 = vmatprep.subr.mxu0 0.0
    %3467 = vmatpush2.msra.mxu0 0.0
    %3468 = vmatprep.mubr.f32.mxu0 0.0
    %3469 = vmatmul.mubr.f32.gmra.mxu0 %v3256
    %v3470 = vpop.f32.mrf.mxu0
    %v3471 = vadd.f32 0.0, %v3470
    %v3472 = vpop.f32.mrf.mxu0
    %3473 = vdwg.mxu0
    %3475 = vrot.lane.b32.xlu0 %v3471, 32
    %v3476 = vpop.permute.xlu0 %3475
    %v3478 = vadd.f32 %v3403, %v3476
    %3479 = vmatprep.subr.mxu0 0.0
    %3480 = vmatpush1.msra.mxu0 0.0
    %3481 = vmatprep.subr.mxu0 0.0
    %3482 = vmatpush1.msra.mxu0 0.0
    %3483 = vmatprep.subr.mxu0 0.0
    %3484 = vmatpush1.msra.mxu0 0.0
    %3485 = vmatprep.subr.mxu0 0.0
    %3486 = vmatpush1.msra.mxu0 0.0
    %3487 = vmatprep.subr.mxu0 0.0
    %3488 = vmatpush1.msra.mxu0 0.0
    %3489 = vmatprep.subr.mxu0 0.0
    %3490 = vmatpush1.msra.mxu0 0.0
    %3491 = vmatprep.subr.mxu0 0.0
    %3492 = vmatpush1.msra.mxu0 0.0
    %3493 = vmatprep.subr.mxu0 0.0
    %3494 = vmatpush1.msra.mxu0 0.0
    %3495 = vmatprep.subr.mxu0 0.0
    %3496 = vmatpush1.msra.mxu0 0.0
    %3497 = vmatprep.subr.mxu0 0.0
    %3498 = vmatpush1.msra.mxu0 0.0
    %3499 = vmatprep.subr.mxu0 0.0
    %3500 = vmatpush1.msra.mxu0 0.0
    %3501 = vmatprep.subr.mxu0 0.0
    %3502 = vmatpush1.msra.mxu0 0.0
    %3503 = vmatprep.subr.mxu0 0.0
    %3504 = vmatpush1.msra.mxu0 %v101
    %3505 = vmatprep.subr.mxu0 0.0
    %3506 = vmatpush1.msra.mxu0 %v100
    %3507 = vmatprep.subr.mxu0 0.0
    %3508 = vmatpush1.msra.mxu0 %v99
    %3509 = vmatprep.subr.mxu0 0.0
    %3510 = vmatpush1.msra.mxu0 %v98
    %3511 = vmatprep.subr.mxu0 0.0
    %3512 = vmatpush2.msra.mxu0 0.0
    %3513 = vmatprep.subr.mxu0 0.0
    %3514 = vmatpush2.msra.mxu0 0.0
    %3515 = vmatprep.subr.mxu0 0.0
    %3516 = vmatpush2.msra.mxu0 0.0
    %3517 = vmatprep.subr.mxu0 0.0
    %3518 = vmatpush2.msra.mxu0 0.0
    %3519 = vmatprep.subr.mxu0 0.0
    %3520 = vmatpush2.msra.mxu0 0.0
    %3521 = vmatprep.subr.mxu0 0.0
    %3522 = vmatpush2.msra.mxu0 0.0
    %3523 = vmatprep.subr.mxu0 0.0
    %3524 = vmatpush2.msra.mxu0 0.0
    %3525 = vmatprep.subr.mxu0 0.0
    %3526 = vmatpush2.msra.mxu0 0.0
    %3527 = vmatprep.subr.mxu0 0.0
    %3528 = vmatpush2.msra.mxu0 0.0
    %3529 = vmatprep.subr.mxu0 0.0
    %3530 = vmatpush2.msra.mxu0 0.0
    %3531 = vmatprep.subr.mxu0 0.0
    %3532 = vmatpush2.msra.mxu0 0.0
    %3533 = vmatprep.subr.mxu0 0.0
    %3534 = vmatpush2.msra.mxu0 0.0
    %3535 = vmatprep.subr.mxu0 0.0
    %3536 = vmatpush2.msra.mxu0 0.0
    %3537 = vmatprep.subr.mxu0 0.0
    %3538 = vmatpush2.msra.mxu0 0.0
    %3539 = vmatprep.subr.mxu0 0.0
    %3540 = vmatpush2.msra.mxu0 0.0
    %3541 = vmatprep.subr.mxu0 0.0
    %3542 = vmatpush2.msra.mxu0 0.0
    %3543 = vmatprep.mubr.f32.mxu0 0.0
    %3544 = vmatmul.mubr.f32.gmra.mxu0 %v3180
    %v3545 = vpop.f32.mrf.mxu0
    %v3546 = vadd.f32 0.0, %v3545
    %v3547 = vpop.f32.mrf.mxu0
    %3548 = vdwg.mxu0
    %3550 = vrot.lane.b32.xlu0 %v3546, 64
    %v3551 = vpop.permute.xlu0 %3550
    %v3553 = vadd.f32 %v123, %v3551
    %3554 = vmatprep.subr.mxu0 0.0
    %3555 = vmatpush1.msra.mxu0 0.0
    %3556 = vmatprep.subr.mxu0 0.0
    %3557 = vmatpush1.msra.mxu0 0.0
    %3558 = vmatprep.subr.mxu0 0.0
    %3559 = vmatpush1.msra.mxu0 0.0
    %3560 = vmatprep.subr.mxu0 0.0
    %3561 = vmatpush1.msra.mxu0 0.0
    %3562 = vmatprep.subr.mxu0 0.0
    %3563 = vmatpush1.msra.mxu0 0.0
    %3564 = vmatprep.subr.mxu0 0.0
    %3565 = vmatpush1.msra.mxu0 0.0
    %3566 = vmatprep.subr.mxu0 0.0
    %3567 = vmatpush1.msra.mxu0 0.0
    %3568 = vmatprep.subr.mxu0 0.0
    %3569 = vmatpush1.msra.mxu0 0.0
    %3570 = vmatprep.subr.mxu0 0.0
    %3571 = vmatpush1.msra.mxu0 0.0
    %3572 = vmatprep.subr.mxu0 0.0
    %3573 = vmatpush1.msra.mxu0 0.0
    %3574 = vmatprep.subr.mxu0 0.0
    %3575 = vmatpush1.msra.mxu0 0.0
    %3576 = vmatprep.subr.mxu0 0.0
    %3577 = vmatpush1.msra.mxu0 0.0
    %3578 = vmatprep.subr.mxu0 0.0
    %3579 = vmatpush1.msra.mxu0 %v117
    %3580 = vmatprep.subr.mxu0 0.0
    %3581 = vmatpush1.msra.mxu0 %v116
    %3582 = vmatprep.subr.mxu0 0.0
    %3583 = vmatpush1.msra.mxu0 %v115
    %3584 = vmatprep.subr.mxu0 0.0
    %3585 = vmatpush1.msra.mxu0 %v114
    %3586 = vmatprep.subr.mxu0 0.0
    %3587 = vmatpush2.msra.mxu0 0.0
    %3588 = vmatprep.subr.mxu0 0.0
    %3589 = vmatpush2.msra.mxu0 0.0
    %3590 = vmatprep.subr.mxu0 0.0
    %3591 = vmatpush2.msra.mxu0 0.0
    %3592 = vmatprep.subr.mxu0 0.0
    %3593 = vmatpush2.msra.mxu0 0.0
    %3594 = vmatprep.subr.mxu0 0.0
    %3595 = vmatpush2.msra.mxu0 0.0
    %3596 = vmatprep.subr.mxu0 0.0
    %3597 = vmatpush2.msra.mxu0 0.0
    %3598 = vmatprep.subr.mxu0 0.0
    %3599 = vmatpush2.msra.mxu0 0.0
    %3600 = vmatprep.subr.mxu0 0.0
    %3601 = vmatpush2.msra.mxu0 0.0
    %3602 = vmatprep.subr.mxu0 0.0
    %3603 = vmatpush2.msra.mxu0 0.0
    %3604 = vmatprep.subr.mxu0 0.0
    %3605 = vmatpush2.msra.mxu0 0.0
    %3606 = vmatprep.subr.mxu0 0.0
    %3607 = vmatpush2.msra.mxu0 0.0
    %3608 = vmatprep.subr.mxu0 0.0
    %3609 = vmatpush2.msra.mxu0 0.0
    %3610 = vmatprep.subr.mxu0 0.0
    %3611 = vmatpush2.msra.mxu0 0.0
    %3612 = vmatprep.subr.mxu0 0.0
    %3613 = vmatpush2.msra.mxu0 0.0
    %3614 = vmatprep.subr.mxu0 0.0
    %3615 = vmatpush2.msra.mxu0 0.0
    %3616 = vmatprep.subr.mxu0 0.0
    %3617 = vmatpush2.msra.mxu0 0.0
    %3618 = vmatprep.mubr.f32.mxu0 0.0
    %3619 = vmatmul.mubr.f32.gmra.mxu0 %v3256
    %v3620 = vpop.f32.mrf.mxu0
    %v3621 = vadd.f32 0.0, %v3620
    %v3622 = vpop.f32.mrf.mxu0
    %3623 = vdwg.mxu0
    %3625 = vrot.lane.b32.xlu0 %v3621, 64
    %v3626 = vpop.permute.xlu0 %3625
    %v3628 = vadd.f32 %v3553, %v3626
    %3629 = vmatprep.subr.mxu0 0.0
    %3630 = vmatpush1.msra.mxu0 0.0
    %3631 = vmatprep.subr.mxu0 0.0
    %3632 = vmatpush1.msra.mxu0 0.0
    %3633 = vmatprep.subr.mxu0 0.0
    %3634 = vmatpush1.msra.mxu0 0.0
    %3635 = vmatprep.subr.mxu0 0.0
    %3636 = vmatpush1.msra.mxu0 0.0
    %3637 = vmatprep.subr.mxu0 0.0
    %3638 = vmatpush1.msra.mxu0 0.0
    %3639 = vmatprep.subr.mxu0 0.0
    %3640 = vmatpush1.msra.mxu0 0.0
    %3641 = vmatprep.subr.mxu0 0.0
    %3642 = vmatpush1.msra.mxu0 0.0
    %3643 = vmatprep.subr.mxu0 0.0
    %3644 = vmatpush1.msra.mxu0 0.0
    %3645 = vmatprep.subr.mxu0 0.0
    %3646 = vmatpush1.msra.mxu0 0.0
    %3647 = vmatprep.subr.mxu0 0.0
    %3648 = vmatpush1.msra.mxu0 0.0
    %3649 = vmatprep.subr.mxu0 0.0
    %3650 = vmatpush1.msra.mxu0 0.0
    %3651 = vmatprep.subr.mxu0 0.0
    %3652 = vmatpush1.msra.mxu0 0.0
    %3653 = vmatprep.subr.mxu0 0.0
    %3654 = vmatpush1.msra.mxu0 %v105
    %3655 = vmatprep.subr.mxu0 0.0
    %3656 = vmatpush1.msra.mxu0 %v104
    %3657 = vmatprep.subr.mxu0 0.0
    %3658 = vmatpush1.msra.mxu0 %v103
    %3659 = vmatprep.subr.mxu0 0.0
    %3660 = vmatpush1.msra.mxu0 %v102
    %3661 = vmatprep.subr.mxu0 0.0
    %3662 = vmatpush2.msra.mxu0 0.0
    %3663 = vmatprep.subr.mxu0 0.0
    %3664 = vmatpush2.msra.mxu0 0.0
    %3665 = vmatprep.subr.mxu0 0.0
    %3666 = vmatpush2.msra.mxu0 0.0
    %3667 = vmatprep.subr.mxu0 0.0
    %3668 = vmatpush2.msra.mxu0 0.0
    %3669 = vmatprep.subr.mxu0 0.0
    %3670 = vmatpush2.msra.mxu0 0.0
    %3671 = vmatprep.subr.mxu0 0.0
    %3672 = vmatpush2.msra.mxu0 0.0
    %3673 = vmatprep.subr.mxu0 0.0
    %3674 = vmatpush2.msra.mxu0 0.0
    %3675 = vmatprep.subr.mxu0 0.0
    %3676 = vmatpush2.msra.mxu0 0.0
    %3677 = vmatprep.subr.mxu0 0.0
    %3678 = vmatpush2.msra.mxu0 0.0
    %3679 = vmatprep.subr.mxu0 0.0
    %3680 = vmatpush2.msra.mxu0 0.0
    %3681 = vmatprep.subr.mxu0 0.0
    %3682 = vmatpush2.msra.mxu0 0.0
    %3683 = vmatprep.subr.mxu0 0.0
    %3684 = vmatpush2.msra.mxu0 0.0
    %3685 = vmatprep.subr.mxu0 0.0
    %3686 = vmatpush2.msra.mxu0 0.0
    %3687 = vmatprep.subr.mxu0 0.0
    %3688 = vmatpush2.msra.mxu0 0.0
    %3689 = vmatprep.subr.mxu0 0.0
    %3690 = vmatpush2.msra.mxu0 0.0
    %3691 = vmatprep.subr.mxu0 0.0
    %3692 = vmatpush2.msra.mxu0 0.0
    %3693 = vmatprep.mubr.f32.mxu0 0.0
    %3694 = vmatmul.mubr.f32.gmra.mxu0 %v3180
    %v3695 = vpop.f32.mrf.mxu0
    %v3696 = vadd.f32 0.0, %v3695
    %v3697 = vpop.f32.mrf.mxu0
    %3698 = vdwg.mxu0
    %3700 = vrot.lane.b32.xlu0 %v3696, 96
    %v3701 = vpop.permute.xlu0 %3700
    %v3703 = vadd.f32 %v123, %v3701
    %3704 = vmatprep.subr.mxu0 0.0
    %3705 = vmatpush1.msra.mxu0 0.0
    %3706 = vmatprep.subr.mxu0 0.0
    %3707 = vmatpush1.msra.mxu0 0.0
    %3708 = vmatprep.subr.mxu0 0.0
    %3709 = vmatpush1.msra.mxu0 0.0
    %3710 = vmatprep.subr.mxu0 0.0
    %3711 = vmatpush1.msra.mxu0 0.0
    %3712 = vmatprep.subr.mxu0 0.0
    %3713 = vmatpush1.msra.mxu0 0.0
    %3714 = vmatprep.subr.mxu0 0.0
    %3715 = vmatpush1.msra.mxu0 0.0
    %3716 = vmatprep.subr.mxu0 0.0
    %3717 = vmatpush1.msra.mxu0 0.0
    %3718 = vmatprep.subr.mxu0 0.0
    %3719 = vmatpush1.msra.mxu0 0.0
    %3720 = vmatprep.subr.mxu0 0.0
    %3721 = vmatpush1.msra.mxu0 0.0
    %3722 = vmatprep.subr.mxu0 0.0
    %3723 = vmatpush1.msra.mxu0 0.0
    %3724 = vmatprep.subr.mxu0 0.0
    %3725 = vmatpush1.msra.mxu0 0.0
    %3726 = vmatprep.subr.mxu0 0.0
    %3727 = vmatpush1.msra.mxu0 0.0
    %3728 = vmatprep.subr.mxu0 0.0
    %3729 = vmatpush1.msra.mxu0 %v121
    %3730 = vmatprep.subr.mxu0 0.0
    %3731 = vmatpush1.msra.mxu0 %v120
    %3732 = vmatprep.subr.mxu0 0.0
    %3733 = vmatpush1.msra.mxu0 %v119
    %3734 = vmatprep.subr.mxu0 0.0
    %3735 = vmatpush1.msra.mxu0 %v118
    %3736 = vmatprep.subr.mxu0 0.0
    %3737 = vmatpush2.msra.mxu0 0.0
    %3738 = vmatprep.subr.mxu0 0.0
    %3739 = vmatpush2.msra.mxu0 0.0
    %3740 = vmatprep.subr.mxu0 0.0
    %3741 = vmatpush2.msra.mxu0 0.0
    %3742 = vmatprep.subr.mxu0 0.0
    %3743 = vmatpush2.msra.mxu0 0.0
    %3744 = vmatprep.subr.mxu0 0.0
    %3745 = vmatpush2.msra.mxu0 0.0
    %3746 = vmatprep.subr.mxu0 0.0
    %3747 = vmatpush2.msra.mxu0 0.0
    %3748 = vmatprep.subr.mxu0 0.0
    %3749 = vmatpush2.msra.mxu0 0.0
    %3750 = vmatprep.subr.mxu0 0.0
    %3751 = vmatpush2.msra.mxu0 0.0
    %3752 = vmatprep.subr.mxu0 0.0
    %3753 = vmatpush2.msra.mxu0 0.0
    %3754 = vmatprep.subr.mxu0 0.0
    %3755 = vmatpush2.msra.mxu0 0.0
    %3756 = vmatprep.subr.mxu0 0.0
    %3757 = vmatpush2.msra.mxu0 0.0
    %3758 = vmatprep.subr.mxu0 0.0
    %3759 = vmatpush2.msra.mxu0 0.0
    %3760 = vmatprep.subr.mxu0 0.0
    %3761 = vmatpush2.msra.mxu0 0.0
    %3762 = vmatprep.subr.mxu0 0.0
    %3763 = vmatpush2.msra.mxu0 0.0
    %3764 = vmatprep.subr.mxu0 0.0
    %3765 = vmatpush2.msra.mxu0 0.0
    %3766 = vmatprep.subr.mxu0 0.0
    %3767 = vmatpush2.msra.mxu0 0.0
    %3768 = vmatprep.mubr.f32.mxu0 0.0
    %3769 = vmatmul.mubr.f32.gmra.mxu0 %v3256
    %v3770 = vpop.f32.mrf.mxu0
    %v3771 = vadd.f32 0.0, %v3770
    %v3772 = vpop.f32.mrf.mxu0
    %3773 = vdwg.mxu0
    %3775 = vrot.lane.b32.xlu0 %v3771, 96
    %v3776 = vpop.permute.xlu0 %3775
    %v3778 = vadd.f32 %v3703, %v3776
    %v3779 = vxor.u32 %v3328, 2147483648
    %v3780 = vmul.f32 %v3779, 1.442695
    %v3781 = vpow.pop %v3780
    %v3782 = vadd.f32 %v3781, 1.0
    %v3783 = vrcp.pop %v3782
    %v3784 = vmul.f32 1.0, %v3783
    %v3785 = vxor.u32 %v3478, 2147483648
    %v3786 = vmul.f32 %v3785, 1.442695
    %v3787 = vpow.pop %v3786
    %v3788 = vadd.f32 %v3787, 1.0
    %v3789 = vrcp.pop %v3788
    %v3790 = vmul.f32 1.0, %v3789
    %v3791 = vtanh.pop %v3628
    %v3792 = vxor.u32 %v3778, 2147483648
    %v3793 = vmul.f32 %v3792, 1.442695
    %v3794 = vpow.pop %v3793
    %v3795 = vadd.f32 %v3794, 1.0
    %v3796 = vrcp.pop %v3795
    %v3797 = vmul.f32 1.0, %v3796
    %v3798 = vmul.f32 %v3790, %v2848
    %3800 = vrot.lane.b32.xlu0 %v3791, 64
    %v3801 = vpop.permute.xlu0 %3800
    %v3803 = vmul.f32 %v3784, %v3801
    %3805 = vrot.lane.b32.xlu0 %v3803, 32
    %v3806 = vpop.permute.xlu0 %3805
    %v3808 = vadd.f32 %v3798, %v3806
    %v3809 = vtanh.pop %v3808
    %3811 = vrot.lane.b32.xlu0 %v3809, 64
    %v3812 = vpop.permute.xlu0 %3811
    %v3814 = vmul.f32 %v3797, %v3812
    %3815 = vmatprep.subr.mxu0 0.0
    %3816 = vmatpush1.msra.mxu0 0.0
    %3817 = vmatprep.subr.mxu0 0.0
    %3818 = vmatpush1.msra.mxu0 0.0
    %3819 = vmatprep.subr.mxu0 0.0
    %3820 = vmatpush1.msra.mxu0 0.0
    %3821 = vmatprep.subr.mxu0 0.0
    %3822 = vmatpush1.msra.mxu0 0.0
    %3823 = vmatprep.subr.mxu0 0.0
    %3824 = vmatpush1.msra.mxu0 0.0
    %3825 = vmatprep.subr.mxu0 0.0
    %3826 = vmatpush1.msra.mxu0 0.0
    %3827 = vmatprep.subr.mxu0 0.0
    %3828 = vmatpush1.msra.mxu0 0.0
    %3829 = vmatprep.subr.mxu0 0.0
    %3830 = vmatpush1.msra.mxu0 0.0
    %3831 = vmatprep.subr.mxu0 0.0
    %3832 = vmatpush1.msra.mxu0 0.0
    %3833 = vmatprep.subr.mxu0 0.0
    %3834 = vmatpush1.msra.mxu0 0.0
    %3835 = vmatprep.subr.mxu0 0.0
    %3836 = vmatpush1.msra.mxu0 0.0
    %3837 = vmatprep.subr.mxu0 0.0
    %3838 = vmatpush1.msra.mxu0 0.0
    %3839 = vmatprep.subr.mxu0 0.0
    %3840 = vmatpush1.msra.mxu0 %v77
    %3841 = vmatprep.subr.mxu0 0.0
    %3842 = vmatpush1.msra.mxu0 %v76
    %3843 = vmatprep.subr.mxu0 0.0
    %3844 = vmatpush1.msra.mxu0 %v75
    %3845 = vmatprep.subr.mxu0 0.0
    %3846 = vmatpush1.msra.mxu0 %v74
    %3847 = vmatprep.subr.mxu0 0.0
    %3848 = vmatpush2.msra.mxu0 0.0
    %3849 = vmatprep.subr.mxu0 0.0
    %3850 = vmatpush2.msra.mxu0 0.0
    %3851 = vmatprep.subr.mxu0 0.0
    %3852 = vmatpush2.msra.mxu0 0.0
    %3853 = vmatprep.subr.mxu0 0.0
    %3854 = vmatpush2.msra.mxu0 0.0
    %3855 = vmatprep.subr.mxu0 0.0
    %3856 = vmatpush2.msra.mxu0 0.0
    %3857 = vmatprep.subr.mxu0 0.0
    %3858 = vmatpush2.msra.mxu0 0.0
    %3859 = vmatprep.subr.mxu0 0.0
    %3860 = vmatpush2.msra.mxu0 0.0
    %3861 = vmatprep.subr.mxu0 0.0
    %3862 = vmatpush2.msra.mxu0 0.0
    %3863 = vmatprep.subr.mxu0 0.0
    %3864 = vmatpush2.msra.mxu0 0.0
    %3865 = vmatprep.subr.mxu0 0.0
    %3866 = vmatpush2.msra.mxu0 0.0
    %3867 = vmatprep.subr.mxu0 0.0
    %3868 = vmatpush2.msra.mxu0 0.0
    %3869 = vmatprep.subr.mxu0 0.0
    %3870 = vmatpush2.msra.mxu0 0.0
    %3871 = vmatprep.subr.mxu0 0.0
    %3872 = vmatpush2.msra.mxu0 0.0
    %3873 = vmatprep.subr.mxu0 0.0
    %3874 = vmatpush2.msra.mxu0 0.0
    %3875 = vmatprep.subr.mxu0 0.0
    %3876 = vmatpush2.msra.mxu0 0.0
    %3877 = vmatprep.subr.mxu0 0.0
    %3878 = vmatpush2.msra.mxu0 0.0
    %3879 = vmatprep.mubr.f32.mxu0 0.0
    %3880 = vmatmul.mubr.f32.gmra.mxu0 %v3180
    %v3881 = vpop.f32.mrf.mxu0
    %v3882 = vadd.f32 0.0, %v3881
    %v3883 = vpop.f32.mrf.mxu0
    %3884 = vdwg.mxu0
    %v3886 = vrot.slane %v3882, 4
    %v3888 = vadd.f32 %v353, %v3886
    %3889 = vmatprep.subr.mxu0 0.0
    %3890 = vmatpush1.msra.mxu0 0.0
    %3891 = vmatprep.subr.mxu0 0.0
    %3892 = vmatpush1.msra.mxu0 0.0
    %3893 = vmatprep.subr.mxu0 0.0
    %3894 = vmatpush1.msra.mxu0 0.0
    %3895 = vmatprep.subr.mxu0 0.0
    %3896 = vmatpush1.msra.mxu0 0.0
    %3897 = vmatprep.subr.mxu0 0.0
    %3898 = vmatpush1.msra.mxu0 0.0
    %3899 = vmatprep.subr.mxu0 0.0
    %3900 = vmatpush1.msra.mxu0 0.0
    %3901 = vmatprep.subr.mxu0 0.0
    %3902 = vmatpush1.msra.mxu0 0.0
    %3903 = vmatprep.subr.mxu0 0.0
    %3904 = vmatpush1.msra.mxu0 0.0
    %3905 = vmatprep.subr.mxu0 0.0
    %3906 = vmatpush1.msra.mxu0 0.0
    %3907 = vmatprep.subr.mxu0 0.0
    %3908 = vmatpush1.msra.mxu0 0.0
    %3909 = vmatprep.subr.mxu0 0.0
    %3910 = vmatpush1.msra.mxu0 0.0
    %3911 = vmatprep.subr.mxu0 0.0
    %3912 = vmatpush1.msra.mxu0 0.0
    %3913 = vmatprep.subr.mxu0 0.0
    %3914 = vmatpush1.msra.mxu0 %v81
    %3915 = vmatprep.subr.mxu0 0.0
    %3916 = vmatpush1.msra.mxu0 %v80
    %3917 = vmatprep.subr.mxu0 0.0
    %3918 = vmatpush1.msra.mxu0 %v79
    %3919 = vmatprep.subr.mxu0 0.0
    %3920 = vmatpush1.msra.mxu0 %v78
    %3921 = vmatprep.subr.mxu0 0.0
    %3922 = vmatpush2.msra.mxu0 0.0
    %3923 = vmatprep.subr.mxu0 0.0
    %3924 = vmatpush2.msra.mxu0 0.0
    %3925 = vmatprep.subr.mxu0 0.0
    %3926 = vmatpush2.msra.mxu0 0.0
    %3927 = vmatprep.subr.mxu0 0.0
    %3928 = vmatpush2.msra.mxu0 0.0
    %3929 = vmatprep.subr.mxu0 0.0
    %3930 = vmatpush2.msra.mxu0 0.0
    %3931 = vmatprep.subr.mxu0 0.0
    %3932 = vmatpush2.msra.mxu0 0.0
    %3933 = vmatprep.subr.mxu0 0.0
    %3934 = vmatpush2.msra.mxu0 0.0
    %3935 = vmatprep.subr.mxu0 0.0
    %3936 = vmatpush2.msra.mxu0 0.0
    %3937 = vmatprep.subr.mxu0 0.0
    %3938 = vmatpush2.msra.mxu0 0.0
    %3939 = vmatprep.subr.mxu0 0.0
    %3940 = vmatpush2.msra.mxu0 0.0
    %3941 = vmatprep.subr.mxu0 0.0
    %3942 = vmatpush2.msra.mxu0 0.0
    %3943 = vmatprep.subr.mxu0 0.0
    %3944 = vmatpush2.msra.mxu0 0.0
    %3945 = vmatprep.subr.mxu0 0.0
    %3946 = vmatpush2.msra.mxu0 0.0
    %3947 = vmatprep.subr.mxu0 0.0
    %3948 = vmatpush2.msra.mxu0 0.0
    %3949 = vmatprep.subr.mxu0 0.0
    %3950 = vmatpush2.msra.mxu0 0.0
    %3951 = vmatprep.subr.mxu0 0.0
    %3952 = vmatpush2.msra.mxu0 0.0
    %3953 = vmatprep.mubr.f32.mxu0 0.0
    %3954 = vmatmul.mubr.f32.gmra.mxu0 %v3180
    %v3955 = vpop.f32.mrf.mxu0
    %v3956 = vadd.f32 0.0, %v3955
    %v3957 = vpop.f32.mrf.mxu0
    %3958 = vdwg.mxu0
    %v3960 = vrot.slane %v3956, 4
    %v3962 = vadd.f32 %v427, %v3960
    %3963 = vmatprep.subr.mxu0 0.0
    %3964 = vmatpush1.msra.mxu0 0.0
    %3965 = vmatprep.subr.mxu0 0.0
    %3966 = vmatpush1.msra.mxu0 0.0
    %3967 = vmatprep.subr.mxu0 0.0
    %3968 = vmatpush1.msra.mxu0 0.0
    %3969 = vmatprep.subr.mxu0 0.0
    %3970 = vmatpush1.msra.mxu0 0.0
    %3971 = vmatprep.subr.mxu0 0.0
    %3972 = vmatpush1.msra.mxu0 0.0
    %3973 = vmatprep.subr.mxu0 0.0
    %3974 = vmatpush1.msra.mxu0 0.0
    %3975 = vmatprep.subr.mxu0 0.0
    %3976 = vmatpush1.msra.mxu0 0.0
    %3977 = vmatprep.subr.mxu0 0.0
    %3978 = vmatpush1.msra.mxu0 0.0
    %3979 = vmatprep.subr.mxu0 0.0
    %3980 = vmatpush1.msra.mxu0 0.0
    %3981 = vmatprep.subr.mxu0 0.0
    %3982 = vmatpush1.msra.mxu0 0.0
    %3983 = vmatprep.subr.mxu0 0.0
    %3984 = vmatpush1.msra.mxu0 0.0
    %3985 = vmatprep.subr.mxu0 0.0
    %3986 = vmatpush1.msra.mxu0 0.0
    %3987 = vmatprep.subr.mxu0 0.0
    %3988 = vmatpush1.msra.mxu0 %v85
    %3989 = vmatprep.subr.mxu0 0.0
    %3990 = vmatpush1.msra.mxu0 %v84
    %3991 = vmatprep.subr.mxu0 0.0
    %3992 = vmatpush1.msra.mxu0 %v83
    %3993 = vmatprep.subr.mxu0 0.0
    %3994 = vmatpush1.msra.mxu0 %v82
    %3995 = vmatprep.subr.mxu0 0.0
    %3996 = vmatpush2.msra.mxu0 0.0
    %3997 = vmatprep.subr.mxu0 0.0
    %3998 = vmatpush2.msra.mxu0 0.0
    %3999 = vmatprep.subr.mxu0 0.0
    %4000 = vmatpush2.msra.mxu0 0.0
    %4001 = vmatprep.subr.mxu0 0.0
    %4002 = vmatpush2.msra.mxu0 0.0
    %4003 = vmatprep.subr.mxu0 0.0
    %4004 = vmatpush2.msra.mxu0 0.0
    %4005 = vmatprep.subr.mxu0 0.0
    %4006 = vmatpush2.msra.mxu0 0.0
    %4007 = vmatprep.subr.mxu0 0.0
    %4008 = vmatpush2.msra.mxu0 0.0
    %4009 = vmatprep.subr.mxu0 0.0
    %4010 = vmatpush2.msra.mxu0 0.0
    %4011 = vmatprep.subr.mxu0 0.0
    %4012 = vmatpush2.msra.mxu0 0.0
    %4013 = vmatprep.subr.mxu0 0.0
    %4014 = vmatpush2.msra.mxu0 0.0
    %4015 = vmatprep.subr.mxu0 0.0
    %4016 = vmatpush2.msra.mxu0 0.0
    %4017 = vmatprep.subr.mxu0 0.0
    %4018 = vmatpush2.msra.mxu0 0.0
    %4019 = vmatprep.subr.mxu0 0.0
    %4020 = vmatpush2.msra.mxu0 0.0
    %4021 = vmatprep.subr.mxu0 0.0
    %4022 = vmatpush2.msra.mxu0 0.0
    %4023 = vmatprep.subr.mxu0 0.0
    %4024 = vmatpush2.msra.mxu0 0.0
    %4025 = vmatprep.subr.mxu0 0.0
    %4026 = vmatpush2.msra.mxu0 0.0
    %4027 = vmatprep.mubr.f32.mxu0 0.0
    %4028 = vmatmul.mubr.f32.gmra.mxu0 %v3180
    %v4029 = vpop.f32.mrf.mxu0
    %v4030 = vadd.f32 0.0, %v4029
    %v4031 = vpop.f32.mrf.mxu0
    %4032 = vdwg.mxu0
    %v4034 = vrot.slane %v4030, 4
    %v4036 = vadd.f32 %v500, %v4034
    %4037 = vmatprep.subr.mxu0 0.0
    %4038 = vmatpush1.msra.mxu0 0.0
    %4039 = vmatprep.subr.mxu0 0.0
    %4040 = vmatpush1.msra.mxu0 0.0
    %4041 = vmatprep.subr.mxu0 0.0
    %4042 = vmatpush1.msra.mxu0 0.0
    %4043 = vmatprep.subr.mxu0 0.0
    %4044 = vmatpush1.msra.mxu0 0.0
    %4045 = vmatprep.subr.mxu0 0.0
    %4046 = vmatpush1.msra.mxu0 0.0
    %4047 = vmatprep.subr.mxu0 0.0
    %4048 = vmatpush1.msra.mxu0 0.0
    %4049 = vmatprep.subr.mxu0 0.0
    %4050 = vmatpush1.msra.mxu0 0.0
    %4051 = vmatprep.subr.mxu0 0.0
    %4052 = vmatpush1.msra.mxu0 0.0
    %4053 = vmatprep.subr.mxu0 0.0
    %4054 = vmatpush1.msra.mxu0 0.0
    %4055 = vmatprep.subr.mxu0 0.0
    %4056 = vmatpush1.msra.mxu0 0.0
    %4057 = vmatprep.subr.mxu0 0.0
    %4058 = vmatpush1.msra.mxu0 0.0
    %4059 = vmatprep.subr.mxu0 0.0
    %4060 = vmatpush1.msra.mxu0 0.0
    %4061 = vmatprep.subr.mxu0 0.0
    %4062 = vmatpush1.msra.mxu0 %v89
    %4063 = vmatprep.subr.mxu0 0.0
    %4064 = vmatpush1.msra.mxu0 %v88
    %4065 = vmatprep.subr.mxu0 0.0
    %4066 = vmatpush1.msra.mxu0 %v87
    %4067 = vmatprep.subr.mxu0 0.0
    %4068 = vmatpush1.msra.mxu0 %v86
    %4069 = vmatprep.subr.mxu0 0.0
    %4070 = vmatpush2.msra.mxu0 0.0
    %4071 = vmatprep.subr.mxu0 0.0
    %4072 = vmatpush2.msra.mxu0 0.0
    %4073 = vmatprep.subr.mxu0 0.0
    %4074 = vmatpush2.msra.mxu0 0.0
    %4075 = vmatprep.subr.mxu0 0.0
    %4076 = vmatpush2.msra.mxu0 0.0
    %4077 = vmatprep.subr.mxu0 0.0
    %4078 = vmatpush2.msra.mxu0 0.0
    %4079 = vmatprep.subr.mxu0 0.0
    %4080 = vmatpush2.msra.mxu0 0.0
    %4081 = vmatprep.subr.mxu0 0.0
    %4082 = vmatpush2.msra.mxu0 0.0
    %4083 = vmatprep.subr.mxu0 0.0
    %4084 = vmatpush2.msra.mxu0 0.0
    %4085 = vmatprep.subr.mxu0 0.0
    %4086 = vmatpush2.msra.mxu0 0.0
    %4087 = vmatprep.subr.mxu0 0.0
    %4088 = vmatpush2.msra.mxu0 0.0
    %4089 = vmatprep.subr.mxu0 0.0
    %4090 = vmatpush2.msra.mxu0 0.0
    %4091 = vmatprep.subr.mxu0 0.0
    %4092 = vmatpush2.msra.mxu0 0.0
    %4093 = vmatprep.subr.mxu0 0.0
    %4094 = vmatpush2.msra.mxu0 0.0
    %4095 = vmatprep.subr.mxu0 0.0
    %4096 = vmatpush2.msra.mxu0 0.0
    %4097 = vmatprep.subr.mxu0 0.0
    %4098 = vmatpush2.msra.mxu0 0.0
    %4099 = vmatprep.subr.mxu0 0.0
    %4100 = vmatpush2.msra.mxu0 0.0
    %4101 = vmatprep.mubr.f32.mxu0 0.0
    %4102 = vmatmul.mubr.f32.gmra.mxu0 %v3180
    %v4103 = vpop.f32.mrf.mxu0
    %v4104 = vadd.f32 0.0, %v4103
    %v4105 = vpop.f32.mrf.mxu0
    %4106 = vdwg.mxu0
    %v4108 = vrot.slane %v4104, 4
    %v4110 = vadd.f32 %v573, %v4108
    %v4111 = vxor.u32 %v3888, 2147483648
    %v4112 = vmul.f32 %v4111, 1.442695
    %v4113 = vpow.pop %v4112
    %v4114 = vadd.f32 %v4113, 1.0
    %v4115 = vrcp.pop %v4114
    %v4116 = vmul.f32 1.0, %v4115
    %v4117 = vxor.u32 %v3962, 2147483648
    %v4118 = vmul.f32 %v4117, 1.442695
    %v4119 = vpow.pop %v4118
    %v4120 = vadd.f32 %v4119, 1.0
    %v4121 = vrcp.pop %v4120
    %v4122 = vmul.f32 1.0, %v4121
    %v4123 = vtanh.pop %v4036
    %v4124 = vxor.u32 %v4110, 2147483648
    %v4125 = vmul.f32 %v4124, 1.442695
    %v4126 = vpow.pop %v4125
    %v4127 = vadd.f32 %v4126, 1.0
    %v4128 = vrcp.pop %v4127
    %v4129 = vmul.f32 1.0, %v4128
    %v4131 = vrot.slane %v3175, 7
    %v4133 = vmul.f32 %v4122, %v4131
    %v4134 = vmul.f32 %v4116, %v4123
    %v4135 = vadd.f32 %v4133, %v4134
    %v4136 = vtanh.pop %v4135
    %v4137 = vmul.f32 %v4129, %v4136
    %v4139 = vrot.slane %v4137, 4
    %v4140 = vsel %vm200, %v4139, 0
    %4142 = vmatprep.subr.mxu0 0.0
    %4143 = vmatpush1.msra.mxu0 0.0
    %4144 = vmatprep.subr.mxu0 0.0
    %4145 = vmatpush1.msra.mxu0 0.0
    %4146 = vmatprep.subr.mxu0 0.0
    %4147 = vmatpush1.msra.mxu0 0.0
    %4148 = vmatprep.subr.mxu0 0.0
    %4149 = vmatpush1.msra.mxu0 0.0
    %4150 = vmatprep.subr.mxu0 0.0
    %4151 = vmatpush1.msra.mxu0 0.0
    %4152 = vmatprep.subr.mxu0 0.0
    %4153 = vmatpush1.msra.mxu0 0.0
    %4154 = vmatprep.subr.mxu0 0.0
    %4155 = vmatpush1.msra.mxu0 0.0
    %4156 = vmatprep.subr.mxu0 0.0
    %4157 = vmatpush1.msra.mxu0 0.0
    %4158 = vmatprep.subr.mxu0 0.0
    %4159 = vmatpush1.msra.mxu0 0.0
    %4160 = vmatprep.subr.mxu0 0.0
    %4161 = vmatpush1.msra.mxu0 0.0
    %4162 = vmatprep.subr.mxu0 0.0
    %4163 = vmatpush1.msra.mxu0 0.0
    %4164 = vmatprep.subr.mxu0 0.0
    %4165 = vmatpush1.msra.mxu0 0.0
    %4166 = vmatprep.subr.mxu0 0.0
    %4167 = vmatpush1.msra.mxu0 %v93
    %4168 = vmatprep.subr.mxu0 0.0
    %4169 = vmatpush1.msra.mxu0 %v92
    %4170 = vmatprep.subr.mxu0 0.0
    %4171 = vmatpush1.msra.mxu0 %v91
    %4172 = vmatprep.subr.mxu0 0.0
    %4173 = vmatpush1.msra.mxu0 %v90
    %4174 = vmatprep.subr.mxu0 0.0
    %4175 = vmatpush2.msra.mxu0 0.0
    %4176 = vmatprep.subr.mxu0 0.0
    %4177 = vmatpush2.msra.mxu0 0.0
    %4178 = vmatprep.subr.mxu0 0.0
    %4179 = vmatpush2.msra.mxu0 0.0
    %4180 = vmatprep.subr.mxu0 0.0
    %4181 = vmatpush2.msra.mxu0 0.0
    %4182 = vmatprep.subr.mxu0 0.0
    %4183 = vmatpush2.msra.mxu0 0.0
    %4184 = vmatprep.subr.mxu0 0.0
    %4185 = vmatpush2.msra.mxu0 0.0
    %4186 = vmatprep.subr.mxu0 0.0
    %4187 = vmatpush2.msra.mxu0 0.0
    %4188 = vmatprep.subr.mxu0 0.0
    %4189 = vmatpush2.msra.mxu0 0.0
    %4190 = vmatprep.subr.mxu0 0.0
    %4191 = vmatpush2.msra.mxu0 0.0
    %4192 = vmatprep.subr.mxu0 0.0
    %4193 = vmatpush2.msra.mxu0 0.0
    %4194 = vmatprep.subr.mxu0 0.0
    %4195 = vmatpush2.msra.mxu0 0.0
    %4196 = vmatprep.subr.mxu0 0.0
    %4197 = vmatpush2.msra.mxu0 0.0
    %4198 = vmatprep.subr.mxu0 0.0
    %4199 = vmatpush2.msra.mxu0 0.0
    %4200 = vmatprep.subr.mxu0 0.0
    %4201 = vmatpush2.msra.mxu0 0.0
    %4202 = vmatprep.subr.mxu0 0.0
    %4203 = vmatpush2.msra.mxu0 0.0
    %4204 = vmatprep.subr.mxu0 0.0
    %4205 = vmatpush2.msra.mxu0 0.0
    %4206 = vmatprep.mubr.f32.mxu0 0.0
    %4207 = vmatmul.mubr.f32.gmra.mxu0 %v4140
    %v4208 = vpop.f32.mrf.mxu0
    %v4209 = vadd.f32 0.0, %v4208
    %v4210 = vpop.f32.mrf.mxu0
    %4211 = vdwg.mxu0
    %v4212 = vadd.f32 %v123, %v4209
    %4214 = vrot.lane.b32.xlu0 %v3814, 32
    %v4215 = vpop.permute.xlu0 %4214
    %v4216 = vsel %vm200, %v4215, 0
    %4218 = vmatprep.subr.mxu0 0.0
    %4219 = vmatpush1.msra.mxu0 0.0
    %4220 = vmatprep.subr.mxu0 0.0
    %4221 = vmatpush1.msra.mxu0 0.0
    %4222 = vmatprep.subr.mxu0 0.0
    %4223 = vmatpush1.msra.mxu0 0.0
    %4224 = vmatprep.subr.mxu0 0.0
    %4225 = vmatpush1.msra.mxu0 0.0
    %4226 = vmatprep.subr.mxu0 0.0
    %4227 = vmatpush1.msra.mxu0 0.0
    %4228 = vmatprep.subr.mxu0 0.0
    %4229 = vmatpush1.msra.mxu0 0.0
    %4230 = vmatprep.subr.mxu0 0.0
    %4231 = vmatpush1.msra.mxu0 0.0
    %4232 = vmatprep.subr.mxu0 0.0
    %4233 = vmatpush1.msra.mxu0 0.0
    %4234 = vmatprep.subr.mxu0 0.0
    %4235 = vmatpush1.msra.mxu0 0.0
    %4236 = vmatprep.subr.mxu0 0.0
    %4237 = vmatpush1.msra.mxu0 0.0
    %4238 = vmatprep.subr.mxu0 0.0
    %4239 = vmatpush1.msra.mxu0 0.0
    %4240 = vmatprep.subr.mxu0 0.0
    %4241 = vmatpush1.msra.mxu0 0.0
    %4242 = vmatprep.subr.mxu0 0.0
    %4243 = vmatpush1.msra.mxu0 %v109
    %4244 = vmatprep.subr.mxu0 0.0
    %4245 = vmatpush1.msra.mxu0 %v108
    %4246 = vmatprep.subr.mxu0 0.0
    %4247 = vmatpush1.msra.mxu0 %v107
    %4248 = vmatprep.subr.mxu0 0.0
    %4249 = vmatpush1.msra.mxu0 %v106
    %4250 = vmatprep.subr.mxu0 0.0
    %4251 = vmatpush2.msra.mxu0 0.0
    %4252 = vmatprep.subr.mxu0 0.0
    %4253 = vmatpush2.msra.mxu0 0.0
    %4254 = vmatprep.subr.mxu0 0.0
    %4255 = vmatpush2.msra.mxu0 0.0
    %4256 = vmatprep.subr.mxu0 0.0
    %4257 = vmatpush2.msra.mxu0 0.0
    %4258 = vmatprep.subr.mxu0 0.0
    %4259 = vmatpush2.msra.mxu0 0.0
    %4260 = vmatprep.subr.mxu0 0.0
    %4261 = vmatpush2.msra.mxu0 0.0
    %4262 = vmatprep.subr.mxu0 0.0
    %4263 = vmatpush2.msra.mxu0 0.0
    %4264 = vmatprep.subr.mxu0 0.0
    %4265 = vmatpush2.msra.mxu0 0.0
    %4266 = vmatprep.subr.mxu0 0.0
    %4267 = vmatpush2.msra.mxu0 0.0
    %4268 = vmatprep.subr.mxu0 0.0
    %4269 = vmatpush2.msra.mxu0 0.0
    %4270 = vmatprep.subr.mxu0 0.0
    %4271 = vmatpush2.msra.mxu0 0.0
    %4272 = vmatprep.subr.mxu0 0.0
    %4273 = vmatpush2.msra.mxu0 0.0
    %4274 = vmatprep.subr.mxu0 0.0
    %4275 = vmatpush2.msra.mxu0 0.0
    %4276 = vmatprep.subr.mxu0 0.0
    %4277 = vmatpush2.msra.mxu0 0.0
    %4278 = vmatprep.subr.mxu0 0.0
    %4279 = vmatpush2.msra.mxu0 0.0
    %4280 = vmatprep.subr.mxu0 0.0
    %4281 = vmatpush2.msra.mxu0 0.0
    %4282 = vmatprep.mubr.f32.mxu0 0.0
    %4283 = vmatmul.mubr.f32.gmra.mxu0 %v4216
    %v4284 = vpop.f32.mrf.mxu0
    %v4285 = vadd.f32 0.0, %v4284
    %v4286 = vpop.f32.mrf.mxu0
    %4287 = vdwg.mxu0
    %v4288 = vadd.f32 %v4212, %v4285
    %4289 = vmatprep.subr.mxu0 0.0
    %4290 = vmatpush1.msra.mxu0 0.0
    %4291 = vmatprep.subr.mxu0 0.0
    %4292 = vmatpush1.msra.mxu0 0.0
    %4293 = vmatprep.subr.mxu0 0.0
    %4294 = vmatpush1.msra.mxu0 0.0
    %4295 = vmatprep.subr.mxu0 0.0
    %4296 = vmatpush1.msra.mxu0 0.0
    %4297 = vmatprep.subr.mxu0 0.0
    %4298 = vmatpush1.msra.mxu0 0.0
    %4299 = vmatprep.subr.mxu0 0.0
    %4300 = vmatpush1.msra.mxu0 0.0
    %4301 = vmatprep.subr.mxu0 0.0
    %4302 = vmatpush1.msra.mxu0 0.0
    %4303 = vmatprep.subr.mxu0 0.0
    %4304 = vmatpush1.msra.mxu0 0.0
    %4305 = vmatprep.subr.mxu0 0.0
    %4306 = vmatpush1.msra.mxu0 0.0
    %4307 = vmatprep.subr.mxu0 0.0
    %4308 = vmatpush1.msra.mxu0 0.0
    %4309 = vmatprep.subr.mxu0 0.0
    %4310 = vmatpush1.msra.mxu0 0.0
    %4311 = vmatprep.subr.mxu0 0.0
    %4312 = vmatpush1.msra.mxu0 0.0
    %4313 = vmatprep.subr.mxu0 0.0
    %4314 = vmatpush1.msra.mxu0 %v97
    %4315 = vmatprep.subr.mxu0 0.0
    %4316 = vmatpush1.msra.mxu0 %v96
    %4317 = vmatprep.subr.mxu0 0.0
    %4318 = vmatpush1.msra.mxu0 %v95
    %4319 = vmatprep.subr.mxu0 0.0
    %4320 = vmatpush1.msra.mxu0 %v94
    %4321 = vmatprep.subr.mxu0 0.0
    %4322 = vmatpush2.msra.mxu0 0.0
    %4323 = vmatprep.subr.mxu0 0.0
    %4324 = vmatpush2.msra.mxu0 0.0
    %4325 = vmatprep.subr.mxu0 0.0
    %4326 = vmatpush2.msra.mxu0 0.0
    %4327 = vmatprep.subr.mxu0 0.0
    %4328 = vmatpush2.msra.mxu0 0.0
    %4329 = vmatprep.subr.mxu0 0.0
    %4330 = vmatpush2.msra.mxu0 0.0
    %4331 = vmatprep.subr.mxu0 0.0
    %4332 = vmatpush2.msra.mxu0 0.0
    %4333 = vmatprep.subr.mxu0 0.0
    %4334 = vmatpush2.msra.mxu0 0.0
    %4335 = vmatprep.subr.mxu0 0.0
    %4336 = vmatpush2.msra.mxu0 0.0
    %4337 = vmatprep.subr.mxu0 0.0
    %4338 = vmatpush2.msra.mxu0 0.0
    %4339 = vmatprep.subr.mxu0 0.0
    %4340 = vmatpush2.msra.mxu0 0.0
    %4341 = vmatprep.subr.mxu0 0.0
    %4342 = vmatpush2.msra.mxu0 0.0
    %4343 = vmatprep.subr.mxu0 0.0
    %4344 = vmatpush2.msra.mxu0 0.0
    %4345 = vmatprep.subr.mxu0 0.0
    %4346 = vmatpush2.msra.mxu0 0.0
    %4347 = vmatprep.subr.mxu0 0.0
    %4348 = vmatpush2.msra.mxu0 0.0
    %4349 = vmatprep.subr.mxu0 0.0
    %4350 = vmatpush2.msra.mxu0 0.0
    %4351 = vmatprep.subr.mxu0 0.0
    %4352 = vmatpush2.msra.mxu0 0.0
    %4353 = vmatprep.mubr.f32.mxu0 0.0
    %4354 = vmatmul.mubr.f32.gmra.mxu0 %v4140
    %v4355 = vpop.f32.mrf.mxu0
    %v4356 = vadd.f32 0.0, %v4355
    %v4357 = vpop.f32.mrf.mxu0
    %4358 = vdwg.mxu0
    %4360 = vrot.lane.b32.xlu0 %v4356, 32
    %v4361 = vpop.permute.xlu0 %4360
    %v4363 = vadd.f32 %v123, %v4361
    %4364 = vmatprep.subr.mxu0 0.0
    %4365 = vmatpush1.msra.mxu0 0.0
    %4366 = vmatprep.subr.mxu0 0.0
    %4367 = vmatpush1.msra.mxu0 0.0
    %4368 = vmatprep.subr.mxu0 0.0
    %4369 = vmatpush1.msra.mxu0 0.0
    %4370 = vmatprep.subr.mxu0 0.0
    %4371 = vmatpush1.msra.mxu0 0.0
    %4372 = vmatprep.subr.mxu0 0.0
    %4373 = vmatpush1.msra.mxu0 0.0
    %4374 = vmatprep.subr.mxu0 0.0
    %4375 = vmatpush1.msra.mxu0 0.0
    %4376 = vmatprep.subr.mxu0 0.0
    %4377 = vmatpush1.msra.mxu0 0.0
    %4378 = vmatprep.subr.mxu0 0.0
    %4379 = vmatpush1.msra.mxu0 0.0
    %4380 = vmatprep.subr.mxu0 0.0
    %4381 = vmatpush1.msra.mxu0 0.0
    %4382 = vmatprep.subr.mxu0 0.0
    %4383 = vmatpush1.msra.mxu0 0.0
    %4384 = vmatprep.subr.mxu0 0.0
    %4385 = vmatpush1.msra.mxu0 0.0
    %4386 = vmatprep.subr.mxu0 0.0
    %4387 = vmatpush1.msra.mxu0 0.0
    %4388 = vmatprep.subr.mxu0 0.0
    %4389 = vmatpush1.msra.mxu0 %v113
    %4390 = vmatprep.subr.mxu0 0.0
    %4391 = vmatpush1.msra.mxu0 %v112
    %4392 = vmatprep.subr.mxu0 0.0
    %4393 = vmatpush1.msra.mxu0 %v111
    %4394 = vmatprep.subr.mxu0 0.0
    %4395 = vmatpush1.msra.mxu0 %v110
    %4396 = vmatprep.subr.mxu0 0.0
    %4397 = vmatpush2.msra.mxu0 0.0
    %4398 = vmatprep.subr.mxu0 0.0
    %4399 = vmatpush2.msra.mxu0 0.0
    %4400 = vmatprep.subr.mxu0 0.0
    %4401 = vmatpush2.msra.mxu0 0.0
    %4402 = vmatprep.subr.mxu0 0.0
    %4403 = vmatpush2.msra.mxu0 0.0
    %4404 = vmatprep.subr.mxu0 0.0
    %4405 = vmatpush2.msra.mxu0 0.0
    %4406 = vmatprep.subr.mxu0 0.0
    %4407 = vmatpush2.msra.mxu0 0.0
    %4408 = vmatprep.subr.mxu0 0.0
    %4409 = vmatpush2.msra.mxu0 0.0
    %4410 = vmatprep.subr.mxu0 0.0
    %4411 = vmatpush2.msra.mxu0 0.0
    %4412 = vmatprep.subr.mxu0 0.0
    %4413 = vmatpush2.msra.mxu0 0.0
    %4414 = vmatprep.subr.mxu0 0.0
    %4415 = vmatpush2.msra.mxu0 0.0
    %4416 = vmatprep.subr.mxu0 0.0
    %4417 = vmatpush2.msra.mxu0 0.0
    %4418 = vmatprep.subr.mxu0 0.0
    %4419 = vmatpush2.msra.mxu0 0.0
    %4420 = vmatprep.subr.mxu0 0.0
    %4421 = vmatpush2.msra.mxu0 0.0
    %4422 = vmatprep.subr.mxu0 0.0
    %4423 = vmatpush2.msra.mxu0 0.0
    %4424 = vmatprep.subr.mxu0 0.0
    %4425 = vmatpush2.msra.mxu0 0.0
    %4426 = vmatprep.subr.mxu0 0.0
    %4427 = vmatpush2.msra.mxu0 0.0
    %4428 = vmatprep.mubr.f32.mxu0 0.0
    %4429 = vmatmul.mubr.f32.gmra.mxu0 %v4216
    %v4430 = vpop.f32.mrf.mxu0
    %v4431 = vadd.f32 0.0, %v4430
    %v4432 = vpop.f32.mrf.mxu0
    %4433 = vdwg.mxu0
    %4435 = vrot.lane.b32.xlu0 %v4431, 32
    %v4436 = vpop.permute.xlu0 %4435
    %v4438 = vadd.f32 %v4363, %v4436
    %4439 = vmatprep.subr.mxu0 0.0
    %4440 = vmatpush1.msra.mxu0 0.0
    %4441 = vmatprep.subr.mxu0 0.0
    %4442 = vmatpush1.msra.mxu0 0.0
    %4443 = vmatprep.subr.mxu0 0.0
    %4444 = vmatpush1.msra.mxu0 0.0
    %4445 = vmatprep.subr.mxu0 0.0
    %4446 = vmatpush1.msra.mxu0 0.0
    %4447 = vmatprep.subr.mxu0 0.0
    %4448 = vmatpush1.msra.mxu0 0.0
    %4449 = vmatprep.subr.mxu0 0.0
    %4450 = vmatpush1.msra.mxu0 0.0
    %4451 = vmatprep.subr.mxu0 0.0
    %4452 = vmatpush1.msra.mxu0 0.0
    %4453 = vmatprep.subr.mxu0 0.0
    %4454 = vmatpush1.msra.mxu0 0.0
    %4455 = vmatprep.subr.mxu0 0.0
    %4456 = vmatpush1.msra.mxu0 0.0
    %4457 = vmatprep.subr.mxu0 0.0
    %4458 = vmatpush1.msra.mxu0 0.0
    %4459 = vmatprep.subr.mxu0 0.0
    %4460 = vmatpush1.msra.mxu0 0.0
    %4461 = vmatprep.subr.mxu0 0.0
    %4462 = vmatpush1.msra.mxu0 0.0
    %4463 = vmatprep.subr.mxu0 0.0
    %4464 = vmatpush1.msra.mxu0 %v101
    %4465 = vmatprep.subr.mxu0 0.0
    %4466 = vmatpush1.msra.mxu0 %v100
    %4467 = vmatprep.subr.mxu0 0.0
    %4468 = vmatpush1.msra.mxu0 %v99
    %4469 = vmatprep.subr.mxu0 0.0
    %4470 = vmatpush1.msra.mxu0 %v98
    %4471 = vmatprep.subr.mxu0 0.0
    %4472 = vmatpush2.msra.mxu0 0.0
    %4473 = vmatprep.subr.mxu0 0.0
    %4474 = vmatpush2.msra.mxu0 0.0
    %4475 = vmatprep.subr.mxu0 0.0
    %4476 = vmatpush2.msra.mxu0 0.0
    %4477 = vmatprep.subr.mxu0 0.0
    %4478 = vmatpush2.msra.mxu0 0.0
    %4479 = vmatprep.subr.mxu0 0.0
    %4480 = vmatpush2.msra.mxu0 0.0
    %4481 = vmatprep.subr.mxu0 0.0
    %4482 = vmatpush2.msra.mxu0 0.0
    %4483 = vmatprep.subr.mxu0 0.0
    %4484 = vmatpush2.msra.mxu0 0.0
    %4485 = vmatprep.subr.mxu0 0.0
    %4486 = vmatpush2.msra.mxu0 0.0
    %4487 = vmatprep.subr.mxu0 0.0
    %4488 = vmatpush2.msra.mxu0 0.0
    %4489 = vmatprep.subr.mxu0 0.0
    %4490 = vmatpush2.msra.mxu0 0.0
    %4491 = vmatprep.subr.mxu0 0.0
    %4492 = vmatpush2.msra.mxu0 0.0
    %4493 = vmatprep.subr.mxu0 0.0
    %4494 = vmatpush2.msra.mxu0 0.0
    %4495 = vmatprep.subr.mxu0 0.0
    %4496 = vmatpush2.msra.mxu0 0.0
    %4497 = vmatprep.subr.mxu0 0.0
    %4498 = vmatpush2.msra.mxu0 0.0
    %4499 = vmatprep.subr.mxu0 0.0
    %4500 = vmatpush2.msra.mxu0 0.0
    %4501 = vmatprep.subr.mxu0 0.0
    %4502 = vmatpush2.msra.mxu0 0.0
    %4503 = vmatprep.mubr.f32.mxu0 0.0
    %4504 = vmatmul.mubr.f32.gmra.mxu0 %v4140
    %v4505 = vpop.f32.mrf.mxu0
    %v4506 = vadd.f32 0.0, %v4505
    %v4507 = vpop.f32.mrf.mxu0
    %4508 = vdwg.mxu0
    %4510 = vrot.lane.b32.xlu0 %v4506, 64
    %v4511 = vpop.permute.xlu0 %4510
    %v4513 = vadd.f32 %v123, %v4511
    %4514 = vmatprep.subr.mxu0 0.0
    %4515 = vmatpush1.msra.mxu0 0.0
    %4516 = vmatprep.subr.mxu0 0.0
    %4517 = vmatpush1.msra.mxu0 0.0
    %4518 = vmatprep.subr.mxu0 0.0
    %4519 = vmatpush1.msra.mxu0 0.0
    %4520 = vmatprep.subr.mxu0 0.0
    %4521 = vmatpush1.msra.mxu0 0.0
    %4522 = vmatprep.subr.mxu0 0.0
    %4523 = vmatpush1.msra.mxu0 0.0
    %4524 = vmatprep.subr.mxu0 0.0
    %4525 = vmatpush1.msra.mxu0 0.0
    %4526 = vmatprep.subr.mxu0 0.0
    %4527 = vmatpush1.msra.mxu0 0.0
    %4528 = vmatprep.subr.mxu0 0.0
    %4529 = vmatpush1.msra.mxu0 0.0
    %4530 = vmatprep.subr.mxu0 0.0
    %4531 = vmatpush1.msra.mxu0 0.0
    %4532 = vmatprep.subr.mxu0 0.0
    %4533 = vmatpush1.msra.mxu0 0.0
    %4534 = vmatprep.subr.mxu0 0.0
    %4535 = vmatpush1.msra.mxu0 0.0
    %4536 = vmatprep.subr.mxu0 0.0
    %4537 = vmatpush1.msra.mxu0 0.0
    %4538 = vmatprep.subr.mxu0 0.0
    %4539 = vmatpush1.msra.mxu0 %v117
    %4540 = vmatprep.subr.mxu0 0.0
    %4541 = vmatpush1.msra.mxu0 %v116
    %4542 = vmatprep.subr.mxu0 0.0
    %4543 = vmatpush1.msra.mxu0 %v115
    %4544 = vmatprep.subr.mxu0 0.0
    %4545 = vmatpush1.msra.mxu0 %v114
    %4546 = vmatprep.subr.mxu0 0.0
    %4547 = vmatpush2.msra.mxu0 0.0
    %4548 = vmatprep.subr.mxu0 0.0
    %4549 = vmatpush2.msra.mxu0 0.0
    %4550 = vmatprep.subr.mxu0 0.0
    %4551 = vmatpush2.msra.mxu0 0.0
    %4552 = vmatprep.subr.mxu0 0.0
    %4553 = vmatpush2.msra.mxu0 0.0
    %4554 = vmatprep.subr.mxu0 0.0
    %4555 = vmatpush2.msra.mxu0 0.0
    %4556 = vmatprep.subr.mxu0 0.0
    %4557 = vmatpush2.msra.mxu0 0.0
    %4558 = vmatprep.subr.mxu0 0.0
    %4559 = vmatpush2.msra.mxu0 0.0
    %4560 = vmatprep.subr.mxu0 0.0
    %4561 = vmatpush2.msra.mxu0 0.0
    %4562 = vmatprep.subr.mxu0 0.0
    %4563 = vmatpush2.msra.mxu0 0.0
    %4564 = vmatprep.subr.mxu0 0.0
    %4565 = vmatpush2.msra.mxu0 0.0
    %4566 = vmatprep.subr.mxu0 0.0
    %4567 = vmatpush2.msra.mxu0 0.0
    %4568 = vmatprep.subr.mxu0 0.0
    %4569 = vmatpush2.msra.mxu0 0.0
    %4570 = vmatprep.subr.mxu0 0.0
    %4571 = vmatpush2.msra.mxu0 0.0
    %4572 = vmatprep.subr.mxu0 0.0
    %4573 = vmatpush2.msra.mxu0 0.0
    %4574 = vmatprep.subr.mxu0 0.0
    %4575 = vmatpush2.msra.mxu0 0.0
    %4576 = vmatprep.subr.mxu0 0.0
    %4577 = vmatpush2.msra.mxu0 0.0
    %4578 = vmatprep.mubr.f32.mxu0 0.0
    %4579 = vmatmul.mubr.f32.gmra.mxu0 %v4216
    %v4580 = vpop.f32.mrf.mxu0
    %v4581 = vadd.f32 0.0, %v4580
    %v4582 = vpop.f32.mrf.mxu0
    %4583 = vdwg.mxu0
    %4585 = vrot.lane.b32.xlu0 %v4581, 64
    %v4586 = vpop.permute.xlu0 %4585
    %v4588 = vadd.f32 %v4513, %v4586
    %4589 = vmatprep.subr.mxu0 0.0
    %4590 = vmatpush1.msra.mxu0 0.0
    %4591 = vmatprep.subr.mxu0 0.0
    %4592 = vmatpush1.msra.mxu0 0.0
    %4593 = vmatprep.subr.mxu0 0.0
    %4594 = vmatpush1.msra.mxu0 0.0
    %4595 = vmatprep.subr.mxu0 0.0
    %4596 = vmatpush1.msra.mxu0 0.0
    %4597 = vmatprep.subr.mxu0 0.0
    %4598 = vmatpush1.msra.mxu0 0.0
    %4599 = vmatprep.subr.mxu0 0.0
    %4600 = vmatpush1.msra.mxu0 0.0
    %4601 = vmatprep.subr.mxu0 0.0
    %4602 = vmatpush1.msra.mxu0 0.0
    %4603 = vmatprep.subr.mxu0 0.0
    %4604 = vmatpush1.msra.mxu0 0.0
    %4605 = vmatprep.subr.mxu0 0.0
    %4606 = vmatpush1.msra.mxu0 0.0
    %4607 = vmatprep.subr.mxu0 0.0
    %4608 = vmatpush1.msra.mxu0 0.0
    %4609 = vmatprep.subr.mxu0 0.0
    %4610 = vmatpush1.msra.mxu0 0.0
    %4611 = vmatprep.subr.mxu0 0.0
    %4612 = vmatpush1.msra.mxu0 0.0
    %4613 = vmatprep.subr.mxu0 0.0
    %4614 = vmatpush1.msra.mxu0 %v105
    %4615 = vmatprep.subr.mxu0 0.0
    %4616 = vmatpush1.msra.mxu0 %v104
    %4617 = vmatprep.subr.mxu0 0.0
    %4618 = vmatpush1.msra.mxu0 %v103
    %4619 = vmatprep.subr.mxu0 0.0
    %4620 = vmatpush1.msra.mxu0 %v102
    %4621 = vmatprep.subr.mxu0 0.0
    %4622 = vmatpush2.msra.mxu0 0.0
    %4623 = vmatprep.subr.mxu0 0.0
    %4624 = vmatpush2.msra.mxu0 0.0
    %4625 = vmatprep.subr.mxu0 0.0
    %4626 = vmatpush2.msra.mxu0 0.0
    %4627 = vmatprep.subr.mxu0 0.0
    %4628 = vmatpush2.msra.mxu0 0.0
    %4629 = vmatprep.subr.mxu0 0.0
    %4630 = vmatpush2.msra.mxu0 0.0
    %4631 = vmatprep.subr.mxu0 0.0
    %4632 = vmatpush2.msra.mxu0 0.0
    %4633 = vmatprep.subr.mxu0 0.0
    %4634 = vmatpush2.msra.mxu0 0.0
    %4635 = vmatprep.subr.mxu0 0.0
    %4636 = vmatpush2.msra.mxu0 0.0
    %4637 = vmatprep.subr.mxu0 0.0
    %4638 = vmatpush2.msra.mxu0 0.0
    %4639 = vmatprep.subr.mxu0 0.0
    %4640 = vmatpush2.msra.mxu0 0.0
    %4641 = vmatprep.subr.mxu0 0.0
    %4642 = vmatpush2.msra.mxu0 0.0
    %4643 = vmatprep.subr.mxu0 0.0
    %4644 = vmatpush2.msra.mxu0 0.0
    %4645 = vmatprep.subr.mxu0 0.0
    %4646 = vmatpush2.msra.mxu0 0.0
    %4647 = vmatprep.subr.mxu0 0.0
    %4648 = vmatpush2.msra.mxu0 0.0
    %4649 = vmatprep.subr.mxu0 0.0
    %4650 = vmatpush2.msra.mxu0 0.0
    %4651 = vmatprep.subr.mxu0 0.0
    %4652 = vmatpush2.msra.mxu0 0.0
    %4653 = vmatprep.mubr.f32.mxu0 0.0
    %4654 = vmatmul.mubr.f32.gmra.mxu0 %v4140
    %v4655 = vpop.f32.mrf.mxu0
    %v4656 = vadd.f32 0.0, %v4655
    %v4657 = vpop.f32.mrf.mxu0
    %4658 = vdwg.mxu0
    %4660 = vrot.lane.b32.xlu0 %v4656, 96
    %v4661 = vpop.permute.xlu0 %4660
    %v4663 = vadd.f32 %v123, %v4661
    %4664 = vmatprep.subr.mxu0 0.0
    %4665 = vmatpush1.msra.mxu0 0.0
    %4666 = vmatprep.subr.mxu0 0.0
    %4667 = vmatpush1.msra.mxu0 0.0
    %4668 = vmatprep.subr.mxu0 0.0
    %4669 = vmatpush1.msra.mxu0 0.0
    %4670 = vmatprep.subr.mxu0 0.0
    %4671 = vmatpush1.msra.mxu0 0.0
    %4672 = vmatprep.subr.mxu0 0.0
    %4673 = vmatpush1.msra.mxu0 0.0
    %4674 = vmatprep.subr.mxu0 0.0
    %4675 = vmatpush1.msra.mxu0 0.0
    %4676 = vmatprep.subr.mxu0 0.0
    %4677 = vmatpush1.msra.mxu0 0.0
    %4678 = vmatprep.subr.mxu0 0.0
    %4679 = vmatpush1.msra.mxu0 0.0
    %4680 = vmatprep.subr.mxu0 0.0
    %4681 = vmatpush1.msra.mxu0 0.0
    %4682 = vmatprep.subr.mxu0 0.0
    %4683 = vmatpush1.msra.mxu0 0.0
    %4684 = vmatprep.subr.mxu0 0.0
    %4685 = vmatpush1.msra.mxu0 0.0
    %4686 = vmatprep.subr.mxu0 0.0
    %4687 = vmatpush1.msra.mxu0 0.0
    %4688 = vmatprep.subr.mxu0 0.0
    %4689 = vmatpush1.msra.mxu0 %v121
    %4690 = vmatprep.subr.mxu0 0.0
    %4691 = vmatpush1.msra.mxu0 %v120
    %4692 = vmatprep.subr.mxu0 0.0
    %4693 = vmatpush1.msra.mxu0 %v119
    %4694 = vmatprep.subr.mxu0 0.0
    %4695 = vmatpush1.msra.mxu0 %v118
    %4696 = vmatprep.subr.mxu0 0.0
    %4697 = vmatpush2.msra.mxu0 0.0
    %4698 = vmatprep.subr.mxu0 0.0
    %4699 = vmatpush2.msra.mxu0 0.0
    %4700 = vmatprep.subr.mxu0 0.0
    %4701 = vmatpush2.msra.mxu0 0.0
    %4702 = vmatprep.subr.mxu0 0.0
    %4703 = vmatpush2.msra.mxu0 0.0
    %4704 = vmatprep.subr.mxu0 0.0
    %4705 = vmatpush2.msra.mxu0 0.0
    %4706 = vmatprep.subr.mxu0 0.0
    %4707 = vmatpush2.msra.mxu0 0.0
    %4708 = vmatprep.subr.mxu0 0.0
    %4709 = vmatpush2.msra.mxu0 0.0
    %4710 = vmatprep.subr.mxu0 0.0
    %4711 = vmatpush2.msra.mxu0 0.0
    %4712 = vmatprep.subr.mxu0 0.0
    %4713 = vmatpush2.msra.mxu0 0.0
    %4714 = vmatprep.subr.mxu0 0.0
    %4715 = vmatpush2.msra.mxu0 0.0
    %4716 = vmatprep.subr.mxu0 0.0
    %4717 = vmatpush2.msra.mxu0 0.0
    %4718 = vmatprep.subr.mxu0 0.0
    %4719 = vmatpush2.msra.mxu0 0.0
    %4720 = vmatprep.subr.mxu0 0.0
    %4721 = vmatpush2.msra.mxu0 0.0
    %4722 = vmatprep.subr.mxu0 0.0
    %4723 = vmatpush2.msra.mxu0 0.0
    %4724 = vmatprep.subr.mxu0 0.0
    %4725 = vmatpush2.msra.mxu0 0.0
    %4726 = vmatprep.subr.mxu0 0.0
    %4727 = vmatpush2.msra.mxu0 0.0
    %4728 = vmatprep.mubr.f32.mxu0 0.0
    %4729 = vmatmul.mubr.f32.gmra.mxu0 %v4216
    %v4730 = vpop.f32.mrf.mxu0
    %v4731 = vadd.f32 0.0, %v4730
    %v4732 = vpop.f32.mrf.mxu0
    %4733 = vdwg.mxu0
    %4735 = vrot.lane.b32.xlu0 %v4731, 96
    %v4736 = vpop.permute.xlu0 %4735
    %v4738 = vadd.f32 %v4663, %v4736
    %v4739 = vxor.u32 %v4288, 2147483648
    %v4740 = vmul.f32 %v4739, 1.442695
    %v4741 = vpow.pop %v4740
    %v4742 = vadd.f32 %v4741, 1.0
    %v4743 = vrcp.pop %v4742
    %v4744 = vmul.f32 1.0, %v4743
    %v4745 = vxor.u32 %v4438, 2147483648
    %v4746 = vmul.f32 %v4745, 1.442695
    %v4747 = vpow.pop %v4746
    %v4748 = vadd.f32 %v4747, 1.0
    %v4749 = vrcp.pop %v4748
    %v4750 = vmul.f32 1.0, %v4749
    %v4751 = vtanh.pop %v4588
    %v4752 = vxor.u32 %v4738, 2147483648
    %v4753 = vmul.f32 %v4752, 1.442695
    %v4754 = vpow.pop %v4753
    %v4755 = vadd.f32 %v4754, 1.0
    %v4756 = vrcp.pop %v4755
    %v4757 = vmul.f32 1.0, %v4756
    %v4758 = vmul.f32 %v4750, %v3808
    %4760 = vrot.lane.b32.xlu0 %v4751, 64
    %v4761 = vpop.permute.xlu0 %4760
    %v4763 = vmul.f32 %v4744, %v4761
    %4765 = vrot.lane.b32.xlu0 %v4763, 32
    %v4766 = vpop.permute.xlu0 %4765
    %v4768 = vadd.f32 %v4758, %v4766
    %v4769 = vtanh.pop %v4768
    %4771 = vrot.lane.b32.xlu0 %v4769, 64
    %v4772 = vpop.permute.xlu0 %4771
    %v4774 = vmul.f32 %v4757, %v4772
    %4775 = vmatprep.subr.mxu0 0.0
    %4776 = vmatpush1.msra.mxu0 0.0
    %4777 = vmatprep.subr.mxu0 0.0
    %4778 = vmatpush1.msra.mxu0 0.0
    %4779 = vmatprep.subr.mxu0 0.0
    %4780 = vmatpush1.msra.mxu0 0.0
    %4781 = vmatprep.subr.mxu0 0.0
    %4782 = vmatpush1.msra.mxu0 0.0
    %4783 = vmatprep.subr.mxu0 0.0
    %4784 = vmatpush1.msra.mxu0 0.0
    %4785 = vmatprep.subr.mxu0 0.0
    %4786 = vmatpush1.msra.mxu0 0.0
    %4787 = vmatprep.subr.mxu0 0.0
    %4788 = vmatpush1.msra.mxu0 0.0
    %4789 = vmatprep.subr.mxu0 0.0
    %4790 = vmatpush1.msra.mxu0 0.0
    %4791 = vmatprep.subr.mxu0 0.0
    %4792 = vmatpush1.msra.mxu0 0.0
    %4793 = vmatprep.subr.mxu0 0.0
    %4794 = vmatpush1.msra.mxu0 0.0
    %4795 = vmatprep.subr.mxu0 0.0
    %4796 = vmatpush1.msra.mxu0 0.0
    %4797 = vmatprep.subr.mxu0 0.0
    %4798 = vmatpush1.msra.mxu0 0.0
    %4799 = vmatprep.subr.mxu0 0.0
    %4800 = vmatpush1.msra.mxu0 %v77
    %4801 = vmatprep.subr.mxu0 0.0
    %4802 = vmatpush1.msra.mxu0 %v76
    %4803 = vmatprep.subr.mxu0 0.0
    %4804 = vmatpush1.msra.mxu0 %v75
    %4805 = vmatprep.subr.mxu0 0.0
    %4806 = vmatpush1.msra.mxu0 %v74
    %4807 = vmatprep.subr.mxu0 0.0
    %4808 = vmatpush2.msra.mxu0 0.0
    %4809 = vmatprep.subr.mxu0 0.0
    %4810 = vmatpush2.msra.mxu0 0.0
    %4811 = vmatprep.subr.mxu0 0.0
    %4812 = vmatpush2.msra.mxu0 0.0
    %4813 = vmatprep.subr.mxu0 0.0
    %4814 = vmatpush2.msra.mxu0 0.0
    %4815 = vmatprep.subr.mxu0 0.0
    %4816 = vmatpush2.msra.mxu0 0.0
    %4817 = vmatprep.subr.mxu0 0.0
    %4818 = vmatpush2.msra.mxu0 0.0
    %4819 = vmatprep.subr.mxu0 0.0
    %4820 = vmatpush2.msra.mxu0 0.0
    %4821 = vmatprep.subr.mxu0 0.0
    %4822 = vmatpush2.msra.mxu0 0.0
    %4823 = vmatprep.subr.mxu0 0.0
    %4824 = vmatpush2.msra.mxu0 0.0
    %4825 = vmatprep.subr.mxu0 0.0
    %4826 = vmatpush2.msra.mxu0 0.0
    %4827 = vmatprep.subr.mxu0 0.0
    %4828 = vmatpush2.msra.mxu0 0.0
    %4829 = vmatprep.subr.mxu0 0.0
    %4830 = vmatpush2.msra.mxu0 0.0
    %4831 = vmatprep.subr.mxu0 0.0
    %4832 = vmatpush2.msra.mxu0 0.0
    %4833 = vmatprep.subr.mxu0 0.0
    %4834 = vmatpush2.msra.mxu0 0.0
    %4835 = vmatprep.subr.mxu0 0.0
    %4836 = vmatpush2.msra.mxu0 0.0
    %4837 = vmatprep.subr.mxu0 0.0
    %4838 = vmatpush2.msra.mxu0 0.0
    %4839 = vmatprep.mubr.f32.mxu0 0.0
    %4840 = vmatmul.mubr.f32.gmra.mxu0 %v4140
    %v4841 = vpop.f32.mrf.mxu0
    %v4842 = vadd.f32 0.0, %v4841
    %v4843 = vpop.f32.mrf.mxu0
    %4844 = vdwg.mxu0
    %v4846 = vrot.slane %v4842, 3
    %v4848 = vadd.f32 %v353, %v4846
    %4849 = vmatprep.subr.mxu0 0.0
    %4850 = vmatpush1.msra.mxu0 0.0
    %4851 = vmatprep.subr.mxu0 0.0
    %4852 = vmatpush1.msra.mxu0 0.0
    %4853 = vmatprep.subr.mxu0 0.0
    %4854 = vmatpush1.msra.mxu0 0.0
    %4855 = vmatprep.subr.mxu0 0.0
    %4856 = vmatpush1.msra.mxu0 0.0
    %4857 = vmatprep.subr.mxu0 0.0
    %4858 = vmatpush1.msra.mxu0 0.0
    %4859 = vmatprep.subr.mxu0 0.0
    %4860 = vmatpush1.msra.mxu0 0.0
    %4861 = vmatprep.subr.mxu0 0.0
    %4862 = vmatpush1.msra.mxu0 0.0
    %4863 = vmatprep.subr.mxu0 0.0
    %4864 = vmatpush1.msra.mxu0 0.0
    %4865 = vmatprep.subr.mxu0 0.0
    %4866 = vmatpush1.msra.mxu0 0.0
    %4867 = vmatprep.subr.mxu0 0.0
    %4868 = vmatpush1.msra.mxu0 0.0
    %4869 = vmatprep.subr.mxu0 0.0
    %4870 = vmatpush1.msra.mxu0 0.0
    %4871 = vmatprep.subr.mxu0 0.0
    %4872 = vmatpush1.msra.mxu0 0.0
    %4873 = vmatprep.subr.mxu0 0.0
    %4874 = vmatpush1.msra.mxu0 %v81
    %4875 = vmatprep.subr.mxu0 0.0
    %4876 = vmatpush1.msra.mxu0 %v80
    %4877 = vmatprep.subr.mxu0 0.0
    %4878 = vmatpush1.msra.mxu0 %v79
    %4879 = vmatprep.subr.mxu0 0.0
    %4880 = vmatpush1.msra.mxu0 %v78
    %4881 = vmatprep.subr.mxu0 0.0
    %4882 = vmatpush2.msra.mxu0 0.0
    %4883 = vmatprep.subr.mxu0 0.0
    %4884 = vmatpush2.msra.mxu0 0.0
    %4885 = vmatprep.subr.mxu0 0.0
    %4886 = vmatpush2.msra.mxu0 0.0
    %4887 = vmatprep.subr.mxu0 0.0
    %4888 = vmatpush2.msra.mxu0 0.0
    %4889 = vmatprep.subr.mxu0 0.0
    %4890 = vmatpush2.msra.mxu0 0.0
    %4891 = vmatprep.subr.mxu0 0.0
    %4892 = vmatpush2.msra.mxu0 0.0
    %4893 = vmatprep.subr.mxu0 0.0
    %4894 = vmatpush2.msra.mxu0 0.0
    %4895 = vmatprep.subr.mxu0 0.0
    %4896 = vmatpush2.msra.mxu0 0.0
    %4897 = vmatprep.subr.mxu0 0.0
    %4898 = vmatpush2.msra.mxu0 0.0
    %4899 = vmatprep.subr.mxu0 0.0
    %4900 = vmatpush2.msra.mxu0 0.0
    %4901 = vmatprep.subr.mxu0 0.0
    %4902 = vmatpush2.msra.mxu0 0.0
    %4903 = vmatprep.subr.mxu0 0.0
    %4904 = vmatpush2.msra.mxu0 0.0
    %4905 = vmatprep.subr.mxu0 0.0
    %4906 = vmatpush2.msra.mxu0 0.0
    %4907 = vmatprep.subr.mxu0 0.0
    %4908 = vmatpush2.msra.mxu0 0.0
    %4909 = vmatprep.subr.mxu0 0.0
    %4910 = vmatpush2.msra.mxu0 0.0
    %4911 = vmatprep.subr.mxu0 0.0
    %4912 = vmatpush2.msra.mxu0 0.0
    %4913 = vmatprep.mubr.f32.mxu0 0.0
    %4914 = vmatmul.mubr.f32.gmra.mxu0 %v4140
    %v4915 = vpop.f32.mrf.mxu0
    %v4916 = vadd.f32 0.0, %v4915
    %v4917 = vpop.f32.mrf.mxu0
    %4918 = vdwg.mxu0
    %v4920 = vrot.slane %v4916, 3
    %v4922 = vadd.f32 %v427, %v4920
    %4923 = vmatprep.subr.mxu0 0.0
    %4924 = vmatpush1.msra.mxu0 0.0
    %4925 = vmatprep.subr.mxu0 0.0
    %4926 = vmatpush1.msra.mxu0 0.0
    %4927 = vmatprep.subr.mxu0 0.0
    %4928 = vmatpush1.msra.mxu0 0.0
    %4929 = vmatprep.subr.mxu0 0.0
    %4930 = vmatpush1.msra.mxu0 0.0
    %4931 = vmatprep.subr.mxu0 0.0
    %4932 = vmatpush1.msra.mxu0 0.0
    %4933 = vmatprep.subr.mxu0 0.0
    %4934 = vmatpush1.msra.mxu0 0.0
    %4935 = vmatprep.subr.mxu0 0.0
    %4936 = vmatpush1.msra.mxu0 0.0
    %4937 = vmatprep.subr.mxu0 0.0
    %4938 = vmatpush1.msra.mxu0 0.0
    %4939 = vmatprep.subr.mxu0 0.0
    %4940 = vmatpush1.msra.mxu0 0.0
    %4941 = vmatprep.subr.mxu0 0.0
    %4942 = vmatpush1.msra.mxu0 0.0
    %4943 = vmatprep.subr.mxu0 0.0
    %4944 = vmatpush1.msra.mxu0 0.0
    %4945 = vmatprep.subr.mxu0 0.0
    %4946 = vmatpush1.msra.mxu0 0.0
    %4947 = vmatprep.subr.mxu0 0.0
    %4948 = vmatpush1.msra.mxu0 %v85
    %4949 = vmatprep.subr.mxu0 0.0
    %4950 = vmatpush1.msra.mxu0 %v84
    %4951 = vmatprep.subr.mxu0 0.0
    %4952 = vmatpush1.msra.mxu0 %v83
    %4953 = vmatprep.subr.mxu0 0.0
    %4954 = vmatpush1.msra.mxu0 %v82
    %4955 = vmatprep.subr.mxu0 0.0
    %4956 = vmatpush2.msra.mxu0 0.0
    %4957 = vmatprep.subr.mxu0 0.0
    %4958 = vmatpush2.msra.mxu0 0.0
    %4959 = vmatprep.subr.mxu0 0.0
    %4960 = vmatpush2.msra.mxu0 0.0
    %4961 = vmatprep.subr.mxu0 0.0
    %4962 = vmatpush2.msra.mxu0 0.0
    %4963 = vmatprep.subr.mxu0 0.0
    %4964 = vmatpush2.msra.mxu0 0.0
    %4965 = vmatprep.subr.mxu0 0.0
    %4966 = vmatpush2.msra.mxu0 0.0
    %4967 = vmatprep.subr.mxu0 0.0
    %4968 = vmatpush2.msra.mxu0 0.0
    %4969 = vmatprep.subr.mxu0 0.0
    %4970 = vmatpush2.msra.mxu0 0.0
    %4971 = vmatprep.subr.mxu0 0.0
    %4972 = vmatpush2.msra.mxu0 0.0
    %4973 = vmatprep.subr.mxu0 0.0
    %4974 = vmatpush2.msra.mxu0 0.0
    %4975 = vmatprep.subr.mxu0 0.0
    %4976 = vmatpush2.msra.mxu0 0.0
    %4977 = vmatprep.subr.mxu0 0.0
    %4978 = vmatpush2.msra.mxu0 0.0
    %4979 = vmatprep.subr.mxu0 0.0
    %4980 = vmatpush2.msra.mxu0 0.0
    %4981 = vmatprep.subr.mxu0 0.0
    %4982 = vmatpush2.msra.mxu0 0.0
    %4983 = vmatprep.subr.mxu0 0.0
    %4984 = vmatpush2.msra.mxu0 0.0
    %4985 = vmatprep.subr.mxu0 0.0
    %4986 = vmatpush2.msra.mxu0 0.0
    %4987 = vmatprep.mubr.f32.mxu0 0.0
    %4988 = vmatmul.mubr.f32.gmra.mxu0 %v4140
    %v4989 = vpop.f32.mrf.mxu0
    %v4990 = vadd.f32 0.0, %v4989
    %v4991 = vpop.f32.mrf.mxu0
    %4992 = vdwg.mxu0
    %v4994 = vrot.slane %v4990, 3
    %v4996 = vadd.f32 %v500, %v4994
    %4997 = vmatprep.subr.mxu0 0.0
    %4998 = vmatpush1.msra.mxu0 0.0
    %4999 = vmatprep.subr.mxu0 0.0
    %5000 = vmatpush1.msra.mxu0 0.0
    %5001 = vmatprep.subr.mxu0 0.0
    %5002 = vmatpush1.msra.mxu0 0.0
    %5003 = vmatprep.subr.mxu0 0.0
    %5004 = vmatpush1.msra.mxu0 0.0
    %5005 = vmatprep.subr.mxu0 0.0
    %5006 = vmatpush1.msra.mxu0 0.0
    %5007 = vmatprep.subr.mxu0 0.0
    %5008 = vmatpush1.msra.mxu0 0.0
    %5009 = vmatprep.subr.mxu0 0.0
    %5010 = vmatpush1.msra.mxu0 0.0
    %5011 = vmatprep.subr.mxu0 0.0
    %5012 = vmatpush1.msra.mxu0 0.0
    %5013 = vmatprep.subr.mxu0 0.0
    %5014 = vmatpush1.msra.mxu0 0.0
    %5015 = vmatprep.subr.mxu0 0.0
    %5016 = vmatpush1.msra.mxu0 0.0
    %5017 = vmatprep.subr.mxu0 0.0
    %5018 = vmatpush1.msra.mxu0 0.0
    %5019 = vmatprep.subr.mxu0 0.0
    %5020 = vmatpush1.msra.mxu0 0.0
    %5021 = vmatprep.subr.mxu0 0.0
    %5022 = vmatpush1.msra.mxu0 %v89
    %5023 = vmatprep.subr.mxu0 0.0
    %5024 = vmatpush1.msra.mxu0 %v88
    %5025 = vmatprep.subr.mxu0 0.0
    %5026 = vmatpush1.msra.mxu0 %v87
    %5027 = vmatprep.subr.mxu0 0.0
    %5028 = vmatpush1.msra.mxu0 %v86
    %5029 = vmatprep.subr.mxu0 0.0
    %5030 = vmatpush2.msra.mxu0 0.0
    %5031 = vmatprep.subr.mxu0 0.0
    %5032 = vmatpush2.msra.mxu0 0.0
    %5033 = vmatprep.subr.mxu0 0.0
    %5034 = vmatpush2.msra.mxu0 0.0
    %5035 = vmatprep.subr.mxu0 0.0
    %5036 = vmatpush2.msra.mxu0 0.0
    %5037 = vmatprep.subr.mxu0 0.0
    %5038 = vmatpush2.msra.mxu0 0.0
    %5039 = vmatprep.subr.mxu0 0.0
    %5040 = vmatpush2.msra.mxu0 0.0
    %5041 = vmatprep.subr.mxu0 0.0
    %5042 = vmatpush2.msra.mxu0 0.0
    %5043 = vmatprep.subr.mxu0 0.0
    %5044 = vmatpush2.msra.mxu0 0.0
    %5045 = vmatprep.subr.mxu0 0.0
    %5046 = vmatpush2.msra.mxu0 0.0
    %5047 = vmatprep.subr.mxu0 0.0
    %5048 = vmatpush2.msra.mxu0 0.0
    %5049 = vmatprep.subr.mxu0 0.0
    %5050 = vmatpush2.msra.mxu0 0.0
    %5051 = vmatprep.subr.mxu0 0.0
    %5052 = vmatpush2.msra.mxu0 0.0
    %5053 = vmatprep.subr.mxu0 0.0
    %5054 = vmatpush2.msra.mxu0 0.0
    %5055 = vmatprep.subr.mxu0 0.0
    %5056 = vmatpush2.msra.mxu0 0.0
    %5057 = vmatprep.subr.mxu0 0.0
    %5058 = vmatpush2.msra.mxu0 0.0
    %5059 = vmatprep.subr.mxu0 0.0
    %5060 = vmatpush2.msra.mxu0 0.0
    %5061 = vmatprep.mubr.f32.mxu0 0.0
    %5062 = vmatmul.mubr.f32.gmra.mxu0 %v4140
    %v5063 = vpop.f32.mrf.mxu0
    %v5064 = vadd.f32 0.0, %v5063
    %v5065 = vpop.f32.mrf.mxu0
    %5066 = vdwg.mxu0
    %v5068 = vrot.slane %v5064, 3
    %v5070 = vadd.f32 %v573, %v5068
    %v5071 = vxor.u32 %v4848, 2147483648
    %v5072 = vmul.f32 %v5071, 1.442695
    %v5073 = vpow.pop %v5072
    %v5074 = vadd.f32 %v5073, 1.0
    %v5075 = vrcp.pop %v5074
    %v5076 = vmul.f32 1.0, %v5075
    %v5077 = vxor.u32 %v4922, 2147483648
    %v5078 = vmul.f32 %v5077, 1.442695
    %v5079 = vpow.pop %v5078
    %v5080 = vadd.f32 %v5079, 1.0
    %v5081 = vrcp.pop %v5080
    %v5082 = vmul.f32 1.0, %v5081
    %v5083 = vtanh.pop %v4996
    %v5084 = vxor.u32 %v5070, 2147483648
    %v5085 = vmul.f32 %v5084, 1.442695
    %v5086 = vpow.pop %v5085
    %v5087 = vadd.f32 %v5086, 1.0
    %v5088 = vrcp.pop %v5087
    %v5089 = vmul.f32 1.0, %v5088
    %v5091 = vrot.slane %v4135, 7
    %v5093 = vmul.f32 %v5082, %v5091
    %v5094 = vmul.f32 %v5076, %v5083
    %v5095 = vadd.f32 %v5093, %v5094
    %v5096 = vtanh.pop %v5095
    %v5097 = vmul.f32 %v5089, %v5096
    %v5099 = vrot.slane %v5097, 5
    %v5100 = vsel %vm200, %v5099, 0
    %5102 = vmatprep.subr.mxu0 0.0
    %5103 = vmatpush1.msra.mxu0 0.0
    %5104 = vmatprep.subr.mxu0 0.0
    %5105 = vmatpush1.msra.mxu0 0.0
    %5106 = vmatprep.subr.mxu0 0.0
    %5107 = vmatpush1.msra.mxu0 0.0
    %5108 = vmatprep.subr.mxu0 0.0
    %5109 = vmatpush1.msra.mxu0 0.0
    %5110 = vmatprep.subr.mxu0 0.0
    %5111 = vmatpush1.msra.mxu0 0.0
    %5112 = vmatprep.subr.mxu0 0.0
    %5113 = vmatpush1.msra.mxu0 0.0
    %5114 = vmatprep.subr.mxu0 0.0
    %5115 = vmatpush1.msra.mxu0 0.0
    %5116 = vmatprep.subr.mxu0 0.0
    %5117 = vmatpush1.msra.mxu0 0.0
    %5118 = vmatprep.subr.mxu0 0.0
    %5119 = vmatpush1.msra.mxu0 0.0
    %5120 = vmatprep.subr.mxu0 0.0
    %5121 = vmatpush1.msra.mxu0 0.0
    %5122 = vmatprep.subr.mxu0 0.0
    %5123 = vmatpush1.msra.mxu0 0.0
    %5124 = vmatprep.subr.mxu0 0.0
    %5125 = vmatpush1.msra.mxu0 0.0
    %5126 = vmatprep.subr.mxu0 0.0
    %5127 = vmatpush1.msra.mxu0 %v93
    %5128 = vmatprep.subr.mxu0 0.0
    %5129 = vmatpush1.msra.mxu0 %v92
    %5130 = vmatprep.subr.mxu0 0.0
    %5131 = vmatpush1.msra.mxu0 %v91
    %5132 = vmatprep.subr.mxu0 0.0
    %5133 = vmatpush1.msra.mxu0 %v90
    %5134 = vmatprep.subr.mxu0 0.0
    %5135 = vmatpush2.msra.mxu0 0.0
    %5136 = vmatprep.subr.mxu0 0.0
    %5137 = vmatpush2.msra.mxu0 0.0
    %5138 = vmatprep.subr.mxu0 0.0
    %5139 = vmatpush2.msra.mxu0 0.0
    %5140 = vmatprep.subr.mxu0 0.0
    %5141 = vmatpush2.msra.mxu0 0.0
    %5142 = vmatprep.subr.mxu0 0.0
    %5143 = vmatpush2.msra.mxu0 0.0
    %5144 = vmatprep.subr.mxu0 0.0
    %5145 = vmatpush2.msra.mxu0 0.0
    %5146 = vmatprep.subr.mxu0 0.0
    %5147 = vmatpush2.msra.mxu0 0.0
    %5148 = vmatprep.subr.mxu0 0.0
    %5149 = vmatpush2.msra.mxu0 0.0
    %5150 = vmatprep.subr.mxu0 0.0
    %5151 = vmatpush2.msra.mxu0 0.0
    %5152 = vmatprep.subr.mxu0 0.0
    %5153 = vmatpush2.msra.mxu0 0.0
    %5154 = vmatprep.subr.mxu0 0.0
    %5155 = vmatpush2.msra.mxu0 0.0
    %5156 = vmatprep.subr.mxu0 0.0
    %5157 = vmatpush2.msra.mxu0 0.0
    %5158 = vmatprep.subr.mxu0 0.0
    %5159 = vmatpush2.msra.mxu0 0.0
    %5160 = vmatprep.subr.mxu0 0.0
    %5161 = vmatpush2.msra.mxu0 0.0
    %5162 = vmatprep.subr.mxu0 0.0
    %5163 = vmatpush2.msra.mxu0 0.0
    %5164 = vmatprep.subr.mxu0 0.0
    %5165 = vmatpush2.msra.mxu0 0.0
    %5166 = vmatprep.mubr.f32.mxu0 0.0
    %5167 = vmatmul.mubr.f32.gmra.mxu0 %v5100
    %v5168 = vpop.f32.mrf.mxu0
    %v5169 = vadd.f32 0.0, %v5168
    %v5170 = vpop.f32.mrf.mxu0
    %5171 = vdwg.mxu0
    %v5172 = vadd.f32 %v123, %v5169
    %5174 = vrot.lane.b32.xlu0 %v4774, 32
    %v5175 = vpop.permute.xlu0 %5174
    %v5176 = vsel %vm200, %v5175, 0
    %5178 = vmatprep.subr.mxu0 0.0
    %5179 = vmatpush1.msra.mxu0 0.0
    %5180 = vmatprep.subr.mxu0 0.0
    %5181 = vmatpush1.msra.mxu0 0.0
    %5182 = vmatprep.subr.mxu0 0.0
    %5183 = vmatpush1.msra.mxu0 0.0
    %5184 = vmatprep.subr.mxu0 0.0
    %5185 = vmatpush1.msra.mxu0 0.0
    %5186 = vmatprep.subr.mxu0 0.0
    %5187 = vmatpush1.msra.mxu0 0.0
    %5188 = vmatprep.subr.mxu0 0.0
    %5189 = vmatpush1.msra.mxu0 0.0
    %5190 = vmatprep.subr.mxu0 0.0
    %5191 = vmatpush1.msra.mxu0 0.0
    %5192 = vmatprep.subr.mxu0 0.0
    %5193 = vmatpush1.msra.mxu0 0.0
    %5194 = vmatprep.subr.mxu0 0.0
    %5195 = vmatpush1.msra.mxu0 0.0
    %5196 = vmatprep.subr.mxu0 0.0
    %5197 = vmatpush1.msra.mxu0 0.0
    %5198 = vmatprep.subr.mxu0 0.0
    %5199 = vmatpush1.msra.mxu0 0.0
    %5200 = vmatprep.subr.mxu0 0.0
    %5201 = vmatpush1.msra.mxu0 0.0
    %5202 = vmatprep.subr.mxu0 0.0
    %5203 = vmatpush1.msra.mxu0 %v109
    %5204 = vmatprep.subr.mxu0 0.0
    %5205 = vmatpush1.msra.mxu0 %v108
    %5206 = vmatprep.subr.mxu0 0.0
    %5207 = vmatpush1.msra.mxu0 %v107
    %5208 = vmatprep.subr.mxu0 0.0
    %5209 = vmatpush1.msra.mxu0 %v106
    %5210 = vmatprep.subr.mxu0 0.0
    %5211 = vmatpush2.msra.mxu0 0.0
    %5212 = vmatprep.subr.mxu0 0.0
    %5213 = vmatpush2.msra.mxu0 0.0
    %5214 = vmatprep.subr.mxu0 0.0
    %5215 = vmatpush2.msra.mxu0 0.0
    %5216 = vmatprep.subr.mxu0 0.0
    %5217 = vmatpush2.msra.mxu0 0.0
    %5218 = vmatprep.subr.mxu0 0.0
    %5219 = vmatpush2.msra.mxu0 0.0
    %5220 = vmatprep.subr.mxu0 0.0
    %5221 = vmatpush2.msra.mxu0 0.0
    %5222 = vmatprep.subr.mxu0 0.0
    %5223 = vmatpush2.msra.mxu0 0.0
    %5224 = vmatprep.subr.mxu0 0.0
    %5225 = vmatpush2.msra.mxu0 0.0
    %5226 = vmatprep.subr.mxu0 0.0
    %5227 = vmatpush2.msra.mxu0 0.0
    %5228 = vmatprep.subr.mxu0 0.0
    %5229 = vmatpush2.msra.mxu0 0.0
    %5230 = vmatprep.subr.mxu0 0.0
    %5231 = vmatpush2.msra.mxu0 0.0
    %5232 = vmatprep.subr.mxu0 0.0
    %5233 = vmatpush2.msra.mxu0 0.0
    %5234 = vmatprep.subr.mxu0 0.0
    %5235 = vmatpush2.msra.mxu0 0.0
    %5236 = vmatprep.subr.mxu0 0.0
    %5237 = vmatpush2.msra.mxu0 0.0
    %5238 = vmatprep.subr.mxu0 0.0
    %5239 = vmatpush2.msra.mxu0 0.0
    %5240 = vmatprep.subr.mxu0 0.0
    %5241 = vmatpush2.msra.mxu0 0.0
    %5242 = vmatprep.mubr.f32.mxu0 0.0
    %5243 = vmatmul.mubr.f32.gmra.mxu0 %v5176
    %v5244 = vpop.f32.mrf.mxu0
    %v5245 = vadd.f32 0.0, %v5244
    %v5246 = vpop.f32.mrf.mxu0
    %5247 = vdwg.mxu0
    %v5248 = vadd.f32 %v5172, %v5245
    %5249 = vmatprep.subr.mxu0 0.0
    %5250 = vmatpush1.msra.mxu0 0.0
    %5251 = vmatprep.subr.mxu0 0.0
    %5252 = vmatpush1.msra.mxu0 0.0
    %5253 = vmatprep.subr.mxu0 0.0
    %5254 = vmatpush1.msra.mxu0 0.0
    %5255 = vmatprep.subr.mxu0 0.0
    %5256 = vmatpush1.msra.mxu0 0.0
    %5257 = vmatprep.subr.mxu0 0.0
    %5258 = vmatpush1.msra.mxu0 0.0
    %5259 = vmatprep.subr.mxu0 0.0
    %5260 = vmatpush1.msra.mxu0 0.0
    %5261 = vmatprep.subr.mxu0 0.0
    %5262 = vmatpush1.msra.mxu0 0.0
    %5263 = vmatprep.subr.mxu0 0.0
    %5264 = vmatpush1.msra.mxu0 0.0
    %5265 = vmatprep.subr.mxu0 0.0
    %5266 = vmatpush1.msra.mxu0 0.0
    %5267 = vmatprep.subr.mxu0 0.0
    %5268 = vmatpush1.msra.mxu0 0.0
    %5269 = vmatprep.subr.mxu0 0.0
    %5270 = vmatpush1.msra.mxu0 0.0
    %5271 = vmatprep.subr.mxu0 0.0
    %5272 = vmatpush1.msra.mxu0 0.0
    %5273 = vmatprep.subr.mxu0 0.0
    %5274 = vmatpush1.msra.mxu0 %v97
    %5275 = vmatprep.subr.mxu0 0.0
    %5276 = vmatpush1.msra.mxu0 %v96
    %5277 = vmatprep.subr.mxu0 0.0
    %5278 = vmatpush1.msra.mxu0 %v95
    %5279 = vmatprep.subr.mxu0 0.0
    %5280 = vmatpush1.msra.mxu0 %v94
    %5281 = vmatprep.subr.mxu0 0.0
    %5282 = vmatpush2.msra.mxu0 0.0
    %5283 = vmatprep.subr.mxu0 0.0
    %5284 = vmatpush2.msra.mxu0 0.0
    %5285 = vmatprep.subr.mxu0 0.0
    %5286 = vmatpush2.msra.mxu0 0.0
    %5287 = vmatprep.subr.mxu0 0.0
    %5288 = vmatpush2.msra.mxu0 0.0
    %5289 = vmatprep.subr.mxu0 0.0
    %5290 = vmatpush2.msra.mxu0 0.0
    %5291 = vmatprep.subr.mxu0 0.0
    %5292 = vmatpush2.msra.mxu0 0.0
    %5293 = vmatprep.subr.mxu0 0.0
    %5294 = vmatpush2.msra.mxu0 0.0
    %5295 = vmatprep.subr.mxu0 0.0
    %5296 = vmatpush2.msra.mxu0 0.0
    %5297 = vmatprep.subr.mxu0 0.0
    %5298 = vmatpush2.msra.mxu0 0.0
    %5299 = vmatprep.subr.mxu0 0.0
    %5300 = vmatpush2.msra.mxu0 0.0
    %5301 = vmatprep.subr.mxu0 0.0
    %5302 = vmatpush2.msra.mxu0 0.0
    %5303 = vmatprep.subr.mxu0 0.0
    %5304 = vmatpush2.msra.mxu0 0.0
    %5305 = vmatprep.subr.mxu0 0.0
    %5306 = vmatpush2.msra.mxu0 0.0
    %5307 = vmatprep.subr.mxu0 0.0
    %5308 = vmatpush2.msra.mxu0 0.0
    %5309 = vmatprep.subr.mxu0 0.0
    %5310 = vmatpush2.msra.mxu0 0.0
    %5311 = vmatprep.subr.mxu0 0.0
    %5312 = vmatpush2.msra.mxu0 0.0
    %5313 = vmatprep.mubr.f32.mxu0 0.0
    %5314 = vmatmul.mubr.f32.gmra.mxu0 %v5100
    %v5315 = vpop.f32.mrf.mxu0
    %v5316 = vadd.f32 0.0, %v5315
    %v5317 = vpop.f32.mrf.mxu0
    %5318 = vdwg.mxu0
    %5320 = vrot.lane.b32.xlu0 %v5316, 32
    %v5321 = vpop.permute.xlu0 %5320
    %v5323 = vadd.f32 %v123, %v5321
    %5324 = vmatprep.subr.mxu0 0.0
    %5325 = vmatpush1.msra.mxu0 0.0
    %5326 = vmatprep.subr.mxu0 0.0
    %5327 = vmatpush1.msra.mxu0 0.0
    %5328 = vmatprep.subr.mxu0 0.0
    %5329 = vmatpush1.msra.mxu0 0.0
    %5330 = vmatprep.subr.mxu0 0.0
    %5331 = vmatpush1.msra.mxu0 0.0
    %5332 = vmatprep.subr.mxu0 0.0
    %5333 = vmatpush1.msra.mxu0 0.0
    %5334 = vmatprep.subr.mxu0 0.0
    %5335 = vmatpush1.msra.mxu0 0.0
    %5336 = vmatprep.subr.mxu0 0.0
    %5337 = vmatpush1.msra.mxu0 0.0
    %5338 = vmatprep.subr.mxu0 0.0
    %5339 = vmatpush1.msra.mxu0 0.0
    %5340 = vmatprep.subr.mxu0 0.0
    %5341 = vmatpush1.msra.mxu0 0.0
    %5342 = vmatprep.subr.mxu0 0.0
    %5343 = vmatpush1.msra.mxu0 0.0
    %5344 = vmatprep.subr.mxu0 0.0
    %5345 = vmatpush1.msra.mxu0 0.0
    %5346 = vmatprep.subr.mxu0 0.0
    %5347 = vmatpush1.msra.mxu0 0.0
    %5348 = vmatprep.subr.mxu0 0.0
    %5349 = vmatpush1.msra.mxu0 %v113
    %5350 = vmatprep.subr.mxu0 0.0
    %5351 = vmatpush1.msra.mxu0 %v112
    %5352 = vmatprep.subr.mxu0 0.0
    %5353 = vmatpush1.msra.mxu0 %v111
    %5354 = vmatprep.subr.mxu0 0.0
    %5355 = vmatpush1.msra.mxu0 %v110
    %5356 = vmatprep.subr.mxu0 0.0
    %5357 = vmatpush2.msra.mxu0 0.0
    %5358 = vmatprep.subr.mxu0 0.0
    %5359 = vmatpush2.msra.mxu0 0.0
    %5360 = vmatprep.subr.mxu0 0.0
    %5361 = vmatpush2.msra.mxu0 0.0
    %5362 = vmatprep.subr.mxu0 0.0
    %5363 = vmatpush2.msra.mxu0 0.0
    %5364 = vmatprep.subr.mxu0 0.0
    %5365 = vmatpush2.msra.mxu0 0.0
    %5366 = vmatprep.subr.mxu0 0.0
    %5367 = vmatpush2.msra.mxu0 0.0
    %5368 = vmatprep.subr.mxu0 0.0
    %5369 = vmatpush2.msra.mxu0 0.0
    %5370 = vmatprep.subr.mxu0 0.0
    %5371 = vmatpush2.msra.mxu0 0.0
    %5372 = vmatprep.subr.mxu0 0.0
    %5373 = vmatpush2.msra.mxu0 0.0
    %5374 = vmatprep.subr.mxu0 0.0
    %5375 = vmatpush2.msra.mxu0 0.0
    %5376 = vmatprep.subr.mxu0 0.0
    %5377 = vmatpush2.msra.mxu0 0.0
    %5378 = vmatprep.subr.mxu0 0.0
    %5379 = vmatpush2.msra.mxu0 0.0
    %5380 = vmatprep.subr.mxu0 0.0
    %5381 = vmatpush2.msra.mxu0 0.0
    %5382 = vmatprep.subr.mxu0 0.0
    %5383 = vmatpush2.msra.mxu0 0.0
    %5384 = vmatprep.subr.mxu0 0.0
    %5385 = vmatpush2.msra.mxu0 0.0
    %5386 = vmatprep.subr.mxu0 0.0
    %5387 = vmatpush2.msra.mxu0 0.0
    %5388 = vmatprep.mubr.f32.mxu0 0.0
    %5389 = vmatmul.mubr.f32.gmra.mxu0 %v5176
    %v5390 = vpop.f32.mrf.mxu0
    %v5391 = vadd.f32 0.0, %v5390
    %v5392 = vpop.f32.mrf.mxu0
    %5393 = vdwg.mxu0
    %5395 = vrot.lane.b32.xlu0 %v5391, 32
    %v5396 = vpop.permute.xlu0 %5395
    %v5398 = vadd.f32 %v5323, %v5396
    %5399 = vmatprep.subr.mxu0 0.0
    %5400 = vmatpush1.msra.mxu0 0.0
    %5401 = vmatprep.subr.mxu0 0.0
    %5402 = vmatpush1.msra.mxu0 0.0
    %5403 = vmatprep.subr.mxu0 0.0
    %5404 = vmatpush1.msra.mxu0 0.0
    %5405 = vmatprep.subr.mxu0 0.0
    %5406 = vmatpush1.msra.mxu0 0.0
    %5407 = vmatprep.subr.mxu0 0.0
    %5408 = vmatpush1.msra.mxu0 0.0
    %5409 = vmatprep.subr.mxu0 0.0
    %5410 = vmatpush1.msra.mxu0 0.0
    %5411 = vmatprep.subr.mxu0 0.0
    %5412 = vmatpush1.msra.mxu0 0.0
    %5413 = vmatprep.subr.mxu0 0.0
    %5414 = vmatpush1.msra.mxu0 0.0
    %5415 = vmatprep.subr.mxu0 0.0
    %5416 = vmatpush1.msra.mxu0 0.0
    %5417 = vmatprep.subr.mxu0 0.0
    %5418 = vmatpush1.msra.mxu0 0.0
    %5419 = vmatprep.subr.mxu0 0.0
    %5420 = vmatpush1.msra.mxu0 0.0
    %5421 = vmatprep.subr.mxu0 0.0
    %5422 = vmatpush1.msra.mxu0 0.0
    %5423 = vmatprep.subr.mxu0 0.0
    %5424 = vmatpush1.msra.mxu0 %v101
    %5425 = vmatprep.subr.mxu0 0.0
    %5426 = vmatpush1.msra.mxu0 %v100
    %5427 = vmatprep.subr.mxu0 0.0
    %5428 = vmatpush1.msra.mxu0 %v99
    %5429 = vmatprep.subr.mxu0 0.0
    %5430 = vmatpush1.msra.mxu0 %v98
    %5431 = vmatprep.subr.mxu0 0.0
    %5432 = vmatpush2.msra.mxu0 0.0
    %5433 = vmatprep.subr.mxu0 0.0
    %5434 = vmatpush2.msra.mxu0 0.0
    %5435 = vmatprep.subr.mxu0 0.0
    %5436 = vmatpush2.msra.mxu0 0.0
    %5437 = vmatprep.subr.mxu0 0.0
    %5438 = vmatpush2.msra.mxu0 0.0
    %5439 = vmatprep.subr.mxu0 0.0
    %5440 = vmatpush2.msra.mxu0 0.0
    %5441 = vmatprep.subr.mxu0 0.0
    %5442 = vmatpush2.msra.mxu0 0.0
    %5443 = vmatprep.subr.mxu0 0.0
    %5444 = vmatpush2.msra.mxu0 0.0
    %5445 = vmatprep.subr.mxu0 0.0
    %5446 = vmatpush2.msra.mxu0 0.0
    %5447 = vmatprep.subr.mxu0 0.0
    %5448 = vmatpush2.msra.mxu0 0.0
    %5449 = vmatprep.subr.mxu0 0.0
    %5450 = vmatpush2.msra.mxu0 0.0
    %5451 = vmatprep.subr.mxu0 0.0
    %5452 = vmatpush2.msra.mxu0 0.0
    %5453 = vmatprep.subr.mxu0 0.0
    %5454 = vmatpush2.msra.mxu0 0.0
    %5455 = vmatprep.subr.mxu0 0.0
    %5456 = vmatpush2.msra.mxu0 0.0
    %5457 = vmatprep.subr.mxu0 0.0
    %5458 = vmatpush2.msra.mxu0 0.0
    %5459 = vmatprep.subr.mxu0 0.0
    %5460 = vmatpush2.msra.mxu0 0.0
    %5461 = vmatprep.subr.mxu0 0.0
    %5462 = vmatpush2.msra.mxu0 0.0
    %5463 = vmatprep.mubr.f32.mxu0 0.0
    %5464 = vmatmul.mubr.f32.gmra.mxu0 %v5100
    %v5465 = vpop.f32.mrf.mxu0
    %v5466 = vadd.f32 0.0, %v5465
    %v5467 = vpop.f32.mrf.mxu0
    %5468 = vdwg.mxu0
    %5470 = vrot.lane.b32.xlu0 %v5466, 64
    %v5471 = vpop.permute.xlu0 %5470
    %v5473 = vadd.f32 %v123, %v5471
    %5474 = vmatprep.subr.mxu0 0.0
    %5475 = vmatpush1.msra.mxu0 0.0
    %5476 = vmatprep.subr.mxu0 0.0
    %5477 = vmatpush1.msra.mxu0 0.0
    %5478 = vmatprep.subr.mxu0 0.0
    %5479 = vmatpush1.msra.mxu0 0.0
    %5480 = vmatprep.subr.mxu0 0.0
    %5481 = vmatpush1.msra.mxu0 0.0
    %5482 = vmatprep.subr.mxu0 0.0
    %5483 = vmatpush1.msra.mxu0 0.0
    %5484 = vmatprep.subr.mxu0 0.0
    %5485 = vmatpush1.msra.mxu0 0.0
    %5486 = vmatprep.subr.mxu0 0.0
    %5487 = vmatpush1.msra.mxu0 0.0
    %5488 = vmatprep.subr.mxu0 0.0
    %5489 = vmatpush1.msra.mxu0 0.0
    %5490 = vmatprep.subr.mxu0 0.0
    %5491 = vmatpush1.msra.mxu0 0.0
    %5492 = vmatprep.subr.mxu0 0.0
    %5493 = vmatpush1.msra.mxu0 0.0
    %5494 = vmatprep.subr.mxu0 0.0
    %5495 = vmatpush1.msra.mxu0 0.0
    %5496 = vmatprep.subr.mxu0 0.0
    %5497 = vmatpush1.msra.mxu0 0.0
    %5498 = vmatprep.subr.mxu0 0.0
    %5499 = vmatpush1.msra.mxu0 %v117
    %5500 = vmatprep.subr.mxu0 0.0
    %5501 = vmatpush1.msra.mxu0 %v116
    %5502 = vmatprep.subr.mxu0 0.0
    %5503 = vmatpush1.msra.mxu0 %v115
    %5504 = vmatprep.subr.mxu0 0.0
    %5505 = vmatpush1.msra.mxu0 %v114
    %5506 = vmatprep.subr.mxu0 0.0
    %5507 = vmatpush2.msra.mxu0 0.0
    %5508 = vmatprep.subr.mxu0 0.0
    %5509 = vmatpush2.msra.mxu0 0.0
    %5510 = vmatprep.subr.mxu0 0.0
    %5511 = vmatpush2.msra.mxu0 0.0
    %5512 = vmatprep.subr.mxu0 0.0
    %5513 = vmatpush2.msra.mxu0 0.0
    %5514 = vmatprep.subr.mxu0 0.0
    %5515 = vmatpush2.msra.mxu0 0.0
    %5516 = vmatprep.subr.mxu0 0.0
    %5517 = vmatpush2.msra.mxu0 0.0
    %5518 = vmatprep.subr.mxu0 0.0
    %5519 = vmatpush2.msra.mxu0 0.0
    %5520 = vmatprep.subr.mxu0 0.0
    %5521 = vmatpush2.msra.mxu0 0.0
    %5522 = vmatprep.subr.mxu0 0.0
    %5523 = vmatpush2.msra.mxu0 0.0
    %5524 = vmatprep.subr.mxu0 0.0
    %5525 = vmatpush2.msra.mxu0 0.0
    %5526 = vmatprep.subr.mxu0 0.0
    %5527 = vmatpush2.msra.mxu0 0.0
    %5528 = vmatprep.subr.mxu0 0.0
    %5529 = vmatpush2.msra.mxu0 0.0
    %5530 = vmatprep.subr.mxu0 0.0
    %5531 = vmatpush2.msra.mxu0 0.0
    %5532 = vmatprep.subr.mxu0 0.0
    %5533 = vmatpush2.msra.mxu0 0.0
    %5534 = vmatprep.subr.mxu0 0.0
    %5535 = vmatpush2.msra.mxu0 0.0
    %5536 = vmatprep.subr.mxu0 0.0
    %5537 = vmatpush2.msra.mxu0 0.0
    %5538 = vmatprep.mubr.f32.mxu0 0.0
    %5539 = vmatmul.mubr.f32.gmra.mxu0 %v5176
    %v5540 = vpop.f32.mrf.mxu0
    %v5541 = vadd.f32 0.0, %v5540
    %v5542 = vpop.f32.mrf.mxu0
    %5543 = vdwg.mxu0
    %5545 = vrot.lane.b32.xlu0 %v5541, 64
    %v5546 = vpop.permute.xlu0 %5545
    %v5548 = vadd.f32 %v5473, %v5546
    %5549 = vmatprep.subr.mxu0 0.0
    %5550 = vmatpush1.msra.mxu0 0.0
    %5551 = vmatprep.subr.mxu0 0.0
    %5552 = vmatpush1.msra.mxu0 0.0
    %5553 = vmatprep.subr.mxu0 0.0
    %5554 = vmatpush1.msra.mxu0 0.0
    %5555 = vmatprep.subr.mxu0 0.0
    %5556 = vmatpush1.msra.mxu0 0.0
    %5557 = vmatprep.subr.mxu0 0.0
    %5558 = vmatpush1.msra.mxu0 0.0
    %5559 = vmatprep.subr.mxu0 0.0
    %5560 = vmatpush1.msra.mxu0 0.0
    %5561 = vmatprep.subr.mxu0 0.0
    %5562 = vmatpush1.msra.mxu0 0.0
    %5563 = vmatprep.subr.mxu0 0.0
    %5564 = vmatpush1.msra.mxu0 0.0
    %5565 = vmatprep.subr.mxu0 0.0
    %5566 = vmatpush1.msra.mxu0 0.0
    %5567 = vmatprep.subr.mxu0 0.0
    %5568 = vmatpush1.msra.mxu0 0.0
    %5569 = vmatprep.subr.mxu0 0.0
    %5570 = vmatpush1.msra.mxu0 0.0
    %5571 = vmatprep.subr.mxu0 0.0
    %5572 = vmatpush1.msra.mxu0 0.0
    %5573 = vmatprep.subr.mxu0 0.0
    %5574 = vmatpush1.msra.mxu0 %v105
    %5575 = vmatprep.subr.mxu0 0.0
    %5576 = vmatpush1.msra.mxu0 %v104
    %5577 = vmatprep.subr.mxu0 0.0
    %5578 = vmatpush1.msra.mxu0 %v103
    %5579 = vmatprep.subr.mxu0 0.0
    %5580 = vmatpush1.msra.mxu0 %v102
    %5581 = vmatprep.subr.mxu0 0.0
    %5582 = vmatpush2.msra.mxu0 0.0
    %5583 = vmatprep.subr.mxu0 0.0
    %5584 = vmatpush2.msra.mxu0 0.0
    %5585 = vmatprep.subr.mxu0 0.0
    %5586 = vmatpush2.msra.mxu0 0.0
    %5587 = vmatprep.subr.mxu0 0.0
    %5588 = vmatpush2.msra.mxu0 0.0
    %5589 = vmatprep.subr.mxu0 0.0
    %5590 = vmatpush2.msra.mxu0 0.0
    %5591 = vmatprep.subr.mxu0 0.0
    %5592 = vmatpush2.msra.mxu0 0.0
    %5593 = vmatprep.subr.mxu0 0.0
    %5594 = vmatpush2.msra.mxu0 0.0
    %5595 = vmatprep.subr.mxu0 0.0
    %5596 = vmatpush2.msra.mxu0 0.0
    %5597 = vmatprep.subr.mxu0 0.0
    %5598 = vmatpush2.msra.mxu0 0.0
    %5599 = vmatprep.subr.mxu0 0.0
    %5600 = vmatpush2.msra.mxu0 0.0
    %5601 = vmatprep.subr.mxu0 0.0
    %5602 = vmatpush2.msra.mxu0 0.0
    %5603 = vmatprep.subr.mxu0 0.0
    %5604 = vmatpush2.msra.mxu0 0.0
    %5605 = vmatprep.subr.mxu0 0.0
    %5606 = vmatpush2.msra.mxu0 0.0
    %5607 = vmatprep.subr.mxu0 0.0
    %5608 = vmatpush2.msra.mxu0 0.0
    %5609 = vmatprep.subr.mxu0 0.0
    %5610 = vmatpush2.msra.mxu0 0.0
    %5611 = vmatprep.subr.mxu0 0.0
    %5612 = vmatpush2.msra.mxu0 0.0
    %5613 = vmatprep.mubr.f32.mxu0 0.0
    %5614 = vmatmul.mubr.f32.gmra.mxu0 %v5100
    %v5615 = vpop.f32.mrf.mxu0
    %v5616 = vadd.f32 0.0, %v5615
    %v5617 = vpop.f32.mrf.mxu0
    %5618 = vdwg.mxu0
    %5620 = vrot.lane.b32.xlu0 %v5616, 96
    %v5621 = vpop.permute.xlu0 %5620
    %v5623 = vadd.f32 %v123, %v5621
    %5624 = vmatprep.subr.mxu0 0.0
    %5625 = vmatpush1.msra.mxu0 0.0
    %5626 = vmatprep.subr.mxu0 0.0
    %5627 = vmatpush1.msra.mxu0 0.0
    %5628 = vmatprep.subr.mxu0 0.0
    %5629 = vmatpush1.msra.mxu0 0.0
    %5630 = vmatprep.subr.mxu0 0.0
    %5631 = vmatpush1.msra.mxu0 0.0
    %5632 = vmatprep.subr.mxu0 0.0
    %5633 = vmatpush1.msra.mxu0 0.0
    %5634 = vmatprep.subr.mxu0 0.0
    %5635 = vmatpush1.msra.mxu0 0.0
    %5636 = vmatprep.subr.mxu0 0.0
    %5637 = vmatpush1.msra.mxu0 0.0
    %5638 = vmatprep.subr.mxu0 0.0
    %5639 = vmatpush1.msra.mxu0 0.0
    %5640 = vmatprep.subr.mxu0 0.0
    %5641 = vmatpush1.msra.mxu0 0.0
    %5642 = vmatprep.subr.mxu0 0.0
    %5643 = vmatpush1.msra.mxu0 0.0
    %5644 = vmatprep.subr.mxu0 0.0
    %5645 = vmatpush1.msra.mxu0 0.0
    %5646 = vmatprep.subr.mxu0 0.0
    %5647 = vmatpush1.msra.mxu0 0.0
    %5648 = vmatprep.subr.mxu0 0.0
    %5649 = vmatpush1.msra.mxu0 %v121
    %5650 = vmatprep.subr.mxu0 0.0
    %5651 = vmatpush1.msra.mxu0 %v120
    %5652 = vmatprep.subr.mxu0 0.0
    %5653 = vmatpush1.msra.mxu0 %v119
    %5654 = vmatprep.subr.mxu0 0.0
    %5655 = vmatpush1.msra.mxu0 %v118
    %5656 = vmatprep.subr.mxu0 0.0
    %5657 = vmatpush2.msra.mxu0 0.0
    %5658 = vmatprep.subr.mxu0 0.0
    %5659 = vmatpush2.msra.mxu0 0.0
    %5660 = vmatprep.subr.mxu0 0.0
    %5661 = vmatpush2.msra.mxu0 0.0
    %5662 = vmatprep.subr.mxu0 0.0
    %5663 = vmatpush2.msra.mxu0 0.0
    %5664 = vmatprep.subr.mxu0 0.0
    %5665 = vmatpush2.msra.mxu0 0.0
    %5666 = vmatprep.subr.mxu0 0.0
    %5667 = vmatpush2.msra.mxu0 0.0
    %5668 = vmatprep.subr.mxu0 0.0
    %5669 = vmatpush2.msra.mxu0 0.0
    %5670 = vmatprep.subr.mxu0 0.0
    %5671 = vmatpush2.msra.mxu0 0.0
    %5672 = vmatprep.subr.mxu0 0.0
    %5673 = vmatpush2.msra.mxu0 0.0
    %5674 = vmatprep.subr.mxu0 0.0
    %5675 = vmatpush2.msra.mxu0 0.0
    %5676 = vmatprep.subr.mxu0 0.0
    %5677 = vmatpush2.msra.mxu0 0.0
    %5678 = vmatprep.subr.mxu0 0.0
    %5679 = vmatpush2.msra.mxu0 0.0
    %5680 = vmatprep.subr.mxu0 0.0
    %5681 = vmatpush2.msra.mxu0 0.0
    %5682 = vmatprep.subr.mxu0 0.0
    %5683 = vmatpush2.msra.mxu0 0.0
    %5684 = vmatprep.subr.mxu0 0.0
    %5685 = vmatpush2.msra.mxu0 0.0
    %5686 = vmatprep.subr.mxu0 0.0
    %5687 = vmatpush2.msra.mxu0 0.0
    %5688 = vmatprep.mubr.f32.mxu0 0.0
    %5689 = vmatmul.mubr.f32.gmra.mxu0 %v5176
    %v5690 = vpop.f32.mrf.mxu0
    %v5691 = vadd.f32 0.0, %v5690
    %v5692 = vpop.f32.mrf.mxu0
    %5693 = vdwg.mxu0
    %5695 = vrot.lane.b32.xlu0 %v5691, 96
    %v5696 = vpop.permute.xlu0 %5695
    %v5698 = vadd.f32 %v5623, %v5696
    %v5699 = vxor.u32 %v5248, 2147483648
    %v5700 = vmul.f32 %v5699, 1.442695
    %v5701 = vpow.pop %v5700
    %v5702 = vadd.f32 %v5701, 1.0
    %v5703 = vrcp.pop %v5702
    %v5704 = vmul.f32 1.0, %v5703
    %v5705 = vxor.u32 %v5398, 2147483648
    %v5706 = vmul.f32 %v5705, 1.442695
    %v5707 = vpow.pop %v5706
    %v5708 = vadd.f32 %v5707, 1.0
    %v5709 = vrcp.pop %v5708
    %v5710 = vmul.f32 1.0, %v5709
    %v5711 = vtanh.pop %v5548
    %v5712 = vxor.u32 %v5698, 2147483648
    %v5713 = vmul.f32 %v5712, 1.442695
    %v5714 = vpow.pop %v5713
    %v5715 = vadd.f32 %v5714, 1.0
    %v5716 = vrcp.pop %v5715
    %v5717 = vmul.f32 1.0, %v5716
    %v5718 = vmul.f32 %v5710, %v4768
    %5720 = vrot.lane.b32.xlu0 %v5711, 64
    %v5721 = vpop.permute.xlu0 %5720
    %v5723 = vmul.f32 %v5704, %v5721
    %5725 = vrot.lane.b32.xlu0 %v5723, 32
    %v5726 = vpop.permute.xlu0 %5725
    %v5728 = vadd.f32 %v5718, %v5726
    %v5729 = vtanh.pop %v5728
    %5731 = vrot.lane.b32.xlu0 %v5729, 64
    %v5732 = vpop.permute.xlu0 %5731
    %v5734 = vmul.f32 %v5717, %v5732
    %5735 = vmatprep.subr.mxu0 0.0
    %5736 = vmatpush1.msra.mxu0 0.0
    %5737 = vmatprep.subr.mxu0 0.0
    %5738 = vmatpush1.msra.mxu0 0.0
    %5739 = vmatprep.subr.mxu0 0.0
    %5740 = vmatpush1.msra.mxu0 0.0
    %5741 = vmatprep.subr.mxu0 0.0
    %5742 = vmatpush1.msra.mxu0 0.0
    %5743 = vmatprep.subr.mxu0 0.0
    %5744 = vmatpush1.msra.mxu0 0.0
    %5745 = vmatprep.subr.mxu0 0.0
    %5746 = vmatpush1.msra.mxu0 0.0
    %5747 = vmatprep.subr.mxu0 0.0
    %5748 = vmatpush1.msra.mxu0 0.0
    %5749 = vmatprep.subr.mxu0 0.0
    %5750 = vmatpush1.msra.mxu0 0.0
    %5751 = vmatprep.subr.mxu0 0.0
    %5752 = vmatpush1.msra.mxu0 0.0
    %5753 = vmatprep.subr.mxu0 0.0
    %5754 = vmatpush1.msra.mxu0 0.0
    %5755 = vmatprep.subr.mxu0 0.0
    %5756 = vmatpush1.msra.mxu0 0.0
    %5757 = vmatprep.subr.mxu0 0.0
    %5758 = vmatpush1.msra.mxu0 0.0
    %5759 = vmatprep.subr.mxu0 0.0
    %5760 = vmatpush1.msra.mxu0 %v77
    %5761 = vmatprep.subr.mxu0 0.0
    %5762 = vmatpush1.msra.mxu0 %v76
    %5763 = vmatprep.subr.mxu0 0.0
    %5764 = vmatpush1.msra.mxu0 %v75
    %5765 = vmatprep.subr.mxu0 0.0
    %5766 = vmatpush1.msra.mxu0 %v74
    %5767 = vmatprep.subr.mxu0 0.0
    %5768 = vmatpush2.msra.mxu0 0.0
    %5769 = vmatprep.subr.mxu0 0.0
    %5770 = vmatpush2.msra.mxu0 0.0
    %5771 = vmatprep.subr.mxu0 0.0
    %5772 = vmatpush2.msra.mxu0 0.0
    %5773 = vmatprep.subr.mxu0 0.0
    %5774 = vmatpush2.msra.mxu0 0.0
    %5775 = vmatprep.subr.mxu0 0.0
    %5776 = vmatpush2.msra.mxu0 0.0
    %5777 = vmatprep.subr.mxu0 0.0
    %5778 = vmatpush2.msra.mxu0 0.0
    %5779 = vmatprep.subr.mxu0 0.0
    %5780 = vmatpush2.msra.mxu0 0.0
    %5781 = vmatprep.subr.mxu0 0.0
    %5782 = vmatpush2.msra.mxu0 0.0
    %5783 = vmatprep.subr.mxu0 0.0
    %5784 = vmatpush2.msra.mxu0 0.0
    %5785 = vmatprep.subr.mxu0 0.0
    %5786 = vmatpush2.msra.mxu0 0.0
    %5787 = vmatprep.subr.mxu0 0.0
    %5788 = vmatpush2.msra.mxu0 0.0
    %5789 = vmatprep.subr.mxu0 0.0
    %5790 = vmatpush2.msra.mxu0 0.0
    %5791 = vmatprep.subr.mxu0 0.0
    %5792 = vmatpush2.msra.mxu0 0.0
    %5793 = vmatprep.subr.mxu0 0.0
    %5794 = vmatpush2.msra.mxu0 0.0
    %5795 = vmatprep.subr.mxu0 0.0
    %5796 = vmatpush2.msra.mxu0 0.0
    %5797 = vmatprep.subr.mxu0 0.0
    %5798 = vmatpush2.msra.mxu0 0.0
    %5799 = vmatprep.mubr.f32.mxu0 0.0
    %5800 = vmatmul.mubr.f32.gmra.mxu0 %v5100
    %v5801 = vpop.f32.mrf.mxu0
    %v5802 = vadd.f32 0.0, %v5801
    %v5803 = vpop.f32.mrf.mxu0
    %5804 = vdwg.mxu0
    %v5806 = vrot.slane %v5802, 2
    %v5808 = vadd.f32 %v353, %v5806
    %5809 = vmatprep.subr.mxu0 0.0
    %5810 = vmatpush1.msra.mxu0 0.0
    %5811 = vmatprep.subr.mxu0 0.0
    %5812 = vmatpush1.msra.mxu0 0.0
    %5813 = vmatprep.subr.mxu0 0.0
    %5814 = vmatpush1.msra.mxu0 0.0
    %5815 = vmatprep.subr.mxu0 0.0
    %5816 = vmatpush1.msra.mxu0 0.0
    %5817 = vmatprep.subr.mxu0 0.0
    %5818 = vmatpush1.msra.mxu0 0.0
    %5819 = vmatprep.subr.mxu0 0.0
    %5820 = vmatpush1.msra.mxu0 0.0
    %5821 = vmatprep.subr.mxu0 0.0
    %5822 = vmatpush1.msra.mxu0 0.0
    %5823 = vmatprep.subr.mxu0 0.0
    %5824 = vmatpush1.msra.mxu0 0.0
    %5825 = vmatprep.subr.mxu0 0.0
    %5826 = vmatpush1.msra.mxu0 0.0
    %5827 = vmatprep.subr.mxu0 0.0
    %5828 = vmatpush1.msra.mxu0 0.0
    %5829 = vmatprep.subr.mxu0 0.0
    %5830 = vmatpush1.msra.mxu0 0.0
    %5831 = vmatprep.subr.mxu0 0.0
    %5832 = vmatpush1.msra.mxu0 0.0
    %5833 = vmatprep.subr.mxu0 0.0
    %5834 = vmatpush1.msra.mxu0 %v81
    %5835 = vmatprep.subr.mxu0 0.0
    %5836 = vmatpush1.msra.mxu0 %v80
    %5837 = vmatprep.subr.mxu0 0.0
    %5838 = vmatpush1.msra.mxu0 %v79
    %5839 = vmatprep.subr.mxu0 0.0
    %5840 = vmatpush1.msra.mxu0 %v78
    %5841 = vmatprep.subr.mxu0 0.0
    %5842 = vmatpush2.msra.mxu0 0.0
    %5843 = vmatprep.subr.mxu0 0.0
    %5844 = vmatpush2.msra.mxu0 0.0
    %5845 = vmatprep.subr.mxu0 0.0
    %5846 = vmatpush2.msra.mxu0 0.0
    %5847 = vmatprep.subr.mxu0 0.0
    %5848 = vmatpush2.msra.mxu0 0.0
    %5849 = vmatprep.subr.mxu0 0.0
    %5850 = vmatpush2.msra.mxu0 0.0
    %5851 = vmatprep.subr.mxu0 0.0
    %5852 = vmatpush2.msra.mxu0 0.0
    %5853 = vmatprep.subr.mxu0 0.0
    %5854 = vmatpush2.msra.mxu0 0.0
    %5855 = vmatprep.subr.mxu0 0.0
    %5856 = vmatpush2.msra.mxu0 0.0
    %5857 = vmatprep.subr.mxu0 0.0
    %5858 = vmatpush2.msra.mxu0 0.0
    %5859 = vmatprep.subr.mxu0 0.0
    %5860 = vmatpush2.msra.mxu0 0.0
    %5861 = vmatprep.subr.mxu0 0.0
    %5862 = vmatpush2.msra.mxu0 0.0
    %5863 = vmatprep.subr.mxu0 0.0
    %5864 = vmatpush2.msra.mxu0 0.0
    %5865 = vmatprep.subr.mxu0 0.0
    %5866 = vmatpush2.msra.mxu0 0.0
    %5867 = vmatprep.subr.mxu0 0.0
    %5868 = vmatpush2.msra.mxu0 0.0
    %5869 = vmatprep.subr.mxu0 0.0
    %5870 = vmatpush2.msra.mxu0 0.0
    %5871 = vmatprep.subr.mxu0 0.0
    %5872 = vmatpush2.msra.mxu0 0.0
    %5873 = vmatprep.mubr.f32.mxu0 0.0
    %5874 = vmatmul.mubr.f32.gmra.mxu0 %v5100
    %v5875 = vpop.f32.mrf.mxu0
    %v5876 = vadd.f32 0.0, %v5875
    %v5877 = vpop.f32.mrf.mxu0
    %5878 = vdwg.mxu0
    %v5880 = vrot.slane %v5876, 2
    %v5882 = vadd.f32 %v427, %v5880
    %5883 = vmatprep.subr.mxu0 0.0
    %5884 = vmatpush1.msra.mxu0 0.0
    %5885 = vmatprep.subr.mxu0 0.0
    %5886 = vmatpush1.msra.mxu0 0.0
    %5887 = vmatprep.subr.mxu0 0.0
    %5888 = vmatpush1.msra.mxu0 0.0
    %5889 = vmatprep.subr.mxu0 0.0
    %5890 = vmatpush1.msra.mxu0 0.0
    %5891 = vmatprep.subr.mxu0 0.0
    %5892 = vmatpush1.msra.mxu0 0.0
    %5893 = vmatprep.subr.mxu0 0.0
    %5894 = vmatpush1.msra.mxu0 0.0
    %5895 = vmatprep.subr.mxu0 0.0
    %5896 = vmatpush1.msra.mxu0 0.0
    %5897 = vmatprep.subr.mxu0 0.0
    %5898 = vmatpush1.msra.mxu0 0.0
    %5899 = vmatprep.subr.mxu0 0.0
    %5900 = vmatpush1.msra.mxu0 0.0
    %5901 = vmatprep.subr.mxu0 0.0
    %5902 = vmatpush1.msra.mxu0 0.0
    %5903 = vmatprep.subr.mxu0 0.0
    %5904 = vmatpush1.msra.mxu0 0.0
    %5905 = vmatprep.subr.mxu0 0.0
    %5906 = vmatpush1.msra.mxu0 0.0
    %5907 = vmatprep.subr.mxu0 0.0
    %5908 = vmatpush1.msra.mxu0 %v85
    %5909 = vmatprep.subr.mxu0 0.0
    %5910 = vmatpush1.msra.mxu0 %v84
    %5911 = vmatprep.subr.mxu0 0.0
    %5912 = vmatpush1.msra.mxu0 %v83
    %5913 = vmatprep.subr.mxu0 0.0
    %5914 = vmatpush1.msra.mxu0 %v82
    %5915 = vmatprep.subr.mxu0 0.0
    %5916 = vmatpush2.msra.mxu0 0.0
    %5917 = vmatprep.subr.mxu0 0.0
    %5918 = vmatpush2.msra.mxu0 0.0
    %5919 = vmatprep.subr.mxu0 0.0
    %5920 = vmatpush2.msra.mxu0 0.0
    %5921 = vmatprep.subr.mxu0 0.0
    %5922 = vmatpush2.msra.mxu0 0.0
    %5923 = vmatprep.subr.mxu0 0.0
    %5924 = vmatpush2.msra.mxu0 0.0
    %5925 = vmatprep.subr.mxu0 0.0
    %5926 = vmatpush2.msra.mxu0 0.0
    %5927 = vmatprep.subr.mxu0 0.0
    %5928 = vmatpush2.msra.mxu0 0.0
    %5929 = vmatprep.subr.mxu0 0.0
    %5930 = vmatpush2.msra.mxu0 0.0
    %5931 = vmatprep.subr.mxu0 0.0
    %5932 = vmatpush2.msra.mxu0 0.0
    %5933 = vmatprep.subr.mxu0 0.0
    %5934 = vmatpush2.msra.mxu0 0.0
    %5935 = vmatprep.subr.mxu0 0.0
    %5936 = vmatpush2.msra.mxu0 0.0
    %5937 = vmatprep.subr.mxu0 0.0
    %5938 = vmatpush2.msra.mxu0 0.0
    %5939 = vmatprep.subr.mxu0 0.0
    %5940 = vmatpush2.msra.mxu0 0.0
    %5941 = vmatprep.subr.mxu0 0.0
    %5942 = vmatpush2.msra.mxu0 0.0
    %5943 = vmatprep.subr.mxu0 0.0
    %5944 = vmatpush2.msra.mxu0 0.0
    %5945 = vmatprep.subr.mxu0 0.0
    %5946 = vmatpush2.msra.mxu0 0.0
    %5947 = vmatprep.mubr.f32.mxu0 0.0
    %5948 = vmatmul.mubr.f32.gmra.mxu0 %v5100
    %v5949 = vpop.f32.mrf.mxu0
    %v5950 = vadd.f32 0.0, %v5949
    %v5951 = vpop.f32.mrf.mxu0
    %5952 = vdwg.mxu0
    %v5954 = vrot.slane %v5950, 2
    %v5956 = vadd.f32 %v500, %v5954
    %5957 = vmatprep.subr.mxu0 0.0
    %5958 = vmatpush1.msra.mxu0 0.0
    %5959 = vmatprep.subr.mxu0 0.0
    %5960 = vmatpush1.msra.mxu0 0.0
    %5961 = vmatprep.subr.mxu0 0.0
    %5962 = vmatpush1.msra.mxu0 0.0
    %5963 = vmatprep.subr.mxu0 0.0
    %5964 = vmatpush1.msra.mxu0 0.0
    %5965 = vmatprep.subr.mxu0 0.0
    %5966 = vmatpush1.msra.mxu0 0.0
    %5967 = vmatprep.subr.mxu0 0.0
    %5968 = vmatpush1.msra.mxu0 0.0
    %5969 = vmatprep.subr.mxu0 0.0
    %5970 = vmatpush1.msra.mxu0 0.0
    %5971 = vmatprep.subr.mxu0 0.0
    %5972 = vmatpush1.msra.mxu0 0.0
    %5973 = vmatprep.subr.mxu0 0.0
    %5974 = vmatpush1.msra.mxu0 0.0
    %5975 = vmatprep.subr.mxu0 0.0
    %5976 = vmatpush1.msra.mxu0 0.0
    %5977 = vmatprep.subr.mxu0 0.0
    %5978 = vmatpush1.msra.mxu0 0.0
    %5979 = vmatprep.subr.mxu0 0.0
    %5980 = vmatpush1.msra.mxu0 0.0
    %5981 = vmatprep.subr.mxu0 0.0
    %5982 = vmatpush1.msra.mxu0 %v89
    %5983 = vmatprep.subr.mxu0 0.0
    %5984 = vmatpush1.msra.mxu0 %v88
    %5985 = vmatprep.subr.mxu0 0.0
    %5986 = vmatpush1.msra.mxu0 %v87
    %5987 = vmatprep.subr.mxu0 0.0
    %5988 = vmatpush1.msra.mxu0 %v86
    %5989 = vmatprep.subr.mxu0 0.0
    %5990 = vmatpush2.msra.mxu0 0.0
    %5991 = vmatprep.subr.mxu0 0.0
    %5992 = vmatpush2.msra.mxu0 0.0
    %5993 = vmatprep.subr.mxu0 0.0
    %5994 = vmatpush2.msra.mxu0 0.0
    %5995 = vmatprep.subr.mxu0 0.0
    %5996 = vmatpush2.msra.mxu0 0.0
    %5997 = vmatprep.subr.mxu0 0.0
    %5998 = vmatpush2.msra.mxu0 0.0
    %5999 = vmatprep.subr.mxu0 0.0
    %6000 = vmatpush2.msra.mxu0 0.0
    %6001 = vmatprep.subr.mxu0 0.0
    %6002 = vmatpush2.msra.mxu0 0.0
    %6003 = vmatprep.subr.mxu0 0.0
    %6004 = vmatpush2.msra.mxu0 0.0
    %6005 = vmatprep.subr.mxu0 0.0
    %6006 = vmatpush2.msra.mxu0 0.0
    %6007 = vmatprep.subr.mxu0 0.0
    %6008 = vmatpush2.msra.mxu0 0.0
    %6009 = vmatprep.subr.mxu0 0.0
    %6010 = vmatpush2.msra.mxu0 0.0
    %6011 = vmatprep.subr.mxu0 0.0
    %6012 = vmatpush2.msra.mxu0 0.0
    %6013 = vmatprep.subr.mxu0 0.0
    %6014 = vmatpush2.msra.mxu0 0.0
    %6015 = vmatprep.subr.mxu0 0.0
    %6016 = vmatpush2.msra.mxu0 0.0
    %6017 = vmatprep.subr.mxu0 0.0
    %6018 = vmatpush2.msra.mxu0 0.0
    %6019 = vmatprep.subr.mxu0 0.0
    %6020 = vmatpush2.msra.mxu0 0.0
    %6021 = vmatprep.mubr.f32.mxu0 0.0
    %6022 = vmatmul.mubr.f32.gmra.mxu0 %v5100
    %v6023 = vpop.f32.mrf.mxu0
    %v6024 = vadd.f32 0.0, %v6023
    %v6025 = vpop.f32.mrf.mxu0
    %6026 = vdwg.mxu0
    %v6028 = vrot.slane %v6024, 2
    %v6030 = vadd.f32 %v573, %v6028
    %v6031 = vxor.u32 %v5808, 2147483648
    %v6032 = vmul.f32 %v6031, 1.442695
    %v6033 = vpow.pop %v6032
    %v6034 = vadd.f32 %v6033, 1.0
    %v6035 = vrcp.pop %v6034
    %v6036 = vmul.f32 1.0, %v6035
    %v6037 = vxor.u32 %v5882, 2147483648
    %v6038 = vmul.f32 %v6037, 1.442695
    %v6039 = vpow.pop %v6038
    %v6040 = vadd.f32 %v6039, 1.0
    %v6041 = vrcp.pop %v6040
    %v6042 = vmul.f32 1.0, %v6041
    %v6043 = vtanh.pop %v5956
    %v6044 = vxor.u32 %v6030, 2147483648
    %v6045 = vmul.f32 %v6044, 1.442695
    %v6046 = vpow.pop %v6045
    %v6047 = vadd.f32 %v6046, 1.0
    %v6048 = vrcp.pop %v6047
    %v6049 = vmul.f32 1.0, %v6048
    %v6051 = vrot.slane %v5095, 7
    %v6053 = vmul.f32 %v6042, %v6051
    %v6054 = vmul.f32 %v6036, %v6043
    %v6055 = vadd.f32 %v6053, %v6054
    %v6056 = vtanh.pop %v6055
    %v6057 = vmul.f32 %v6049, %v6056
    %v6059 = vrot.slane %v6057, 6
    %v6060 = vsel %vm200, %v6059, 0
    %6062 = vmatprep.subr.mxu0 0.0
    %6063 = vmatpush1.msra.mxu0 0.0
    %6064 = vmatprep.subr.mxu0 0.0
    %6065 = vmatpush1.msra.mxu0 0.0
    %6066 = vmatprep.subr.mxu0 0.0
    %6067 = vmatpush1.msra.mxu0 0.0
    %6068 = vmatprep.subr.mxu0 0.0
    %6069 = vmatpush1.msra.mxu0 0.0
    %6070 = vmatprep.subr.mxu0 0.0
    %6071 = vmatpush1.msra.mxu0 0.0
    %6072 = vmatprep.subr.mxu0 0.0
    %6073 = vmatpush1.msra.mxu0 0.0
    %6074 = vmatprep.subr.mxu0 0.0
    %6075 = vmatpush1.msra.mxu0 0.0
    %6076 = vmatprep.subr.mxu0 0.0
    %6077 = vmatpush1.msra.mxu0 0.0
    %6078 = vmatprep.subr.mxu0 0.0
    %6079 = vmatpush1.msra.mxu0 0.0
    %6080 = vmatprep.subr.mxu0 0.0
    %6081 = vmatpush1.msra.mxu0 0.0
    %6082 = vmatprep.subr.mxu0 0.0
    %6083 = vmatpush1.msra.mxu0 0.0
    %6084 = vmatprep.subr.mxu0 0.0
    %6085 = vmatpush1.msra.mxu0 0.0
    %6086 = vmatprep.subr.mxu0 0.0
    %6087 = vmatpush1.msra.mxu0 %v93
    %6088 = vmatprep.subr.mxu0 0.0
    %6089 = vmatpush1.msra.mxu0 %v92
    %6090 = vmatprep.subr.mxu0 0.0
    %6091 = vmatpush1.msra.mxu0 %v91
    %6092 = vmatprep.subr.mxu0 0.0
    %6093 = vmatpush1.msra.mxu0 %v90
    %6094 = vmatprep.subr.mxu0 0.0
    %6095 = vmatpush2.msra.mxu0 0.0
    %6096 = vmatprep.subr.mxu0 0.0
    %6097 = vmatpush2.msra.mxu0 0.0
    %6098 = vmatprep.subr.mxu0 0.0
    %6099 = vmatpush2.msra.mxu0 0.0
    %6100 = vmatprep.subr.mxu0 0.0
    %6101 = vmatpush2.msra.mxu0 0.0
    %6102 = vmatprep.subr.mxu0 0.0
    %6103 = vmatpush2.msra.mxu0 0.0
    %6104 = vmatprep.subr.mxu0 0.0
    %6105 = vmatpush2.msra.mxu0 0.0
    %6106 = vmatprep.subr.mxu0 0.0
    %6107 = vmatpush2.msra.mxu0 0.0
    %6108 = vmatprep.subr.mxu0 0.0
    %6109 = vmatpush2.msra.mxu0 0.0
    %6110 = vmatprep.subr.mxu0 0.0
    %6111 = vmatpush2.msra.mxu0 0.0
    %6112 = vmatprep.subr.mxu0 0.0
    %6113 = vmatpush2.msra.mxu0 0.0
    %6114 = vmatprep.subr.mxu0 0.0
    %6115 = vmatpush2.msra.mxu0 0.0
    %6116 = vmatprep.subr.mxu0 0.0
    %6117 = vmatpush2.msra.mxu0 0.0
    %6118 = vmatprep.subr.mxu0 0.0
    %6119 = vmatpush2.msra.mxu0 0.0
    %6120 = vmatprep.subr.mxu0 0.0
    %6121 = vmatpush2.msra.mxu0 0.0
    %6122 = vmatprep.subr.mxu0 0.0
    %6123 = vmatpush2.msra.mxu0 0.0
    %6124 = vmatprep.subr.mxu0 0.0
    %6125 = vmatpush2.msra.mxu0 0.0
    %6126 = vmatprep.mubr.f32.mxu0 0.0
    %6127 = vmatmul.mubr.f32.gmra.mxu0 %v6060
    %v6128 = vpop.f32.mrf.mxu0
    %v6129 = vadd.f32 0.0, %v6128
    %v6130 = vpop.f32.mrf.mxu0
    %6131 = vdwg.mxu0
    %v6132 = vadd.f32 %v123, %v6129
    %6134 = vrot.lane.b32.xlu0 %v5734, 32
    %v6135 = vpop.permute.xlu0 %6134
    %v6136 = vsel %vm200, %v6135, 0
    %6138 = vmatprep.subr.mxu0 0.0
    %6139 = vmatpush1.msra.mxu0 0.0
    %6140 = vmatprep.subr.mxu0 0.0
    %6141 = vmatpush1.msra.mxu0 0.0
    %6142 = vmatprep.subr.mxu0 0.0
    %6143 = vmatpush1.msra.mxu0 0.0
    %6144 = vmatprep.subr.mxu0 0.0
    %6145 = vmatpush1.msra.mxu0 0.0
    %6146 = vmatprep.subr.mxu0 0.0
    %6147 = vmatpush1.msra.mxu0 0.0
    %6148 = vmatprep.subr.mxu0 0.0
    %6149 = vmatpush1.msra.mxu0 0.0
    %6150 = vmatprep.subr.mxu0 0.0
    %6151 = vmatpush1.msra.mxu0 0.0
    %6152 = vmatprep.subr.mxu0 0.0
    %6153 = vmatpush1.msra.mxu0 0.0
    %6154 = vmatprep.subr.mxu0 0.0
    %6155 = vmatpush1.msra.mxu0 0.0
    %6156 = vmatprep.subr.mxu0 0.0
    %6157 = vmatpush1.msra.mxu0 0.0
    %6158 = vmatprep.subr.mxu0 0.0
    %6159 = vmatpush1.msra.mxu0 0.0
    %6160 = vmatprep.subr.mxu0 0.0
    %6161 = vmatpush1.msra.mxu0 0.0
    %6162 = vmatprep.subr.mxu0 0.0
    %6163 = vmatpush1.msra.mxu0 %v109
    %6164 = vmatprep.subr.mxu0 0.0
    %6165 = vmatpush1.msra.mxu0 %v108
    %6166 = vmatprep.subr.mxu0 0.0
    %6167 = vmatpush1.msra.mxu0 %v107
    %6168 = vmatprep.subr.mxu0 0.0
    %6169 = vmatpush1.msra.mxu0 %v106
    %6170 = vmatprep.subr.mxu0 0.0
    %6171 = vmatpush2.msra.mxu0 0.0
    %6172 = vmatprep.subr.mxu0 0.0
    %6173 = vmatpush2.msra.mxu0 0.0
    %6174 = vmatprep.subr.mxu0 0.0
    %6175 = vmatpush2.msra.mxu0 0.0
    %6176 = vmatprep.subr.mxu0 0.0
    %6177 = vmatpush2.msra.mxu0 0.0
    %6178 = vmatprep.subr.mxu0 0.0
    %6179 = vmatpush2.msra.mxu0 0.0
    %6180 = vmatprep.subr.mxu0 0.0
    %6181 = vmatpush2.msra.mxu0 0.0
    %6182 = vmatprep.subr.mxu0 0.0
    %6183 = vmatpush2.msra.mxu0 0.0
    %6184 = vmatprep.subr.mxu0 0.0
    %6185 = vmatpush2.msra.mxu0 0.0
    %6186 = vmatprep.subr.mxu0 0.0
    %6187 = vmatpush2.msra.mxu0 0.0
    %6188 = vmatprep.subr.mxu0 0.0
    %6189 = vmatpush2.msra.mxu0 0.0
    %6190 = vmatprep.subr.mxu0 0.0
    %6191 = vmatpush2.msra.mxu0 0.0
    %6192 = vmatprep.subr.mxu0 0.0
    %6193 = vmatpush2.msra.mxu0 0.0
    %6194 = vmatprep.subr.mxu0 0.0
    %6195 = vmatpush2.msra.mxu0 0.0
    %6196 = vmatprep.subr.mxu0 0.0
    %6197 = vmatpush2.msra.mxu0 0.0
    %6198 = vmatprep.subr.mxu0 0.0
    %6199 = vmatpush2.msra.mxu0 0.0
    %6200 = vmatprep.subr.mxu0 0.0
    %6201 = vmatpush2.msra.mxu0 0.0
    %6202 = vmatprep.mubr.f32.mxu0 0.0
    %6203 = vmatmul.mubr.f32.gmra.mxu0 %v6136
    %v6204 = vpop.f32.mrf.mxu0
    %v6205 = vadd.f32 0.0, %v6204
    %v6206 = vpop.f32.mrf.mxu0
    %6207 = vdwg.mxu0
    %v6208 = vadd.f32 %v6132, %v6205
    %6209 = vmatprep.subr.mxu0 0.0
    %6210 = vmatpush1.msra.mxu0 0.0
    %6211 = vmatprep.subr.mxu0 0.0
    %6212 = vmatpush1.msra.mxu0 0.0
    %6213 = vmatprep.subr.mxu0 0.0
    %6214 = vmatpush1.msra.mxu0 0.0
    %6215 = vmatprep.subr.mxu0 0.0
    %6216 = vmatpush1.msra.mxu0 0.0
    %6217 = vmatprep.subr.mxu0 0.0
    %6218 = vmatpush1.msra.mxu0 0.0
    %6219 = vmatprep.subr.mxu0 0.0
    %6220 = vmatpush1.msra.mxu0 0.0
    %6221 = vmatprep.subr.mxu0 0.0
    %6222 = vmatpush1.msra.mxu0 0.0
    %6223 = vmatprep.subr.mxu0 0.0
    %6224 = vmatpush1.msra.mxu0 0.0
    %6225 = vmatprep.subr.mxu0 0.0
    %6226 = vmatpush1.msra.mxu0 0.0
    %6227 = vmatprep.subr.mxu0 0.0
    %6228 = vmatpush1.msra.mxu0 0.0
    %6229 = vmatprep.subr.mxu0 0.0
    %6230 = vmatpush1.msra.mxu0 0.0
    %6231 = vmatprep.subr.mxu0 0.0
    %6232 = vmatpush1.msra.mxu0 0.0
    %6233 = vmatprep.subr.mxu0 0.0
    %6234 = vmatpush1.msra.mxu0 %v97
    %6235 = vmatprep.subr.mxu0 0.0
    %6236 = vmatpush1.msra.mxu0 %v96
    %6237 = vmatprep.subr.mxu0 0.0
    %6238 = vmatpush1.msra.mxu0 %v95
    %6239 = vmatprep.subr.mxu0 0.0
    %6240 = vmatpush1.msra.mxu0 %v94
    %6241 = vmatprep.subr.mxu0 0.0
    %6242 = vmatpush2.msra.mxu0 0.0
    %6243 = vmatprep.subr.mxu0 0.0
    %6244 = vmatpush2.msra.mxu0 0.0
    %6245 = vmatprep.subr.mxu0 0.0
    %6246 = vmatpush2.msra.mxu0 0.0
    %6247 = vmatprep.subr.mxu0 0.0
    %6248 = vmatpush2.msra.mxu0 0.0
    %6249 = vmatprep.subr.mxu0 0.0
    %6250 = vmatpush2.msra.mxu0 0.0
    %6251 = vmatprep.subr.mxu0 0.0
    %6252 = vmatpush2.msra.mxu0 0.0
    %6253 = vmatprep.subr.mxu0 0.0
    %6254 = vmatpush2.msra.mxu0 0.0
    %6255 = vmatprep.subr.mxu0 0.0
    %6256 = vmatpush2.msra.mxu0 0.0
    %6257 = vmatprep.subr.mxu0 0.0
    %6258 = vmatpush2.msra.mxu0 0.0
    %6259 = vmatprep.subr.mxu0 0.0
    %6260 = vmatpush2.msra.mxu0 0.0
    %6261 = vmatprep.subr.mxu0 0.0
    %6262 = vmatpush2.msra.mxu0 0.0
    %6263 = vmatprep.subr.mxu0 0.0
    %6264 = vmatpush2.msra.mxu0 0.0
    %6265 = vmatprep.subr.mxu0 0.0
    %6266 = vmatpush2.msra.mxu0 0.0
    %6267 = vmatprep.subr.mxu0 0.0
    %6268 = vmatpush2.msra.mxu0 0.0
    %6269 = vmatprep.subr.mxu0 0.0
    %6270 = vmatpush2.msra.mxu0 0.0
    %6271 = vmatprep.subr.mxu0 0.0
    %6272 = vmatpush2.msra.mxu0 0.0
    %6273 = vmatprep.mubr.f32.mxu0 0.0
    %6274 = vmatmul.mubr.f32.gmra.mxu0 %v6060
    %v6275 = vpop.f32.mrf.mxu0
    %v6276 = vadd.f32 0.0, %v6275
    %v6277 = vpop.f32.mrf.mxu0
    %6278 = vdwg.mxu0
    %6280 = vrot.lane.b32.xlu0 %v6276, 32
    %v6281 = vpop.permute.xlu0 %6280
    %v6283 = vadd.f32 %v123, %v6281
    %6284 = vmatprep.subr.mxu0 0.0
    %6285 = vmatpush1.msra.mxu0 0.0
    %6286 = vmatprep.subr.mxu0 0.0
    %6287 = vmatpush1.msra.mxu0 0.0
    %6288 = vmatprep.subr.mxu0 0.0
    %6289 = vmatpush1.msra.mxu0 0.0
    %6290 = vmatprep.subr.mxu0 0.0
    %6291 = vmatpush1.msra.mxu0 0.0
    %6292 = vmatprep.subr.mxu0 0.0
    %6293 = vmatpush1.msra.mxu0 0.0
    %6294 = vmatprep.subr.mxu0 0.0
    %6295 = vmatpush1.msra.mxu0 0.0
    %6296 = vmatprep.subr.mxu0 0.0
    %6297 = vmatpush1.msra.mxu0 0.0
    %6298 = vmatprep.subr.mxu0 0.0
    %6299 = vmatpush1.msra.mxu0 0.0
    %6300 = vmatprep.subr.mxu0 0.0
    %6301 = vmatpush1.msra.mxu0 0.0
    %6302 = vmatprep.subr.mxu0 0.0
    %6303 = vmatpush1.msra.mxu0 0.0
    %6304 = vmatprep.subr.mxu0 0.0
    %6305 = vmatpush1.msra.mxu0 0.0
    %6306 = vmatprep.subr.mxu0 0.0
    %6307 = vmatpush1.msra.mxu0 0.0
    %6308 = vmatprep.subr.mxu0 0.0
    %6309 = vmatpush1.msra.mxu0 %v113
    %6310 = vmatprep.subr.mxu0 0.0
    %6311 = vmatpush1.msra.mxu0 %v112
    %6312 = vmatprep.subr.mxu0 0.0
    %6313 = vmatpush1.msra.mxu0 %v111
    %6314 = vmatprep.subr.mxu0 0.0
    %6315 = vmatpush1.msra.mxu0 %v110
    %6316 = vmatprep.subr.mxu0 0.0
    %6317 = vmatpush2.msra.mxu0 0.0
    %6318 = vmatprep.subr.mxu0 0.0
    %6319 = vmatpush2.msra.mxu0 0.0
    %6320 = vmatprep.subr.mxu0 0.0
    %6321 = vmatpush2.msra.mxu0 0.0
    %6322 = vmatprep.subr.mxu0 0.0
    %6323 = vmatpush2.msra.mxu0 0.0
    %6324 = vmatprep.subr.mxu0 0.0
    %6325 = vmatpush2.msra.mxu0 0.0
    %6326 = vmatprep.subr.mxu0 0.0
    %6327 = vmatpush2.msra.mxu0 0.0
    %6328 = vmatprep.subr.mxu0 0.0
    %6329 = vmatpush2.msra.mxu0 0.0
    %6330 = vmatprep.subr.mxu0 0.0
    %6331 = vmatpush2.msra.mxu0 0.0
    %6332 = vmatprep.subr.mxu0 0.0
    %6333 = vmatpush2.msra.mxu0 0.0
    %6334 = vmatprep.subr.mxu0 0.0
    %6335 = vmatpush2.msra.mxu0 0.0
    %6336 = vmatprep.subr.mxu0 0.0
    %6337 = vmatpush2.msra.mxu0 0.0
    %6338 = vmatprep.subr.mxu0 0.0
    %6339 = vmatpush2.msra.mxu0 0.0
    %6340 = vmatprep.subr.mxu0 0.0
    %6341 = vmatpush2.msra.mxu0 0.0
    %6342 = vmatprep.subr.mxu0 0.0
    %6343 = vmatpush2.msra.mxu0 0.0
    %6344 = vmatprep.subr.mxu0 0.0
    %6345 = vmatpush2.msra.mxu0 0.0
    %6346 = vmatprep.subr.mxu0 0.0
    %6347 = vmatpush2.msra.mxu0 0.0
    %6348 = vmatprep.mubr.f32.mxu0 0.0
    %6349 = vmatmul.mubr.f32.gmra.mxu0 %v6136
    %v6350 = vpop.f32.mrf.mxu0
    %v6351 = vadd.f32 0.0, %v6350
    %v6352 = vpop.f32.mrf.mxu0
    %6353 = vdwg.mxu0
    %6355 = vrot.lane.b32.xlu0 %v6351, 32
    %v6356 = vpop.permute.xlu0 %6355
    %v6358 = vadd.f32 %v6283, %v6356
    %6359 = vmatprep.subr.mxu0 0.0
    %6360 = vmatpush1.msra.mxu0 0.0
    %6361 = vmatprep.subr.mxu0 0.0
    %6362 = vmatpush1.msra.mxu0 0.0
    %6363 = vmatprep.subr.mxu0 0.0
    %6364 = vmatpush1.msra.mxu0 0.0
    %6365 = vmatprep.subr.mxu0 0.0
    %6366 = vmatpush1.msra.mxu0 0.0
    %6367 = vmatprep.subr.mxu0 0.0
    %6368 = vmatpush1.msra.mxu0 0.0
    %6369 = vmatprep.subr.mxu0 0.0
    %6370 = vmatpush1.msra.mxu0 0.0
    %6371 = vmatprep.subr.mxu0 0.0
    %6372 = vmatpush1.msra.mxu0 0.0
    %6373 = vmatprep.subr.mxu0 0.0
    %6374 = vmatpush1.msra.mxu0 0.0
    %6375 = vmatprep.subr.mxu0 0.0
    %6376 = vmatpush1.msra.mxu0 0.0
    %6377 = vmatprep.subr.mxu0 0.0
    %6378 = vmatpush1.msra.mxu0 0.0
    %6379 = vmatprep.subr.mxu0 0.0
    %6380 = vmatpush1.msra.mxu0 0.0
    %6381 = vmatprep.subr.mxu0 0.0
    %6382 = vmatpush1.msra.mxu0 0.0
    %6383 = vmatprep.subr.mxu0 0.0
    %6384 = vmatpush1.msra.mxu0 %v101
    %6385 = vmatprep.subr.mxu0 0.0
    %6386 = vmatpush1.msra.mxu0 %v100
    %6387 = vmatprep.subr.mxu0 0.0
    %6388 = vmatpush1.msra.mxu0 %v99
    %6389 = vmatprep.subr.mxu0 0.0
    %6390 = vmatpush1.msra.mxu0 %v98
    %6391 = vmatprep.subr.mxu0 0.0
    %6392 = vmatpush2.msra.mxu0 0.0
    %6393 = vmatprep.subr.mxu0 0.0
    %6394 = vmatpush2.msra.mxu0 0.0
    %6395 = vmatprep.subr.mxu0 0.0
    %6396 = vmatpush2.msra.mxu0 0.0
    %6397 = vmatprep.subr.mxu0 0.0
    %6398 = vmatpush2.msra.mxu0 0.0
    %6399 = vmatprep.subr.mxu0 0.0
    %6400 = vmatpush2.msra.mxu0 0.0
    %6401 = vmatprep.subr.mxu0 0.0
    %6402 = vmatpush2.msra.mxu0 0.0
    %6403 = vmatprep.subr.mxu0 0.0
    %6404 = vmatpush2.msra.mxu0 0.0
    %6405 = vmatprep.subr.mxu0 0.0
    %6406 = vmatpush2.msra.mxu0 0.0
    %6407 = vmatprep.subr.mxu0 0.0
    %6408 = vmatpush2.msra.mxu0 0.0
    %6409 = vmatprep.subr.mxu0 0.0
    %6410 = vmatpush2.msra.mxu0 0.0
    %6411 = vmatprep.subr.mxu0 0.0
    %6412 = vmatpush2.msra.mxu0 0.0
    %6413 = vmatprep.subr.mxu0 0.0
    %6414 = vmatpush2.msra.mxu0 0.0
    %6415 = vmatprep.subr.mxu0 0.0
    %6416 = vmatpush2.msra.mxu0 0.0
    %6417 = vmatprep.subr.mxu0 0.0
    %6418 = vmatpush2.msra.mxu0 0.0
    %6419 = vmatprep.subr.mxu0 0.0
    %6420 = vmatpush2.msra.mxu0 0.0
    %6421 = vmatprep.subr.mxu0 0.0
    %6422 = vmatpush2.msra.mxu0 0.0
    %6423 = vmatprep.mubr.f32.mxu0 0.0
    %6424 = vmatmul.mubr.f32.gmra.mxu0 %v6060
    %v6425 = vpop.f32.mrf.mxu0
    %v6426 = vadd.f32 0.0, %v6425
    %v6427 = vpop.f32.mrf.mxu0
    %6428 = vdwg.mxu0
    %6430 = vrot.lane.b32.xlu0 %v6426, 64
    %v6431 = vpop.permute.xlu0 %6430
    %v6433 = vadd.f32 %v123, %v6431
    %6434 = vmatprep.subr.mxu0 0.0
    %6435 = vmatpush1.msra.mxu0 0.0
    %6436 = vmatprep.subr.mxu0 0.0
    %6437 = vmatpush1.msra.mxu0 0.0
    %6438 = vmatprep.subr.mxu0 0.0
    %6439 = vmatpush1.msra.mxu0 0.0
    %6440 = vmatprep.subr.mxu0 0.0
    %6441 = vmatpush1.msra.mxu0 0.0
    %6442 = vmatprep.subr.mxu0 0.0
    %6443 = vmatpush1.msra.mxu0 0.0
    %6444 = vmatprep.subr.mxu0 0.0
    %6445 = vmatpush1.msra.mxu0 0.0
    %6446 = vmatprep.subr.mxu0 0.0
    %6447 = vmatpush1.msra.mxu0 0.0
    %6448 = vmatprep.subr.mxu0 0.0
    %6449 = vmatpush1.msra.mxu0 0.0
    %6450 = vmatprep.subr.mxu0 0.0
    %6451 = vmatpush1.msra.mxu0 0.0
    %6452 = vmatprep.subr.mxu0 0.0
    %6453 = vmatpush1.msra.mxu0 0.0
    %6454 = vmatprep.subr.mxu0 0.0
    %6455 = vmatpush1.msra.mxu0 0.0
    %6456 = vmatprep.subr.mxu0 0.0
    %6457 = vmatpush1.msra.mxu0 0.0
    %6458 = vmatprep.subr.mxu0 0.0
    %6459 = vmatpush1.msra.mxu0 %v117
    %6460 = vmatprep.subr.mxu0 0.0
    %6461 = vmatpush1.msra.mxu0 %v116
    %6462 = vmatprep.subr.mxu0 0.0
    %6463 = vmatpush1.msra.mxu0 %v115
    %6464 = vmatprep.subr.mxu0 0.0
    %6465 = vmatpush1.msra.mxu0 %v114
    %6466 = vmatprep.subr.mxu0 0.0
    %6467 = vmatpush2.msra.mxu0 0.0
    %6468 = vmatprep.subr.mxu0 0.0
    %6469 = vmatpush2.msra.mxu0 0.0
    %6470 = vmatprep.subr.mxu0 0.0
    %6471 = vmatpush2.msra.mxu0 0.0
    %6472 = vmatprep.subr.mxu0 0.0
    %6473 = vmatpush2.msra.mxu0 0.0
    %6474 = vmatprep.subr.mxu0 0.0
    %6475 = vmatpush2.msra.mxu0 0.0
    %6476 = vmatprep.subr.mxu0 0.0
    %6477 = vmatpush2.msra.mxu0 0.0
    %6478 = vmatprep.subr.mxu0 0.0
    %6479 = vmatpush2.msra.mxu0 0.0
    %6480 = vmatprep.subr.mxu0 0.0
    %6481 = vmatpush2.msra.mxu0 0.0
    %6482 = vmatprep.subr.mxu0 0.0
    %6483 = vmatpush2.msra.mxu0 0.0
    %6484 = vmatprep.subr.mxu0 0.0
    %6485 = vmatpush2.msra.mxu0 0.0
    %6486 = vmatprep.subr.mxu0 0.0
    %6487 = vmatpush2.msra.mxu0 0.0
    %6488 = vmatprep.subr.mxu0 0.0
    %6489 = vmatpush2.msra.mxu0 0.0
    %6490 = vmatprep.subr.mxu0 0.0
    %6491 = vmatpush2.msra.mxu0 0.0
    %6492 = vmatprep.subr.mxu0 0.0
    %6493 = vmatpush2.msra.mxu0 0.0
    %6494 = vmatprep.subr.mxu0 0.0
    %6495 = vmatpush2.msra.mxu0 0.0
    %6496 = vmatprep.subr.mxu0 0.0
    %6497 = vmatpush2.msra.mxu0 0.0
    %6498 = vmatprep.mubr.f32.mxu0 0.0
    %6499 = vmatmul.mubr.f32.gmra.mxu0 %v6136
    %v6500 = vpop.f32.mrf.mxu0
    %v6501 = vadd.f32 0.0, %v6500
    %v6502 = vpop.f32.mrf.mxu0
    %6503 = vdwg.mxu0
    %6505 = vrot.lane.b32.xlu0 %v6501, 64
    %v6506 = vpop.permute.xlu0 %6505
    %v6508 = vadd.f32 %v6433, %v6506
    %6509 = vmatprep.subr.mxu0 0.0
    %6510 = vmatpush1.msra.mxu0 0.0
    %6511 = vmatprep.subr.mxu0 0.0
    %6512 = vmatpush1.msra.mxu0 0.0
    %6513 = vmatprep.subr.mxu0 0.0
    %6514 = vmatpush1.msra.mxu0 0.0
    %6515 = vmatprep.subr.mxu0 0.0
    %6516 = vmatpush1.msra.mxu0 0.0
    %6517 = vmatprep.subr.mxu0 0.0
    %6518 = vmatpush1.msra.mxu0 0.0
    %6519 = vmatprep.subr.mxu0 0.0
    %6520 = vmatpush1.msra.mxu0 0.0
    %6521 = vmatprep.subr.mxu0 0.0
    %6522 = vmatpush1.msra.mxu0 0.0
    %6523 = vmatprep.subr.mxu0 0.0
    %6524 = vmatpush1.msra.mxu0 0.0
    %6525 = vmatprep.subr.mxu0 0.0
    %6526 = vmatpush1.msra.mxu0 0.0
    %6527 = vmatprep.subr.mxu0 0.0
    %6528 = vmatpush1.msra.mxu0 0.0
    %6529 = vmatprep.subr.mxu0 0.0
    %6530 = vmatpush1.msra.mxu0 0.0
    %6531 = vmatprep.subr.mxu0 0.0
    %6532 = vmatpush1.msra.mxu0 0.0
    %6533 = vmatprep.subr.mxu0 0.0
    %6534 = vmatpush1.msra.mxu0 %v105
    %6535 = vmatprep.subr.mxu0 0.0
    %6536 = vmatpush1.msra.mxu0 %v104
    %6537 = vmatprep.subr.mxu0 0.0
    %6538 = vmatpush1.msra.mxu0 %v103
    %6539 = vmatprep.subr.mxu0 0.0
    %6540 = vmatpush1.msra.mxu0 %v102
    %6541 = vmatprep.subr.mxu0 0.0
    %6542 = vmatpush2.msra.mxu0 0.0
    %6543 = vmatprep.subr.mxu0 0.0
    %6544 = vmatpush2.msra.mxu0 0.0
    %6545 = vmatprep.subr.mxu0 0.0
    %6546 = vmatpush2.msra.mxu0 0.0
    %6547 = vmatprep.subr.mxu0 0.0
    %6548 = vmatpush2.msra.mxu0 0.0
    %6549 = vmatprep.subr.mxu0 0.0
    %6550 = vmatpush2.msra.mxu0 0.0
    %6551 = vmatprep.subr.mxu0 0.0
    %6552 = vmatpush2.msra.mxu0 0.0
    %6553 = vmatprep.subr.mxu0 0.0
    %6554 = vmatpush2.msra.mxu0 0.0
    %6555 = vmatprep.subr.mxu0 0.0
    %6556 = vmatpush2.msra.mxu0 0.0
    %6557 = vmatprep.subr.mxu0 0.0
    %6558 = vmatpush2.msra.mxu0 0.0
    %6559 = vmatprep.subr.mxu0 0.0
    %6560 = vmatpush2.msra.mxu0 0.0
    %6561 = vmatprep.subr.mxu0 0.0
    %6562 = vmatpush2.msra.mxu0 0.0
    %6563 = vmatprep.subr.mxu0 0.0
    %6564 = vmatpush2.msra.mxu0 0.0
    %6565 = vmatprep.subr.mxu0 0.0
    %6566 = vmatpush2.msra.mxu0 0.0
    %6567 = vmatprep.subr.mxu0 0.0
    %6568 = vmatpush2.msra.mxu0 0.0
    %6569 = vmatprep.subr.mxu0 0.0
    %6570 = vmatpush2.msra.mxu0 0.0
    %6571 = vmatprep.subr.mxu0 0.0
    %6572 = vmatpush2.msra.mxu0 0.0
    %6573 = vmatprep.mubr.f32.mxu0 0.0
    %6574 = vmatmul.mubr.f32.gmra.mxu0 %v6060
    %v6575 = vpop.f32.mrf.mxu0
    %v6576 = vadd.f32 0.0, %v6575
    %v6577 = vpop.f32.mrf.mxu0
    %6578 = vdwg.mxu0
    %6580 = vrot.lane.b32.xlu0 %v6576, 96
    %v6581 = vpop.permute.xlu0 %6580
    %v6583 = vadd.f32 %v123, %v6581
    %6584 = vmatprep.subr.mxu0 0.0
    %6585 = vmatpush1.msra.mxu0 0.0
    %6586 = vmatprep.subr.mxu0 0.0
    %6587 = vmatpush1.msra.mxu0 0.0
    %6588 = vmatprep.subr.mxu0 0.0
    %6589 = vmatpush1.msra.mxu0 0.0
    %6590 = vmatprep.subr.mxu0 0.0
    %6591 = vmatpush1.msra.mxu0 0.0
    %6592 = vmatprep.subr.mxu0 0.0
    %6593 = vmatpush1.msra.mxu0 0.0
    %6594 = vmatprep.subr.mxu0 0.0
    %6595 = vmatpush1.msra.mxu0 0.0
    %6596 = vmatprep.subr.mxu0 0.0
    %6597 = vmatpush1.msra.mxu0 0.0
    %6598 = vmatprep.subr.mxu0 0.0
    %6599 = vmatpush1.msra.mxu0 0.0
    %6600 = vmatprep.subr.mxu0 0.0
    %6601 = vmatpush1.msra.mxu0 0.0
    %6602 = vmatprep.subr.mxu0 0.0
    %6603 = vmatpush1.msra.mxu0 0.0
    %6604 = vmatprep.subr.mxu0 0.0
    %6605 = vmatpush1.msra.mxu0 0.0
    %6606 = vmatprep.subr.mxu0 0.0
    %6607 = vmatpush1.msra.mxu0 0.0
    %6608 = vmatprep.subr.mxu0 0.0
    %6609 = vmatpush1.msra.mxu0 %v121
    %6610 = vmatprep.subr.mxu0 0.0
    %6611 = vmatpush1.msra.mxu0 %v120
    %6612 = vmatprep.subr.mxu0 0.0
    %6613 = vmatpush1.msra.mxu0 %v119
    %6614 = vmatprep.subr.mxu0 0.0
    %6615 = vmatpush1.msra.mxu0 %v118
    %6616 = vmatprep.subr.mxu0 0.0
    %6617 = vmatpush2.msra.mxu0 0.0
    %6618 = vmatprep.subr.mxu0 0.0
    %6619 = vmatpush2.msra.mxu0 0.0
    %6620 = vmatprep.subr.mxu0 0.0
    %6621 = vmatpush2.msra.mxu0 0.0
    %6622 = vmatprep.subr.mxu0 0.0
    %6623 = vmatpush2.msra.mxu0 0.0
    %6624 = vmatprep.subr.mxu0 0.0
    %6625 = vmatpush2.msra.mxu0 0.0
    %6626 = vmatprep.subr.mxu0 0.0
    %6627 = vmatpush2.msra.mxu0 0.0
    %6628 = vmatprep.subr.mxu0 0.0
    %6629 = vmatpush2.msra.mxu0 0.0
    %6630 = vmatprep.subr.mxu0 0.0
    %6631 = vmatpush2.msra.mxu0 0.0
    %6632 = vmatprep.subr.mxu0 0.0
    %6633 = vmatpush2.msra.mxu0 0.0
    %6634 = vmatprep.subr.mxu0 0.0
    %6635 = vmatpush2.msra.mxu0 0.0
    %6636 = vmatprep.subr.mxu0 0.0
    %6637 = vmatpush2.msra.mxu0 0.0
    %6638 = vmatprep.subr.mxu0 0.0
    %6639 = vmatpush2.msra.mxu0 0.0
    %6640 = vmatprep.subr.mxu0 0.0
    %6641 = vmatpush2.msra.mxu0 0.0
    %6642 = vmatprep.subr.mxu0 0.0
    %6643 = vmatpush2.msra.mxu0 0.0
    %6644 = vmatprep.subr.mxu0 0.0
    %6645 = vmatpush2.msra.mxu0 0.0
    %6646 = vmatprep.subr.mxu0 0.0
    %6647 = vmatpush2.msra.mxu0 0.0
    %6648 = vmatprep.mubr.f32.mxu0 0.0
    %6649 = vmatmul.mubr.f32.gmra.mxu0 %v6136
    %v6650 = vpop.f32.mrf.mxu0
    %v6651 = vadd.f32 0.0, %v6650
    %v6652 = vpop.f32.mrf.mxu0
    %6653 = vdwg.mxu0
    %6655 = vrot.lane.b32.xlu0 %v6651, 96
    %v6656 = vpop.permute.xlu0 %6655
    %v6658 = vadd.f32 %v6583, %v6656
    %v6659 = vxor.u32 %v6208, 2147483648
    %v6660 = vmul.f32 %v6659, 1.442695
    %v6661 = vpow.pop %v6660
    %v6662 = vadd.f32 %v6661, 1.0
    %v6663 = vrcp.pop %v6662
    %v6664 = vmul.f32 1.0, %v6663
    %v6665 = vxor.u32 %v6358, 2147483648
    %v6666 = vmul.f32 %v6665, 1.442695
    %v6667 = vpow.pop %v6666
    %v6668 = vadd.f32 %v6667, 1.0
    %v6669 = vrcp.pop %v6668
    %v6670 = vmul.f32 1.0, %v6669
    %v6671 = vtanh.pop %v6508
    %v6672 = vxor.u32 %v6658, 2147483648
    %v6673 = vmul.f32 %v6672, 1.442695
    %v6674 = vpow.pop %v6673
    %v6675 = vadd.f32 %v6674, 1.0
    %v6676 = vrcp.pop %v6675
    %v6677 = vmul.f32 1.0, %v6676
    %v6678 = vmul.f32 %v6670, %v5728
    %6680 = vrot.lane.b32.xlu0 %v6671, 64
    %v6681 = vpop.permute.xlu0 %6680
    %v6683 = vmul.f32 %v6664, %v6681
    %6685 = vrot.lane.b32.xlu0 %v6683, 32
    %v6686 = vpop.permute.xlu0 %6685
    %v6688 = vadd.f32 %v6678, %v6686
    %v6689 = vtanh.pop %v6688
    %6691 = vrot.lane.b32.xlu0 %v6689, 64
    %v6692 = vpop.permute.xlu0 %6691
    %v6694 = vmul.f32 %v6677, %v6692
    %6695 = vmatprep.subr.mxu0 0.0
    %6696 = vmatpush1.msra.mxu0 0.0
    %6697 = vmatprep.subr.mxu0 0.0
    %6698 = vmatpush1.msra.mxu0 0.0
    %6699 = vmatprep.subr.mxu0 0.0
    %6700 = vmatpush1.msra.mxu0 0.0
    %6701 = vmatprep.subr.mxu0 0.0
    %6702 = vmatpush1.msra.mxu0 0.0
    %6703 = vmatprep.subr.mxu0 0.0
    %6704 = vmatpush1.msra.mxu0 0.0
    %6705 = vmatprep.subr.mxu0 0.0
    %6706 = vmatpush1.msra.mxu0 0.0
    %6707 = vmatprep.subr.mxu0 0.0
    %6708 = vmatpush1.msra.mxu0 0.0
    %6709 = vmatprep.subr.mxu0 0.0
    %6710 = vmatpush1.msra.mxu0 0.0
    %6711 = vmatprep.subr.mxu0 0.0
    %6712 = vmatpush1.msra.mxu0 0.0
    %6713 = vmatprep.subr.mxu0 0.0
    %6714 = vmatpush1.msra.mxu0 0.0
    %6715 = vmatprep.subr.mxu0 0.0
    %6716 = vmatpush1.msra.mxu0 0.0
    %6717 = vmatprep.subr.mxu0 0.0
    %6718 = vmatpush1.msra.mxu0 0.0
    %6719 = vmatprep.subr.mxu0 0.0
    %6720 = vmatpush1.msra.mxu0 %v77
    %6721 = vmatprep.subr.mxu0 0.0
    %6722 = vmatpush1.msra.mxu0 %v76
    %6723 = vmatprep.subr.mxu0 0.0
    %6724 = vmatpush1.msra.mxu0 %v75
    %6725 = vmatprep.subr.mxu0 0.0
    %6726 = vmatpush1.msra.mxu0 %v74
    %6727 = vmatprep.subr.mxu0 0.0
    %6728 = vmatpush2.msra.mxu0 0.0
    %6729 = vmatprep.subr.mxu0 0.0
    %6730 = vmatpush2.msra.mxu0 0.0
    %6731 = vmatprep.subr.mxu0 0.0
    %6732 = vmatpush2.msra.mxu0 0.0
    %6733 = vmatprep.subr.mxu0 0.0
    %6734 = vmatpush2.msra.mxu0 0.0
    %6735 = vmatprep.subr.mxu0 0.0
    %6736 = vmatpush2.msra.mxu0 0.0
    %6737 = vmatprep.subr.mxu0 0.0
    %6738 = vmatpush2.msra.mxu0 0.0
    %6739 = vmatprep.subr.mxu0 0.0
    %6740 = vmatpush2.msra.mxu0 0.0
    %6741 = vmatprep.subr.mxu0 0.0
    %6742 = vmatpush2.msra.mxu0 0.0
    %6743 = vmatprep.subr.mxu0 0.0
    %6744 = vmatpush2.msra.mxu0 0.0
    %6745 = vmatprep.subr.mxu0 0.0
    %6746 = vmatpush2.msra.mxu0 0.0
    %6747 = vmatprep.subr.mxu0 0.0
    %6748 = vmatpush2.msra.mxu0 0.0
    %6749 = vmatprep.subr.mxu0 0.0
    %6750 = vmatpush2.msra.mxu0 0.0
    %6751 = vmatprep.subr.mxu0 0.0
    %6752 = vmatpush2.msra.mxu0 0.0
    %6753 = vmatprep.subr.mxu0 0.0
    %6754 = vmatpush2.msra.mxu0 0.0
    %6755 = vmatprep.subr.mxu0 0.0
    %6756 = vmatpush2.msra.mxu0 0.0
    %6757 = vmatprep.subr.mxu0 0.0
    %6758 = vmatpush2.msra.mxu0 0.0
    %6759 = vmatprep.mubr.f32.mxu0 0.0
    %6760 = vmatmul.mubr.f32.gmra.mxu0 %v6060
    %v6761 = vpop.f32.mrf.mxu0
    %v6762 = vadd.f32 0.0, %v6761
    %v6763 = vpop.f32.mrf.mxu0
    %6764 = vdwg.mxu0
    %v6766 = vrot.slane %v6762, 1
    %v6768 = vadd.f32 %v353, %v6766
    %6769 = vmatprep.subr.mxu0 0.0
    %6770 = vmatpush1.msra.mxu0 0.0
    %6771 = vmatprep.subr.mxu0 0.0
    %6772 = vmatpush1.msra.mxu0 0.0
    %6773 = vmatprep.subr.mxu0 0.0
    %6774 = vmatpush1.msra.mxu0 0.0
    %6775 = vmatprep.subr.mxu0 0.0
    %6776 = vmatpush1.msra.mxu0 0.0
    %6777 = vmatprep.subr.mxu0 0.0
    %6778 = vmatpush1.msra.mxu0 0.0
    %6779 = vmatprep.subr.mxu0 0.0
    %6780 = vmatpush1.msra.mxu0 0.0
    %6781 = vmatprep.subr.mxu0 0.0
    %6782 = vmatpush1.msra.mxu0 0.0
    %6783 = vmatprep.subr.mxu0 0.0
    %6784 = vmatpush1.msra.mxu0 0.0
    %6785 = vmatprep.subr.mxu0 0.0
    %6786 = vmatpush1.msra.mxu0 0.0
    %6787 = vmatprep.subr.mxu0 0.0
    %6788 = vmatpush1.msra.mxu0 0.0
    %6789 = vmatprep.subr.mxu0 0.0
    %6790 = vmatpush1.msra.mxu0 0.0
    %6791 = vmatprep.subr.mxu0 0.0
    %6792 = vmatpush1.msra.mxu0 0.0
    %6793 = vmatprep.subr.mxu0 0.0
    %6794 = vmatpush1.msra.mxu0 %v81
    %6795 = vmatprep.subr.mxu0 0.0
    %6796 = vmatpush1.msra.mxu0 %v80
    %6797 = vmatprep.subr.mxu0 0.0
    %6798 = vmatpush1.msra.mxu0 %v79
    %6799 = vmatprep.subr.mxu0 0.0
    %6800 = vmatpush1.msra.mxu0 %v78
    %6801 = vmatprep.subr.mxu0 0.0
    %6802 = vmatpush2.msra.mxu0 0.0
    %6803 = vmatprep.subr.mxu0 0.0
    %6804 = vmatpush2.msra.mxu0 0.0
    %6805 = vmatprep.subr.mxu0 0.0
    %6806 = vmatpush2.msra.mxu0 0.0
    %6807 = vmatprep.subr.mxu0 0.0
    %6808 = vmatpush2.msra.mxu0 0.0
    %6809 = vmatprep.subr.mxu0 0.0
    %6810 = vmatpush2.msra.mxu0 0.0
    %6811 = vmatprep.subr.mxu0 0.0
    %6812 = vmatpush2.msra.mxu0 0.0
    %6813 = vmatprep.subr.mxu0 0.0
    %6814 = vmatpush2.msra.mxu0 0.0
    %6815 = vmatprep.subr.mxu0 0.0
    %6816 = vmatpush2.msra.mxu0 0.0
    %6817 = vmatprep.subr.mxu0 0.0
    %6818 = vmatpush2.msra.mxu0 0.0
    %6819 = vmatprep.subr.mxu0 0.0
    %6820 = vmatpush2.msra.mxu0 0.0
    %6821 = vmatprep.subr.mxu0 0.0
    %6822 = vmatpush2.msra.mxu0 0.0
    %6823 = vmatprep.subr.mxu0 0.0
    %6824 = vmatpush2.msra.mxu0 0.0
    %6825 = vmatprep.subr.mxu0 0.0
    %6826 = vmatpush2.msra.mxu0 0.0
    %6827 = vmatprep.subr.mxu0 0.0
    %6828 = vmatpush2.msra.mxu0 0.0
    %6829 = vmatprep.subr.mxu0 0.0
    %6830 = vmatpush2.msra.mxu0 0.0
    %6831 = vmatprep.subr.mxu0 0.0
    %6832 = vmatpush2.msra.mxu0 0.0
    %6833 = vmatprep.mubr.f32.mxu0 0.0
    %6834 = vmatmul.mubr.f32.gmra.mxu0 %v6060
    %v6835 = vpop.f32.mrf.mxu0
    %v6836 = vadd.f32 0.0, %v6835
    %v6837 = vpop.f32.mrf.mxu0
    %6838 = vdwg.mxu0
    %v6840 = vrot.slane %v6836, 1
    %v6842 = vadd.f32 %v427, %v6840
    %6843 = vmatprep.subr.mxu0 0.0
    %6844 = vmatpush1.msra.mxu0 0.0
    %6845 = vmatprep.subr.mxu0 0.0
    %6846 = vmatpush1.msra.mxu0 0.0
    %6847 = vmatprep.subr.mxu0 0.0
    %6848 = vmatpush1.msra.mxu0 0.0
    %6849 = vmatprep.subr.mxu0 0.0
    %6850 = vmatpush1.msra.mxu0 0.0
    %6851 = vmatprep.subr.mxu0 0.0
    %6852 = vmatpush1.msra.mxu0 0.0
    %6853 = vmatprep.subr.mxu0 0.0
    %6854 = vmatpush1.msra.mxu0 0.0
    %6855 = vmatprep.subr.mxu0 0.0
    %6856 = vmatpush1.msra.mxu0 0.0
    %6857 = vmatprep.subr.mxu0 0.0
    %6858 = vmatpush1.msra.mxu0 0.0
    %6859 = vmatprep.subr.mxu0 0.0
    %6860 = vmatpush1.msra.mxu0 0.0
    %6861 = vmatprep.subr.mxu0 0.0
    %6862 = vmatpush1.msra.mxu0 0.0
    %6863 = vmatprep.subr.mxu0 0.0
    %6864 = vmatpush1.msra.mxu0 0.0
    %6865 = vmatprep.subr.mxu0 0.0
    %6866 = vmatpush1.msra.mxu0 0.0
    %6867 = vmatprep.subr.mxu0 0.0
    %6868 = vmatpush1.msra.mxu0 %v85
    %6869 = vmatprep.subr.mxu0 0.0
    %6870 = vmatpush1.msra.mxu0 %v84
    %6871 = vmatprep.subr.mxu0 0.0
    %6872 = vmatpush1.msra.mxu0 %v83
    %6873 = vmatprep.subr.mxu0 0.0
    %6874 = vmatpush1.msra.mxu0 %v82
    %6875 = vmatprep.subr.mxu0 0.0
    %6876 = vmatpush2.msra.mxu0 0.0
    %6877 = vmatprep.subr.mxu0 0.0
    %6878 = vmatpush2.msra.mxu0 0.0
    %6879 = vmatprep.subr.mxu0 0.0
    %6880 = vmatpush2.msra.mxu0 0.0
    %6881 = vmatprep.subr.mxu0 0.0
    %6882 = vmatpush2.msra.mxu0 0.0
    %6883 = vmatprep.subr.mxu0 0.0
    %6884 = vmatpush2.msra.mxu0 0.0
    %6885 = vmatprep.subr.mxu0 0.0
    %6886 = vmatpush2.msra.mxu0 0.0
    %6887 = vmatprep.subr.mxu0 0.0
    %6888 = vmatpush2.msra.mxu0 0.0
    %6889 = vmatprep.subr.mxu0 0.0
    %6890 = vmatpush2.msra.mxu0 0.0
    %6891 = vmatprep.subr.mxu0 0.0
    %6892 = vmatpush2.msra.mxu0 0.0
    %6893 = vmatprep.subr.mxu0 0.0
    %6894 = vmatpush2.msra.mxu0 0.0
    %6895 = vmatprep.subr.mxu0 0.0
    %6896 = vmatpush2.msra.mxu0 0.0
    %6897 = vmatprep.subr.mxu0 0.0
    %6898 = vmatpush2.msra.mxu0 0.0
    %6899 = vmatprep.subr.mxu0 0.0
    %6900 = vmatpush2.msra.mxu0 0.0
    %6901 = vmatprep.subr.mxu0 0.0
    %6902 = vmatpush2.msra.mxu0 0.0
    %6903 = vmatprep.subr.mxu0 0.0
    %6904 = vmatpush2.msra.mxu0 0.0
    %6905 = vmatprep.subr.mxu0 0.0
    %6906 = vmatpush2.msra.mxu0 0.0
    %6907 = vmatprep.mubr.f32.mxu0 0.0
    %6908 = vmatmul.mubr.f32.gmra.mxu0 %v6060
    %v6909 = vpop.f32.mrf.mxu0
    %v6910 = vadd.f32 0.0, %v6909
    %v6911 = vpop.f32.mrf.mxu0
    %6912 = vdwg.mxu0
    %v6914 = vrot.slane %v6910, 1
    %v6916 = vadd.f32 %v500, %v6914
    %6917 = vmatprep.subr.mxu0 0.0
    %6918 = vmatpush1.msra.mxu0 0.0
    %6919 = vmatprep.subr.mxu0 0.0
    %6920 = vmatpush1.msra.mxu0 0.0
    %6921 = vmatprep.subr.mxu0 0.0
    %6922 = vmatpush1.msra.mxu0 0.0
    %6923 = vmatprep.subr.mxu0 0.0
    %6924 = vmatpush1.msra.mxu0 0.0
    %6925 = vmatprep.subr.mxu0 0.0
    %6926 = vmatpush1.msra.mxu0 0.0
    %6927 = vmatprep.subr.mxu0 0.0
    %6928 = vmatpush1.msra.mxu0 0.0
    %6929 = vmatprep.subr.mxu0 0.0
    %6930 = vmatpush1.msra.mxu0 0.0
    %6931 = vmatprep.subr.mxu0 0.0
    %6932 = vmatpush1.msra.mxu0 0.0
    %6933 = vmatprep.subr.mxu0 0.0
    %6934 = vmatpush1.msra.mxu0 0.0
    %6935 = vmatprep.subr.mxu0 0.0
    %6936 = vmatpush1.msra.mxu0 0.0
    %6937 = vmatprep.subr.mxu0 0.0
    %6938 = vmatpush1.msra.mxu0 0.0
    %6939 = vmatprep.subr.mxu0 0.0
    %6940 = vmatpush1.msra.mxu0 0.0
    %6941 = vmatprep.subr.mxu0 0.0
    %6942 = vmatpush1.msra.mxu0 %v89
    %6943 = vmatprep.subr.mxu0 0.0
    %6944 = vmatpush1.msra.mxu0 %v88
    %6945 = vmatprep.subr.mxu0 0.0
    %6946 = vmatpush1.msra.mxu0 %v87
    %6947 = vmatprep.subr.mxu0 0.0
    %6948 = vmatpush1.msra.mxu0 %v86
    %6949 = vmatprep.subr.mxu0 0.0
    %6950 = vmatpush2.msra.mxu0 0.0
    %6951 = vmatprep.subr.mxu0 0.0
    %6952 = vmatpush2.msra.mxu0 0.0
    %6953 = vmatprep.subr.mxu0 0.0
    %6954 = vmatpush2.msra.mxu0 0.0
    %6955 = vmatprep.subr.mxu0 0.0
    %6956 = vmatpush2.msra.mxu0 0.0
    %6957 = vmatprep.subr.mxu0 0.0
    %6958 = vmatpush2.msra.mxu0 0.0
    %6959 = vmatprep.subr.mxu0 0.0
    %6960 = vmatpush2.msra.mxu0 0.0
    %6961 = vmatprep.subr.mxu0 0.0
    %6962 = vmatpush2.msra.mxu0 0.0
    %6963 = vmatprep.subr.mxu0 0.0
    %6964 = vmatpush2.msra.mxu0 0.0
    %6965 = vmatprep.subr.mxu0 0.0
    %6966 = vmatpush2.msra.mxu0 0.0
    %6967 = vmatprep.subr.mxu0 0.0
    %6968 = vmatpush2.msra.mxu0 0.0
    %6969 = vmatprep.subr.mxu0 0.0
    %6970 = vmatpush2.msra.mxu0 0.0
    %6971 = vmatprep.subr.mxu0 0.0
    %6972 = vmatpush2.msra.mxu0 0.0
    %6973 = vmatprep.subr.mxu0 0.0
    %6974 = vmatpush2.msra.mxu0 0.0
    %6975 = vmatprep.subr.mxu0 0.0
    %6976 = vmatpush2.msra.mxu0 0.0
    %6977 = vmatprep.subr.mxu0 0.0
    %6978 = vmatpush2.msra.mxu0 0.0
    %6979 = vmatprep.subr.mxu0 0.0
    %6980 = vmatpush2.msra.mxu0 0.0
    %6981 = vmatprep.mubr.f32.mxu0 0.0
    %6982 = vmatmul.mubr.f32.gmra.mxu0 %v6060
    %v6983 = vpop.f32.mrf.mxu0
    %v6984 = vadd.f32 0.0, %v6983
    %v6985 = vpop.f32.mrf.mxu0
    %6986 = vdwg.mxu0
    %v6988 = vrot.slane %v6984, 1
    %v6990 = vadd.f32 %v573, %v6988
    %v6991 = vxor.u32 %v6768, 2147483648
    %v6992 = vmul.f32 %v6991, 1.442695
    %v6993 = vpow.pop %v6992
    %v6994 = vadd.f32 %v6993, 1.0
    %v6995 = vrcp.pop %v6994
    %v6996 = vmul.f32 1.0, %v6995
    %v6997 = vxor.u32 %v6842, 2147483648
    %v6998 = vmul.f32 %v6997, 1.442695
    %v6999 = vpow.pop %v6998
    %v7000 = vadd.f32 %v6999, 1.0
    %v7001 = vrcp.pop %v7000
    %v7002 = vmul.f32 1.0, %v7001
    %v7003 = vtanh.pop %v6916
    %v7004 = vxor.u32 %v6990, 2147483648
    %v7005 = vmul.f32 %v7004, 1.442695
    %v7006 = vpow.pop %v7005
    %v7007 = vadd.f32 %v7006, 1.0
    %v7008 = vrcp.pop %v7007
    %v7009 = vmul.f32 1.0, %v7008
    %v7011 = vrot.slane %v6055, 7
    %v7013 = vmul.f32 %v7002, %v7011
    %v7014 = vmul.f32 %v6996, %v7003
    %v7015 = vadd.f32 %v7013, %v7014
    %v7016 = vtanh.pop %v7015
    %v7017 = vmul.f32 %v7009, %v7016
    %v7019 = vrot.slane %v7017, 7
    %v7020 = vsel %vm200, %v7019, 0
    %7022 = vmatprep.subr.mxu0 0.0
    %7023 = vmatpush1.msra.mxu0 0.0
    %7024 = vmatprep.subr.mxu0 0.0
    %7025 = vmatpush1.msra.mxu0 0.0
    %7026 = vmatprep.subr.mxu0 0.0
    %7027 = vmatpush1.msra.mxu0 0.0
    %7028 = vmatprep.subr.mxu0 0.0
    %7029 = vmatpush1.msra.mxu0 0.0
    %7030 = vmatprep.subr.mxu0 0.0
    %7031 = vmatpush1.msra.mxu0 0.0
    %7032 = vmatprep.subr.mxu0 0.0
    %7033 = vmatpush1.msra.mxu0 0.0
    %7034 = vmatprep.subr.mxu0 0.0
    %7035 = vmatpush1.msra.mxu0 0.0
    %7036 = vmatprep.subr.mxu0 0.0
    %7037 = vmatpush1.msra.mxu0 0.0
    %7038 = vmatprep.subr.mxu0 0.0
    %7039 = vmatpush1.msra.mxu0 0.0
    %7040 = vmatprep.subr.mxu0 0.0
    %7041 = vmatpush1.msra.mxu0 0.0
    %7042 = vmatprep.subr.mxu0 0.0
    %7043 = vmatpush1.msra.mxu0 0.0
    %7044 = vmatprep.subr.mxu0 0.0
    %7045 = vmatpush1.msra.mxu0 0.0
    %7046 = vmatprep.subr.mxu0 0.0
    %7047 = vmatpush1.msra.mxu0 %v93
    %7048 = vmatprep.subr.mxu0 0.0
    %7049 = vmatpush1.msra.mxu0 %v92
    %7050 = vmatprep.subr.mxu0 0.0
    %7051 = vmatpush1.msra.mxu0 %v91
    %7052 = vmatprep.subr.mxu0 0.0
    %7053 = vmatpush1.msra.mxu0 %v90
    %7054 = vmatprep.subr.mxu0 0.0
    %7055 = vmatpush2.msra.mxu0 0.0
    %7056 = vmatprep.subr.mxu0 0.0
    %7057 = vmatpush2.msra.mxu0 0.0
    %7058 = vmatprep.subr.mxu0 0.0
    %7059 = vmatpush2.msra.mxu0 0.0
    %7060 = vmatprep.subr.mxu0 0.0
    %7061 = vmatpush2.msra.mxu0 0.0
    %7062 = vmatprep.subr.mxu0 0.0
    %7063 = vmatpush2.msra.mxu0 0.0
    %7064 = vmatprep.subr.mxu0 0.0
    %7065 = vmatpush2.msra.mxu0 0.0
    %7066 = vmatprep.subr.mxu0 0.0
    %7067 = vmatpush2.msra.mxu0 0.0
    %7068 = vmatprep.subr.mxu0 0.0
    %7069 = vmatpush2.msra.mxu0 0.0
    %7070 = vmatprep.subr.mxu0 0.0
    %7071 = vmatpush2.msra.mxu0 0.0
    %7072 = vmatprep.subr.mxu0 0.0
    %7073 = vmatpush2.msra.mxu0 0.0
    %7074 = vmatprep.subr.mxu0 0.0
    %7075 = vmatpush2.msra.mxu0 0.0
    %7076 = vmatprep.subr.mxu0 0.0
    %7077 = vmatpush2.msra.mxu0 0.0
    %7078 = vmatprep.subr.mxu0 0.0
    %7079 = vmatpush2.msra.mxu0 0.0
    %7080 = vmatprep.subr.mxu0 0.0
    %7081 = vmatpush2.msra.mxu0 0.0
    %7082 = vmatprep.subr.mxu0 0.0
    %7083 = vmatpush2.msra.mxu0 0.0
    %7084 = vmatprep.subr.mxu0 0.0
    %7085 = vmatpush2.msra.mxu0 0.0
    %7086 = vmatprep.mubr.f32.mxu0 0.0
    %7087 = vmatmul.mubr.f32.gmra.mxu0 %v7020
    %v7088 = vpop.f32.mrf.mxu0
    %v7089 = vadd.f32 0.0, %v7088
    %v7090 = vpop.f32.mrf.mxu0
    %7091 = vdwg.mxu0
    %v7092 = vadd.f32 %v123, %v7089
    %7094 = vrot.lane.b32.xlu0 %v6694, 32
    %v7095 = vpop.permute.xlu0 %7094
    %v7096 = vsel %vm200, %v7095, 0
    %7098 = vmatprep.subr.mxu0 0.0
    %7099 = vmatpush1.msra.mxu0 0.0
    %7100 = vmatprep.subr.mxu0 0.0
    %7101 = vmatpush1.msra.mxu0 0.0
    %7102 = vmatprep.subr.mxu0 0.0
    %7103 = vmatpush1.msra.mxu0 0.0
    %7104 = vmatprep.subr.mxu0 0.0
    %7105 = vmatpush1.msra.mxu0 0.0
    %7106 = vmatprep.subr.mxu0 0.0
    %7107 = vmatpush1.msra.mxu0 0.0
    %7108 = vmatprep.subr.mxu0 0.0
    %7109 = vmatpush1.msra.mxu0 0.0
    %7110 = vmatprep.subr.mxu0 0.0
    %7111 = vmatpush1.msra.mxu0 0.0
    %7112 = vmatprep.subr.mxu0 0.0
    %7113 = vmatpush1.msra.mxu0 0.0
    %7114 = vmatprep.subr.mxu0 0.0
    %7115 = vmatpush1.msra.mxu0 0.0
    %7116 = vmatprep.subr.mxu0 0.0
    %7117 = vmatpush1.msra.mxu0 0.0
    %7118 = vmatprep.subr.mxu0 0.0
    %7119 = vmatpush1.msra.mxu0 0.0
    %7120 = vmatprep.subr.mxu0 0.0
    %7121 = vmatpush1.msra.mxu0 0.0
    %7122 = vmatprep.subr.mxu0 0.0
    %7123 = vmatpush1.msra.mxu0 %v109
    %7124 = vmatprep.subr.mxu0 0.0
    %7125 = vmatpush1.msra.mxu0 %v108
    %7126 = vmatprep.subr.mxu0 0.0
    %7127 = vmatpush1.msra.mxu0 %v107
    %7128 = vmatprep.subr.mxu0 0.0
    %7129 = vmatpush1.msra.mxu0 %v106
    %7130 = vmatprep.subr.mxu0 0.0
    %7131 = vmatpush2.msra.mxu0 0.0
    %7132 = vmatprep.subr.mxu0 0.0
    %7133 = vmatpush2.msra.mxu0 0.0
    %7134 = vmatprep.subr.mxu0 0.0
    %7135 = vmatpush2.msra.mxu0 0.0
    %7136 = vmatprep.subr.mxu0 0.0
    %7137 = vmatpush2.msra.mxu0 0.0
    %7138 = vmatprep.subr.mxu0 0.0
    %7139 = vmatpush2.msra.mxu0 0.0
    %7140 = vmatprep.subr.mxu0 0.0
    %7141 = vmatpush2.msra.mxu0 0.0
    %7142 = vmatprep.subr.mxu0 0.0
    %7143 = vmatpush2.msra.mxu0 0.0
    %7144 = vmatprep.subr.mxu0 0.0
    %7145 = vmatpush2.msra.mxu0 0.0
    %7146 = vmatprep.subr.mxu0 0.0
    %7147 = vmatpush2.msra.mxu0 0.0
    %7148 = vmatprep.subr.mxu0 0.0
    %7149 = vmatpush2.msra.mxu0 0.0
    %7150 = vmatprep.subr.mxu0 0.0
    %7151 = vmatpush2.msra.mxu0 0.0
    %7152 = vmatprep.subr.mxu0 0.0
    %7153 = vmatpush2.msra.mxu0 0.0
    %7154 = vmatprep.subr.mxu0 0.0
    %7155 = vmatpush2.msra.mxu0 0.0
    %7156 = vmatprep.subr.mxu0 0.0
    %7157 = vmatpush2.msra.mxu0 0.0
    %7158 = vmatprep.subr.mxu0 0.0
    %7159 = vmatpush2.msra.mxu0 0.0
    %7160 = vmatprep.subr.mxu0 0.0
    %7161 = vmatpush2.msra.mxu0 0.0
    %7162 = vmatprep.mubr.f32.mxu0 0.0
    %7163 = vmatmul.mubr.f32.gmra.mxu0 %v7096
    %v7164 = vpop.f32.mrf.mxu0
    %v7165 = vadd.f32 0.0, %v7164
    %v7166 = vpop.f32.mrf.mxu0
    %7167 = vdwg.mxu0
    %v7168 = vadd.f32 %v7092, %v7165
    %7169 = vmatprep.subr.mxu0 0.0
    %7170 = vmatpush1.msra.mxu0 0.0
    %7171 = vmatprep.subr.mxu0 0.0
    %7172 = vmatpush1.msra.mxu0 0.0
    %7173 = vmatprep.subr.mxu0 0.0
    %7174 = vmatpush1.msra.mxu0 0.0
    %7175 = vmatprep.subr.mxu0 0.0
    %7176 = vmatpush1.msra.mxu0 0.0
    %7177 = vmatprep.subr.mxu0 0.0
    %7178 = vmatpush1.msra.mxu0 0.0
    %7179 = vmatprep.subr.mxu0 0.0
    %7180 = vmatpush1.msra.mxu0 0.0
    %7181 = vmatprep.subr.mxu0 0.0
    %7182 = vmatpush1.msra.mxu0 0.0
    %7183 = vmatprep.subr.mxu0 0.0
    %7184 = vmatpush1.msra.mxu0 0.0
    %7185 = vmatprep.subr.mxu0 0.0
    %7186 = vmatpush1.msra.mxu0 0.0
    %7187 = vmatprep.subr.mxu0 0.0
    %7188 = vmatpush1.msra.mxu0 0.0
    %7189 = vmatprep.subr.mxu0 0.0
    %7190 = vmatpush1.msra.mxu0 0.0
    %7191 = vmatprep.subr.mxu0 0.0
    %7192 = vmatpush1.msra.mxu0 0.0
    %7193 = vmatprep.subr.mxu0 0.0
    %7194 = vmatpush1.msra.mxu0 %v97
    %7195 = vmatprep.subr.mxu0 0.0
    %7196 = vmatpush1.msra.mxu0 %v96
    %7197 = vmatprep.subr.mxu0 0.0
    %7198 = vmatpush1.msra.mxu0 %v95
    %7199 = vmatprep.subr.mxu0 0.0
    %7200 = vmatpush1.msra.mxu0 %v94
    %7201 = vmatprep.subr.mxu0 0.0
    %7202 = vmatpush2.msra.mxu0 0.0
    %7203 = vmatprep.subr.mxu0 0.0
    %7204 = vmatpush2.msra.mxu0 0.0
    %7205 = vmatprep.subr.mxu0 0.0
    %7206 = vmatpush2.msra.mxu0 0.0
    %7207 = vmatprep.subr.mxu0 0.0
    %7208 = vmatpush2.msra.mxu0 0.0
    %7209 = vmatprep.subr.mxu0 0.0
    %7210 = vmatpush2.msra.mxu0 0.0
    %7211 = vmatprep.subr.mxu0 0.0
    %7212 = vmatpush2.msra.mxu0 0.0
    %7213 = vmatprep.subr.mxu0 0.0
    %7214 = vmatpush2.msra.mxu0 0.0
    %7215 = vmatprep.subr.mxu0 0.0
    %7216 = vmatpush2.msra.mxu0 0.0
    %7217 = vmatprep.subr.mxu0 0.0
    %7218 = vmatpush2.msra.mxu0 0.0
    %7219 = vmatprep.subr.mxu0 0.0
    %7220 = vmatpush2.msra.mxu0 0.0
    %7221 = vmatprep.subr.mxu0 0.0
    %7222 = vmatpush2.msra.mxu0 0.0
    %7223 = vmatprep.subr.mxu0 0.0
    %7224 = vmatpush2.msra.mxu0 0.0
    %7225 = vmatprep.subr.mxu0 0.0
    %7226 = vmatpush2.msra.mxu0 0.0
    %7227 = vmatprep.subr.mxu0 0.0
    %7228 = vmatpush2.msra.mxu0 0.0
    %7229 = vmatprep.subr.mxu0 0.0
    %7230 = vmatpush2.msra.mxu0 0.0
    %7231 = vmatprep.subr.mxu0 0.0
    %7232 = vmatpush2.msra.mxu0 0.0
    %7233 = vmatprep.mubr.f32.mxu0 0.0
    %7234 = vmatmul.mubr.f32.gmra.mxu0 %v7020
    %v7235 = vpop.f32.mrf.mxu0
    %v7236 = vadd.f32 0.0, %v7235
    %v7237 = vpop.f32.mrf.mxu0
    %7238 = vdwg.mxu0
    %7240 = vrot.lane.b32.xlu0 %v7236, 32
    %v7241 = vpop.permute.xlu0 %7240
    %v7243 = vadd.f32 %v123, %v7241
    %7244 = vmatprep.subr.mxu0 0.0
    %7245 = vmatpush1.msra.mxu0 0.0
    %7246 = vmatprep.subr.mxu0 0.0
    %7247 = vmatpush1.msra.mxu0 0.0
    %7248 = vmatprep.subr.mxu0 0.0
    %7249 = vmatpush1.msra.mxu0 0.0
    %7250 = vmatprep.subr.mxu0 0.0
    %7251 = vmatpush1.msra.mxu0 0.0
    %7252 = vmatprep.subr.mxu0 0.0
    %7253 = vmatpush1.msra.mxu0 0.0
    %7254 = vmatprep.subr.mxu0 0.0
    %7255 = vmatpush1.msra.mxu0 0.0
    %7256 = vmatprep.subr.mxu0 0.0
    %7257 = vmatpush1.msra.mxu0 0.0
    %7258 = vmatprep.subr.mxu0 0.0
    %7259 = vmatpush1.msra.mxu0 0.0
    %7260 = vmatprep.subr.mxu0 0.0
    %7261 = vmatpush1.msra.mxu0 0.0
    %7262 = vmatprep.subr.mxu0 0.0
    %7263 = vmatpush1.msra.mxu0 0.0
    %7264 = vmatprep.subr.mxu0 0.0
    %7265 = vmatpush1.msra.mxu0 0.0
    %7266 = vmatprep.subr.mxu0 0.0
    %7267 = vmatpush1.msra.mxu0 0.0
    %7268 = vmatprep.subr.mxu0 0.0
    %7269 = vmatpush1.msra.mxu0 %v113
    %7270 = vmatprep.subr.mxu0 0.0
    %7271 = vmatpush1.msra.mxu0 %v112
    %7272 = vmatprep.subr.mxu0 0.0
    %7273 = vmatpush1.msra.mxu0 %v111
    %7274 = vmatprep.subr.mxu0 0.0
    %7275 = vmatpush1.msra.mxu0 %v110
    %7276 = vmatprep.subr.mxu0 0.0
    %7277 = vmatpush2.msra.mxu0 0.0
    %7278 = vmatprep.subr.mxu0 0.0
    %7279 = vmatpush2.msra.mxu0 0.0
    %7280 = vmatprep.subr.mxu0 0.0
    %7281 = vmatpush2.msra.mxu0 0.0
    %7282 = vmatprep.subr.mxu0 0.0
    %7283 = vmatpush2.msra.mxu0 0.0
    %7284 = vmatprep.subr.mxu0 0.0
    %7285 = vmatpush2.msra.mxu0 0.0
    %7286 = vmatprep.subr.mxu0 0.0
    %7287 = vmatpush2.msra.mxu0 0.0
    %7288 = vmatprep.subr.mxu0 0.0
    %7289 = vmatpush2.msra.mxu0 0.0
    %7290 = vmatprep.subr.mxu0 0.0
    %7291 = vmatpush2.msra.mxu0 0.0
    %7292 = vmatprep.subr.mxu0 0.0
    %7293 = vmatpush2.msra.mxu0 0.0
    %7294 = vmatprep.subr.mxu0 0.0
    %7295 = vmatpush2.msra.mxu0 0.0
    %7296 = vmatprep.subr.mxu0 0.0
    %7297 = vmatpush2.msra.mxu0 0.0
    %7298 = vmatprep.subr.mxu0 0.0
    %7299 = vmatpush2.msra.mxu0 0.0
    %7300 = vmatprep.subr.mxu0 0.0
    %7301 = vmatpush2.msra.mxu0 0.0
    %7302 = vmatprep.subr.mxu0 0.0
    %7303 = vmatpush2.msra.mxu0 0.0
    %7304 = vmatprep.subr.mxu0 0.0
    %7305 = vmatpush2.msra.mxu0 0.0
    %7306 = vmatprep.subr.mxu0 0.0
    %7307 = vmatpush2.msra.mxu0 0.0
    %7308 = vmatprep.mubr.f32.mxu0 0.0
    %7309 = vmatmul.mubr.f32.gmra.mxu0 %v7096
    %v7310 = vpop.f32.mrf.mxu0
    %v7311 = vadd.f32 0.0, %v7310
    %v7312 = vpop.f32.mrf.mxu0
    %7313 = vdwg.mxu0
    %7315 = vrot.lane.b32.xlu0 %v7311, 32
    %v7316 = vpop.permute.xlu0 %7315
    %v7318 = vadd.f32 %v7243, %v7316
    %7319 = vmatprep.subr.mxu0 0.0
    %7320 = vmatpush1.msra.mxu0 0.0
    %7321 = vmatprep.subr.mxu0 0.0
    %7322 = vmatpush1.msra.mxu0 0.0
    %7323 = vmatprep.subr.mxu0 0.0
    %7324 = vmatpush1.msra.mxu0 0.0
    %7325 = vmatprep.subr.mxu0 0.0
    %7326 = vmatpush1.msra.mxu0 0.0
    %7327 = vmatprep.subr.mxu0 0.0
    %7328 = vmatpush1.msra.mxu0 0.0
    %7329 = vmatprep.subr.mxu0 0.0
    %7330 = vmatpush1.msra.mxu0 0.0
    %7331 = vmatprep.subr.mxu0 0.0
    %7332 = vmatpush1.msra.mxu0 0.0
    %7333 = vmatprep.subr.mxu0 0.0
    %7334 = vmatpush1.msra.mxu0 0.0
    %7335 = vmatprep.subr.mxu0 0.0
    %7336 = vmatpush1.msra.mxu0 0.0
    %7337 = vmatprep.subr.mxu0 0.0
    %7338 = vmatpush1.msra.mxu0 0.0
    %7339 = vmatprep.subr.mxu0 0.0
    %7340 = vmatpush1.msra.mxu0 0.0
    %7341 = vmatprep.subr.mxu0 0.0
    %7342 = vmatpush1.msra.mxu0 0.0
    %7343 = vmatprep.subr.mxu0 0.0
    %7344 = vmatpush1.msra.mxu0 %v101
    %7345 = vmatprep.subr.mxu0 0.0
    %7346 = vmatpush1.msra.mxu0 %v100
    %7347 = vmatprep.subr.mxu0 0.0
    %7348 = vmatpush1.msra.mxu0 %v99
    %7349 = vmatprep.subr.mxu0 0.0
    %7350 = vmatpush1.msra.mxu0 %v98
    %7351 = vmatprep.subr.mxu0 0.0
    %7352 = vmatpush2.msra.mxu0 0.0
    %7353 = vmatprep.subr.mxu0 0.0
    %7354 = vmatpush2.msra.mxu0 0.0
    %7355 = vmatprep.subr.mxu0 0.0
    %7356 = vmatpush2.msra.mxu0 0.0
    %7357 = vmatprep.subr.mxu0 0.0
    %7358 = vmatpush2.msra.mxu0 0.0
    %7359 = vmatprep.subr.mxu0 0.0
    %7360 = vmatpush2.msra.mxu0 0.0
    %7361 = vmatprep.subr.mxu0 0.0
    %7362 = vmatpush2.msra.mxu0 0.0
    %7363 = vmatprep.subr.mxu0 0.0
    %7364 = vmatpush2.msra.mxu0 0.0
    %7365 = vmatprep.subr.mxu0 0.0
    %7366 = vmatpush2.msra.mxu0 0.0
    %7367 = vmatprep.subr.mxu0 0.0
    %7368 = vmatpush2.msra.mxu0 0.0
    %7369 = vmatprep.subr.mxu0 0.0
    %7370 = vmatpush2.msra.mxu0 0.0
    %7371 = vmatprep.subr.mxu0 0.0
    %7372 = vmatpush2.msra.mxu0 0.0
    %7373 = vmatprep.subr.mxu0 0.0
    %7374 = vmatpush2.msra.mxu0 0.0
    %7375 = vmatprep.subr.mxu0 0.0
    %7376 = vmatpush2.msra.mxu0 0.0
    %7377 = vmatprep.subr.mxu0 0.0
    %7378 = vmatpush2.msra.mxu0 0.0
    %7379 = vmatprep.subr.mxu0 0.0
    %7380 = vmatpush2.msra.mxu0 0.0
    %7381 = vmatprep.subr.mxu0 0.0
    %7382 = vmatpush2.msra.mxu0 0.0
    %7383 = vmatprep.mubr.f32.mxu0 0.0
    %7384 = vmatmul.mubr.f32.gmra.mxu0 %v7020
    %v7385 = vpop.f32.mrf.mxu0
    %v7386 = vadd.f32 0.0, %v7385
    %v7387 = vpop.f32.mrf.mxu0
    %7388 = vdwg.mxu0
    %7390 = vrot.lane.b32.xlu0 %v7386, 64
    %v7391 = vpop.permute.xlu0 %7390
    %v7393 = vadd.f32 %v123, %v7391
    %7394 = vmatprep.subr.mxu0 0.0
    %7395 = vmatpush1.msra.mxu0 0.0
    %7396 = vmatprep.subr.mxu0 0.0
    %7397 = vmatpush1.msra.mxu0 0.0
    %7398 = vmatprep.subr.mxu0 0.0
    %7399 = vmatpush1.msra.mxu0 0.0
    %7400 = vmatprep.subr.mxu0 0.0
    %7401 = vmatpush1.msra.mxu0 0.0
    %7402 = vmatprep.subr.mxu0 0.0
    %7403 = vmatpush1.msra.mxu0 0.0
    %7404 = vmatprep.subr.mxu0 0.0
    %7405 = vmatpush1.msra.mxu0 0.0
    %7406 = vmatprep.subr.mxu0 0.0
    %7407 = vmatpush1.msra.mxu0 0.0
    %7408 = vmatprep.subr.mxu0 0.0
    %7409 = vmatpush1.msra.mxu0 0.0
    %7410 = vmatprep.subr.mxu0 0.0
    %7411 = vmatpush1.msra.mxu0 0.0
    %7412 = vmatprep.subr.mxu0 0.0
    %7413 = vmatpush1.msra.mxu0 0.0
    %7414 = vmatprep.subr.mxu0 0.0
    %7415 = vmatpush1.msra.mxu0 0.0
    %7416 = vmatprep.subr.mxu0 0.0
    %7417 = vmatpush1.msra.mxu0 0.0
    %7418 = vmatprep.subr.mxu0 0.0
    %7419 = vmatpush1.msra.mxu0 %v117
    %7420 = vmatprep.subr.mxu0 0.0
    %7421 = vmatpush1.msra.mxu0 %v116
    %7422 = vmatprep.subr.mxu0 0.0
    %7423 = vmatpush1.msra.mxu0 %v115
    %7424 = vmatprep.subr.mxu0 0.0
    %7425 = vmatpush1.msra.mxu0 %v114
    %7426 = vmatprep.subr.mxu0 0.0
    %7427 = vmatpush2.msra.mxu0 0.0
    %7428 = vmatprep.subr.mxu0 0.0
    %7429 = vmatpush2.msra.mxu0 0.0
    %7430 = vmatprep.subr.mxu0 0.0
    %7431 = vmatpush2.msra.mxu0 0.0
    %7432 = vmatprep.subr.mxu0 0.0
    %7433 = vmatpush2.msra.mxu0 0.0
    %7434 = vmatprep.subr.mxu0 0.0
    %7435 = vmatpush2.msra.mxu0 0.0
    %7436 = vmatprep.subr.mxu0 0.0
    %7437 = vmatpush2.msra.mxu0 0.0
    %7438 = vmatprep.subr.mxu0 0.0
    %7439 = vmatpush2.msra.mxu0 0.0
    %7440 = vmatprep.subr.mxu0 0.0
    %7441 = vmatpush2.msra.mxu0 0.0
    %7442 = vmatprep.subr.mxu0 0.0
    %7443 = vmatpush2.msra.mxu0 0.0
    %7444 = vmatprep.subr.mxu0 0.0
    %7445 = vmatpush2.msra.mxu0 0.0
    %7446 = vmatprep.subr.mxu0 0.0
    %7447 = vmatpush2.msra.mxu0 0.0
    %7448 = vmatprep.subr.mxu0 0.0
    %7449 = vmatpush2.msra.mxu0 0.0
    %7450 = vmatprep.subr.mxu0 0.0
    %7451 = vmatpush2.msra.mxu0 0.0
    %7452 = vmatprep.subr.mxu0 0.0
    %7453 = vmatpush2.msra.mxu0 0.0
    %7454 = vmatprep.subr.mxu0 0.0
    %7455 = vmatpush2.msra.mxu0 0.0
    %7456 = vmatprep.subr.mxu0 0.0
    %7457 = vmatpush2.msra.mxu0 0.0
    %7458 = vmatprep.mubr.f32.mxu0 0.0
    %7459 = vmatmul.mubr.f32.gmra.mxu0 %v7096
    %v7460 = vpop.f32.mrf.mxu0
    %v7461 = vadd.f32 0.0, %v7460
    %v7462 = vpop.f32.mrf.mxu0
    %7463 = vdwg.mxu0
    %7465 = vrot.lane.b32.xlu0 %v7461, 64
    %v7466 = vpop.permute.xlu0 %7465
    %v7468 = vadd.f32 %v7393, %v7466
    %7469 = vmatprep.subr.mxu0 0.0
    %7470 = vmatpush1.msra.mxu0 0.0
    %7471 = vmatprep.subr.mxu0 0.0
    %7472 = vmatpush1.msra.mxu0 0.0
    %7473 = vmatprep.subr.mxu0 0.0
    %7474 = vmatpush1.msra.mxu0 0.0
    %7475 = vmatprep.subr.mxu0 0.0
    %7476 = vmatpush1.msra.mxu0 0.0
    %7477 = vmatprep.subr.mxu0 0.0
    %7478 = vmatpush1.msra.mxu0 0.0
    %7479 = vmatprep.subr.mxu0 0.0
    %7480 = vmatpush1.msra.mxu0 0.0
    %7481 = vmatprep.subr.mxu0 0.0
    %7482 = vmatpush1.msra.mxu0 0.0
    %7483 = vmatprep.subr.mxu0 0.0
    %7484 = vmatpush1.msra.mxu0 0.0
    %7485 = vmatprep.subr.mxu0 0.0
    %7486 = vmatpush1.msra.mxu0 0.0
    %7487 = vmatprep.subr.mxu0 0.0
    %7488 = vmatpush1.msra.mxu0 0.0
    %7489 = vmatprep.subr.mxu0 0.0
    %7490 = vmatpush1.msra.mxu0 0.0
    %7491 = vmatprep.subr.mxu0 0.0
    %7492 = vmatpush1.msra.mxu0 0.0
    %7493 = vmatprep.subr.mxu0 0.0
    %7494 = vmatpush1.msra.mxu0 %v105
    %7495 = vmatprep.subr.mxu0 0.0
    %7496 = vmatpush1.msra.mxu0 %v104
    %7497 = vmatprep.subr.mxu0 0.0
    %7498 = vmatpush1.msra.mxu0 %v103
    %7499 = vmatprep.subr.mxu0 0.0
    %7500 = vmatpush1.msra.mxu0 %v102
    %7501 = vmatprep.subr.mxu0 0.0
    %7502 = vmatpush2.msra.mxu0 0.0
    %7503 = vmatprep.subr.mxu0 0.0
    %7504 = vmatpush2.msra.mxu0 0.0
    %7505 = vmatprep.subr.mxu0 0.0
    %7506 = vmatpush2.msra.mxu0 0.0
    %7507 = vmatprep.subr.mxu0 0.0
    %7508 = vmatpush2.msra.mxu0 0.0
    %7509 = vmatprep.subr.mxu0 0.0
    %7510 = vmatpush2.msra.mxu0 0.0
    %7511 = vmatprep.subr.mxu0 0.0
    %7512 = vmatpush2.msra.mxu0 0.0
    %7513 = vmatprep.subr.mxu0 0.0
    %7514 = vmatpush2.msra.mxu0 0.0
    %7515 = vmatprep.subr.mxu0 0.0
    %7516 = vmatpush2.msra.mxu0 0.0
    %7517 = vmatprep.subr.mxu0 0.0
    %7518 = vmatpush2.msra.mxu0 0.0
    %7519 = vmatprep.subr.mxu0 0.0
    %7520 = vmatpush2.msra.mxu0 0.0
    %7521 = vmatprep.subr.mxu0 0.0
    %7522 = vmatpush2.msra.mxu0 0.0
    %7523 = vmatprep.subr.mxu0 0.0
    %7524 = vmatpush2.msra.mxu0 0.0
    %7525 = vmatprep.subr.mxu0 0.0
    %7526 = vmatpush2.msra.mxu0 0.0
    %7527 = vmatprep.subr.mxu0 0.0
    %7528 = vmatpush2.msra.mxu0 0.0
    %7529 = vmatprep.subr.mxu0 0.0
    %7530 = vmatpush2.msra.mxu0 0.0
    %7531 = vmatprep.subr.mxu0 0.0
    %7532 = vmatpush2.msra.mxu0 0.0
    %7533 = vmatprep.mubr.f32.mxu0 0.0
    %7534 = vmatmul.mubr.f32.gmra.mxu0 %v7020
    %v7535 = vpop.f32.mrf.mxu0
    %v7536 = vadd.f32 0.0, %v7535
    %v7537 = vpop.f32.mrf.mxu0
    %7538 = vdwg.mxu0
    %7540 = vrot.lane.b32.xlu0 %v7536, 96
    %v7541 = vpop.permute.xlu0 %7540
    %v7543 = vadd.f32 %v123, %v7541
    %7544 = vmatprep.subr.mxu0 0.0
    %7545 = vmatpush1.msra.mxu0 0.0
    %7546 = vmatprep.subr.mxu0 0.0
    %7547 = vmatpush1.msra.mxu0 0.0
    %7548 = vmatprep.subr.mxu0 0.0
    %7549 = vmatpush1.msra.mxu0 0.0
    %7550 = vmatprep.subr.mxu0 0.0
    %7551 = vmatpush1.msra.mxu0 0.0
    %7552 = vmatprep.subr.mxu0 0.0
    %7553 = vmatpush1.msra.mxu0 0.0
    %7554 = vmatprep.subr.mxu0 0.0
    %7555 = vmatpush1.msra.mxu0 0.0
    %7556 = vmatprep.subr.mxu0 0.0
    %7557 = vmatpush1.msra.mxu0 0.0
    %7558 = vmatprep.subr.mxu0 0.0
    %7559 = vmatpush1.msra.mxu0 0.0
    %7560 = vmatprep.subr.mxu0 0.0
    %7561 = vmatpush1.msra.mxu0 0.0
    %7562 = vmatprep.subr.mxu0 0.0
    %7563 = vmatpush1.msra.mxu0 0.0
    %7564 = vmatprep.subr.mxu0 0.0
    %7565 = vmatpush1.msra.mxu0 0.0
    %7566 = vmatprep.subr.mxu0 0.0
    %7567 = vmatpush1.msra.mxu0 0.0
    %7568 = vmatprep.subr.mxu0 0.0
    %7569 = vmatpush1.msra.mxu0 %v121
    %7570 = vmatprep.subr.mxu0 0.0
    %7571 = vmatpush1.msra.mxu0 %v120
    %7572 = vmatprep.subr.mxu0 0.0
    %7573 = vmatpush1.msra.mxu0 %v119
    %7574 = vmatprep.subr.mxu0 0.0
    %7575 = vmatpush1.msra.mxu0 %v118
    %7576 = vmatprep.subr.mxu0 0.0
    %7577 = vmatpush2.msra.mxu0 0.0
    %7578 = vmatprep.subr.mxu0 0.0
    %7579 = vmatpush2.msra.mxu0 0.0
    %7580 = vmatprep.subr.mxu0 0.0
    %7581 = vmatpush2.msra.mxu0 0.0
    %7582 = vmatprep.subr.mxu0 0.0
    %7583 = vmatpush2.msra.mxu0 0.0
    %7584 = vmatprep.subr.mxu0 0.0
    %7585 = vmatpush2.msra.mxu0 0.0
    %7586 = vmatprep.subr.mxu0 0.0
    %7587 = vmatpush2.msra.mxu0 0.0
    %7588 = vmatprep.subr.mxu0 0.0
    %7589 = vmatpush2.msra.mxu0 0.0
    %7590 = vmatprep.subr.mxu0 0.0
    %7591 = vmatpush2.msra.mxu0 0.0
    %7592 = vmatprep.subr.mxu0 0.0
    %7593 = vmatpush2.msra.mxu0 0.0
    %7594 = vmatprep.subr.mxu0 0.0
    %7595 = vmatpush2.msra.mxu0 0.0
    %7596 = vmatprep.subr.mxu0 0.0
    %7597 = vmatpush2.msra.mxu0 0.0
    %7598 = vmatprep.subr.mxu0 0.0
    %7599 = vmatpush2.msra.mxu0 0.0
    %7600 = vmatprep.subr.mxu0 0.0
    %7601 = vmatpush2.msra.mxu0 0.0
    %7602 = vmatprep.subr.mxu0 0.0
    %7603 = vmatpush2.msra.mxu0 0.0
    %7604 = vmatprep.subr.mxu0 0.0
    %7605 = vmatpush2.msra.mxu0 0.0
    %7606 = vmatprep.subr.mxu0 0.0
    %7607 = vmatpush2.msra.mxu0 0.0
    %7608 = vmatprep.mubr.f32.mxu0 0.0
    %7609 = vmatmul.mubr.f32.gmra.mxu0 %v7096
    %v7610 = vpop.f32.mrf.mxu0
    %v7611 = vadd.f32 0.0, %v7610
    %v7612 = vpop.f32.mrf.mxu0
    %7613 = vdwg.mxu0
    %7615 = vrot.lane.b32.xlu0 %v7611, 96
    %v7616 = vpop.permute.xlu0 %7615
    %v7618 = vadd.f32 %v7543, %v7616
    %v7619 = vxor.u32 %v7168, 2147483648
    %v7620 = vmul.f32 %v7619, 1.442695
    %v7621 = vpow.pop %v7620
    %v7622 = vadd.f32 %v7621, 1.0
    %v7623 = vrcp.pop %v7622
    %v7624 = vmul.f32 1.0, %v7623
    %v7625 = vxor.u32 %v7318, 2147483648
    %v7626 = vmul.f32 %v7625, 1.442695
    %v7627 = vpow.pop %v7626
    %v7628 = vadd.f32 %v7627, 1.0
    %v7629 = vrcp.pop %v7628
    %v7630 = vmul.f32 1.0, %v7629
    %v7631 = vtanh.pop %v7468
    %v7632 = vxor.u32 %v7618, 2147483648
    %v7633 = vmul.f32 %v7632, 1.442695
    %v7634 = vpow.pop %v7633
    %v7635 = vadd.f32 %v7634, 1.0
    %v7636 = vrcp.pop %v7635
    %v7637 = vmul.f32 1.0, %v7636
    %v7638 = vmul.f32 %v7630, %v6688
    %7640 = vrot.lane.b32.xlu0 %v7631, 64
    %v7641 = vpop.permute.xlu0 %7640
    %v7643 = vmul.f32 %v7624, %v7641
    %7645 = vrot.lane.b32.xlu0 %v7643, 32
    %v7646 = vpop.permute.xlu0 %7645
    %v7648 = vadd.f32 %v7638, %v7646
    %v7649 = vtanh.pop %v7648
    %7651 = vrot.lane.b32.xlu0 %v7649, 64
    %v7652 = vpop.permute.xlu0 %7651
    %v7654 = vmul.f32 %v7637, %v7652
    %v7655 = vrot.slane %v1894, 7
    %v7657 = vrot.slane %v2854, 6
    %v7659 = vrot.slane %v3814, 5
    %v7661 = vrot.slane %v4774, 4
    %v7663 = vrot.slane %v5734, 3
    %v7665 = vrot.slane %v6694, 2
    %v7668 = vrot.slane %v7654, 1
    %vm7670 = vcmask 1040384
    %v7671 = vsel %vm7670, %v934, %v7655
    %vm7672 = vcmask 1041408
    %v7673 = vsel %vm7672, %v7671, %v7657
    %vm7674 = vcmask 1042432
    %v7675 = vsel %vm7674, %v7673, %v7659
    %vm7676 = vcmask 1043456
    %v7677 = vsel %vm7676, %v7675, %v7661
    %vm7678 = vcmask 1044480
    %v7679 = vsel %vm7678, %v7677, %v7663
    %vm7680 = vcmask 1045504
    %v7681 = vsel %vm7680, %v7679, %v7665
    %vm7682 = vcmask 1046528
    %v7683 = vsel %vm7682, %v7681, %v7668
    %vm7684 = vcmask 1048320
    %v7685 = vsel %vm7684, %v7683, inf
    %7686 = vmin.xlane.f32.xlu0 %v7685
    %v7687 = vpop.xlane.xlu0 %7686
    %v7688 = vsel %vm7684, %v7683, -inf
    %7689 = vmax.xlane.f32.xlu0 %v7688
    %v7690 = vpop.xlane.xlu0 %7689
    %v7691 = vsub.f32 %v7690, %v7687
    %vm7692 = vcmp.lt.f32.partialorder %v7691, 1e-05
    %v7693 = vadd.f32 %v7691, 1e-05
    %v7694 = vsel %vm7692, %v7693, %v7691
    %v7695 = vsub.f32 %v7683, %v7687
    %v7696 = vrcp.pop %v7694
    %v7697 = vmul.f32 %v7695, %v7696
    %7699 = vrot.lane.b32.xlu0 %v7697, 32
    %v7700 = vpop.permute.xlu0 %7699
    %7702 = vst.msk [vmem:[#allocation8] sm:$0xff] %vm200, %v7700
    // Predicated region
    $region26: #{tpu_custom_call.1} parent=1 // pred_check
      _
    $region27: #{tpu_custom_call.1} parent=1 // pred_check_branch
      %7704 = sbr.rel (0) target = $region29
    $region28: #{tpu_custom_call.1} parent=1 // pred_region
      %s7706 = ssub.s32 128, 128
      %7707 = vsyncadd [#allocation4], %s7706
      %s7709 = sshll.u32 [#allocation8], 4
      %s7710 = int_to_ptr.vmem [resolvable:$true] %s7709
      %7712 = dma.vmem_to_hbm [thread:$0]  %s7710, 128, %s3, [#allocation4]
    $region29: #{tpu_custom_call.1} parent=1 // pred_fallthru
      _
    // Predicated region
    $region30: #{tpu_custom_call.1} parent=1 // pred_check
      _
    $region31: #{tpu_custom_call.1} parent=1 // pred_check_branch
      %7714 = sbr.rel (0) target = $region33
    $region32: #{tpu_custom_call.1} parent=1 // pred_region
      %7715 = dma.done [#allocation4], 128
    $region33: #{tpu_custom_call.1} parent=1 // pred_fallthru
      _
    %7716 = vsyncpa [#allocation3], 1
    %7717 = vsyncpa [#allocation6], 1
    %7718 = vsyncpa [#allocation4], 1

</llo_original>
